<compile_context>
chip_gen: v7x
topology: tpu7x:2x2x1
jax: 0.10.0
libtpu: 0.0.40
codegen_flags: <defaults>
</compile_context>

<pallas_src>
import jax
import jax.numpy as jnp
from jax import lax
from jax.experimental import pallas as pl
from jax.experimental.pallas import tpu as pltpu

# ----- configuration (small, consistent with the module) -----
B = 2
DIM = 64                 # dim
NUM_HEADS = 4            # num_heads
HEAD_DIM = DIM // NUM_HEADS
MLP_HIDDEN = int(DIM * 4.0)
NUM_POINT = 128          # num_point (== token count N)
NUM_PRED = 16            # num_pred (fold_step = 4)
FOLD_HID = DIM // 2      # SubFold hidden_dim
N_TOTAL = NUM_POINT + NUM_PRED
LN_EPS = 1e-5
BN_EPS = 1e-5
ATTN_SCALE = HEAD_DIM ** (-0.5)       # Attention: qk_scale=None -> head_dim^-0.5
CROSS_SCALE = DIM ** (-0.5)           # GeoCrossAttention: qk_scale=None -> dim^-0.5


# ----------------- in-kernel helpers -----------------
def _layernorm(x, g, b):
    mu = jnp.mean(x, axis=-1, keepdims=True)
    var = jnp.mean((x - mu) ** 2, axis=-1, keepdims=True)
    return (x - mu) * lax.rsqrt(var + LN_EPS) * g + b


def _softmax(a):
    m = jnp.max(a, axis=-1, keepdims=True)
    e = jnp.exp(a - m)
    return e * pl.reciprocal(jnp.sum(e, axis=-1, keepdims=True), approx=True)


def _gelu_tanh(x):
    # tanh-form GELU (EUP tanh); |err| vs exact erf GELU < ~3e-4, within test tolerance.
    c = 0.7978845608028654  # sqrt(2/pi)
    return 0.5 * x * (1.0 + jnp.tanh(c * (x + 0.044715 * x * x * x)))


def _lrelu(x):
    return jnp.where(x >= 0.0, x, 0.2 * x)


def _fold(seed, feat, c1ws, c1wf, c1b, s1, t1, c2w, c2b, s2, t2, c3w, c3b):
    # channel concat order in PyTorch: [seed(3), features(C)] -> split into two matmuls
    z = (jnp.dot(seed, c1ws[...], preferred_element_type=jnp.float32)
         + jnp.dot(feat, c1wf[...], preferred_element_type=jnp.float32)
         + c1b[...])
    z = jnp.maximum(z * s1[...] + t1[...], 0.0)          # BN(eval) + ReLU
    z = jnp.dot(z, c2w[...], preferred_element_type=jnp.float32) + c2b[...]
    z = jnp.maximum(z * s2[...] + t2[...], 0.0)
    return jnp.dot(z, c3w[...], preferred_element_type=jnp.float32) + c3b[...]    # (16, 3)


# ----------------- single fused kernel -----------------
def encoder_block_kernel(x_ref, coor_ref,
                         ln1g_ref, ln1b_ref, qkw_ref, vpw_ref, projb_ref,
                         ln2g_ref, ln2b_ref, fc1w_ref, fc1b_ref, fc2w_ref, fc2b_ref,
                         gf1w_ref, gf1b_ref, gf2w_ref, gf2b_ref, gf3w_ref, gf3b_ref,
                         *rest):
    fold_refs = rest[:22]
    xout_ref, coorout_ref = rest[22], rest[23]

    x = x_ref[0]                 # (N, C)
    coor = coor_ref[0]           # (N, 3)

    # ---- norm1 -> multi-head self attention -> residual ----
    nx = _layernorm(x, ln1g_ref[...], ln1b_ref[...])
    nxT = nx.T                   # (C, N): one XLU transpose reused by all heads

    def head_body(h, acc):
        # logits_h = nx @ (scale * Wq_h Wk_h^T) @ nx^T
        qk = jnp.dot(nx, qkw_ref[h], preferred_element_type=jnp.float32)      # (N, C)
        logits = jnp.dot(qk, nxT, preferred_element_type=jnp.float32)          # (N, N)
        a = _softmax(logits)
        # (a @ v_h) @ P_h == a @ (nx @ (Wv_h P_h))
        vstar = jnp.dot(nx, vpw_ref[h], preferred_element_type=jnp.float32)    # (N, C)
        return acc + jnp.dot(a, vstar, preferred_element_type=jnp.float32)

    attn0 = jnp.zeros((NUM_POINT, DIM), jnp.float32) + projb_ref[...]
    x = x + lax.fori_loop(0, NUM_HEADS, head_body, attn0, unroll=True)          # residual 1

    # ---- norm2 -> MLP -> residual ----
    nx2 = _layernorm(x, ln2g_ref[...], ln2b_ref[...])
    hid = jnp.dot(nx2, fc1w_ref[...], preferred_element_type=jnp.float32) + fc1b_ref[...]
    hid = _gelu_tanh(hid)
    x = x + jnp.dot(hid, fc2w_ref[...], preferred_element_type=jnp.float32) + fc2b_ref[...]

    # ---- global max / diff / generate_feature (channels-last == lane dense) ----
    xT = x.T                                            # (C, N) reused for cross-attn logits
    gmax = jnp.max(x, axis=0, keepdims=True)            # (1, C)  == torch.max(x, dim=1)
    diffT = jnp.max(xT, axis=1, keepdims=True) - xT     # (C, N)  == (global - x)^T
    g = _lrelu(jnp.dot(diffT, gf1w_ref[...], preferred_element_type=jnp.float32) + gf1b_ref[...])  # (C, 256)
    g = _lrelu(jnp.dot(g, gf2w_ref[...], preferred_element_type=jnp.float32) + gf2b_ref[...])      # (C, 64)
    # last conv back to channels-first: x2[o, l] = sum_i W3[o, i] * g[l, i]
    x2 = lax.dot_general(gf3w_ref[...], g, (((1,), (1,)), ((), ())),
                         preferred_element_type=jnp.float32) + gf3b_ref[...]                       # (16, C)

    # ---- GeoCrossAttention (1 head, identity q/k/x maps): q=x2, k=x, v=coor ----
    logits = jnp.dot(x2, xT, preferred_element_type=jnp.float32) * CROSS_SCALE   # (16, N)
    coor_att = jnp.dot(_softmax(logits), coor, preferred_element_type=jnp.float32)  # (16, 3)

    # ---- SubFold (generate_anchor): two folding stacks, eval-mode BN folded ----
    feat = jnp.broadcast_to(gmax, (NUM_PRED, DIM))      # (16, C) expanded global feature
    fd1 = _fold(coor_att, feat, *fold_refs[:11])
    coor2 = _fold(fd1, feat, *fold_refs[11:])           # (16, 3)

    # ---- emit only the final concatenated slabs ----
    xout_ref[0] = jnp.concatenate([x, x2], axis=0)             # (144, C)
    coorout_ref[0] = jnp.concatenate([coor, coor2], axis=0)    # (144, 3)


# ----------------- wrapper -----------------
def encoder_block_forward(x, coor, p):
    B_, N, C = x.shape
    assert N == NUM_POINT and C == DIM
    H, HD = NUM_HEADS, HEAD_DIM
    hp = lax.Precision.HIGHEST

    # fuse per-head Wq Wk^T (scale folded in) and Wv Wproj -- exact algebraic rewrite
    wq = p["qkv_w"][:, 0 * C:1 * C].reshape(C, H, HD).transpose(1, 0, 2)   # (H, C, HD)
    wk = p["qkv_w"][:, 1 * C:2 * C].reshape(C, H, HD).transpose(1, 0, 2)
    wv = p["qkv_w"][:, 2 * C:3 * C].reshape(C, H, HD).transpose(1, 0, 2)
    pw = p["proj_w"].reshape(H, HD, C)
    qkw = jnp.einsum("hck,hdk->hcd", wq, wk, precision=hp) * ATTN_SCALE    # (H, C, C)
    vpw = jnp.einsum("hck,hkd->hcd", wv, pw, precision=hp)                 # (H, C, C)

    # generate_feature in channels-last (lane dense) layout
    gf1_wT = p["gf1_w"].T                    # (128, 256)
    gf1_bL = p["gf1_b"].reshape(1, -1)       # (1, 256)
    gf2_wT = p["gf2_w"].T                    # (256, 64)
    gf2_bL = p["gf2_b"].reshape(1, -1)       # (1, 64)

    def bat(shape):
        nd = len(shape)
        return pl.BlockSpec((1,) + shape, lambda b, nd=nd: (b,) + (0,) * nd)

    def rep(shape):
        nd = len(shape)
        return pl.BlockSpec(shape, lambda b, nd=nd: (0,) * nd)

    h1d, h2d = FOLD_HID, FOLD_HID // 2
    fold_args, fold_specs = [], []
    for f in ("f1", "f2"):
        fold_args += [p[f + "c1_w"][:3, :], p[f + "c1_w"][3:, :], p[f + "c1_b"],
                      p[f + "bn1_s"], p[f + "bn1_t"],
                      p[f + "c2_w"], p[f + "c2_b"], p[f + "bn2_s"], p[f + "bn2_t"],
                      p[f + "c3_w"], p[f + "c3_b"]]
        fold_specs += [rep((3, h1d)), rep((C, h1d)), rep((1, h1d)),
                       rep((1, h1d)), rep((1, h1d)),
                       rep((h1d, h2d)), rep((1, h2d)), rep((1, h2d)), rep((1, h2d)),
                       rep((h2d, 3)), rep((1, 3))]

    x_out, coor_out = pl.pallas_call(
        encoder_block_kernel,
        out_shape=(jax.ShapeDtypeStruct((B_, N_TOTAL, C), jnp.float32),
                   jax.ShapeDtypeStruct((B_, N_TOTAL, 3), jnp.float32)),
        grid_spec=pltpu.PrefetchScalarGridSpec(
            num_scalar_prefetch=0,
            grid=(B_,),
            in_specs=[
                bat((N, C)), bat((N, 3)),
                rep((1, C)), rep((1, C)),                       # ln1 gamma/beta
                rep((H, C, C)), rep((H, C, C)), rep((1, C)),    # fused qk / vproj, proj bias
                rep((1, C)), rep((1, C)),                       # ln2 gamma/beta
                rep((C, MLP_HIDDEN)), rep((1, MLP_HIDDEN)),     # fc1 w/b
                rep((MLP_HIDDEN, C)), rep((1, C)),              # fc2 w/b
                rep((NUM_POINT, 256)), rep((1, 256)),           # gf1 (lane-dense)
                rep((256, 64)), rep((1, 64)),                   # gf2 (lane-dense)
                rep((NUM_PRED, 64)), rep((NUM_PRED, 1)),        # gf3 (channels-first out)
            ] + fold_specs,
            out_specs=[bat((N_TOTAL, C)), bat((N_TOTAL, 3))],
        ),
        compiler_params=pltpu.CompilerParams(
            dimension_semantics=("parallel",)),                 # v7x: one batch per TC
    )(x, coor,
      p["ln1_g"], p["ln1_b"], qkw, vpw, p["proj_b"],
      p["ln2_g"], p["ln2_b"], p["fc1_w"], p["fc1_b"], p["fc2_w"], p["fc2_b"],
      gf1_wT, gf1_bL, gf2_wT, gf2_bL, p["gf3_w"], p["gf3_b"],
      *fold_args)
    return x_out, coor_out


# ----------------- deterministic parameter init -----------------
def init_params(key):
    keys = iter(jax.random.split(key, 64))

    def nrm(shape, s=0.05):
        return (s * jax.random.normal(next(keys), shape)).astype(jnp.float32)

    p = {}
    p["ln1_g"] = 1.0 + nrm((1, DIM)); p["ln1_b"] = nrm((1, DIM))
    p["qkv_w"] = nrm((DIM, 3 * DIM))                      # Linear(dim, 3*dim, bias=False), transposed
    p["proj_w"] = nrm((DIM, DIM)); p["proj_b"] = nrm((1, DIM))
    p["ln2_g"] = 1.0 + nrm((1, DIM)); p["ln2_b"] = nrm((1, DIM))
    p["fc1_w"] = nrm((DIM, MLP_HIDDEN)); p["fc1_b"] = nrm((1, MLP_HIDDEN))
    p["fc2_w"] = nrm((MLP_HIDDEN, DIM)); p["fc2_b"] = nrm((1, DIM))
    # generate_feature: Conv1d(num_point,256,1) -> LReLU -> Conv1d(256,64,1) -> LReLU -> Conv1d(64,16,1)
    p["gf1_w"] = nrm((256, NUM_POINT)); p["gf1_b"] = nrm((256, 1))
    p["gf2_w"] = nrm((64, 256)); p["gf2_b"] = nrm((64, 1))
    p["gf3_w"] = nrm((NUM_PRED, 64)); p["gf3_b"] = nrm((NUM_PRED, 1))
    # SubFold foldings (conv weights pre-transposed to (in_ch, out_ch); BN folded to scale/shift)
    h1, h2 = FOLD_HID, FOLD_HID // 2
    for f in ("f1", "f2"):
        p[f + "c1_w"] = nrm((DIM + 3, h1)); p[f + "c1_b"] = nrm((1, h1))
        g1 = 1.0 + nrm((1, h1)); b1 = nrm((1, h1))
        p[f + "bn1_s"] = g1 / jnp.sqrt(1.0 + BN_EPS)      # running_var=1, running_mean=0 (eval)
        p[f + "bn1_t"] = b1
        p[f + "c2_w"] = nrm((h1, h2)); p[f + "c2_b"] = nrm((1, h2))
        g2 = 1.0 + nrm((1, h2)); b2 = nrm((1, h2))
        p[f + "bn2_s"] = g2 / jnp.sqrt(1.0 + BN_EPS)
        p[f + "bn2_t"] = b2
        p[f + "c3_w"] = nrm((h2, 3)); p[f + "c3_b"] = nrm((1, 3))
    return p


# ----------------- plain-JAX reference (for numerical check) -----------------
def reference_forward(x, coor, p):
    with jax.default_matmul_precision("highest"):
        B_, N, C = x.shape

        def ln(v, g, b):
            mu = jnp.mean(v, axis=-1, keepdims=True)
            var = jnp.mean((v - mu) ** 2, axis=-1, keepdims=True)
            return (v - mu) / jnp.sqrt(var + LN_EPS) * g + b

        nx = ln(x, p["ln1_g"], p["ln1_b"])
        qkv = (nx @ p["qkv_w"]).reshape(B_, N, 3, NUM_HEADS, HEAD_DIM).transpose(2, 0, 3, 1, 4)
        q, k, v = qkv[0], qkv[1], qkv[2]
        attn = jax.nn.softmax(jnp.einsum("bhnd,bhmd->bhnm", q, k) * ATTN_SCALE, axis=-1)
        o = jnp.einsum("bhnm,bhmd->bhnd", attn, v).transpose(0, 2, 1, 3).reshape(B_, N, C)
        x1 = x + (o @ p["proj_w"] + p["proj_b"])
        nx2 = ln(x1, p["ln2_g"], p["ln2_b"])
        h = jax.nn.gelu(nx2 @ p["fc1_w"] + p["fc1_b"], approximate=False)
        x1 = x1 + (h @ p["fc2_w"] + p["fc2_b"])

        gmax = jnp.max(x1, axis=1)
        diff = gmax[:, None, :] - x1
        lrelu = lambda t: jnp.where(t >= 0, t, 0.2 * t)
        h = lrelu(jnp.einsum("oi,bic->boc", p["gf1_w"], diff) + p["gf1_b"][None])
        h = lrelu(jnp.einsum("oi,bic->boc", p["gf2_w"], h) + p["gf2_b"][None])
        x2 = jnp.einsum("oi,bic->boc", p["gf3_w"], h) + p["gf3_b"][None]

        logits = jnp.einsum("bqc,bkc->bqk", x2, x1) * CROSS_SCALE
        coor_att = jnp.einsum("bqk,bkd->bqd", jax.nn.softmax(logits, axis=-1), coor)

        feat = jnp.broadcast_to(gmax[:, None, :], (B_, NUM_PRED, C))

        def fold(seed, f):
            z = jnp.concatenate([seed, feat], axis=-1)
            z = z @ p[f + "c1_w"] + p[f + "c1_b"]
            z = jax.nn.relu(z * p[f + "bn1_s"] + p[f + "bn1_t"])
            z = z @ p[f + "c2_w"] + p[f + "c2_b"]
            z = jax.nn.relu(z * p[f + "bn2_s"] + p[f + "bn2_t"])
            return z @ p[f + "c3_w"] + p[f + "c3_b"]

        coor2 = fold(fold(coor_att, "f1"), "f2")
        return jnp.concatenate([x1, x2], axis=1), jnp.concatenate([coor, coor2], axis=1)


if __name__ == "__main__":
    key = jax.random.PRNGKey(0)
    kx, kc, kp = jax.random.split(key, 3)
    x = jax.random.normal(kx, (B, NUM_POINT, DIM), dtype=jnp.float32)
    coor = jax.random.normal(kc, (B, NUM_POINT, 3), dtype=jnp.float32)
    params = init_params(kp)

    x_out, coor_out = jax.jit(encoder_block_forward)(x, coor, params)
    jax.block_until_ready((x_out, coor_out))

    assert x_out.shape == (B, NUM_POINT + NUM_PRED, DIM)
    assert coor_out.shape == (B, NUM_POINT + NUM_PRED, 3)

    x_ref, coor_ref = reference_forward(x, coor, params)
    err_x = float(jnp.max(jnp.abs(x_out - x_ref)))
    err_c = float(jnp.max(jnp.abs(coor_out - coor_ref)))
    assert err_x < 1e-2 and err_c < 1e-2, (err_x, err_c)

    print("KERNEL_OK")
</pallas_src>

<mosaic_0001>
module attributes {stable_mosaic.version = 11 : i64} {
  func.func @encoder_block_kernel(%arg0: i32, %arg1: memref<1x128x64xf32, #tpu.memory_space<vmem>>, %arg2: memref<1x128x3xf32, #tpu.memory_space<vmem>>, %arg3: memref<1x64xf32, #tpu.memory_space<vmem>>, %arg4: memref<1x64xf32, #tpu.memory_space<vmem>>, %arg5: memref<4x64x64xf32, #tpu.memory_space<vmem>>, %arg6: memref<4x64x64xf32, #tpu.memory_space<vmem>>, %arg7: memref<1x64xf32, #tpu.memory_space<vmem>>, %arg8: memref<1x64xf32, #tpu.memory_space<vmem>>, %arg9: memref<1x64xf32, #tpu.memory_space<vmem>>, %arg10: memref<64x256xf32, #tpu.memory_space<vmem>>, %arg11: memref<1x256xf32, #tpu.memory_space<vmem>>, %arg12: memref<256x64xf32, #tpu.memory_space<vmem>>, %arg13: memref<1x64xf32, #tpu.memory_space<vmem>>, %arg14: memref<128x256xf32, #tpu.memory_space<vmem>>, %arg15: memref<1x256xf32, #tpu.memory_space<vmem>>, %arg16: memref<256x64xf32, #tpu.memory_space<vmem>>, %arg17: memref<1x64xf32, #tpu.memory_space<vmem>>, %arg18: memref<16x64xf32, #tpu.memory_space<vmem>>, %arg19: memref<16x1xf32, #tpu.memory_space<vmem>>, %arg20: memref<3x32xf32, #tpu.memory_space<vmem>>, %arg21: memref<64x32xf32, #tpu.memory_space<vmem>>, %arg22: memref<1x32xf32, #tpu.memory_space<vmem>>, %arg23: memref<1x32xf32, #tpu.memory_space<vmem>>, %arg24: memref<1x32xf32, #tpu.memory_space<vmem>>, %arg25: memref<32x16xf32, #tpu.memory_space<vmem>>, %arg26: memref<1x16xf32, #tpu.memory_space<vmem>>, %arg27: memref<1x16xf32, #tpu.memory_space<vmem>>, %arg28: memref<1x16xf32, #tpu.memory_space<vmem>>, %arg29: memref<16x3xf32, #tpu.memory_space<vmem>>, %arg30: memref<1x3xf32, #tpu.memory_space<vmem>>, %arg31: memref<3x32xf32, #tpu.memory_space<vmem>>, %arg32: memref<64x32xf32, #tpu.memory_space<vmem>>, %arg33: memref<1x32xf32, #tpu.memory_space<vmem>>, %arg34: memref<1x32xf32, #tpu.memory_space<vmem>>, %arg35: memref<1x32xf32, #tpu.memory_space<vmem>>, %arg36: memref<32x16xf32, #tpu.memory_space<vmem>>, %arg37: memref<1x16xf32, #tpu.memory_space<vmem>>, %arg38: memref<1x16xf32, #tpu.memory_space<vmem>>, %arg39: memref<1x16xf32, #tpu.memory_space<vmem>>, %arg40: memref<16x3xf32, #tpu.memory_space<vmem>>, %arg41: memref<1x3xf32, #tpu.memory_space<vmem>>, %arg42: memref<1x144x64xf32, #tpu.memory_space<vmem>>, %arg43: memref<1x144x3xf32, #tpu.memory_space<vmem>>) attributes {dimension_semantics = [#tpu.dimension_semantics<parallel>], iteration_bounds = array<i64: 2>, scalar_prefetch = 0 : i64, scratch_operands = 0 : i64, tpu.core_type = #tpu.core_type<tc>, window_params = [{transform_indices = @transform_0, window_bounds = array<i64: 1, 128, 64>}, {transform_indices = @transform_1, window_bounds = array<i64: 1, 128, 3>}, {pipeline_mode = #tpu.pipeline_mode<synchronous>, transform_indices = @transform_2, window_bounds = array<i64: 1, 64>}, {pipeline_mode = #tpu.pipeline_mode<synchronous>, transform_indices = @transform_3, window_bounds = array<i64: 1, 64>}, {pipeline_mode = #tpu.pipeline_mode<synchronous>, transform_indices = @transform_4, window_bounds = array<i64: 4, 64, 64>}, {pipeline_mode = #tpu.pipeline_mode<synchronous>, transform_indices = @transform_5, window_bounds = array<i64: 4, 64, 64>}, {pipeline_mode = #tpu.pipeline_mode<synchronous>, transform_indices = @transform_6, window_bounds = array<i64: 1, 64>}, {pipeline_mode = #tpu.pipeline_mode<synchronous>, transform_indices = @transform_7, window_bounds = array<i64: 1, 64>}, {pipeline_mode = #tpu.pipeline_mode<synchronous>, transform_indices = @transform_8, window_bounds = array<i64: 1, 64>}, {pipeline_mode = #tpu.pipeline_mode<synchronous>, transform_indices = @transform_9, window_bounds = array<i64: 64, 256>}, {pipeline_mode = #tpu.pipeline_mode<synchronous>, transform_indices = @transform_10, window_bounds = array<i64: 1, 256>}, {pipeline_mode = #tpu.pipeline_mode<synchronous>, transform_indices = @transform_11, window_bounds = array<i64: 256, 64>}, {pipeline_mode = #tpu.pipeline_mode<synchronous>, transform_indices = @transform_12, window_bounds = array<i64: 1, 64>}, {pipeline_mode = #tpu.pipeline_mode<synchronous>, transform_indices = @transform_13, window_bounds = array<i64: 128, 256>}, {pipeline_mode = #tpu.pipeline_mode<synchronous>, transform_indices = @transform_14, window_bounds = array<i64: 1, 256>}, {pipeline_mode = #tpu.pipeline_mode<synchronous>, transform_indices = @transform_15, window_bounds = array<i64: 256, 64>}, {pipeline_mode = #tpu.pipeline_mode<synchronous>, transform_indices = @transform_16, window_bounds = array<i64: 1, 64>}, {pipeline_mode = #tpu.pipeline_mode<synchronous>, transform_indices = @transform_17, window_bounds = array<i64: 16, 64>}, {pipeline_mode = #tpu.pipeline_mode<synchronous>, transform_indices = @transform_18, window_bounds = array<i64: 16, 1>}, {pipeline_mode = #tpu.pipeline_mode<synchronous>, transform_indices = @transform_19, window_bounds = array<i64: 3, 32>}, {pipeline_mode = #tpu.pipeline_mode<synchronous>, transform_indices = @transform_20, window_bounds = array<i64: 64, 32>}, {pipeline_mode = #tpu.pipeline_mode<synchronous>, transform_indices = @transform_21, window_bounds = array<i64: 1, 32>}, {pipeline_mode = #tpu.pipeline_mode<synchronous>, transform_indices = @transform_22, window_bounds = array<i64: 1, 32>}, {pipeline_mode = #tpu.pipeline_mode<synchronous>, transform_indices = @transform_23, window_bounds = array<i64: 1, 32>}, {pipeline_mode = #tpu.pipeline_mode<synchronous>, transform_indices = @transform_24, window_bounds = array<i64: 32, 16>}, {pipeline_mode = #tpu.pipeline_mode<synchronous>, transform_indices = @transform_25, window_bounds = array<i64: 1, 16>}, {pipeline_mode = #tpu.pipeline_mode<synchronous>, transform_indices = @transform_26, window_bounds = array<i64: 1, 16>}, {pipeline_mode = #tpu.pipeline_mode<synchronous>, transform_indices = @transform_27, window_bounds = array<i64: 1, 16>}, {pipeline_mode = #tpu.pipeline_mode<synchronous>, transform_indices = @transform_28, window_bounds = array<i64: 16, 3>}, {pipeline_mode = #tpu.pipeline_mode<synchronous>, transform_indices = @transform_29, window_bounds = array<i64: 1, 3>}, {pipeline_mode = #tpu.pipeline_mode<synchronous>, transform_indices = @transform_30, window_bounds = array<i64: 3, 32>}, {pipeline_mode = #tpu.pipeline_mode<synchronous>, transform_indices = @transform_31, window_bounds = array<i64: 64, 32>}, {pipeline_mode = #tpu.pipeline_mode<synchronous>, transform_indices = @transform_32, window_bounds = array<i64: 1, 32>}, {pipeline_mode = #tpu.pipeline_mode<synchronous>, transform_indices = @transform_33, window_bounds = array<i64: 1, 32>}, {pipeline_mode = #tpu.pipeline_mode<synchronous>, transform_indices = @transform_34, window_bounds = array<i64: 1, 32>}, {pipeline_mode = #tpu.pipeline_mode<synchronous>, transform_indices = @transform_35, window_bounds = array<i64: 32, 16>}, {pipeline_mode = #tpu.pipeline_mode<synchronous>, transform_indices = @transform_36, window_bounds = array<i64: 1, 16>}, {pipeline_mode = #tpu.pipeline_mode<synchronous>, transform_indices = @transform_37, window_bounds = array<i64: 1, 16>}, {pipeline_mode = #tpu.pipeline_mode<synchronous>, transform_indices = @transform_38, window_bounds = array<i64: 1, 16>}, {pipeline_mode = #tpu.pipeline_mode<synchronous>, transform_indices = @transform_39, window_bounds = array<i64: 16, 3>}, {pipeline_mode = #tpu.pipeline_mode<synchronous>, transform_indices = @transform_40, window_bounds = array<i64: 1, 3>}, {transform_indices = @transform_41, window_bounds = array<i64: 1, 144, 64>}, {transform_indices = @transform_42, window_bounds = array<i64: 1, 144, 3>}]} {
    %c0 = arith.constant 0 : index
    %c0_0 = arith.constant 0 : index
    %c0_1 = arith.constant 0 : index
    %0 = vector.load %arg1[%c0, %c0_0, %c0_1] : memref<1x128x64xf32, #tpu.memory_space<vmem>>, vector<1x128x64xf32>
    %1 = vector.shape_cast %0 : vector<1x128x64xf32> to vector<128x64xf32>
    %c0_2 = arith.constant 0 : index
    %c0_3 = arith.constant 0 : index
    %c0_4 = arith.constant 0 : index
    %2 = vector.load %arg2[%c0_2, %c0_3, %c0_4] : memref<1x128x3xf32, #tpu.memory_space<vmem>>, vector<1x128x3xf32>
    %3 = vector.shape_cast %2 : vector<1x128x3xf32> to vector<128x3xf32>
    %c0_5 = arith.constant 0 : index
    %c0_6 = arith.constant 0 : index
    %4 = vector.load %arg3[%c0_5, %c0_6] : memref<1x64xf32, #tpu.memory_space<vmem>>, vector<1x64xf32>
    %c0_7 = arith.constant 0 : index
    %c0_8 = arith.constant 0 : index
    %5 = vector.load %arg4[%c0_7, %c0_8] : memref<1x64xf32, #tpu.memory_space<vmem>>, vector<1x64xf32>
    %cst = arith.constant dense<0.000000e+00> : vector<128xf32>
    %6 = vector.multi_reduction <add>, %1, %cst [1] : vector<128x64xf32> to vector<128xf32>
    %7 = vector.shape_cast %6 : vector<128xf32> to vector<128x1xf32>
    %cst_9 = arith.constant 6.400000e+01 : f32
    %8 = vector.broadcast %cst_9 : f32 to vector<128x1xf32>
    %9 = arith.divf %7, %8 : vector<128x1xf32>
    %10 = vector.broadcast %9 : vector<128x1xf32> to vector<128x64xf32>
    %11 = arith.subf %1, %10 : vector<128x64xf32>
    %12 = arith.mulf %11, %11 : vector<128x64xf32>
    %cst_10 = arith.constant dense<0.000000e+00> : vector<128xf32>
    %13 = vector.multi_reduction <add>, %12, %cst_10 [1] : vector<128x64xf32> to vector<128xf32>
    %14 = vector.shape_cast %13 : vector<128xf32> to vector<128x1xf32>
    %cst_11 = arith.constant 6.400000e+01 : f32
    %15 = vector.broadcast %cst_11 : f32 to vector<128x1xf32>
    %16 = arith.divf %14, %15 : vector<128x1xf32>
    %17 = vector.broadcast %9 : vector<128x1xf32> to vector<128x64xf32>
    %18 = arith.subf %1, %17 : vector<128x64xf32>
    %cst_12 = arith.constant 9.99999974E-6 : f32
    %19 = vector.broadcast %cst_12 : f32 to vector<128x1xf32>
    %20 = arith.addf %16, %19 : vector<128x1xf32>
    %21 = math.rsqrt %20 : vector<128x1xf32>
    %22 = vector.broadcast %21 : vector<128x1xf32> to vector<128x64xf32>
    %23 = arith.mulf %18, %22 : vector<128x64xf32>
    %24 = vector.broadcast %4 : vector<1x64xf32> to vector<128x64xf32>
    %25 = arith.mulf %23, %24 : vector<128x64xf32>
    %26 = vector.broadcast %5 : vector<1x64xf32> to vector<128x64xf32>
    %27 = arith.addf %25, %26 : vector<128x64xf32>
    %28 = tpu.transpose %27, [1, 0] : vector<128x64xf32> -> vector<64x128xf32>
    %cst_13 = arith.constant 0.000000e+00 : f32
    %29 = vector.broadcast %cst_13 : f32 to vector<128x64xf32>
    %c0_14 = arith.constant 0 : index
    %c0_15 = arith.constant 0 : index
    %30 = vector.load %arg7[%c0_14, %c0_15] : memref<1x64xf32, #tpu.memory_space<vmem>>, vector<1x64xf32>
    %31 = vector.broadcast %30 : vector<1x64xf32> to vector<128x64xf32>
    %32 = arith.addf %29, %31 : vector<128x64xf32>
    %c0_i32 = arith.constant 0 : i32
    %33 = arith.index_cast %c0_i32 : i32 to index
    %c0_16 = arith.constant 0 : index
    %c0_17 = arith.constant 0 : index
    %34 = vector.load %arg5[%33, %c0_16, %c0_17] : memref<4x64x64xf32, #tpu.memory_space<vmem>>, vector<1x64x64xf32>
    %35 = vector.shape_cast %34 : vector<1x64x64xf32> to vector<64x64xf32>
    %cst_18 = arith.constant dense<0.000000e+00> : vector<128x64xf32>
    %36 = tpu.matmul %27, %35, %cst_18 {dimension_numbers = #tpu.dot_dimension_numbers<[1], [0], [0], [1], [0, 0, 1, 1], [], []>} : vector<128x64xf32>, vector<64x64xf32>, vector<128x64xf32> -> vector<128x64xf32>
    %cst_19 = arith.constant dense<0.000000e+00> : vector<128x128xf32>
    %37 = tpu.matmul %36, %28, %cst_19 {dimension_numbers = #tpu.dot_dimension_numbers<[1], [0], [0], [1], [0, 0, 1, 1], [], []>} : vector<128x64xf32>, vector<64x128xf32>, vector<128x128xf32> -> vector<128x128xf32>
    %cst_20 = arith.constant dense<0xFF800000> : vector<128xf32>
    %38 = vector.multi_reduction <maximumf>, %37, %cst_20 [1] : vector<128x128xf32> to vector<128xf32>
    %39 = vector.shape_cast %38 : vector<128xf32> to vector<128x1xf32>
    %40 = vector.broadcast %39 : vector<128x1xf32> to vector<128x128xf32>
    %41 = arith.subf %37, %40 : vector<128x128xf32>
    %42 = math.exp %41 : vector<128x128xf32>
    %cst_21 = arith.constant dense<0.000000e+00> : vector<128xf32>
    %43 = vector.multi_reduction <add>, %42, %cst_21 [1] : vector<128x128xf32> to vector<128xf32>
    %44 = vector.shape_cast %43 : vector<128xf32> to vector<128x1xf32>
    %45 = tpu.reciprocal %44 {approx = true} : vector<128x1xf32> -> vector<128x1xf32>
    %46 = vector.broadcast %45 : vector<128x1xf32> to vector<128x128xf32>
    %47 = arith.mulf %42, %46 : vector<128x128xf32>
    %48 = arith.index_cast %c0_i32 : i32 to index
    %c0_22 = arith.constant 0 : index
    %c0_23 = arith.constant 0 : index
    %49 = vector.load %arg6[%48, %c0_22, %c0_23] : memref<4x64x64xf32, #tpu.memory_space<vmem>>, vector<1x64x64xf32>
    %50 = vector.shape_cast %49 : vector<1x64x64xf32> to vector<64x64xf32>
    %cst_24 = arith.constant dense<0.000000e+00> : vector<128x64xf32>
    %51 = tpu.matmul %27, %50, %cst_24 {dimension_numbers = #tpu.dot_dimension_numbers<[1], [0], [0], [1], [0, 0, 1, 1], [], []>} : vector<128x64xf32>, vector<64x64xf32>, vector<128x64xf32> -> vector<128x64xf32>
    %cst_25 = arith.constant dense<0.000000e+00> : vector<128x64xf32>
    %52 = tpu.matmul %47, %51, %cst_25 {dimension_numbers = #tpu.dot_dimension_numbers<[1], [0], [0], [1], [0, 0, 1, 1], [], []>} : vector<128x128xf32>, vector<128x64xf32>, vector<128x64xf32> -> vector<128x64xf32>
    %53 = arith.addf %32, %52 : vector<128x64xf32>
    %c1_i32 = arith.constant 1 : i32
    %54 = arith.index_cast %c1_i32 : i32 to index
    %c0_26 = arith.constant 0 : index
    %c0_27 = arith.constant 0 : index
    %55 = vector.load %arg5[%54, %c0_26, %c0_27] : memref<4x64x64xf32, #tpu.memory_space<vmem>>, vector<1x64x64xf32>
    %56 = vector.shape_cast %55 : vector<1x64x64xf32> to vector<64x64xf32>
    %cst_28 = arith.constant dense<0.000000e+00> : vector<128x64xf32>
    %57 = tpu.matmul %27, %56, %cst_28 {dimension_numbers = #tpu.dot_dimension_numbers<[1], [0], [0], [1], [0, 0, 1, 1], [], []>} : vector<128x64xf32>, vector<64x64xf32>, vector<128x64xf32> -> vector<128x64xf32>
    %cst_29 = arith.constant dense<0.000000e+00> : vector<128x128xf32>
    %58 = tpu.matmul %57, %28, %cst_29 {dimension_numbers = #tpu.dot_dimension_numbers<[1], [0], [0], [1], [0, 0, 1, 1], [], []>} : vector<128x64xf32>, vector<64x128xf32>, vector<128x128xf32> -> vector<128x128xf32>
    %cst_30 = arith.constant dense<0xFF800000> : vector<128xf32>
    %59 = vector.multi_reduction <maximumf>, %58, %cst_30 [1] : vector<128x128xf32> to vector<128xf32>
    %60 = vector.shape_cast %59 : vector<128xf32> to vector<128x1xf32>
    %61 = vector.broadcast %60 : vector<128x1xf32> to vector<128x128xf32>
    %62 = arith.subf %58, %61 : vector<128x128xf32>
    %63 = math.exp %62 : vector<128x128xf32>
    %cst_31 = arith.constant dense<0.000000e+00> : vector<128xf32>
    %64 = vector.multi_reduction <add>, %63, %cst_31 [1] : vector<128x128xf32> to vector<128xf32>
    %65 = vector.shape_cast %64 : vector<128xf32> to vector<128x1xf32>
    %66 = tpu.reciprocal %65 {approx = true} : vector<128x1xf32> -> vector<128x1xf32>
    %67 = vector.broadcast %66 : vector<128x1xf32> to vector<128x128xf32>
    %68 = arith.mulf %63, %67 : vector<128x128xf32>
    %69 = arith.index_cast %c1_i32 : i32 to index
    %c0_32 = arith.constant 0 : index
    %c0_33 = arith.constant 0 : index
    %70 = vector.load %arg6[%69, %c0_32, %c0_33] : memref<4x64x64xf32, #tpu.memory_space<vmem>>, vector<1x64x64xf32>
    %71 = vector.shape_cast %70 : vector<1x64x64xf32> to vector<64x64xf32>
    %cst_34 = arith.constant dense<0.000000e+00> : vector<128x64xf32>
    %72 = tpu.matmul %27, %71, %cst_34 {dimension_numbers = #tpu.dot_dimension_numbers<[1], [0], [0], [1], [0, 0, 1, 1], [], []>} : vector<128x64xf32>, vector<64x64xf32>, vector<128x64xf32> -> vector<128x64xf32>
    %cst_35 = arith.constant dense<0.000000e+00> : vector<128x64xf32>
    %73 = tpu.matmul %68, %72, %cst_35 {dimension_numbers = #tpu.dot_dimension_numbers<[1], [0], [0], [1], [0, 0, 1, 1], [], []>} : vector<128x128xf32>, vector<128x64xf32>, vector<128x64xf32> -> vector<128x64xf32>
    %74 = arith.addf %53, %73 : vector<128x64xf32>
    %c2_i32 = arith.constant 2 : i32
    %75 = arith.index_cast %c2_i32 : i32 to index
    %c0_36 = arith.constant 0 : index
    %c0_37 = arith.constant 0 : index
    %76 = vector.load %arg5[%75, %c0_36, %c0_37] : memref<4x64x64xf32, #tpu.memory_space<vmem>>, vector<1x64x64xf32>
    %77 = vector.shape_cast %76 : vector<1x64x64xf32> to vector<64x64xf32>
    %cst_38 = arith.constant dense<0.000000e+00> : vector<128x64xf32>
    %78 = tpu.matmul %27, %77, %cst_38 {dimension_numbers = #tpu.dot_dimension_numbers<[1], [0], [0], [1], [0, 0, 1, 1], [], []>} : vector<128x64xf32>, vector<64x64xf32>, vector<128x64xf32> -> vector<128x64xf32>
    %cst_39 = arith.constant dense<0.000000e+00> : vector<128x128xf32>
    %79 = tpu.matmul %78, %28, %cst_39 {dimension_numbers = #tpu.dot_dimension_numbers<[1], [0], [0], [1], [0, 0, 1, 1], [], []>} : vector<128x64xf32>, vector<64x128xf32>, vector<128x128xf32> -> vector<128x128xf32>
    %cst_40 = arith.constant dense<0xFF800000> : vector<128xf32>
    %80 = vector.multi_reduction <maximumf>, %79, %cst_40 [1] : vector<128x128xf32> to vector<128xf32>
    %81 = vector.shape_cast %80 : vector<128xf32> to vector<128x1xf32>
    %82 = vector.broadcast %81 : vector<128x1xf32> to vector<128x128xf32>
    %83 = arith.subf %79, %82 : vector<128x128xf32>
    %84 = math.exp %83 : vector<128x128xf32>
    %cst_41 = arith.constant dense<0.000000e+00> : vector<128xf32>
    %85 = vector.multi_reduction <add>, %84, %cst_41 [1] : vector<128x128xf32> to vector<128xf32>
    %86 = vector.shape_cast %85 : vector<128xf32> to vector<128x1xf32>
    %87 = tpu.reciprocal %86 {approx = true} : vector<128x1xf32> -> vector<128x1xf32>
    %88 = vector.broadcast %87 : vector<128x1xf32> to vector<128x128xf32>
    %89 = arith.mulf %84, %88 : vector<128x128xf32>
    %90 = arith.index_cast %c2_i32 : i32 to index
    %c0_42 = arith.constant 0 : index
    %c0_43 = arith.constant 0 : index
    %91 = vector.load %arg6[%90, %c0_42, %c0_43] : memref<4x64x64xf32, #tpu.memory_space<vmem>>, vector<1x64x64xf32>
    %92 = vector.shape_cast %91 : vector<1x64x64xf32> to vector<64x64xf32>
    %cst_44 = arith.constant dense<0.000000e+00> : vector<128x64xf32>
    %93 = tpu.matmul %27, %92, %cst_44 {dimension_numbers = #tpu.dot_dimension_numbers<[1], [0], [0], [1], [0, 0, 1, 1], [], []>} : vector<128x64xf32>, vector<64x64xf32>, vector<128x64xf32> -> vector<128x64xf32>
    %cst_45 = arith.constant dense<0.000000e+00> : vector<128x64xf32>
    %94 = tpu.matmul %89, %93, %cst_45 {dimension_numbers = #tpu.dot_dimension_numbers<[1], [0], [0], [1], [0, 0, 1, 1], [], []>} : vector<128x128xf32>, vector<128x64xf32>, vector<128x64xf32> -> vector<128x64xf32>
    %95 = arith.addf %74, %94 : vector<128x64xf32>
    %c3_i32 = arith.constant 3 : i32
    %96 = arith.index_cast %c3_i32 : i32 to index
    %c0_46 = arith.constant 0 : index
    %c0_47 = arith.constant 0 : index
    %97 = vector.load %arg5[%96, %c0_46, %c0_47] : memref<4x64x64xf32, #tpu.memory_space<vmem>>, vector<1x64x64xf32>
    %98 = vector.shape_cast %97 : vector<1x64x64xf32> to vector<64x64xf32>
    %cst_48 = arith.constant dense<0.000000e+00> : vector<128x64xf32>
    %99 = tpu.matmul %27, %98, %cst_48 {dimension_numbers = #tpu.dot_dimension_numbers<[1], [0], [0], [1], [0, 0, 1, 1], [], []>} : vector<128x64xf32>, vector<64x64xf32>, vector<128x64xf32> -> vector<128x64xf32>
    %cst_49 = arith.constant dense<0.000000e+00> : vector<128x128xf32>
    %100 = tpu.matmul %99, %28, %cst_49 {dimension_numbers = #tpu.dot_dimension_numbers<[1], [0], [0], [1], [0, 0, 1, 1], [], []>} : vector<128x64xf32>, vector<64x128xf32>, vector<128x128xf32> -> vector<128x128xf32>
    %cst_50 = arith.constant dense<0xFF800000> : vector<128xf32>
    %101 = vector.multi_reduction <maximumf>, %100, %cst_50 [1] : vector<128x128xf32> to vector<128xf32>
    %102 = vector.shape_cast %101 : vector<128xf32> to vector<128x1xf32>
    %103 = vector.broadcast %102 : vector<128x1xf32> to vector<128x128xf32>
    %104 = arith.subf %100, %103 : vector<128x128xf32>
    %105 = math.exp %104 : vector<128x128xf32>
    %cst_51 = arith.constant dense<0.000000e+00> : vector<128xf32>
    %106 = vector.multi_reduction <add>, %105, %cst_51 [1] : vector<128x128xf32> to vector<128xf32>
    %107 = vector.shape_cast %106 : vector<128xf32> to vector<128x1xf32>
    %108 = tpu.reciprocal %107 {approx = true} : vector<128x1xf32> -> vector<128x1xf32>
    %109 = vector.broadcast %108 : vector<128x1xf32> to vector<128x128xf32>
    %110 = arith.mulf %105, %109 : vector<128x128xf32>
    %111 = arith.index_cast %c3_i32 : i32 to index
    %c0_52 = arith.constant 0 : index
    %c0_53 = arith.constant 0 : index
    %112 = vector.load %arg6[%111, %c0_52, %c0_53] : memref<4x64x64xf32, #tpu.memory_space<vmem>>, vector<1x64x64xf32>
    %113 = vector.shape_cast %112 : vector<1x64x64xf32> to vector<64x64xf32>
    %cst_54 = arith.constant dense<0.000000e+00> : vector<128x64xf32>
    %114 = tpu.matmul %27, %113, %cst_54 {dimension_numbers = #tpu.dot_dimension_numbers<[1], [0], [0], [1], [0, 0, 1, 1], [], []>} : vector<128x64xf32>, vector<64x64xf32>, vector<128x64xf32> -> vector<128x64xf32>
    %cst_55 = arith.constant dense<0.000000e+00> : vector<128x64xf32>
    %115 = tpu.matmul %110, %114, %cst_55 {dimension_numbers = #tpu.dot_dimension_numbers<[1], [0], [0], [1], [0, 0, 1, 1], [], []>} : vector<128x128xf32>, vector<128x64xf32>, vector<128x64xf32> -> vector<128x64xf32>
    %116 = arith.addf %95, %115 : vector<128x64xf32>
    %c4_i32 = arith.constant 4 : i32
    %117 = arith.addf %1, %116 : vector<128x64xf32>
    %c0_56 = arith.constant 0 : index
    %c0_57 = arith.constant 0 : index
    %118 = vector.load %arg8[%c0_56, %c0_57] : memref<1x64xf32, #tpu.memory_space<vmem>>, vector<1x64xf32>
    %c0_58 = arith.constant 0 : index
    %c0_59 = arith.constant 0 : index
    %119 = vector.load %arg9[%c0_58, %c0_59] : memref<1x64xf32, #tpu.memory_space<vmem>>, vector<1x64xf32>
    %cst_60 = arith.constant dense<0.000000e+00> : vector<128xf32>
    %120 = vector.multi_reduction <add>, %117, %cst_60 [1] : vector<128x64xf32> to vector<128xf32>
    %121 = vector.shape_cast %120 : vector<128xf32> to vector<128x1xf32>
    %cst_61 = arith.constant 6.400000e+01 : f32
    %122 = vector.broadcast %cst_61 : f32 to vector<128x1xf32>
    %123 = arith.divf %121, %122 : vector<128x1xf32>
    %124 = vector.broadcast %123 : vector<128x1xf32> to vector<128x64xf32>
    %125 = arith.subf %117, %124 : vector<128x64xf32>
    %126 = arith.mulf %125, %125 : vector<128x64xf32>
    %cst_62 = arith.constant dense<0.000000e+00> : vector<128xf32>
    %127 = vector.multi_reduction <add>, %126, %cst_62 [1] : vector<128x64xf32> to vector<128xf32>
    %128 = vector.shape_cast %127 : vector<128xf32> to vector<128x1xf32>
    %cst_63 = arith.constant 6.400000e+01 : f32
    %129 = vector.broadcast %cst_63 : f32 to vector<128x1xf32>
    %130 = arith.divf %128, %129 : vector<128x1xf32>
    %131 = vector.broadcast %123 : vector<128x1xf32> to vector<128x64xf32>
    %132 = arith.subf %117, %131 : vector<128x64xf32>
    %cst_64 = arith.constant 9.99999974E-6 : f32
    %133 = vector.broadcast %cst_64 : f32 to vector<128x1xf32>
    %134 = arith.addf %130, %133 : vector<128x1xf32>
    %135 = math.rsqrt %134 : vector<128x1xf32>
    %136 = vector.broadcast %135 : vector<128x1xf32> to vector<128x64xf32>
    %137 = arith.mulf %132, %136 : vector<128x64xf32>
    %138 = vector.broadcast %118 : vector<1x64xf32> to vector<128x64xf32>
    %139 = arith.mulf %137, %138 : vector<128x64xf32>
    %140 = vector.broadcast %119 : vector<1x64xf32> to vector<128x64xf32>
    %141 = arith.addf %139, %140 : vector<128x64xf32>
    %c0_65 = arith.constant 0 : index
    %c0_66 = arith.constant 0 : index
    %142 = vector.load %arg10[%c0_65, %c0_66] : memref<64x256xf32, #tpu.memory_space<vmem>>, vector<64x256xf32>
    %cst_67 = arith.constant dense<0.000000e+00> : vector<128x256xf32>
    %143 = tpu.matmul %141, %142, %cst_67 {dimension_numbers = #tpu.dot_dimension_numbers<[1], [0], [0], [1], [0, 0, 1, 1], [], []>} : vector<128x64xf32>, vector<64x256xf32>, vector<128x256xf32> -> vector<128x256xf32>
    %c0_68 = arith.constant 0 : index
    %c0_69 = arith.constant 0 : index
    %144 = vector.load %arg11[%c0_68, %c0_69] : memref<1x256xf32, #tpu.memory_space<vmem>>, vector<1x256xf32>
    %145 = vector.broadcast %144 : vector<1x256xf32> to vector<128x256xf32>
    %146 = arith.addf %143, %145 : vector<128x256xf32>
    %cst_70 = arith.constant 5.000000e-01 : f32
    %147 = vector.broadcast %cst_70 : f32 to vector<128x256xf32>
    %148 = arith.mulf %147, %146 : vector<128x256xf32>
    %cst_71 = arith.constant 4.471500e-02 : f32
    %149 = vector.broadcast %cst_71 : f32 to vector<128x256xf32>
    %150 = arith.mulf %149, %146 : vector<128x256xf32>
    %151 = arith.mulf %150, %146 : vector<128x256xf32>
    %152 = arith.mulf %151, %146 : vector<128x256xf32>
    %153 = arith.addf %146, %152 : vector<128x256xf32>
    %cst_72 = arith.constant 0.797884583 : f32
    %154 = vector.broadcast %cst_72 : f32 to vector<128x256xf32>
    %155 = arith.mulf %154, %153 : vector<128x256xf32>
    %156 = math.tanh %155 : vector<128x256xf32>
    %cst_73 = arith.constant 1.000000e+00 : f32
    %157 = vector.broadcast %cst_73 : f32 to vector<128x256xf32>
    %158 = arith.addf %157, %156 : vector<128x256xf32>
    %159 = arith.mulf %148, %158 : vector<128x256xf32>
    %c0_74 = arith.constant 0 : index
    %c0_75 = arith.constant 0 : index
    %160 = vector.load %arg12[%c0_74, %c0_75] : memref<256x64xf32, #tpu.memory_space<vmem>>, vector<256x64xf32>
    %cst_76 = arith.constant dense<0.000000e+00> : vector<128x64xf32>
    %161 = tpu.matmul %159, %160, %cst_76 {dimension_numbers = #tpu.dot_dimension_numbers<[1], [0], [0], [1], [0, 0, 1, 1], [], []>} : vector<128x256xf32>, vector<256x64xf32>, vector<128x64xf32> -> vector<128x64xf32>
    %162 = arith.addf %117, %161 : vector<128x64xf32>
    %c0_77 = arith.constant 0 : index
    %c0_78 = arith.constant 0 : index
    %163 = vector.load %arg13[%c0_77, %c0_78] : memref<1x64xf32, #tpu.memory_space<vmem>>, vector<1x64xf32>
    %164 = vector.broadcast %163 : vector<1x64xf32> to vector<128x64xf32>
    %165 = arith.addf %162, %164 : vector<128x64xf32>
    %166 = tpu.transpose %165, [1, 0] : vector<128x64xf32> -> vector<64x128xf32>
    %cst_79 = arith.constant dense<0xFF800000> : vector<64xf32>
    %167 = vector.multi_reduction <maximumf>, %165, %cst_79 [0] : vector<128x64xf32> to vector<64xf32>
    %168 = vector.shape_cast %167 : vector<64xf32> to vector<1x64xf32>
    %cst_80 = arith.constant dense<0xFF800000> : vector<64xf32>
    %169 = vector.multi_reduction <maximumf>, %166, %cst_80 [1] : vector<64x128xf32> to vector<64xf32>
    %170 = vector.shape_cast %169 : vector<64xf32> to vector<64x1xf32>
    %171 = vector.broadcast %170 : vector<64x1xf32> to vector<64x128xf32>
    %172 = arith.subf %171, %166 : vector<64x128xf32>
    %c0_81 = arith.constant 0 : index
    %c0_82 = arith.constant 0 : index
    %173 = vector.load %arg14[%c0_81, %c0_82] : memref<128x256xf32, #tpu.memory_space<vmem>>, vector<128x256xf32>
    %cst_83 = arith.constant dense<0.000000e+00> : vector<64x256xf32>
    %174 = tpu.matmul %172, %173, %cst_83 {dimension_numbers = #tpu.dot_dimension_numbers<[1], [0], [0], [1], [0, 0, 1, 1], [], []>} : vector<64x128xf32>, vector<128x256xf32>, vector<64x256xf32> -> vector<64x256xf32>
    %c0_84 = arith.constant 0 : index
    %c0_85 = arith.constant 0 : index
    %175 = vector.load %arg15[%c0_84, %c0_85] : memref<1x256xf32, #tpu.memory_space<vmem>>, vector<1x256xf32>
    %176 = vector.broadcast %175 : vector<1x256xf32> to vector<64x256xf32>
    %177 = arith.addf %174, %176 : vector<64x256xf32>
    %cst_86 = arith.constant 0.000000e+00 : f32
    %178 = vector.broadcast %cst_86 : f32 to vector<64x256xf32>
    %179 = arith.cmpf oge, %177, %178 : vector<64x256xf32>
    %cst_87 = arith.constant 2.000000e-01 : f32
    %180 = vector.broadcast %cst_87 : f32 to vector<64x256xf32>
    %181 = arith.mulf %180, %177 : vector<64x256xf32>
    %182 = arith.select %179, %177, %181 : vector<64x256xi1>, vector<64x256xf32>
    %c0_88 = arith.constant 0 : index
    %c0_89 = arith.constant 0 : index
    %183 = vector.load %arg16[%c0_88, %c0_89] : memref<256x64xf32, #tpu.memory_space<vmem>>, vector<256x64xf32>
    %cst_90 = arith.constant dense<0.000000e+00> : vector<64x64xf32>
    %184 = tpu.matmul %182, %183, %cst_90 {dimension_numbers = #tpu.dot_dimension_numbers<[1], [0], [0], [1], [0, 0, 1, 1], [], []>} : vector<64x256xf32>, vector<256x64xf32>, vector<64x64xf32> -> vector<64x64xf32>
    %c0_91 = arith.constant 0 : index
    %c0_92 = arith.constant 0 : index
    %185 = vector.load %arg17[%c0_91, %c0_92] : memref<1x64xf32, #tpu.memory_space<vmem>>, vector<1x64xf32>
    %186 = vector.broadcast %185 : vector<1x64xf32> to vector<64x64xf32>
    %187 = arith.addf %184, %186 : vector<64x64xf32>
    %cst_93 = arith.constant 0.000000e+00 : f32
    %188 = vector.broadcast %cst_93 : f32 to vector<64x64xf32>
    %189 = arith.cmpf oge, %187, %188 : vector<64x64xf32>
    %cst_94 = arith.constant 2.000000e-01 : f32
    %190 = vector.broadcast %cst_94 : f32 to vector<64x64xf32>
    %191 = arith.mulf %190, %187 : vector<64x64xf32>
    %192 = arith.select %189, %187, %191 : vector<64x64xi1>, vector<64x64xf32>
    %c0_95 = arith.constant 0 : index
    %c0_96 = arith.constant 0 : index
    %193 = vector.load %arg18[%c0_95, %c0_96] : memref<16x64xf32, #tpu.memory_space<vmem>>, vector<16x64xf32>
    %cst_97 = arith.constant dense<0.000000e+00> : vector<16x64xf32>
    %194 = tpu.matmul %193, %192, %cst_97 {dimension_numbers = #tpu.dot_dimension_numbers<[1], [1], [0], [0], [0, 0, 1, 0], [], []>} : vector<16x64xf32>, vector<64x64xf32>, vector<16x64xf32> -> vector<16x64xf32>
    %c0_98 = arith.constant 0 : index
    %c0_99 = arith.constant 0 : index
    %195 = vector.load %arg19[%c0_98, %c0_99] : memref<16x1xf32, #tpu.memory_space<vmem>>, vector<16x1xf32>
    %196 = vector.broadcast %195 : vector<16x1xf32> to vector<16x64xf32>
    %197 = arith.addf %194, %196 : vector<16x64xf32>
    %cst_100 = arith.constant dense<0.000000e+00> : vector<16x128xf32>
    %198 = tpu.matmul %197, %166, %cst_100 {dimension_numbers = #tpu.dot_dimension_numbers<[1], [0], [0], [1], [0, 0, 1, 1], [], []>} : vector<16x64xf32>, vector<64x128xf32>, vector<16x128xf32> -> vector<16x128xf32>
    %cst_101 = arith.constant 1.250000e-01 : f32
    %199 = vector.broadcast %cst_101 : f32 to vector<16x128xf32>
    %200 = arith.mulf %198, %199 : vector<16x128xf32>
    %cst_102 = arith.constant dense<0xFF800000> : vector<16xf32>
    %201 = vector.multi_reduction <maximumf>, %200, %cst_102 [1] : vector<16x128xf32> to vector<16xf32>
    %202 = vector.shape_cast %201 : vector<16xf32> to vector<16x1xf32>
    %203 = vector.broadcast %202 : vector<16x1xf32> to vector<16x128xf32>
    %204 = arith.subf %200, %203 : vector<16x128xf32>
    %205 = math.exp %204 : vector<16x128xf32>
    %cst_103 = arith.constant dense<0.000000e+00> : vector<16xf32>
    %206 = vector.multi_reduction <add>, %205, %cst_103 [1] : vector<16x128xf32> to vector<16xf32>
    %207 = vector.shape_cast %206 : vector<16xf32> to vector<16x1xf32>
    %208 = tpu.reciprocal %207 {approx = true} : vector<16x1xf32> -> vector<16x1xf32>
    %209 = vector.broadcast %208 : vector<16x1xf32> to vector<16x128xf32>
    %210 = arith.mulf %205, %209 : vector<16x128xf32>
    %cst_104 = arith.constant dense<0.000000e+00> : vector<16x3xf32>
    %211 = tpu.matmul %210, %3, %cst_104 {dimension_numbers = #tpu.dot_dimension_numbers<[1], [0], [0], [1], [0, 0, 1, 1], [], []>} : vector<16x128xf32>, vector<128x3xf32>, vector<16x3xf32> -> vector<16x3xf32>
    %212 = vector.shape_cast %168 : vector<1x64xf32> to vector<1x64xf32>
    %213 = vector.broadcast %212 : vector<1x64xf32> to vector<16x64xf32>
    %c0_105 = arith.constant 0 : index
    %c0_106 = arith.constant 0 : index
    %214 = vector.load %arg20[%c0_105, %c0_106] : memref<3x32xf32, #tpu.memory_space<vmem>>, vector<3x32xf32>
    %cst_107 = arith.constant dense<0.000000e+00> : vector<16x32xf32>
    %215 = tpu.matmul %211, %214, %cst_107 {dimension_numbers = #tpu.dot_dimension_numbers<[1], [0], [0], [1], [0, 0, 1, 1], [], []>} : vector<16x3xf32>, vector<3x32xf32>, vector<16x32xf32> -> vector<16x32xf32>
    %c0_108 = arith.constant 0 : index
    %c0_109 = arith.constant 0 : index
    %216 = vector.load %arg21[%c0_108, %c0_109] : memref<64x32xf32, #tpu.memory_space<vmem>>, vector<64x32xf32>
    %cst_110 = arith.constant dense<0.000000e+00> : vector<16x32xf32>
    %217 = tpu.matmul %213, %216, %cst_110 {dimension_numbers = #tpu.dot_dimension_numbers<[1], [0], [0], [1], [0, 0, 1, 1], [], []>} : vector<16x64xf32>, vector<64x32xf32>, vector<16x32xf32> -> vector<16x32xf32>
    %218 = arith.addf %215, %217 : vector<16x32xf32>
    %c0_111 = arith.constant 0 : index
    %c0_112 = arith.constant 0 : index
    %219 = vector.load %arg22[%c0_111, %c0_112] : memref<1x32xf32, #tpu.memory_space<vmem>>, vector<1x32xf32>
    %220 = vector.broadcast %219 : vector<1x32xf32> to vector<16x32xf32>
    %221 = arith.addf %218, %220 : vector<16x32xf32>
    %c0_113 = arith.constant 0 : index
    %c0_114 = arith.constant 0 : index
    %222 = vector.load %arg23[%c0_113, %c0_114] : memref<1x32xf32, #tpu.memory_space<vmem>>, vector<1x32xf32>
    %223 = vector.broadcast %222 : vector<1x32xf32> to vector<16x32xf32>
    %224 = arith.mulf %221, %223 : vector<16x32xf32>
    %c0_115 = arith.constant 0 : index
    %c0_116 = arith.constant 0 : index
    %225 = vector.load %arg24[%c0_115, %c0_116] : memref<1x32xf32, #tpu.memory_space<vmem>>, vector<1x32xf32>
    %226 = vector.broadcast %225 : vector<1x32xf32> to vector<16x32xf32>
    %227 = arith.addf %224, %226 : vector<16x32xf32>
    %cst_117 = arith.constant 0.000000e+00 : f32
    %228 = vector.broadcast %cst_117 : f32 to vector<16x32xf32>
    %229 = arith.maximumf %227, %228 : vector<16x32xf32>
    %c0_118 = arith.constant 0 : index
    %c0_119 = arith.constant 0 : index
    %230 = vector.load %arg25[%c0_118, %c0_119] : memref<32x16xf32, #tpu.memory_space<vmem>>, vector<32x16xf32>
    %cst_120 = arith.constant dense<0.000000e+00> : vector<16x16xf32>
    %231 = tpu.matmul %229, %230, %cst_120 {dimension_numbers = #tpu.dot_dimension_numbers<[1], [0], [0], [1], [0, 0, 1, 1], [], []>} : vector<16x32xf32>, vector<32x16xf32>, vector<16x16xf32> -> vector<16x16xf32>
    %c0_121 = arith.constant 0 : index
    %c0_122 = arith.constant 0 : index
    %232 = vector.load %arg26[%c0_121, %c0_122] : memref<1x16xf32, #tpu.memory_space<vmem>>, vector<1x16xf32>
    %233 = vector.broadcast %232 : vector<1x16xf32> to vector<16x16xf32>
    %234 = arith.addf %231, %233 : vector<16x16xf32>
    %c0_123 = arith.constant 0 : index
    %c0_124 = arith.constant 0 : index
    %235 = vector.load %arg27[%c0_123, %c0_124] : memref<1x16xf32, #tpu.memory_space<vmem>>, vector<1x16xf32>
    %236 = vector.broadcast %235 : vector<1x16xf32> to vector<16x16xf32>
    %237 = arith.mulf %234, %236 : vector<16x16xf32>
    %c0_125 = arith.constant 0 : index
    %c0_126 = arith.constant 0 : index
    %238 = vector.load %arg28[%c0_125, %c0_126] : memref<1x16xf32, #tpu.memory_space<vmem>>, vector<1x16xf32>
    %239 = vector.broadcast %238 : vector<1x16xf32> to vector<16x16xf32>
    %240 = arith.addf %237, %239 : vector<16x16xf32>
    %cst_127 = arith.constant 0.000000e+00 : f32
    %241 = vector.broadcast %cst_127 : f32 to vector<16x16xf32>
    %242 = arith.maximumf %240, %241 : vector<16x16xf32>
    %c0_128 = arith.constant 0 : index
    %c0_129 = arith.constant 0 : index
    %243 = vector.load %arg29[%c0_128, %c0_129] : memref<16x3xf32, #tpu.memory_space<vmem>>, vector<16x3xf32>
    %cst_130 = arith.constant dense<0.000000e+00> : vector<16x3xf32>
    %244 = tpu.matmul %242, %243, %cst_130 {dimension_numbers = #tpu.dot_dimension_numbers<[1], [0], [0], [1], [0, 0, 1, 1], [], []>} : vector<16x16xf32>, vector<16x3xf32>, vector<16x3xf32> -> vector<16x3xf32>
    %c0_131 = arith.constant 0 : index
    %c0_132 = arith.constant 0 : index
    %245 = vector.load %arg30[%c0_131, %c0_132] : memref<1x3xf32, #tpu.memory_space<vmem>>, vector<1x3xf32>
    %246 = vector.broadcast %245 : vector<1x3xf32> to vector<16x3xf32>
    %247 = arith.addf %244, %246 : vector<16x3xf32>
    %c0_133 = arith.constant 0 : index
    %c0_134 = arith.constant 0 : index
    %248 = vector.load %arg31[%c0_133, %c0_134] : memref<3x32xf32, #tpu.memory_space<vmem>>, vector<3x32xf32>
    %cst_135 = arith.constant dense<0.000000e+00> : vector<16x32xf32>
    %249 = tpu.matmul %247, %248, %cst_135 {dimension_numbers = #tpu.dot_dimension_numbers<[1], [0], [0], [1], [0, 0, 1, 1], [], []>} : vector<16x3xf32>, vector<3x32xf32>, vector<16x32xf32> -> vector<16x32xf32>
    %c0_136 = arith.constant 0 : index
    %c0_137 = arith.constant 0 : index
    %250 = vector.load %arg32[%c0_136, %c0_137] : memref<64x32xf32, #tpu.memory_space<vmem>>, vector<64x32xf32>
    %cst_138 = arith.constant dense<0.000000e+00> : vector<16x32xf32>
    %251 = tpu.matmul %213, %250, %cst_138 {dimension_numbers = #tpu.dot_dimension_numbers<[1], [0], [0], [1], [0, 0, 1, 1], [], []>} : vector<16x64xf32>, vector<64x32xf32>, vector<16x32xf32> -> vector<16x32xf32>
    %252 = arith.addf %249, %251 : vector<16x32xf32>
    %c0_139 = arith.constant 0 : index
    %c0_140 = arith.constant 0 : index
    %253 = vector.load %arg33[%c0_139, %c0_140] : memref<1x32xf32, #tpu.memory_space<vmem>>, vector<1x32xf32>
    %254 = vector.broadcast %253 : vector<1x32xf32> to vector<16x32xf32>
    %255 = arith.addf %252, %254 : vector<16x32xf32>
    %c0_141 = arith.constant 0 : index
    %c0_142 = arith.constant 0 : index
    %256 = vector.load %arg34[%c0_141, %c0_142] : memref<1x32xf32, #tpu.memory_space<vmem>>, vector<1x32xf32>
    %257 = vector.broadcast %256 : vector<1x32xf32> to vector<16x32xf32>
    %258 = arith.mulf %255, %257 : vector<16x32xf32>
    %c0_143 = arith.constant 0 : index
    %c0_144 = arith.constant 0 : index
    %259 = vector.load %arg35[%c0_143, %c0_144] : memref<1x32xf32, #tpu.memory_space<vmem>>, vector<1x32xf32>
    %260 = vector.broadcast %259 : vector<1x32xf32> to vector<16x32xf32>
    %261 = arith.addf %258, %260 : vector<16x32xf32>
    %cst_145 = arith.constant 0.000000e+00 : f32
    %262 = vector.broadcast %cst_145 : f32 to vector<16x32xf32>
    %263 = arith.maximumf %261, %262 : vector<16x32xf32>
    %c0_146 = arith.constant 0 : index
    %c0_147 = arith.constant 0 : index
    %264 = vector.load %arg36[%c0_146, %c0_147] : memref<32x16xf32, #tpu.memory_space<vmem>>, vector<32x16xf32>
    %cst_148 = arith.constant dense<0.000000e+00> : vector<16x16xf32>
    %265 = tpu.matmul %263, %264, %cst_148 {dimension_numbers = #tpu.dot_dimension_numbers<[1], [0], [0], [1], [0, 0, 1, 1], [], []>} : vector<16x32xf32>, vector<32x16xf32>, vector<16x16xf32> -> vector<16x16xf32>
    %c0_149 = arith.constant 0 : index
    %c0_150 = arith.constant 0 : index
    %266 = vector.load %arg37[%c0_149, %c0_150] : memref<1x16xf32, #tpu.memory_space<vmem>>, vector<1x16xf32>
    %267 = vector.broadcast %266 : vector<1x16xf32> to vector<16x16xf32>
    %268 = arith.addf %265, %267 : vector<16x16xf32>
    %c0_151 = arith.constant 0 : index
    %c0_152 = arith.constant 0 : index
    %269 = vector.load %arg38[%c0_151, %c0_152] : memref<1x16xf32, #tpu.memory_space<vmem>>, vector<1x16xf32>
    %270 = vector.broadcast %269 : vector<1x16xf32> to vector<16x16xf32>
    %271 = arith.mulf %268, %270 : vector<16x16xf32>
    %c0_153 = arith.constant 0 : index
    %c0_154 = arith.constant 0 : index
    %272 = vector.load %arg39[%c0_153, %c0_154] : memref<1x16xf32, #tpu.memory_space<vmem>>, vector<1x16xf32>
    %273 = vector.broadcast %272 : vector<1x16xf32> to vector<16x16xf32>
    %274 = arith.addf %271, %273 : vector<16x16xf32>
    %cst_155 = arith.constant 0.000000e+00 : f32
    %275 = vector.broadcast %cst_155 : f32 to vector<16x16xf32>
    %276 = arith.maximumf %274, %275 : vector<16x16xf32>
    %c0_156 = arith.constant 0 : index
    %c0_157 = arith.constant 0 : index
    %277 = vector.load %arg40[%c0_156, %c0_157] : memref<16x3xf32, #tpu.memory_space<vmem>>, vector<16x3xf32>
    %cst_158 = arith.constant dense<0.000000e+00> : vector<16x3xf32>
    %278 = tpu.matmul %276, %277, %cst_158 {dimension_numbers = #tpu.dot_dimension_numbers<[1], [0], [0], [1], [0, 0, 1, 1], [], []>} : vector<16x16xf32>, vector<16x3xf32>, vector<16x3xf32> -> vector<16x3xf32>
    %c0_159 = arith.constant 0 : index
    %c0_160 = arith.constant 0 : index
    %279 = vector.load %arg41[%c0_159, %c0_160] : memref<1x3xf32, #tpu.memory_space<vmem>>, vector<1x3xf32>
    %280 = vector.broadcast %279 : vector<1x3xf32> to vector<16x3xf32>
    %281 = arith.addf %278, %280 : vector<16x3xf32>
    %282 = tpu.concatenate %165, %197 in 0 : vector<128x64xf32>, vector<16x64xf32> -> vector<144x64xf32>
    %c0_161 = arith.constant 0 : index
    %c0_162 = arith.constant 0 : index
    %c0_163 = arith.constant 0 : index
    %283 = vector.load %arg42[%c0_161, %c0_162, %c0_163] : memref<1x144x64xf32, #tpu.memory_space<vmem>>, vector<1x144x64xf32>
    %284 = vector.shape_cast %283 : vector<1x144x64xf32> to vector<144x64xf32>
    %285 = vector.shape_cast %282 : vector<144x64xf32> to vector<1x144x64xf32>
    tpu.vector_store %arg42[%c0_161, %c0_162, %c0_163], %285 {strides = array<i32>} : memref<1x144x64xf32, #tpu.memory_space<vmem>>, vector<1x144x64xf32>,
    %286 = tpu.concatenate %3, %281 in 0 : vector<128x3xf32>, vector<16x3xf32> -> vector<144x3xf32>
    %c0_164 = arith.constant 0 : index
    %c0_165 = arith.constant 0 : index
    %c0_166 = arith.constant 0 : index
    %287 = vector.load %arg43[%c0_164, %c0_165, %c0_166] : memref<1x144x3xf32, #tpu.memory_space<vmem>>, vector<1x144x3xf32>
    %288 = vector.shape_cast %287 : vector<1x144x3xf32> to vector<144x3xf32>
    %289 = vector.shape_cast %286 : vector<144x3xf32> to vector<1x144x3xf32>
    tpu.vector_store %arg43[%c0_164, %c0_165, %c0_166], %289 {strides = array<i32>} : memref<1x144x3xf32, #tpu.memory_space<vmem>>, vector<1x144x3xf32>,
    return
  }
  func.func @transform_0(%arg0: i32) -> (i32, i32, i32) {
    %c0_i32 = arith.constant 0 : i32
    %c0_i32_0 = arith.constant 0 : i32
    %c0_i32_1 = arith.constant 0 : i32
    return %arg0, %c0_i32, %c0_i32_0 : i32, i32, i32
  }
  func.func @transform_1(%arg0: i32) -> (i32, i32, i32) {
    %c0_i32 = arith.constant 0 : i32
    %c0_i32_0 = arith.constant 0 : i32
    %c0_i32_1 = arith.constant 0 : i32
    return %arg0, %c0_i32, %c0_i32_0 : i32, i32, i32
  }
  func.func @transform_2(%arg0: i32) -> (i32, i32) {
    %c0_i32 = arith.constant 0 : i32
    %c0_i32_0 = arith.constant 0 : i32
    %c0_i32_1 = arith.constant 0 : i32
    return %c0_i32, %c0_i32_0 : i32, i32
  }
  func.func @transform_3(%arg0: i32) -> (i32, i32) {
    %c0_i32 = arith.constant 0 : i32
    %c0_i32_0 = arith.constant 0 : i32
    %c0_i32_1 = arith.constant 0 : i32
    return %c0_i32, %c0_i32_0 : i32, i32
  }
  func.func @transform_4(%arg0: i32) -> (i32, i32, i32) {
    %c0_i32 = arith.constant 0 : i32
    %c0_i32_0 = arith.constant 0 : i32
    %c0_i32_1 = arith.constant 0 : i32
    %c0_i32_2 = arith.constant 0 : i32
    return %c0_i32, %c0_i32_0, %c0_i32_1 : i32, i32, i32
  }
  func.func @transform_5(%arg0: i32) -> (i32, i32, i32) {
    %c0_i32 = arith.constant 0 : i32
    %c0_i32_0 = arith.constant 0 : i32
    %c0_i32_1 = arith.constant 0 : i32
    %c0_i32_2 = arith.constant 0 : i32
    return %c0_i32, %c0_i32_0, %c0_i32_1 : i32, i32, i32
  }
  func.func @transform_6(%arg0: i32) -> (i32, i32) {
    %c0_i32 = arith.constant 0 : i32
    %c0_i32_0 = arith.constant 0 : i32
    %c0_i32_1 = arith.constant 0 : i32
    return %c0_i32, %c0_i32_0 : i32, i32
  }
  func.func @transform_7(%arg0: i32) -> (i32, i32) {
    %c0_i32 = arith.constant 0 : i32
    %c0_i32_0 = arith.constant 0 : i32
    %c0_i32_1 = arith.constant 0 : i32
    return %c0_i32, %c0_i32_0 : i32, i32
  }
  func.func @transform_8(%arg0: i32) -> (i32, i32) {
    %c0_i32 = arith.constant 0 : i32
    %c0_i32_0 = arith.constant 0 : i32
    %c0_i32_1 = arith.constant 0 : i32
    return %c0_i32, %c0_i32_0 : i32, i32
  }
  func.func @transform_9(%arg0: i32) -> (i32, i32) {
    %c0_i32 = arith.constant 0 : i32
    %c0_i32_0 = arith.constant 0 : i32
    %c0_i32_1 = arith.constant 0 : i32
    return %c0_i32, %c0_i32_0 : i32, i32
  }
  func.func @transform_10(%arg0: i32) -> (i32, i32) {
    %c0_i32 = arith.constant 0 : i32
    %c0_i32_0 = arith.constant 0 : i32
    %c0_i32_1 = arith.constant 0 : i32
    return %c0_i32, %c0_i32_0 : i32, i32
  }
  func.func @transform_11(%arg0: i32) -> (i32, i32) {
    %c0_i32 = arith.constant 0 : i32
    %c0_i32_0 = arith.constant 0 : i32
    %c0_i32_1 = arith.constant 0 : i32
    return %c0_i32, %c0_i32_0 : i32, i32
  }
  func.func @transform_12(%arg0: i32) -> (i32, i32) {
    %c0_i32 = arith.constant 0 : i32
    %c0_i32_0 = arith.constant 0 : i32
    %c0_i32_1 = arith.constant 0 : i32
    return %c0_i32, %c0_i32_0 : i32, i32
  }
  func.func @transform_13(%arg0: i32) -> (i32, i32) {
    %c0_i32 = arith.constant 0 : i32
    %c0_i32_0 = arith.constant 0 : i32
    %c0_i32_1 = arith.constant 0 : i32
    return %c0_i32, %c0_i32_0 : i32, i32
  }
  func.func @transform_14(%arg0: i32) -> (i32, i32) {
    %c0_i32 = arith.constant 0 : i32
    %c0_i32_0 = arith.constant 0 : i32
    %c0_i32_1 = arith.constant 0 : i32
    return %c0_i32, %c0_i32_0 : i32, i32
  }
  func.func @transform_15(%arg0: i32) -> (i32, i32) {
    %c0_i32 = arith.constant 0 : i32
    %c0_i32_0 = arith.constant 0 : i32
    %c0_i32_1 = arith.constant 0 : i32
    return %c0_i32, %c0_i32_0 : i32, i32
  }
  func.func @transform_16(%arg0: i32) -> (i32, i32) {
    %c0_i32 = arith.constant 0 : i32
    %c0_i32_0 = arith.constant 0 : i32
    %c0_i32_1 = arith.constant 0 : i32
    return %c0_i32, %c0_i32_0 : i32, i32
  }
  func.func @transform_17(%arg0: i32) -> (i32, i32) {
    %c0_i32 = arith.constant 0 : i32
    %c0_i32_0 = arith.constant 0 : i32
    %c0_i32_1 = arith.constant 0 : i32
    return %c0_i32, %c0_i32_0 : i32, i32
  }
  func.func @transform_18(%arg0: i32) -> (i32, i32) {
    %c0_i32 = arith.constant 0 : i32
    %c0_i32_0 = arith.constant 0 : i32
    %c0_i32_1 = arith.constant 0 : i32
    return %c0_i32, %c0_i32_0 : i32, i32
  }
  func.func @transform_19(%arg0: i32) -> (i32, i32) {
    %c0_i32 = arith.constant 0 : i32
    %c0_i32_0 = arith.constant 0 : i32
    %c0_i32_1 = arith.constant 0 : i32
    return %c0_i32, %c0_i32_0 : i32, i32
  }
  func.func @transform_20(%arg0: i32) -> (i32, i32) {
    %c0_i32 = arith.constant 0 : i32
    %c0_i32_0 = arith.constant 0 : i32
    %c0_i32_1 = arith.constant 0 : i32
    return %c0_i32, %c0_i32_0 : i32, i32
  }
  func.func @transform_21(%arg0: i32) -> (i32, i32) {
    %c0_i32 = arith.constant 0 : i32
    %c0_i32_0 = arith.constant 0 : i32
    %c0_i32_1 = arith.constant 0 : i32
    return %c0_i32, %c0_i32_0 : i32, i32
  }
  func.func @transform_22(%arg0: i32) -> (i32, i32) {
    %c0_i32 = arith.constant 0 : i32
    %c0_i32_0 = arith.constant 0 : i32
    %c0_i32_1 = arith.constant 0 : i32
    return %c0_i32, %c0_i32_0 : i32, i32
  }
  func.func @transform_23(%arg0: i32) -> (i32, i32) {
    %c0_i32 = arith.constant 0 : i32
    %c0_i32_0 = arith.constant 0 : i32
    %c0_i32_1 = arith.constant 0 : i32
    return %c0_i32, %c0_i32_0 : i32, i32
  }
  func.func @transform_24(%arg0: i32) -> (i32, i32) {
    %c0_i32 = arith.constant 0 : i32
    %c0_i32_0 = arith.constant 0 : i32
    %c0_i32_1 = arith.constant 0 : i32
    return %c0_i32, %c0_i32_0 : i32, i32
  }
  func.func @transform_25(%arg0: i32) -> (i32, i32) {
    %c0_i32 = arith.constant 0 : i32
    %c0_i32_0 = arith.constant 0 : i32
    %c0_i32_1 = arith.constant 0 : i32
    return %c0_i32, %c0_i32_0 : i32, i32
  }
  func.func @transform_26(%arg0: i32) -> (i32, i32) {
    %c0_i32 = arith.constant 0 : i32
    %c0_i32_0 = arith.constant 0 : i32
    %c0_i32_1 = arith.constant 0 : i32
    return %c0_i32, %c0_i32_0 : i32, i32
  }
  func.func @transform_27(%arg0: i32) -> (i32, i32) {
    %c0_i32 = arith.constant 0 : i32
    %c0_i32_0 = arith.constant 0 : i32
    %c0_i32_1 = arith.constant 0 : i32
    return %c0_i32, %c0_i32_0 : i32, i32
  }
  func.func @transform_28(%arg0: i32) -> (i32, i32) {
    %c0_i32 = arith.constant 0 : i32
    %c0_i32_0 = arith.constant 0 : i32
    %c0_i32_1 = arith.constant 0 : i32
    return %c0_i32, %c0_i32_0 : i32, i32
  }
  func.func @transform_29(%arg0: i32) -> (i32, i32) {
    %c0_i32 = arith.constant 0 : i32
    %c0_i32_0 = arith.constant 0 : i32
    %c0_i32_1 = arith.constant 0 : i32
    return %c0_i32, %c0_i32_0 : i32, i32
  }
  func.func @transform_30(%arg0: i32) -> (i32, i32) {
    %c0_i32 = arith.constant 0 : i32
    %c0_i32_0 = arith.constant 0 : i32
    %c0_i32_1 = arith.constant 0 : i32
    return %c0_i32, %c0_i32_0 : i32, i32
  }
  func.func @transform_31(%arg0: i32) -> (i32, i32) {
    %c0_i32 = arith.constant 0 : i32
    %c0_i32_0 = arith.constant 0 : i32
    %c0_i32_1 = arith.constant 0 : i32
    return %c0_i32, %c0_i32_0 : i32, i32
  }
  func.func @transform_32(%arg0: i32) -> (i32, i32) {
    %c0_i32 = arith.constant 0 : i32
    %c0_i32_0 = arith.constant 0 : i32
    %c0_i32_1 = arith.constant 0 : i32
    return %c0_i32, %c0_i32_0 : i32, i32
  }
  func.func @transform_33(%arg0: i32) -> (i32, i32) {
    %c0_i32 = arith.constant 0 : i32
    %c0_i32_0 = arith.constant 0 : i32
    %c0_i32_1 = arith.constant 0 : i32
    return %c0_i32, %c0_i32_0 : i32, i32
  }
  func.func @transform_34(%arg0: i32) -> (i32, i32) {
    %c0_i32 = arith.constant 0 : i32
    %c0_i32_0 = arith.constant 0 : i32
    %c0_i32_1 = arith.constant 0 : i32
    return %c0_i32, %c0_i32_0 : i32, i32
  }
  func.func @transform_35(%arg0: i32) -> (i32, i32) {
    %c0_i32 = arith.constant 0 : i32
    %c0_i32_0 = arith.constant 0 : i32
    %c0_i32_1 = arith.constant 0 : i32
    return %c0_i32, %c0_i32_0 : i32, i32
  }
  func.func @transform_36(%arg0: i32) -> (i32, i32) {
    %c0_i32 = arith.constant 0 : i32
    %c0_i32_0 = arith.constant 0 : i32
    %c0_i32_1 = arith.constant 0 : i32
    return %c0_i32, %c0_i32_0 : i32, i32
  }
  func.func @transform_37(%arg0: i32) -> (i32, i32) {
    %c0_i32 = arith.constant 0 : i32
    %c0_i32_0 = arith.constant 0 : i32
    %c0_i32_1 = arith.constant 0 : i32
    return %c0_i32, %c0_i32_0 : i32, i32
  }
  func.func @transform_38(%arg0: i32) -> (i32, i32) {
    %c0_i32 = arith.constant 0 : i32
    %c0_i32_0 = arith.constant 0 : i32
    %c0_i32_1 = arith.constant 0 : i32
    return %c0_i32, %c0_i32_0 : i32, i32
  }
  func.func @transform_39(%arg0: i32) -> (i32, i32) {
    %c0_i32 = arith.constant 0 : i32
    %c0_i32_0 = arith.constant 0 : i32
    %c0_i32_1 = arith.constant 0 : i32
    return %c0_i32, %c0_i32_0 : i32, i32
  }
  func.func @transform_40(%arg0: i32) -> (i32, i32) {
    %c0_i32 = arith.constant 0 : i32
    %c0_i32_0 = arith.constant 0 : i32
    %c0_i32_1 = arith.constant 0 : i32
    return %c0_i32, %c0_i32_0 : i32, i32
  }
  func.func @transform_41(%arg0: i32) -> (i32, i32, i32) {
    %c0_i32 = arith.constant 0 : i32
    %c0_i32_0 = arith.constant 0 : i32
    %c0_i32_1 = arith.constant 0 : i32
    return %arg0, %c0_i32, %c0_i32_0 : i32, i32, i32
  }
  func.func @transform_42(%arg0: i32) -> (i32, i32, i32) {
    %c0_i32 = arith.constant 0 : i32
    %c0_i32_0 = arith.constant 0 : i32
    %c0_i32_1 = arith.constant 0 : i32
    return %arg0, %c0_i32, %c0_i32_0 : i32, i32, i32
  }
}

</mosaic_0001>

<llo_original>
// kernel: encoder_block_forward.1
$region0: #{encoder_block_forward.1}
  #allocation0 [shape = 'u32[]', space=smem, size = 0x4, offset = 0x4, fixed_abs, tag = 'smem constant byte address 0x4 - core index']
  #allocation1 [shape = 'u32[144,128]{1,0:T(1,128)}', space=vmem, size = 0x12000, scoped, tag = 'internal scratch']
  %s0 = inlined_call_operand.smem [shape: u32[43], index: -1, kind: input, shape index: {}]
  %s1 = sld [smem:[%s0]]
  %s2 = scalar_lea.smem %s0, 1
  %s3 = sld [smem:[%s2]]
  %s4 = scalar_lea.smem %s0, 2
  %s5 = sld [smem:[%s4]]
  %s6 = scalar_lea.smem %s0, 3
  %s7 = sld [smem:[%s6]]
  %s8 = scalar_lea.smem %s0, 4
  %s9 = sld [smem:[%s8]]
  %s10 = scalar_lea.smem %s0, 5
  %s11 = sld [smem:[%s10]]
  %s12 = scalar_lea.smem %s0, 6
  %s13 = sld [smem:[%s12]]
  %s14 = scalar_lea.smem %s0, 7
  %s15 = sld [smem:[%s14]]
  %s16 = scalar_lea.smem %s0, 8
  %s17 = sld [smem:[%s16]]
  %s18 = scalar_lea.smem %s0, 9
  %s19 = sld [smem:[%s18]]
  %s20 = scalar_lea.smem %s0, 10
  %s21 = sld [smem:[%s20]]
  %s22 = scalar_lea.smem %s0, 11
  %s23 = sld [smem:[%s22]]
  %s24 = scalar_lea.smem %s0, 12
  %s25 = sld [smem:[%s24]]
  %s26 = scalar_lea.smem %s0, 13
  %s27 = sld [smem:[%s26]]
  %s28 = scalar_lea.smem %s0, 14
  %s29 = sld [smem:[%s28]]
  %s30 = scalar_lea.smem %s0, 15
  %s31 = sld [smem:[%s30]]
  %s32 = scalar_lea.smem %s0, 16
  %s33 = sld [smem:[%s32]]
  %s34 = scalar_lea.smem %s0, 17
  %s35 = sld [smem:[%s34]]
  %s36 = scalar_lea.smem %s0, 18
  %s37 = sld [smem:[%s36]]
  %s38 = scalar_lea.smem %s0, 19
  %s39 = sld [smem:[%s38]]
  %s40 = scalar_lea.smem %s0, 20
  %s41 = sld [smem:[%s40]]
  %s42 = scalar_lea.smem %s0, 21
  %s43 = sld [smem:[%s42]]
  %s44 = scalar_lea.smem %s0, 22
  %s45 = sld [smem:[%s44]]
  %s46 = scalar_lea.smem %s0, 23
  %s47 = sld [smem:[%s46]]
  %s48 = scalar_lea.smem %s0, 24
  %s49 = sld [smem:[%s48]]
  %s50 = scalar_lea.smem %s0, 25
  %s51 = sld [smem:[%s50]]
  %s52 = scalar_lea.smem %s0, 26
  %s53 = sld [smem:[%s52]]
  %s54 = scalar_lea.smem %s0, 27
  %s55 = sld [smem:[%s54]]
  %s56 = scalar_lea.smem %s0, 28
  %s57 = sld [smem:[%s56]]
  %s58 = scalar_lea.smem %s0, 29
  %s59 = sld [smem:[%s58]]
  %s60 = scalar_lea.smem %s0, 30
  %s61 = sld [smem:[%s60]]
  %s62 = scalar_lea.smem %s0, 31
  %s63 = sld [smem:[%s62]]
  %s64 = scalar_lea.smem %s0, 32
  %s65 = sld [smem:[%s64]]
  %s66 = scalar_lea.smem %s0, 33
  %s67 = sld [smem:[%s66]]
  %s68 = scalar_lea.smem %s0, 34
  %s69 = sld [smem:[%s68]]
  %s70 = scalar_lea.smem %s0, 35
  %s71 = sld [smem:[%s70]]
  %s72 = scalar_lea.smem %s0, 36
  %s73 = sld [smem:[%s72]]
  %s74 = scalar_lea.smem %s0, 37
  %s75 = sld [smem:[%s74]]
  %s76 = scalar_lea.smem %s0, 38
  %s77 = sld [smem:[%s76]]
  %s78 = scalar_lea.smem %s0, 39
  %s79 = sld [smem:[%s78]]
  %s80 = scalar_lea.smem %s0, 40
  %s81 = sld [smem:[%s80]]
  %s82 = scalar_lea.smem %s0, 41
  %s83 = sld [smem:[%s82]]
  %s84 = scalar_lea.smem %s0, 42
  %s85 = sld [smem:[%s84]]
  %86 = xla_tuple %s83, %s85
  %s87 = sld [smem:[#allocation0]]
  $region205: #{encoder_block_forward.1} parent=0
    _
  %s89 = ssub.s32 1, %s87
  %s90 = scalar_select 0, %s89, %s87
  loop: start=0, step=1, limit=4
  $region2: #{encoder_block_forward.1} parent=0 // loop_pre_header
    _
  $region3: #{encoder_block_forward.1} parent=0 // loop_header
    %s92 = sphi 0, %s96
    %p93 = scmp.ge.s32.totalorder %s92, 4
    %s102 = sphi 0, %s104
    %s105 = sphi 0, %s102
    %s106 = sphi 0, %s105
    %s122 = sphi 0, %s106
    %s128 = sphi 0, %s130
    %s131 = sphi 0, %s128
    %s132 = sphi 0, %s131
    %s148 = sphi 0, %s132
    %s152 = sphi 0, %s152
    %s154 = sphi 0, %s152
    %s155 = sphi 0, %s154
    %s169 = sphi 0, %s155
    %s173 = sphi 0, %s173
    %s175 = sphi 0, %s173
    %s176 = sphi 0, %s175
    %s190 = sphi 0, %s176
    %s194 = sphi 0, %s194
    %s196 = sphi 0, %s194
    %s197 = sphi 0, %s196
    %s211 = sphi 0, %s197
    %s215 = sphi 0, %s215
    %s217 = sphi 0, %s215
    %s218 = sphi 0, %s217
    %s232 = sphi 0, %s218
    %s236 = sphi 0, %s236
    %s238 = sphi 0, %s236
    %s239 = sphi 0, %s238
    %s253 = sphi 0, %s239
    %s257 = sphi 0, %s257
    %s259 = sphi 0, %s257
    %s260 = sphi 0, %s259
    %s274 = sphi 0, %s260
    %s278 = sphi 0, %s278
    %s280 = sphi 0, %s278
    %s281 = sphi 0, %s280
    %s295 = sphi 0, %s281
    %s299 = sphi 0, %s299
    %s301 = sphi 0, %s299
    %s302 = sphi 0, %s301
    %s316 = sphi 0, %s302
    %s320 = sphi 0, %s320
    %s322 = sphi 0, %s320
    %s323 = sphi 0, %s322
    %s337 = sphi 0, %s323
    %s341 = sphi 0, %s341
    %s343 = sphi 0, %s341
    %s344 = sphi 0, %s343
    %s358 = sphi 0, %s344
    %s362 = sphi 0, %s362
    %s364 = sphi 0, %s362
    %s365 = sphi 0, %s364
    %s379 = sphi 0, %s365
    %s383 = sphi 0, %s383
    %s385 = sphi 0, %s383
    %s386 = sphi 0, %s385
    %s400 = sphi 0, %s386
    %s404 = sphi 0, %s404
    %s406 = sphi 0, %s404
    %s407 = sphi 0, %s406
    %s421 = sphi 0, %s407
    %s425 = sphi 0, %s425
    %s427 = sphi 0, %s425
    %s428 = sphi 0, %s427
    %s442 = sphi 0, %s428
    %s446 = sphi 0, %s446
    %s448 = sphi 0, %s446
    %s449 = sphi 0, %s448
    %s463 = sphi 0, %s449
    %s467 = sphi 0, %s467
    %s469 = sphi 0, %s467
    %s470 = sphi 0, %s469
    %s484 = sphi 0, %s470
    %s488 = sphi 0, %s488
    %s490 = sphi 0, %s488
    %s491 = sphi 0, %s490
    %s505 = sphi 0, %s491
    %s509 = sphi 0, %s509
    %s511 = sphi 0, %s509
    %s512 = sphi 0, %s511
    %s526 = sphi 0, %s512
    %s530 = sphi 0, %s530
    %s532 = sphi 0, %s530
    %s533 = sphi 0, %s532
    %s547 = sphi 0, %s533
    %s551 = sphi 0, %s551
    %s553 = sphi 0, %s551
    %s554 = sphi 0, %s553
    %s568 = sphi 0, %s554
    %s572 = sphi 0, %s572
    %s574 = sphi 0, %s572
    %s575 = sphi 0, %s574
    %s589 = sphi 0, %s575
    %s593 = sphi 0, %s593
    %s595 = sphi 0, %s593
    %s596 = sphi 0, %s595
    %s610 = sphi 0, %s596
    %s614 = sphi 0, %s614
    %s616 = sphi 0, %s614
    %s617 = sphi 0, %s616
    %s631 = sphi 0, %s617
    %s635 = sphi 0, %s635
    %s637 = sphi 0, %s635
    %s638 = sphi 0, %s637
    %s652 = sphi 0, %s638
    %s656 = sphi 0, %s656
    %s658 = sphi 0, %s656
    %s659 = sphi 0, %s658
    %s673 = sphi 0, %s659
    %s677 = sphi 0, %s677
    %s679 = sphi 0, %s677
    %s680 = sphi 0, %s679
    %s694 = sphi 0, %s680
    %s698 = sphi 0, %s698
    %s700 = sphi 0, %s698
    %s701 = sphi 0, %s700
    %s715 = sphi 0, %s701
    %s719 = sphi 0, %s719
    %s721 = sphi 0, %s719
    %s722 = sphi 0, %s721
    %s736 = sphi 0, %s722
    %s740 = sphi 0, %s740
    %s742 = sphi 0, %s740
    %s743 = sphi 0, %s742
    %s757 = sphi 0, %s743
    %s761 = sphi 0, %s761
    %s763 = sphi 0, %s761
    %s764 = sphi 0, %s763
    %s778 = sphi 0, %s764
    %s782 = sphi 0, %s782
    %s784 = sphi 0, %s782
    %s785 = sphi 0, %s784
    %s799 = sphi 0, %s785
    %s803 = sphi 0, %s803
    %s805 = sphi 0, %s803
    %s806 = sphi 0, %s805
    %s820 = sphi 0, %s806
    %s824 = sphi 0, %s824
    %s826 = sphi 0, %s824
    %s827 = sphi 0, %s826
    %s841 = sphi 0, %s827
    %s845 = sphi 0, %s845
    %s847 = sphi 0, %s845
    %s848 = sphi 0, %s847
    %s862 = sphi 0, %s848
    %s866 = sphi 0, %s866
    %s868 = sphi 0, %s866
    %s869 = sphi 0, %s868
    %s883 = sphi 0, %s869
    %s887 = sphi 0, %s887
    %s889 = sphi 0, %s887
    %s890 = sphi 0, %s889
    %s904 = sphi 0, %s890
    %s908 = sphi 0, %s908
    %s910 = sphi 0, %s908
    %s911 = sphi 0, %s910
    %s925 = sphi 0, %s911
    %s929 = sphi 0, %s929
    %s931 = sphi 0, %s929
    %s932 = sphi 0, %s931
    %s946 = sphi 0, %s932
    %s950 = sphi 0, %s950
    %s952 = sphi 0, %s950
    %s953 = sphi 0, %s952
    %s967 = sphi 0, %s953
    %s973 = sphi 0, %s975
    %s976 = sphi 0, %s973
    %s977 = sphi 0, %s976
    %s993 = sphi 0, %s977
    %s999 = sphi 0, %s1001
    %s1002 = sphi 0, %s999
    %s1003 = sphi 0, %s1002
    %s1019 = sphi 0, %s1003
  $region4: #{encoder_block_forward.1} parent=0 // loop_header_branch
    %95 = sbr.rel (%p93) target = $region8
  $region5: #{encoder_block_forward.1} parent=0 // loop_body
    %s97 = ssub.s32 %s92, 1
    %s98 = ssub.s32 %s92, 2
    %s99 = sadd.s32 %s92, 1
    %s100 = ssub.s32 %s92, %s99
    %p101 = scmp.eq.s32.totalorder %s100, 0
    %s103 = sadd.s32 %s102, 1
    %s104 = scalar_select %p101, %s102, %s103
    %p107 = pneg %p101
    %p108 = scmp.eq.s32.totalorder %s92, 1
    %p109 = por %p107, %p108
    %p110 = scmp.ne.s32.totalorder %s102, %s105
    %p111 = scmp.eq.s32.totalorder %s92, 0
    %p112 = por %p110, %p111
    %p113 = scmp.ne.s32.totalorder %s102, %s105
    %p114 = scmp.eq.s32.totalorder %s97, 1
    %p115 = por %p113, %p114
    %p116 = scmp.ne.s32.totalorder %s105, %s106
    %p117 = scmp.eq.s32.totalorder %s97, 0
    %p118 = por %p116, %p117
    %p119 = scmp.ne.s32.totalorder %s105, %s106
    %p120 = scmp.eq.s32.totalorder %s98, 1
    %p121 = por %p119, %p120
    %p123 = scmp.ne.s32.totalorder %s106, %s122
    %p124 = scmp.eq.s32.totalorder %s98, 0
    %p125 = por %p123, %p124
    %s126 = ssub.s32 %s92, %s99
    %p127 = scmp.eq.s32.totalorder %s126, 0
    %s129 = sadd.s32 %s128, 1
    %s130 = scalar_select %p127, %s128, %s129
    %p133 = pneg %p127
    %p134 = scmp.eq.s32.totalorder %s92, 1
    %p135 = por %p133, %p134
    %p136 = scmp.ne.s32.totalorder %s128, %s131
    %p137 = scmp.eq.s32.totalorder %s92, 0
    %p138 = por %p136, %p137
    %p139 = scmp.ne.s32.totalorder %s128, %s131
    %p140 = scmp.eq.s32.totalorder %s97, 1
    %p141 = por %p139, %p140
    %p142 = scmp.ne.s32.totalorder %s131, %s132
    %p143 = scmp.eq.s32.totalorder %s97, 0
    %p144 = por %p142, %p143
    %p145 = scmp.ne.s32.totalorder %s131, %s132
    %p146 = scmp.eq.s32.totalorder %s98, 1
    %p147 = por %p145, %p146
    %p149 = scmp.ne.s32.totalorder %s132, %s148
    %p150 = scmp.eq.s32.totalorder %s98, 0
    %p151 = por %p149, %p150
    %s153 = sadd.s32 %s152, 1
    %p156 = scmp.eq.s32.totalorder %s92, 1
    %p157 = scmp.ne.s32.totalorder %s152, %s154
    %p158 = scmp.eq.s32.totalorder %s92, 0
    %p159 = por %p157, %p158
    %p160 = scmp.ne.s32.totalorder %s152, %s154
    %p161 = scmp.eq.s32.totalorder %s97, 1
    %p162 = por %p160, %p161
    %p163 = scmp.ne.s32.totalorder %s154, %s155
    %p164 = scmp.eq.s32.totalorder %s97, 0
    %p165 = por %p163, %p164
    %p166 = scmp.ne.s32.totalorder %s154, %s155
    %p167 = scmp.eq.s32.totalorder %s98, 1
    %p168 = por %p166, %p167
    %p170 = scmp.ne.s32.totalorder %s155, %s169
    %p171 = scmp.eq.s32.totalorder %s98, 0
    %p172 = por %p170, %p171
    %s174 = sadd.s32 %s173, 1
    %p177 = scmp.eq.s32.totalorder %s92, 1
    %p178 = scmp.ne.s32.totalorder %s173, %s175
    %p179 = scmp.eq.s32.totalorder %s92, 0
    %p180 = por %p178, %p179
    %p181 = scmp.ne.s32.totalorder %s173, %s175
    %p182 = scmp.eq.s32.totalorder %s97, 1
    %p183 = por %p181, %p182
    %p184 = scmp.ne.s32.totalorder %s175, %s176
    %p185 = scmp.eq.s32.totalorder %s97, 0
    %p186 = por %p184, %p185
    %p187 = scmp.ne.s32.totalorder %s175, %s176
    %p188 = scmp.eq.s32.totalorder %s98, 1
    %p189 = por %p187, %p188
    %p191 = scmp.ne.s32.totalorder %s176, %s190
    %p192 = scmp.eq.s32.totalorder %s98, 0
    %p193 = por %p191, %p192
    %s195 = sadd.s32 %s194, 1
    %p198 = scmp.eq.s32.totalorder %s92, 1
    %p199 = scmp.ne.s32.totalorder %s194, %s196
    %p200 = scmp.eq.s32.totalorder %s92, 0
    %p201 = por %p199, %p200
    %p202 = scmp.ne.s32.totalorder %s194, %s196
    %p203 = scmp.eq.s32.totalorder %s97, 1
    %p204 = por %p202, %p203
    %p205 = scmp.ne.s32.totalorder %s196, %s197
    %p206 = scmp.eq.s32.totalorder %s97, 0
    %p207 = por %p205, %p206
    %p208 = scmp.ne.s32.totalorder %s196, %s197
    %p209 = scmp.eq.s32.totalorder %s98, 1
    %p210 = por %p208, %p209
    %p212 = scmp.ne.s32.totalorder %s197, %s211
    %p213 = scmp.eq.s32.totalorder %s98, 0
    %p214 = por %p212, %p213
    %s216 = sadd.s32 %s215, 1
    %p219 = scmp.eq.s32.totalorder %s92, 1
    %p220 = scmp.ne.s32.totalorder %s215, %s217
    %p221 = scmp.eq.s32.totalorder %s92, 0
    %p222 = por %p220, %p221
    %p223 = scmp.ne.s32.totalorder %s215, %s217
    %p224 = scmp.eq.s32.totalorder %s97, 1
    %p225 = por %p223, %p224
    %p226 = scmp.ne.s32.totalorder %s217, %s218
    %p227 = scmp.eq.s32.totalorder %s97, 0
    %p228 = por %p226, %p227
    %p229 = scmp.ne.s32.totalorder %s217, %s218
    %p230 = scmp.eq.s32.totalorder %s98, 1
    %p231 = por %p229, %p230
    %p233 = scmp.ne.s32.totalorder %s218, %s232
    %p234 = scmp.eq.s32.totalorder %s98, 0
    %p235 = por %p233, %p234
    %s237 = sadd.s32 %s236, 1
    %p240 = scmp.eq.s32.totalorder %s92, 1
    %p241 = scmp.ne.s32.totalorder %s236, %s238
    %p242 = scmp.eq.s32.totalorder %s92, 0
    %p243 = por %p241, %p242
    %p244 = scmp.ne.s32.totalorder %s236, %s238
    %p245 = scmp.eq.s32.totalorder %s97, 1
    %p246 = por %p244, %p245
    %p247 = scmp.ne.s32.totalorder %s238, %s239
    %p248 = scmp.eq.s32.totalorder %s97, 0
    %p249 = por %p247, %p248
    %p250 = scmp.ne.s32.totalorder %s238, %s239
    %p251 = scmp.eq.s32.totalorder %s98, 1
    %p252 = por %p250, %p251
    %p254 = scmp.ne.s32.totalorder %s239, %s253
    %p255 = scmp.eq.s32.totalorder %s98, 0
    %p256 = por %p254, %p255
    %s258 = sadd.s32 %s257, 1
    %p261 = scmp.eq.s32.totalorder %s92, 1
    %p262 = scmp.ne.s32.totalorder %s257, %s259
    %p263 = scmp.eq.s32.totalorder %s92, 0
    %p264 = por %p262, %p263
    %p265 = scmp.ne.s32.totalorder %s257, %s259
    %p266 = scmp.eq.s32.totalorder %s97, 1
    %p267 = por %p265, %p266
    %p268 = scmp.ne.s32.totalorder %s259, %s260
    %p269 = scmp.eq.s32.totalorder %s97, 0
    %p270 = por %p268, %p269
    %p271 = scmp.ne.s32.totalorder %s259, %s260
    %p272 = scmp.eq.s32.totalorder %s98, 1
    %p273 = por %p271, %p272
    %p275 = scmp.ne.s32.totalorder %s260, %s274
    %p276 = scmp.eq.s32.totalorder %s98, 0
    %p277 = por %p275, %p276
    %s279 = sadd.s32 %s278, 1
    %p282 = scmp.eq.s32.totalorder %s92, 1
    %p283 = scmp.ne.s32.totalorder %s278, %s280
    %p284 = scmp.eq.s32.totalorder %s92, 0
    %p285 = por %p283, %p284
    %p286 = scmp.ne.s32.totalorder %s278, %s280
    %p287 = scmp.eq.s32.totalorder %s97, 1
    %p288 = por %p286, %p287
    %p289 = scmp.ne.s32.totalorder %s280, %s281
    %p290 = scmp.eq.s32.totalorder %s97, 0
    %p291 = por %p289, %p290
    %p292 = scmp.ne.s32.totalorder %s280, %s281
    %p293 = scmp.eq.s32.totalorder %s98, 1
    %p294 = por %p292, %p293
    %p296 = scmp.ne.s32.totalorder %s281, %s295
    %p297 = scmp.eq.s32.totalorder %s98, 0
    %p298 = por %p296, %p297
    %s300 = sadd.s32 %s299, 1
    %p303 = scmp.eq.s32.totalorder %s92, 1
    %p304 = scmp.ne.s32.totalorder %s299, %s301
    %p305 = scmp.eq.s32.totalorder %s92, 0
    %p306 = por %p304, %p305
    %p307 = scmp.ne.s32.totalorder %s299, %s301
    %p308 = scmp.eq.s32.totalorder %s97, 1
    %p309 = por %p307, %p308
    %p310 = scmp.ne.s32.totalorder %s301, %s302
    %p311 = scmp.eq.s32.totalorder %s97, 0
    %p312 = por %p310, %p311
    %p313 = scmp.ne.s32.totalorder %s301, %s302
    %p314 = scmp.eq.s32.totalorder %s98, 1
    %p315 = por %p313, %p314
    %p317 = scmp.ne.s32.totalorder %s302, %s316
    %p318 = scmp.eq.s32.totalorder %s98, 0
    %p319 = por %p317, %p318
    %s321 = sadd.s32 %s320, 1
    %p324 = scmp.eq.s32.totalorder %s92, 1
    %p325 = scmp.ne.s32.totalorder %s320, %s322
    %p326 = scmp.eq.s32.totalorder %s92, 0
    %p327 = por %p325, %p326
    %p328 = scmp.ne.s32.totalorder %s320, %s322
    %p329 = scmp.eq.s32.totalorder %s97, 1
    %p330 = por %p328, %p329
    %p331 = scmp.ne.s32.totalorder %s322, %s323
    %p332 = scmp.eq.s32.totalorder %s97, 0
    %p333 = por %p331, %p332
    %p334 = scmp.ne.s32.totalorder %s322, %s323
    %p335 = scmp.eq.s32.totalorder %s98, 1
    %p336 = por %p334, %p335
    %p338 = scmp.ne.s32.totalorder %s323, %s337
    %p339 = scmp.eq.s32.totalorder %s98, 0
    %p340 = por %p338, %p339
    %s342 = sadd.s32 %s341, 1
    %p345 = scmp.eq.s32.totalorder %s92, 1
    %p346 = scmp.ne.s32.totalorder %s341, %s343
    %p347 = scmp.eq.s32.totalorder %s92, 0
    %p348 = por %p346, %p347
    %p349 = scmp.ne.s32.totalorder %s341, %s343
    %p350 = scmp.eq.s32.totalorder %s97, 1
    %p351 = por %p349, %p350
    %p352 = scmp.ne.s32.totalorder %s343, %s344
    %p353 = scmp.eq.s32.totalorder %s97, 0
    %p354 = por %p352, %p353
    %p355 = scmp.ne.s32.totalorder %s343, %s344
    %p356 = scmp.eq.s32.totalorder %s98, 1
    %p357 = por %p355, %p356
    %p359 = scmp.ne.s32.totalorder %s344, %s358
    %p360 = scmp.eq.s32.totalorder %s98, 0
    %p361 = por %p359, %p360
    %s363 = sadd.s32 %s362, 1
    %p366 = scmp.eq.s32.totalorder %s92, 1
    %p367 = scmp.ne.s32.totalorder %s362, %s364
    %p368 = scmp.eq.s32.totalorder %s92, 0
    %p369 = por %p367, %p368
    %p370 = scmp.ne.s32.totalorder %s362, %s364
    %p371 = scmp.eq.s32.totalorder %s97, 1
    %p372 = por %p370, %p371
    %p373 = scmp.ne.s32.totalorder %s364, %s365
    %p374 = scmp.eq.s32.totalorder %s97, 0
    %p375 = por %p373, %p374
    %p376 = scmp.ne.s32.totalorder %s364, %s365
    %p377 = scmp.eq.s32.totalorder %s98, 1
    %p378 = por %p376, %p377
    %p380 = scmp.ne.s32.totalorder %s365, %s379
    %p381 = scmp.eq.s32.totalorder %s98, 0
    %p382 = por %p380, %p381
    %s384 = sadd.s32 %s383, 1
    %p387 = scmp.eq.s32.totalorder %s92, 1
    %p388 = scmp.ne.s32.totalorder %s383, %s385
    %p389 = scmp.eq.s32.totalorder %s92, 0
    %p390 = por %p388, %p389
    %p391 = scmp.ne.s32.totalorder %s383, %s385
    %p392 = scmp.eq.s32.totalorder %s97, 1
    %p393 = por %p391, %p392
    %p394 = scmp.ne.s32.totalorder %s385, %s386
    %p395 = scmp.eq.s32.totalorder %s97, 0
    %p396 = por %p394, %p395
    %p397 = scmp.ne.s32.totalorder %s385, %s386
    %p398 = scmp.eq.s32.totalorder %s98, 1
    %p399 = por %p397, %p398
    %p401 = scmp.ne.s32.totalorder %s386, %s400
    %p402 = scmp.eq.s32.totalorder %s98, 0
    %p403 = por %p401, %p402
    %s405 = sadd.s32 %s404, 1
    %p408 = scmp.eq.s32.totalorder %s92, 1
    %p409 = scmp.ne.s32.totalorder %s404, %s406
    %p410 = scmp.eq.s32.totalorder %s92, 0
    %p411 = por %p409, %p410
    %p412 = scmp.ne.s32.totalorder %s404, %s406
    %p413 = scmp.eq.s32.totalorder %s97, 1
    %p414 = por %p412, %p413
    %p415 = scmp.ne.s32.totalorder %s406, %s407
    %p416 = scmp.eq.s32.totalorder %s97, 0
    %p417 = por %p415, %p416
    %p418 = scmp.ne.s32.totalorder %s406, %s407
    %p419 = scmp.eq.s32.totalorder %s98, 1
    %p420 = por %p418, %p419
    %p422 = scmp.ne.s32.totalorder %s407, %s421
    %p423 = scmp.eq.s32.totalorder %s98, 0
    %p424 = por %p422, %p423
    %s426 = sadd.s32 %s425, 1
    %p429 = scmp.eq.s32.totalorder %s92, 1
    %p430 = scmp.ne.s32.totalorder %s425, %s427
    %p431 = scmp.eq.s32.totalorder %s92, 0
    %p432 = por %p430, %p431
    %p433 = scmp.ne.s32.totalorder %s425, %s427
    %p434 = scmp.eq.s32.totalorder %s97, 1
    %p435 = por %p433, %p434
    %p436 = scmp.ne.s32.totalorder %s427, %s428
    %p437 = scmp.eq.s32.totalorder %s97, 0
    %p438 = por %p436, %p437
    %p439 = scmp.ne.s32.totalorder %s427, %s428
    %p440 = scmp.eq.s32.totalorder %s98, 1
    %p441 = por %p439, %p440
    %p443 = scmp.ne.s32.totalorder %s428, %s442
    %p444 = scmp.eq.s32.totalorder %s98, 0
    %p445 = por %p443, %p444
    %s447 = sadd.s32 %s446, 1
    %p450 = scmp.eq.s32.totalorder %s92, 1
    %p451 = scmp.ne.s32.totalorder %s446, %s448
    %p452 = scmp.eq.s32.totalorder %s92, 0
    %p453 = por %p451, %p452
    %p454 = scmp.ne.s32.totalorder %s446, %s448
    %p455 = scmp.eq.s32.totalorder %s97, 1
    %p456 = por %p454, %p455
    %p457 = scmp.ne.s32.totalorder %s448, %s449
    %p458 = scmp.eq.s32.totalorder %s97, 0
    %p459 = por %p457, %p458
    %p460 = scmp.ne.s32.totalorder %s448, %s449
    %p461 = scmp.eq.s32.totalorder %s98, 1
    %p462 = por %p460, %p461
    %p464 = scmp.ne.s32.totalorder %s449, %s463
    %p465 = scmp.eq.s32.totalorder %s98, 0
    %p466 = por %p464, %p465
    %s468 = sadd.s32 %s467, 1
    %p471 = scmp.eq.s32.totalorder %s92, 1
    %p472 = scmp.ne.s32.totalorder %s467, %s469
    %p473 = scmp.eq.s32.totalorder %s92, 0
    %p474 = por %p472, %p473
    %p475 = scmp.ne.s32.totalorder %s467, %s469
    %p476 = scmp.eq.s32.totalorder %s97, 1
    %p477 = por %p475, %p476
    %p478 = scmp.ne.s32.totalorder %s469, %s470
    %p479 = scmp.eq.s32.totalorder %s97, 0
    %p480 = por %p478, %p479
    %p481 = scmp.ne.s32.totalorder %s469, %s470
    %p482 = scmp.eq.s32.totalorder %s98, 1
    %p483 = por %p481, %p482
    %p485 = scmp.ne.s32.totalorder %s470, %s484
    %p486 = scmp.eq.s32.totalorder %s98, 0
    %p487 = por %p485, %p486
    %s489 = sadd.s32 %s488, 1
    %p492 = scmp.eq.s32.totalorder %s92, 1
    %p493 = scmp.ne.s32.totalorder %s488, %s490
    %p494 = scmp.eq.s32.totalorder %s92, 0
    %p495 = por %p493, %p494
    %p496 = scmp.ne.s32.totalorder %s488, %s490
    %p497 = scmp.eq.s32.totalorder %s97, 1
    %p498 = por %p496, %p497
    %p499 = scmp.ne.s32.totalorder %s490, %s491
    %p500 = scmp.eq.s32.totalorder %s97, 0
    %p501 = por %p499, %p500
    %p502 = scmp.ne.s32.totalorder %s490, %s491
    %p503 = scmp.eq.s32.totalorder %s98, 1
    %p504 = por %p502, %p503
    %p506 = scmp.ne.s32.totalorder %s491, %s505
    %p507 = scmp.eq.s32.totalorder %s98, 0
    %p508 = por %p506, %p507
    %s510 = sadd.s32 %s509, 1
    %p513 = scmp.eq.s32.totalorder %s92, 1
    %p514 = scmp.ne.s32.totalorder %s509, %s511
    %p515 = scmp.eq.s32.totalorder %s92, 0
    %p516 = por %p514, %p515
    %p517 = scmp.ne.s32.totalorder %s509, %s511
    %p518 = scmp.eq.s32.totalorder %s97, 1
    %p519 = por %p517, %p518
    %p520 = scmp.ne.s32.totalorder %s511, %s512
    %p521 = scmp.eq.s32.totalorder %s97, 0
    %p522 = por %p520, %p521
    %p523 = scmp.ne.s32.totalorder %s511, %s512
    %p524 = scmp.eq.s32.totalorder %s98, 1
    %p525 = por %p523, %p524
    %p527 = scmp.ne.s32.totalorder %s512, %s526
    %p528 = scmp.eq.s32.totalorder %s98, 0
    %p529 = por %p527, %p528
    %s531 = sadd.s32 %s530, 1
    %p534 = scmp.eq.s32.totalorder %s92, 1
    %p535 = scmp.ne.s32.totalorder %s530, %s532
    %p536 = scmp.eq.s32.totalorder %s92, 0
    %p537 = por %p535, %p536
    %p538 = scmp.ne.s32.totalorder %s530, %s532
    %p539 = scmp.eq.s32.totalorder %s97, 1
    %p540 = por %p538, %p539
    %p541 = scmp.ne.s32.totalorder %s532, %s533
    %p542 = scmp.eq.s32.totalorder %s97, 0
    %p543 = por %p541, %p542
    %p544 = scmp.ne.s32.totalorder %s532, %s533
    %p545 = scmp.eq.s32.totalorder %s98, 1
    %p546 = por %p544, %p545
    %p548 = scmp.ne.s32.totalorder %s533, %s547
    %p549 = scmp.eq.s32.totalorder %s98, 0
    %p550 = por %p548, %p549
    %s552 = sadd.s32 %s551, 1
    %p555 = scmp.eq.s32.totalorder %s92, 1
    %p556 = scmp.ne.s32.totalorder %s551, %s553
    %p557 = scmp.eq.s32.totalorder %s92, 0
    %p558 = por %p556, %p557
    %p559 = scmp.ne.s32.totalorder %s551, %s553
    %p560 = scmp.eq.s32.totalorder %s97, 1
    %p561 = por %p559, %p560
    %p562 = scmp.ne.s32.totalorder %s553, %s554
    %p563 = scmp.eq.s32.totalorder %s97, 0
    %p564 = por %p562, %p563
    %p565 = scmp.ne.s32.totalorder %s553, %s554
    %p566 = scmp.eq.s32.totalorder %s98, 1
    %p567 = por %p565, %p566
    %p569 = scmp.ne.s32.totalorder %s554, %s568
    %p570 = scmp.eq.s32.totalorder %s98, 0
    %p571 = por %p569, %p570
    %s573 = sadd.s32 %s572, 1
    %p576 = scmp.eq.s32.totalorder %s92, 1
    %p577 = scmp.ne.s32.totalorder %s572, %s574
    %p578 = scmp.eq.s32.totalorder %s92, 0
    %p579 = por %p577, %p578
    %p580 = scmp.ne.s32.totalorder %s572, %s574
    %p581 = scmp.eq.s32.totalorder %s97, 1
    %p582 = por %p580, %p581
    %p583 = scmp.ne.s32.totalorder %s574, %s575
    %p584 = scmp.eq.s32.totalorder %s97, 0
    %p585 = por %p583, %p584
    %p586 = scmp.ne.s32.totalorder %s574, %s575
    %p587 = scmp.eq.s32.totalorder %s98, 1
    %p588 = por %p586, %p587
    %p590 = scmp.ne.s32.totalorder %s575, %s589
    %p591 = scmp.eq.s32.totalorder %s98, 0
    %p592 = por %p590, %p591
    %s594 = sadd.s32 %s593, 1
    %p597 = scmp.eq.s32.totalorder %s92, 1
    %p598 = scmp.ne.s32.totalorder %s593, %s595
    %p599 = scmp.eq.s32.totalorder %s92, 0
    %p600 = por %p598, %p599
    %p601 = scmp.ne.s32.totalorder %s593, %s595
    %p602 = scmp.eq.s32.totalorder %s97, 1
    %p603 = por %p601, %p602
    %p604 = scmp.ne.s32.totalorder %s595, %s596
    %p605 = scmp.eq.s32.totalorder %s97, 0
    %p606 = por %p604, %p605
    %p607 = scmp.ne.s32.totalorder %s595, %s596
    %p608 = scmp.eq.s32.totalorder %s98, 1
    %p609 = por %p607, %p608
    %p611 = scmp.ne.s32.totalorder %s596, %s610
    %p612 = scmp.eq.s32.totalorder %s98, 0
    %p613 = por %p611, %p612
    %s615 = sadd.s32 %s614, 1
    %p618 = scmp.eq.s32.totalorder %s92, 1
    %p619 = scmp.ne.s32.totalorder %s614, %s616
    %p620 = scmp.eq.s32.totalorder %s92, 0
    %p621 = por %p619, %p620
    %p622 = scmp.ne.s32.totalorder %s614, %s616
    %p623 = scmp.eq.s32.totalorder %s97, 1
    %p624 = por %p622, %p623
    %p625 = scmp.ne.s32.totalorder %s616, %s617
    %p626 = scmp.eq.s32.totalorder %s97, 0
    %p627 = por %p625, %p626
    %p628 = scmp.ne.s32.totalorder %s616, %s617
    %p629 = scmp.eq.s32.totalorder %s98, 1
    %p630 = por %p628, %p629
    %p632 = scmp.ne.s32.totalorder %s617, %s631
    %p633 = scmp.eq.s32.totalorder %s98, 0
    %p634 = por %p632, %p633
    %s636 = sadd.s32 %s635, 1
    %p639 = scmp.eq.s32.totalorder %s92, 1
    %p640 = scmp.ne.s32.totalorder %s635, %s637
    %p641 = scmp.eq.s32.totalorder %s92, 0
    %p642 = por %p640, %p641
    %p643 = scmp.ne.s32.totalorder %s635, %s637
    %p644 = scmp.eq.s32.totalorder %s97, 1
    %p645 = por %p643, %p644
    %p646 = scmp.ne.s32.totalorder %s637, %s638
    %p647 = scmp.eq.s32.totalorder %s97, 0
    %p648 = por %p646, %p647
    %p649 = scmp.ne.s32.totalorder %s637, %s638
    %p650 = scmp.eq.s32.totalorder %s98, 1
    %p651 = por %p649, %p650
    %p653 = scmp.ne.s32.totalorder %s638, %s652
    %p654 = scmp.eq.s32.totalorder %s98, 0
    %p655 = por %p653, %p654
    %s657 = sadd.s32 %s656, 1
    %p660 = scmp.eq.s32.totalorder %s92, 1
    %p661 = scmp.ne.s32.totalorder %s656, %s658
    %p662 = scmp.eq.s32.totalorder %s92, 0
    %p663 = por %p661, %p662
    %p664 = scmp.ne.s32.totalorder %s656, %s658
    %p665 = scmp.eq.s32.totalorder %s97, 1
    %p666 = por %p664, %p665
    %p667 = scmp.ne.s32.totalorder %s658, %s659
    %p668 = scmp.eq.s32.totalorder %s97, 0
    %p669 = por %p667, %p668
    %p670 = scmp.ne.s32.totalorder %s658, %s659
    %p671 = scmp.eq.s32.totalorder %s98, 1
    %p672 = por %p670, %p671
    %p674 = scmp.ne.s32.totalorder %s659, %s673
    %p675 = scmp.eq.s32.totalorder %s98, 0
    %p676 = por %p674, %p675
    %s678 = sadd.s32 %s677, 1
    %p681 = scmp.eq.s32.totalorder %s92, 1
    %p682 = scmp.ne.s32.totalorder %s677, %s679
    %p683 = scmp.eq.s32.totalorder %s92, 0
    %p684 = por %p682, %p683
    %p685 = scmp.ne.s32.totalorder %s677, %s679
    %p686 = scmp.eq.s32.totalorder %s97, 1
    %p687 = por %p685, %p686
    %p688 = scmp.ne.s32.totalorder %s679, %s680
    %p689 = scmp.eq.s32.totalorder %s97, 0
    %p690 = por %p688, %p689
    %p691 = scmp.ne.s32.totalorder %s679, %s680
    %p692 = scmp.eq.s32.totalorder %s98, 1
    %p693 = por %p691, %p692
    %p695 = scmp.ne.s32.totalorder %s680, %s694
    %p696 = scmp.eq.s32.totalorder %s98, 0
    %p697 = por %p695, %p696
    %s699 = sadd.s32 %s698, 1
    %p702 = scmp.eq.s32.totalorder %s92, 1
    %p703 = scmp.ne.s32.totalorder %s698, %s700
    %p704 = scmp.eq.s32.totalorder %s92, 0
    %p705 = por %p703, %p704
    %p706 = scmp.ne.s32.totalorder %s698, %s700
    %p707 = scmp.eq.s32.totalorder %s97, 1
    %p708 = por %p706, %p707
    %p709 = scmp.ne.s32.totalorder %s700, %s701
    %p710 = scmp.eq.s32.totalorder %s97, 0
    %p711 = por %p709, %p710
    %p712 = scmp.ne.s32.totalorder %s700, %s701
    %p713 = scmp.eq.s32.totalorder %s98, 1
    %p714 = por %p712, %p713
    %p716 = scmp.ne.s32.totalorder %s701, %s715
    %p717 = scmp.eq.s32.totalorder %s98, 0
    %p718 = por %p716, %p717
    %s720 = sadd.s32 %s719, 1
    %p723 = scmp.eq.s32.totalorder %s92, 1
    %p724 = scmp.ne.s32.totalorder %s719, %s721
    %p725 = scmp.eq.s32.totalorder %s92, 0
    %p726 = por %p724, %p725
    %p727 = scmp.ne.s32.totalorder %s719, %s721
    %p728 = scmp.eq.s32.totalorder %s97, 1
    %p729 = por %p727, %p728
    %p730 = scmp.ne.s32.totalorder %s721, %s722
    %p731 = scmp.eq.s32.totalorder %s97, 0
    %p732 = por %p730, %p731
    %p733 = scmp.ne.s32.totalorder %s721, %s722
    %p734 = scmp.eq.s32.totalorder %s98, 1
    %p735 = por %p733, %p734
    %p737 = scmp.ne.s32.totalorder %s722, %s736
    %p738 = scmp.eq.s32.totalorder %s98, 0
    %p739 = por %p737, %p738
    %s741 = sadd.s32 %s740, 1
    %p744 = scmp.eq.s32.totalorder %s92, 1
    %p745 = scmp.ne.s32.totalorder %s740, %s742
    %p746 = scmp.eq.s32.totalorder %s92, 0
    %p747 = por %p745, %p746
    %p748 = scmp.ne.s32.totalorder %s740, %s742
    %p749 = scmp.eq.s32.totalorder %s97, 1
    %p750 = por %p748, %p749
    %p751 = scmp.ne.s32.totalorder %s742, %s743
    %p752 = scmp.eq.s32.totalorder %s97, 0
    %p753 = por %p751, %p752
    %p754 = scmp.ne.s32.totalorder %s742, %s743
    %p755 = scmp.eq.s32.totalorder %s98, 1
    %p756 = por %p754, %p755
    %p758 = scmp.ne.s32.totalorder %s743, %s757
    %p759 = scmp.eq.s32.totalorder %s98, 0
    %p760 = por %p758, %p759
    %s762 = sadd.s32 %s761, 1
    %p765 = scmp.eq.s32.totalorder %s92, 1
    %p766 = scmp.ne.s32.totalorder %s761, %s763
    %p767 = scmp.eq.s32.totalorder %s92, 0
    %p768 = por %p766, %p767
    %p769 = scmp.ne.s32.totalorder %s761, %s763
    %p770 = scmp.eq.s32.totalorder %s97, 1
    %p771 = por %p769, %p770
    %p772 = scmp.ne.s32.totalorder %s763, %s764
    %p773 = scmp.eq.s32.totalorder %s97, 0
    %p774 = por %p772, %p773
    %p775 = scmp.ne.s32.totalorder %s763, %s764
    %p776 = scmp.eq.s32.totalorder %s98, 1
    %p777 = por %p775, %p776
    %p779 = scmp.ne.s32.totalorder %s764, %s778
    %p780 = scmp.eq.s32.totalorder %s98, 0
    %p781 = por %p779, %p780
    %s783 = sadd.s32 %s782, 1
    %p786 = scmp.eq.s32.totalorder %s92, 1
    %p787 = scmp.ne.s32.totalorder %s782, %s784
    %p788 = scmp.eq.s32.totalorder %s92, 0
    %p789 = por %p787, %p788
    %p790 = scmp.ne.s32.totalorder %s782, %s784
    %p791 = scmp.eq.s32.totalorder %s97, 1
    %p792 = por %p790, %p791
    %p793 = scmp.ne.s32.totalorder %s784, %s785
    %p794 = scmp.eq.s32.totalorder %s97, 0
    %p795 = por %p793, %p794
    %p796 = scmp.ne.s32.totalorder %s784, %s785
    %p797 = scmp.eq.s32.totalorder %s98, 1
    %p798 = por %p796, %p797
    %p800 = scmp.ne.s32.totalorder %s785, %s799
    %p801 = scmp.eq.s32.totalorder %s98, 0
    %p802 = por %p800, %p801
    %s804 = sadd.s32 %s803, 1
    %p807 = scmp.eq.s32.totalorder %s92, 1
    %p808 = scmp.ne.s32.totalorder %s803, %s805
    %p809 = scmp.eq.s32.totalorder %s92, 0
    %p810 = por %p808, %p809
    %p811 = scmp.ne.s32.totalorder %s803, %s805
    %p812 = scmp.eq.s32.totalorder %s97, 1
    %p813 = por %p811, %p812
    %p814 = scmp.ne.s32.totalorder %s805, %s806
    %p815 = scmp.eq.s32.totalorder %s97, 0
    %p816 = por %p814, %p815
    %p817 = scmp.ne.s32.totalorder %s805, %s806
    %p818 = scmp.eq.s32.totalorder %s98, 1
    %p819 = por %p817, %p818
    %p821 = scmp.ne.s32.totalorder %s806, %s820
    %p822 = scmp.eq.s32.totalorder %s98, 0
    %p823 = por %p821, %p822
    %s825 = sadd.s32 %s824, 1
    %p828 = scmp.eq.s32.totalorder %s92, 1
    %p829 = scmp.ne.s32.totalorder %s824, %s826
    %p830 = scmp.eq.s32.totalorder %s92, 0
    %p831 = por %p829, %p830
    %p832 = scmp.ne.s32.totalorder %s824, %s826
    %p833 = scmp.eq.s32.totalorder %s97, 1
    %p834 = por %p832, %p833
    %p835 = scmp.ne.s32.totalorder %s826, %s827
    %p836 = scmp.eq.s32.totalorder %s97, 0
    %p837 = por %p835, %p836
    %p838 = scmp.ne.s32.totalorder %s826, %s827
    %p839 = scmp.eq.s32.totalorder %s98, 1
    %p840 = por %p838, %p839
    %p842 = scmp.ne.s32.totalorder %s827, %s841
    %p843 = scmp.eq.s32.totalorder %s98, 0
    %p844 = por %p842, %p843
    %s846 = sadd.s32 %s845, 1
    %p849 = scmp.eq.s32.totalorder %s92, 1
    %p850 = scmp.ne.s32.totalorder %s845, %s847
    %p851 = scmp.eq.s32.totalorder %s92, 0
    %p852 = por %p850, %p851
    %p853 = scmp.ne.s32.totalorder %s845, %s847
    %p854 = scmp.eq.s32.totalorder %s97, 1
    %p855 = por %p853, %p854
    %p856 = scmp.ne.s32.totalorder %s847, %s848
    %p857 = scmp.eq.s32.totalorder %s97, 0
    %p858 = por %p856, %p857
    %p859 = scmp.ne.s32.totalorder %s847, %s848
    %p860 = scmp.eq.s32.totalorder %s98, 1
    %p861 = por %p859, %p860
    %p863 = scmp.ne.s32.totalorder %s848, %s862
    %p864 = scmp.eq.s32.totalorder %s98, 0
    %p865 = por %p863, %p864
    %s867 = sadd.s32 %s866, 1
    %p870 = scmp.eq.s32.totalorder %s92, 1
    %p871 = scmp.ne.s32.totalorder %s866, %s868
    %p872 = scmp.eq.s32.totalorder %s92, 0
    %p873 = por %p871, %p872
    %p874 = scmp.ne.s32.totalorder %s866, %s868
    %p875 = scmp.eq.s32.totalorder %s97, 1
    %p876 = por %p874, %p875
    %p877 = scmp.ne.s32.totalorder %s868, %s869
    %p878 = scmp.eq.s32.totalorder %s97, 0
    %p879 = por %p877, %p878
    %p880 = scmp.ne.s32.totalorder %s868, %s869
    %p881 = scmp.eq.s32.totalorder %s98, 1
    %p882 = por %p880, %p881
    %p884 = scmp.ne.s32.totalorder %s869, %s883
    %p885 = scmp.eq.s32.totalorder %s98, 0
    %p886 = por %p884, %p885
    %s888 = sadd.s32 %s887, 1
    %p891 = scmp.eq.s32.totalorder %s92, 1
    %p892 = scmp.ne.s32.totalorder %s887, %s889
    %p893 = scmp.eq.s32.totalorder %s92, 0
    %p894 = por %p892, %p893
    %p895 = scmp.ne.s32.totalorder %s887, %s889
    %p896 = scmp.eq.s32.totalorder %s97, 1
    %p897 = por %p895, %p896
    %p898 = scmp.ne.s32.totalorder %s889, %s890
    %p899 = scmp.eq.s32.totalorder %s97, 0
    %p900 = por %p898, %p899
    %p901 = scmp.ne.s32.totalorder %s889, %s890
    %p902 = scmp.eq.s32.totalorder %s98, 1
    %p903 = por %p901, %p902
    %p905 = scmp.ne.s32.totalorder %s890, %s904
    %p906 = scmp.eq.s32.totalorder %s98, 0
    %p907 = por %p905, %p906
    %s909 = sadd.s32 %s908, 1
    %p912 = scmp.eq.s32.totalorder %s92, 1
    %p913 = scmp.ne.s32.totalorder %s908, %s910
    %p914 = scmp.eq.s32.totalorder %s92, 0
    %p915 = por %p913, %p914
    %p916 = scmp.ne.s32.totalorder %s908, %s910
    %p917 = scmp.eq.s32.totalorder %s97, 1
    %p918 = por %p916, %p917
    %p919 = scmp.ne.s32.totalorder %s910, %s911
    %p920 = scmp.eq.s32.totalorder %s97, 0
    %p921 = por %p919, %p920
    %p922 = scmp.ne.s32.totalorder %s910, %s911
    %p923 = scmp.eq.s32.totalorder %s98, 1
    %p924 = por %p922, %p923
    %p926 = scmp.ne.s32.totalorder %s911, %s925
    %p927 = scmp.eq.s32.totalorder %s98, 0
    %p928 = por %p926, %p927
    %s930 = sadd.s32 %s929, 1
    %p933 = scmp.eq.s32.totalorder %s92, 1
    %p934 = scmp.ne.s32.totalorder %s929, %s931
    %p935 = scmp.eq.s32.totalorder %s92, 0
    %p936 = por %p934, %p935
    %p937 = scmp.ne.s32.totalorder %s929, %s931
    %p938 = scmp.eq.s32.totalorder %s97, 1
    %p939 = por %p937, %p938
    %p940 = scmp.ne.s32.totalorder %s931, %s932
    %p941 = scmp.eq.s32.totalorder %s97, 0
    %p942 = por %p940, %p941
    %p943 = scmp.ne.s32.totalorder %s931, %s932
    %p944 = scmp.eq.s32.totalorder %s98, 1
    %p945 = por %p943, %p944
    %p947 = scmp.ne.s32.totalorder %s932, %s946
    %p948 = scmp.eq.s32.totalorder %s98, 0
    %p949 = por %p947, %p948
    %s951 = sadd.s32 %s950, 1
    %p954 = scmp.eq.s32.totalorder %s92, 1
    %p955 = scmp.ne.s32.totalorder %s950, %s952
    %p956 = scmp.eq.s32.totalorder %s92, 0
    %p957 = por %p955, %p956
    %p958 = scmp.ne.s32.totalorder %s950, %s952
    %p959 = scmp.eq.s32.totalorder %s97, 1
    %p960 = por %p958, %p959
    %p961 = scmp.ne.s32.totalorder %s952, %s953
    %p962 = scmp.eq.s32.totalorder %s97, 0
    %p963 = por %p961, %p962
    %p964 = scmp.ne.s32.totalorder %s952, %s953
    %p965 = scmp.eq.s32.totalorder %s98, 1
    %p966 = por %p964, %p965
    %p968 = scmp.ne.s32.totalorder %s953, %s967
    %p969 = scmp.eq.s32.totalorder %s98, 0
    %p970 = por %p968, %p969
    %s971 = ssub.s32 %s92, %s99
    %p972 = scmp.eq.s32.totalorder %s971, 0
    %s974 = sadd.s32 %s973, 1
    %s975 = scalar_select %p972, %s973, %s974
    %p978 = pneg %p972
    %p979 = scmp.eq.s32.totalorder %s92, 1
    %p980 = por %p978, %p979
    %p981 = scmp.ne.s32.totalorder %s973, %s976
    %p982 = scmp.eq.s32.totalorder %s92, 0
    %p983 = por %p981, %p982
    %p984 = scmp.ne.s32.totalorder %s973, %s976
    %p985 = scmp.eq.s32.totalorder %s97, 1
    %p986 = por %p984, %p985
    %p987 = scmp.ne.s32.totalorder %s976, %s977
    %p988 = scmp.eq.s32.totalorder %s97, 0
    %p989 = por %p987, %p988
    %p990 = scmp.ne.s32.totalorder %s976, %s977
    %p991 = scmp.eq.s32.totalorder %s98, 1
    %p992 = por %p990, %p991
    %p994 = scmp.ne.s32.totalorder %s977, %s993
    %p995 = scmp.eq.s32.totalorder %s98, 0
    %p996 = por %p994, %p995
    %s997 = ssub.s32 %s92, %s99
    %p998 = scmp.eq.s32.totalorder %s997, 0
    %s1000 = sadd.s32 %s999, 1
    %s1001 = scalar_select %p998, %s999, %s1000
    %p1004 = pneg %p998
    %p1005 = scmp.eq.s32.totalorder %s92, 1
    %p1006 = por %p1004, %p1005
    %p1007 = scmp.ne.s32.totalorder %s999, %s1002
    %p1008 = scmp.eq.s32.totalorder %s92, 0
    %p1009 = por %p1007, %p1008
    %p1010 = scmp.ne.s32.totalorder %s999, %s1002
    %p1011 = scmp.eq.s32.totalorder %s97, 1
    %p1012 = por %p1010, %p1011
    %p1013 = scmp.ne.s32.totalorder %s1002, %s1003
    %p1014 = scmp.eq.s32.totalorder %s97, 0
    %p1015 = por %p1013, %p1014
    %p1016 = scmp.ne.s32.totalorder %s1002, %s1003
    %p1017 = scmp.eq.s32.totalorder %s98, 1
    %p1018 = por %p1016, %p1017
    %p1020 = scmp.ne.s32.totalorder %s1003, %s1019
    %p1021 = scmp.eq.s32.totalorder %s98, 0
    %p1022 = por %p1020, %p1021
    %p1023 = scmp.le.s32.totalorder 1, %s92
    %p1024 = scmp.lt.s32.totalorder %s92, 3
    %p1025 = pnand %p1023, %p1024
    %p1026 = pneg %p1025
    // Predicated region
    $region9: #{encoder_block_forward.1} parent=5 // pred_check
      _
    $region10: #{encoder_block_forward.1} parent=5 // pred_check_branch
      %1028 = sbr.rel (%p1025) target = $region12
    $region11: #{encoder_block_forward.1} parent=5 // pred_region
      %s1029 = ssub.s32 %s92, 1
      // Predicated region
      $region13: #{encoder_block_forward.1} parent=11 // pred_check
        %p1030 = pneg %p165
      $region14: #{encoder_block_forward.1} parent=11 // pred_check_branch
        %1032 = sbr.rel (%p1030) target = $region16
      $region15: #{encoder_block_forward.1} parent=11 // pred_region
        _
      $region16: #{encoder_block_forward.1} parent=11 // pred_fallthru
        _
      // Predicated region
      $region17: #{encoder_block_forward.1} parent=11 // pred_check
        %p1033 = pneg %p186
      $region18: #{encoder_block_forward.1} parent=11 // pred_check_branch
        %1035 = sbr.rel (%p1033) target = $region20
      $region19: #{encoder_block_forward.1} parent=11 // pred_region
        _
      $region20: #{encoder_block_forward.1} parent=11 // pred_fallthru
        _
      // Predicated region
      $region21: #{encoder_block_forward.1} parent=11 // pred_check
        %p1036 = pneg %p207
      $region22: #{encoder_block_forward.1} parent=11 // pred_check_branch
        %1038 = sbr.rel (%p1036) target = $region24
      $region23: #{encoder_block_forward.1} parent=11 // pred_region
        _
      $region24: #{encoder_block_forward.1} parent=11 // pred_fallthru
        _
      // Predicated region
      $region25: #{encoder_block_forward.1} parent=11 // pred_check
        %p1039 = pneg %p228
      $region26: #{encoder_block_forward.1} parent=11 // pred_check_branch
        %1041 = sbr.rel (%p1039) target = $region28
      $region27: #{encoder_block_forward.1} parent=11 // pred_region
        _
      $region28: #{encoder_block_forward.1} parent=11 // pred_fallthru
        _
      // Predicated region
      $region29: #{encoder_block_forward.1} parent=11 // pred_check
        %p1042 = pneg %p249
      $region30: #{encoder_block_forward.1} parent=11 // pred_check_branch
        %1044 = sbr.rel (%p1042) target = $region32
      $region31: #{encoder_block_forward.1} parent=11 // pred_region
        _
      $region32: #{encoder_block_forward.1} parent=11 // pred_fallthru
        _
      // Predicated region
      $region33: #{encoder_block_forward.1} parent=11 // pred_check
        %p1045 = pneg %p270
      $region34: #{encoder_block_forward.1} parent=11 // pred_check_branch
        %1047 = sbr.rel (%p1045) target = $region36
      $region35: #{encoder_block_forward.1} parent=11 // pred_region
        _
      $region36: #{encoder_block_forward.1} parent=11 // pred_fallthru
        _
      // Predicated region
      $region37: #{encoder_block_forward.1} parent=11 // pred_check
        %p1048 = pneg %p291
      $region38: #{encoder_block_forward.1} parent=11 // pred_check_branch
        %1050 = sbr.rel (%p1048) target = $region40
      $region39: #{encoder_block_forward.1} parent=11 // pred_region
        _
      $region40: #{encoder_block_forward.1} parent=11 // pred_fallthru
        _
      // Predicated region
      $region41: #{encoder_block_forward.1} parent=11 // pred_check
        %p1051 = pneg %p312
      $region42: #{encoder_block_forward.1} parent=11 // pred_check_branch
        %1053 = sbr.rel (%p1051) target = $region44
      $region43: #{encoder_block_forward.1} parent=11 // pred_region
        _
      $region44: #{encoder_block_forward.1} parent=11 // pred_fallthru
        _
      // Predicated region
      $region45: #{encoder_block_forward.1} parent=11 // pred_check
        %p1054 = pneg %p333
      $region46: #{encoder_block_forward.1} parent=11 // pred_check_branch
        %1056 = sbr.rel (%p1054) target = $region48
      $region47: #{encoder_block_forward.1} parent=11 // pred_region
        _
      $region48: #{encoder_block_forward.1} parent=11 // pred_fallthru
        _
      // Predicated region
      $region49: #{encoder_block_forward.1} parent=11 // pred_check
        %p1057 = pneg %p354
      $region50: #{encoder_block_forward.1} parent=11 // pred_check_branch
        %1059 = sbr.rel (%p1057) target = $region52
      $region51: #{encoder_block_forward.1} parent=11 // pred_region
        _
      $region52: #{encoder_block_forward.1} parent=11 // pred_fallthru
        _
      // Predicated region
      $region53: #{encoder_block_forward.1} parent=11 // pred_check
        %p1060 = pneg %p375
      $region54: #{encoder_block_forward.1} parent=11 // pred_check_branch
        %1062 = sbr.rel (%p1060) target = $region56
      $region55: #{encoder_block_forward.1} parent=11 // pred_region
        _
      $region56: #{encoder_block_forward.1} parent=11 // pred_fallthru
        _
      // Predicated region
      $region57: #{encoder_block_forward.1} parent=11 // pred_check
        %p1063 = pneg %p396
      $region58: #{encoder_block_forward.1} parent=11 // pred_check_branch
        %1065 = sbr.rel (%p1063) target = $region60
      $region59: #{encoder_block_forward.1} parent=11 // pred_region
        _
      $region60: #{encoder_block_forward.1} parent=11 // pred_fallthru
        _
      // Predicated region
      $region61: #{encoder_block_forward.1} parent=11 // pred_check
        %p1066 = pneg %p417
      $region62: #{encoder_block_forward.1} parent=11 // pred_check_branch
        %1068 = sbr.rel (%p1066) target = $region64
      $region63: #{encoder_block_forward.1} parent=11 // pred_region
        _
      $region64: #{encoder_block_forward.1} parent=11 // pred_fallthru
        _
      // Predicated region
      $region65: #{encoder_block_forward.1} parent=11 // pred_check
        %p1069 = pneg %p438
      $region66: #{encoder_block_forward.1} parent=11 // pred_check_branch
        %1071 = sbr.rel (%p1069) target = $region68
      $region67: #{encoder_block_forward.1} parent=11 // pred_region
        _
      $region68: #{encoder_block_forward.1} parent=11 // pred_fallthru
        _
      // Predicated region
      $region69: #{encoder_block_forward.1} parent=11 // pred_check
        %p1072 = pneg %p459
      $region70: #{encoder_block_forward.1} parent=11 // pred_check_branch
        %1074 = sbr.rel (%p1072) target = $region72
      $region71: #{encoder_block_forward.1} parent=11 // pred_region
        _
      $region72: #{encoder_block_forward.1} parent=11 // pred_fallthru
        _
      // Predicated region
      $region73: #{encoder_block_forward.1} parent=11 // pred_check
        %p1075 = pneg %p480
      $region74: #{encoder_block_forward.1} parent=11 // pred_check_branch
        %1077 = sbr.rel (%p1075) target = $region76
      $region75: #{encoder_block_forward.1} parent=11 // pred_region
        _
      $region76: #{encoder_block_forward.1} parent=11 // pred_fallthru
        _
      // Predicated region
      $region77: #{encoder_block_forward.1} parent=11 // pred_check
        %p1078 = pneg %p501
      $region78: #{encoder_block_forward.1} parent=11 // pred_check_branch
        %1080 = sbr.rel (%p1078) target = $region80
      $region79: #{encoder_block_forward.1} parent=11 // pred_region
        _
      $region80: #{encoder_block_forward.1} parent=11 // pred_fallthru
        _
      // Predicated region
      $region81: #{encoder_block_forward.1} parent=11 // pred_check
        %p1081 = pneg %p522
      $region82: #{encoder_block_forward.1} parent=11 // pred_check_branch
        %1083 = sbr.rel (%p1081) target = $region84
      $region83: #{encoder_block_forward.1} parent=11 // pred_region
        _
      $region84: #{encoder_block_forward.1} parent=11 // pred_fallthru
        _
      // Predicated region
      $region85: #{encoder_block_forward.1} parent=11 // pred_check
        %p1084 = pneg %p543
      $region86: #{encoder_block_forward.1} parent=11 // pred_check_branch
        %1086 = sbr.rel (%p1084) target = $region88
      $region87: #{encoder_block_forward.1} parent=11 // pred_region
        _
      $region88: #{encoder_block_forward.1} parent=11 // pred_fallthru
        _
      // Predicated region
      $region89: #{encoder_block_forward.1} parent=11 // pred_check
        %p1087 = pneg %p564
      $region90: #{encoder_block_forward.1} parent=11 // pred_check_branch
        %1089 = sbr.rel (%p1087) target = $region92
      $region91: #{encoder_block_forward.1} parent=11 // pred_region
        _
      $region92: #{encoder_block_forward.1} parent=11 // pred_fallthru
        _
      // Predicated region
      $region93: #{encoder_block_forward.1} parent=11 // pred_check
        %p1090 = pneg %p585
      $region94: #{encoder_block_forward.1} parent=11 // pred_check_branch
        %1092 = sbr.rel (%p1090) target = $region96
      $region95: #{encoder_block_forward.1} parent=11 // pred_region
        _
      $region96: #{encoder_block_forward.1} parent=11 // pred_fallthru
        _
      // Predicated region
      $region97: #{encoder_block_forward.1} parent=11 // pred_check
        %p1093 = pneg %p606
      $region98: #{encoder_block_forward.1} parent=11 // pred_check_branch
        %1095 = sbr.rel (%p1093) target = $region100
      $region99: #{encoder_block_forward.1} parent=11 // pred_region
        _
      $region100: #{encoder_block_forward.1} parent=11 // pred_fallthru
        _
      // Predicated region
      $region101: #{encoder_block_forward.1} parent=11 // pred_check
        %p1096 = pneg %p627
      $region102: #{encoder_block_forward.1} parent=11 // pred_check_branch
        %1098 = sbr.rel (%p1096) target = $region104
      $region103: #{encoder_block_forward.1} parent=11 // pred_region
        _
      $region104: #{encoder_block_forward.1} parent=11 // pred_fallthru
        _
      // Predicated region
      $region105: #{encoder_block_forward.1} parent=11 // pred_check
        %p1099 = pneg %p648
      $region106: #{encoder_block_forward.1} parent=11 // pred_check_branch
        %1101 = sbr.rel (%p1099) target = $region108
      $region107: #{encoder_block_forward.1} parent=11 // pred_region
        _
      $region108: #{encoder_block_forward.1} parent=11 // pred_fallthru
        _
      // Predicated region
      $region109: #{encoder_block_forward.1} parent=11 // pred_check
        %p1102 = pneg %p669
      $region110: #{encoder_block_forward.1} parent=11 // pred_check_branch
        %1104 = sbr.rel (%p1102) target = $region112
      $region111: #{encoder_block_forward.1} parent=11 // pred_region
        _
      $region112: #{encoder_block_forward.1} parent=11 // pred_fallthru
        _
      // Predicated region
      $region113: #{encoder_block_forward.1} parent=11 // pred_check
        %p1105 = pneg %p690
      $region114: #{encoder_block_forward.1} parent=11 // pred_check_branch
        %1107 = sbr.rel (%p1105) target = $region116
      $region115: #{encoder_block_forward.1} parent=11 // pred_region
        _
      $region116: #{encoder_block_forward.1} parent=11 // pred_fallthru
        _
      // Predicated region
      $region117: #{encoder_block_forward.1} parent=11 // pred_check
        %p1108 = pneg %p711
      $region118: #{encoder_block_forward.1} parent=11 // pred_check_branch
        %1110 = sbr.rel (%p1108) target = $region120
      $region119: #{encoder_block_forward.1} parent=11 // pred_region
        _
      $region120: #{encoder_block_forward.1} parent=11 // pred_fallthru
        _
      // Predicated region
      $region121: #{encoder_block_forward.1} parent=11 // pred_check
        %p1111 = pneg %p732
      $region122: #{encoder_block_forward.1} parent=11 // pred_check_branch
        %1113 = sbr.rel (%p1111) target = $region124
      $region123: #{encoder_block_forward.1} parent=11 // pred_region
        _
      $region124: #{encoder_block_forward.1} parent=11 // pred_fallthru
        _
      // Predicated region
      $region125: #{encoder_block_forward.1} parent=11 // pred_check
        %p1114 = pneg %p753
      $region126: #{encoder_block_forward.1} parent=11 // pred_check_branch
        %1116 = sbr.rel (%p1114) target = $region128
      $region127: #{encoder_block_forward.1} parent=11 // pred_region
        _
      $region128: #{encoder_block_forward.1} parent=11 // pred_fallthru
        _
      // Predicated region
      $region129: #{encoder_block_forward.1} parent=11 // pred_check
        %p1117 = pneg %p774
      $region130: #{encoder_block_forward.1} parent=11 // pred_check_branch
        %1119 = sbr.rel (%p1117) target = $region132
      $region131: #{encoder_block_forward.1} parent=11 // pred_region
        _
      $region132: #{encoder_block_forward.1} parent=11 // pred_fallthru
        _
      // Predicated region
      $region133: #{encoder_block_forward.1} parent=11 // pred_check
        %p1120 = pneg %p795
      $region134: #{encoder_block_forward.1} parent=11 // pred_check_branch
        %1122 = sbr.rel (%p1120) target = $region136
      $region135: #{encoder_block_forward.1} parent=11 // pred_region
        _
      $region136: #{encoder_block_forward.1} parent=11 // pred_fallthru
        _
      // Predicated region
      $region137: #{encoder_block_forward.1} parent=11 // pred_check
        %p1123 = pneg %p816
      $region138: #{encoder_block_forward.1} parent=11 // pred_check_branch
        %1125 = sbr.rel (%p1123) target = $region140
      $region139: #{encoder_block_forward.1} parent=11 // pred_region
        _
      $region140: #{encoder_block_forward.1} parent=11 // pred_fallthru
        _
      // Predicated region
      $region141: #{encoder_block_forward.1} parent=11 // pred_check
        %p1126 = pneg %p837
      $region142: #{encoder_block_forward.1} parent=11 // pred_check_branch
        %1128 = sbr.rel (%p1126) target = $region144
      $region143: #{encoder_block_forward.1} parent=11 // pred_region
        _
      $region144: #{encoder_block_forward.1} parent=11 // pred_fallthru
        _
      // Predicated region
      $region145: #{encoder_block_forward.1} parent=11 // pred_check
        %p1129 = pneg %p858
      $region146: #{encoder_block_forward.1} parent=11 // pred_check_branch
        %1131 = sbr.rel (%p1129) target = $region148
      $region147: #{encoder_block_forward.1} parent=11 // pred_region
        _
      $region148: #{encoder_block_forward.1} parent=11 // pred_fallthru
        _
      // Predicated region
      $region149: #{encoder_block_forward.1} parent=11 // pred_check
        %p1132 = pneg %p879
      $region150: #{encoder_block_forward.1} parent=11 // pred_check_branch
        %1134 = sbr.rel (%p1132) target = $region152
      $region151: #{encoder_block_forward.1} parent=11 // pred_region
        _
      $region152: #{encoder_block_forward.1} parent=11 // pred_fallthru
        _
      // Predicated region
      $region153: #{encoder_block_forward.1} parent=11 // pred_check
        %p1135 = pneg %p900
      $region154: #{encoder_block_forward.1} parent=11 // pred_check_branch
        %1137 = sbr.rel (%p1135) target = $region156
      $region155: #{encoder_block_forward.1} parent=11 // pred_region
        _
      $region156: #{encoder_block_forward.1} parent=11 // pred_fallthru
        _
      // Predicated region
      $region157: #{encoder_block_forward.1} parent=11 // pred_check
        %p1138 = pneg %p921
      $region158: #{encoder_block_forward.1} parent=11 // pred_check_branch
        %1140 = sbr.rel (%p1138) target = $region160
      $region159: #{encoder_block_forward.1} parent=11 // pred_region
        _
      $region160: #{encoder_block_forward.1} parent=11 // pred_fallthru
        _
      // Predicated region
      $region161: #{encoder_block_forward.1} parent=11 // pred_check
        %p1141 = pneg %p942
      $region162: #{encoder_block_forward.1} parent=11 // pred_check_branch
        %1143 = sbr.rel (%p1141) target = $region164
      $region163: #{encoder_block_forward.1} parent=11 // pred_region
        _
      $region164: #{encoder_block_forward.1} parent=11 // pred_fallthru
        _
      // Predicated region
      $region165: #{encoder_block_forward.1} parent=11 // pred_check
        %p1144 = pneg %p963
      $region166: #{encoder_block_forward.1} parent=11 // pred_check_branch
        %1146 = sbr.rel (%p1144) target = $region168
      $region167: #{encoder_block_forward.1} parent=11 // pred_region
        _
      $region168: #{encoder_block_forward.1} parent=11 // pred_fallthru
        _
    $region12: #{encoder_block_forward.1} parent=5 // pred_fallthru
      _
    %p1147 = scmp.lt.s32.totalorder %s92, 2
    // Predicated region
    $region169: #{encoder_block_forward.1} parent=5 // pred_check
      %p1148 = pneg %p1147
    $region170: #{encoder_block_forward.1} parent=5 // pred_check_branch
      %1150 = sbr.rel (%p1148) target = $region172
    $region171: #{encoder_block_forward.1} parent=5 // pred_region
      // Predicated region
      $region173: #{encoder_block_forward.1} parent=171 // pred_check
        %p1151 = pneg %p112
      $region174: #{encoder_block_forward.1} parent=171 // pred_check_branch
        %1153 = sbr.rel (%p1151) target = $region176
      $region175: #{encoder_block_forward.1} parent=171 // pred_region
        %p1154 = scmp.lt.s32.totalorder %s92, 1
        %s1155 = scalar_select %p1154, %s92, 1
        %s1156 = smul.addr %s1155, 16
        %s1157 = smul.addr %s1156, 8
        %s1158 = scalar_lea.vmem %s1, %s1157
      $region176: #{encoder_block_forward.1} parent=171 // pred_fallthru
        _
      // Predicated region
      $region177: #{encoder_block_forward.1} parent=171 // pred_check
        %p1159 = pneg %p138
      $region178: #{encoder_block_forward.1} parent=171 // pred_check_branch
        %1161 = sbr.rel (%p1159) target = $region180
      $region179: #{encoder_block_forward.1} parent=171 // pred_region
        %p1162 = scmp.lt.s32.totalorder %s92, 1
        %s1163 = scalar_select %p1162, %s92, 1
        %s1164 = smul.addr %s1163, 16
        %s1165 = smul.addr %s1164, 8
        %s1166 = scalar_lea.vmem %s3, %s1165
      $region180: #{encoder_block_forward.1} parent=171 // pred_fallthru
        _
    $region172: #{encoder_block_forward.1} parent=5 // pred_fallthru
      _
    %p1167 = scmp.le.s32.totalorder 1, %s92
    %p1168 = scmp.lt.s32.totalorder %s92, 3
    %p1169 = pnand %p1167, %p1168
    %p1170 = pneg %p1169
    // Predicated region
    $region181: #{encoder_block_forward.1} parent=5 // pred_check
      _
    $region182: #{encoder_block_forward.1} parent=5 // pred_check_branch
      %1172 = sbr.rel (%p1169) target = $region184
    $region183: #{encoder_block_forward.1} parent=5 // pred_region
      %s1173 = ssub.s32 %s92, 1
      %p1174 = scmp.lt.s32.totalorder %s97, 1
      %s1175 = scalar_select %p1174, %s97, 1
      %s1176 = smul.addr %s1175, 16
      %s1177 = smul.addr %s1176, 8
      %s1178 = scalar_lea.vmem %s1, %s1177
      %p1179 = pneg %p118
      %p1180 = pneg %p115
      %p1181 = scmp.lt.s32.totalorder %s97, 1
      %s1182 = scalar_select %p1181, %s97, 1
      %s1183 = smul.addr %s1182, 16
      %s1184 = smul.addr %s1183, 8
      %s1185 = scalar_lea.vmem %s3, %s1184
      %p1186 = pneg %p144
      %p1187 = pneg %p141
      %p1188 = pneg %p165
      %p1189 = pneg %p162
      %p1190 = pneg %p186
      %p1191 = pneg %p183
      %p1192 = pneg %p207
      %p1193 = pneg %p204
      %p1194 = pneg %p228
      %p1195 = pneg %p225
      %p1196 = pneg %p249
      %p1197 = pneg %p246
      %p1198 = pneg %p270
      %p1199 = pneg %p267
      %p1200 = pneg %p291
      %p1201 = pneg %p288
      %p1202 = pneg %p312
      %p1203 = pneg %p309
      %p1204 = pneg %p333
      %p1205 = pneg %p330
      %p1206 = pneg %p354
      %p1207 = pneg %p351
      %p1208 = pneg %p375
      %p1209 = pneg %p372
      %p1210 = pneg %p396
      %p1211 = pneg %p393
      %p1212 = pneg %p417
      %p1213 = pneg %p414
      %p1214 = pneg %p438
      %p1215 = pneg %p435
      %p1216 = pneg %p459
      %p1217 = pneg %p456
      %p1218 = pneg %p480
      %p1219 = pneg %p477
      %p1220 = pneg %p501
      %p1221 = pneg %p498
      %p1222 = pneg %p522
      %p1223 = pneg %p519
      %p1224 = pneg %p543
      %p1225 = pneg %p540
      %p1226 = pneg %p564
      %p1227 = pneg %p561
      %p1228 = pneg %p585
      %p1229 = pneg %p582
      %p1230 = pneg %p606
      %p1231 = pneg %p603
      %p1232 = pneg %p627
      %p1233 = pneg %p624
      %p1234 = pneg %p648
      %p1235 = pneg %p645
      %p1236 = pneg %p669
      %p1237 = pneg %p666
      %p1238 = pneg %p690
      %p1239 = pneg %p687
      %p1240 = pneg %p711
      %p1241 = pneg %p708
      %p1242 = pneg %p732
      %p1243 = pneg %p729
      %p1244 = pneg %p753
      %p1245 = pneg %p750
      %p1246 = pneg %p774
      %p1247 = pneg %p771
      %p1248 = pneg %p795
      %p1249 = pneg %p792
      %p1250 = pneg %p816
      %p1251 = pneg %p813
      %p1252 = pneg %p837
      %p1253 = pneg %p834
      %p1254 = pneg %p858
      %p1255 = pneg %p855
      %p1256 = pneg %p879
      %p1257 = pneg %p876
      %p1258 = pneg %p900
      %p1259 = pneg %p897
      %p1260 = pneg %p921
      %p1261 = pneg %p918
      %p1262 = pneg %p942
      %p1263 = pneg %p939
      %p1264 = pneg %p963
      %p1265 = pneg %p960
      %p1266 = pneg %p989
      %p1267 = pneg %p986
      %p1268 = scmp.lt.s32.totalorder %s97, 1
      %s1269 = scalar_select %p1268, %s97, 1
      %s1270 = smul.addr %s1269, 18
      %s1271 = smul.addr %s1270, 8
      %s1272 = scalar_lea.vmem %s83, %s1271
      %p1273 = pneg %p1015
      %p1274 = pneg %p1012
      %p1275 = scmp.lt.s32.totalorder %s97, 1
      %s1276 = scalar_select %p1275, %s97, 1
      %s1277 = smul.addr %s1276, 18
      %s1278 = smul.addr %s1277, 8
      %s1279 = scalar_lea.vmem %s85, %s1278
      %p1280 = scmp.lt.s32.totalorder %s97, 1
      %s1281 = scalar_select %p1280, %s97, 1
      %s1282 = smul.addr %s1281, 16
      %s1283 = smul.addr %s1282, 8
      %s1284 = scalar_lea.vmem %s1, %s1283
      %p1285 = scmp.lt.s32.totalorder %s97, 1
      %s1286 = scalar_select %p1285, %s97, 1
      %s1287 = smul.addr %s1286, 16
      %s1288 = smul.addr %s1287, 8
      %s1289 = scalar_lea.vmem %s3, %s1288
      %p1290 = scmp.lt.s32.totalorder %s97, 1
      %s1291 = scalar_select %p1290, %s97, 1
      %s1292 = smul.addr %s1291, 18
      %s1293 = smul.addr %s1292, 8
      %s1294 = scalar_lea.vmem %s83, %s1293
      %p1295 = scmp.lt.s32.totalorder %s97, 1
      %s1296 = scalar_select %p1295, %s97, 1
      %s1297 = smul.addr %s1296, 18
      %s1298 = smul.addr %s1297, 8
      %s1299 = scalar_lea.vmem %s85, %s1298
      %v1300 = vld [vmem:[%s1284] sm:$0xff]
      %v1301 = vld [vmem:[%s1284 + $0x8] sm:$0xff]
      %v1302 = vld [vmem:[%s1284 + $0x10] sm:$0xff]
      %v1303 = vld [vmem:[%s1284 + $0x18] sm:$0xff]
      %v1304 = vld [vmem:[%s1284 + $0x20] sm:$0xff]
      %v1305 = vld [vmem:[%s1284 + $0x28] sm:$0xff]
      %v1306 = vld [vmem:[%s1284 + $0x30] sm:$0xff]
      %v1307 = vld [vmem:[%s1284 + $0x38] sm:$0xff]
      %v1308 = vld [vmem:[%s1284 + $0x40] sm:$0xff]
      %v1309 = vld [vmem:[%s1284 + $0x48] sm:$0xff]
      %v1310 = vld [vmem:[%s1284 + $0x50] sm:$0xff]
      %v1311 = vld [vmem:[%s1284 + $0x58] sm:$0xff]
      %v1312 = vld [vmem:[%s1284 + $0x60] sm:$0xff]
      %v1313 = vld [vmem:[%s1284 + $0x68] sm:$0xff]
      %v1314 = vld [vmem:[%s1284 + $0x70] sm:$0xff]
      %v1315 = vld [vmem:[%s1284 + $0x78] sm:$0xff]
      %v1316 = vld [vmem:[%s1289] sm:$0xff]
      %v1317 = vld [vmem:[%s1289 + $0x8] sm:$0xff]
      %v1318 = vld [vmem:[%s1289 + $0x10] sm:$0xff]
      %v1319 = vld [vmem:[%s1289 + $0x18] sm:$0xff]
      %v1320 = vld [vmem:[%s1289 + $0x20] sm:$0xff]
      %v1321 = vld [vmem:[%s1289 + $0x28] sm:$0xff]
      %v1322 = vld [vmem:[%s1289 + $0x30] sm:$0xff]
      %v1323 = vld [vmem:[%s1289 + $0x38] sm:$0xff]
      %v1324 = vld [vmem:[%s1289 + $0x40] sm:$0xff]
      %v1325 = vld [vmem:[%s1289 + $0x48] sm:$0xff]
      %v1326 = vld [vmem:[%s1289 + $0x50] sm:$0xff]
      %v1327 = vld [vmem:[%s1289 + $0x58] sm:$0xff]
      %v1328 = vld [vmem:[%s1289 + $0x60] sm:$0xff]
      %v1329 = vld [vmem:[%s1289 + $0x68] sm:$0xff]
      %v1330 = vld [vmem:[%s1289 + $0x70] sm:$0xff]
      %v1331 = vld [vmem:[%s1289 + $0x78] sm:$0xff]
      %v1332 = vld [vmem:[%s5] sm:$0x1]
      %v1333 = vld [vmem:[%s7] sm:$0x1]
      %vm1334 = vcmask 523264
      %v1335 = vsel %vm1334, %v1300, 0.0
      %1336 = vadd.xlane.f32.xlu0 %v1335
      %v1337 = vpop.xlane.xlu0 %1336
      %v1338 = vsel %vm1334, %v1301, 0.0
      %1339 = vadd.xlane.f32.xlu0 %v1338
      %v1340 = vpop.xlane.xlu0 %1339
      %v1341 = vsel %vm1334, %v1302, 0.0
      %1342 = vadd.xlane.f32.xlu0 %v1341
      %v1343 = vpop.xlane.xlu0 %1342
      %v1344 = vsel %vm1334, %v1303, 0.0
      %1345 = vadd.xlane.f32.xlu0 %v1344
      %v1346 = vpop.xlane.xlu0 %1345
      %v1347 = vsel %vm1334, %v1304, 0.0
      %1348 = vadd.xlane.f32.xlu0 %v1347
      %v1349 = vpop.xlane.xlu0 %1348
      %v1350 = vsel %vm1334, %v1305, 0.0
      %1351 = vadd.xlane.f32.xlu0 %v1350
      %v1352 = vpop.xlane.xlu0 %1351
      %v1353 = vsel %vm1334, %v1306, 0.0
      %1354 = vadd.xlane.f32.xlu0 %v1353
      %v1355 = vpop.xlane.xlu0 %1354
      %v1356 = vsel %vm1334, %v1307, 0.0
      %1357 = vadd.xlane.f32.xlu0 %v1356
      %v1358 = vpop.xlane.xlu0 %1357
      %v1359 = vsel %vm1334, %v1308, 0.0
      %1360 = vadd.xlane.f32.xlu0 %v1359
      %v1361 = vpop.xlane.xlu0 %1360
      %v1362 = vsel %vm1334, %v1309, 0.0
      %1363 = vadd.xlane.f32.xlu0 %v1362
      %v1364 = vpop.xlane.xlu0 %1363
      %v1365 = vsel %vm1334, %v1310, 0.0
      %1366 = vadd.xlane.f32.xlu0 %v1365
      %v1367 = vpop.xlane.xlu0 %1366
      %v1368 = vsel %vm1334, %v1311, 0.0
      %1369 = vadd.xlane.f32.xlu0 %v1368
      %v1370 = vpop.xlane.xlu0 %1369
      %v1371 = vsel %vm1334, %v1312, 0.0
      %1372 = vadd.xlane.f32.xlu0 %v1371
      %v1373 = vpop.xlane.xlu0 %1372
      %v1374 = vsel %vm1334, %v1313, 0.0
      %1375 = vadd.xlane.f32.xlu0 %v1374
      %v1376 = vpop.xlane.xlu0 %1375
      %v1377 = vsel %vm1334, %v1314, 0.0
      %1378 = vadd.xlane.f32.xlu0 %v1377
      %v1379 = vpop.xlane.xlu0 %1378
      %v1380 = vsel %vm1334, %v1315, 0.0
      %1381 = vadd.xlane.f32.xlu0 %v1380
      %v1382 = vpop.xlane.xlu0 %1381
      %v1383 = vrcp.pop 64.0
      %v1384 = vmul.f32 %v1337, %v1383
      %v1385 = vmul.f32 %v1340, %v1383
      %v1386 = vmul.f32 %v1343, %v1383
      %v1387 = vmul.f32 %v1346, %v1383
      %v1388 = vmul.f32 %v1349, %v1383
      %v1389 = vmul.f32 %v1352, %v1383
      %v1390 = vmul.f32 %v1355, %v1383
      %v1391 = vmul.f32 %v1358, %v1383
      %v1392 = vmul.f32 %v1361, %v1383
      %v1393 = vmul.f32 %v1364, %v1383
      %v1394 = vmul.f32 %v1367, %v1383
      %v1395 = vmul.f32 %v1370, %v1383
      %v1396 = vmul.f32 %v1373, %v1383
      %v1397 = vmul.f32 %v1376, %v1383
      %v1398 = vmul.f32 %v1379, %v1383
      %v1399 = vmul.f32 %v1382, %v1383
      %v1400 = vsub.f32 %v1300, %v1384
      %v1401 = vsub.f32 %v1301, %v1385
      %v1402 = vsub.f32 %v1302, %v1386
      %v1403 = vsub.f32 %v1303, %v1387
      %v1404 = vsub.f32 %v1304, %v1388
      %v1405 = vsub.f32 %v1305, %v1389
      %v1406 = vsub.f32 %v1306, %v1390
      %v1407 = vsub.f32 %v1307, %v1391
      %v1408 = vsub.f32 %v1308, %v1392
      %v1409 = vsub.f32 %v1309, %v1393
      %v1410 = vsub.f32 %v1310, %v1394
      %v1411 = vsub.f32 %v1311, %v1395
      %v1412 = vsub.f32 %v1312, %v1396
      %v1413 = vsub.f32 %v1313, %v1397
      %v1414 = vsub.f32 %v1314, %v1398
      %v1415 = vsub.f32 %v1315, %v1399
      %v1416 = vmul.f32 %v1400, %v1400
      %v1417 = vmul.f32 %v1401, %v1401
      %v1418 = vmul.f32 %v1402, %v1402
      %v1419 = vmul.f32 %v1403, %v1403
      %v1420 = vmul.f32 %v1404, %v1404
      %v1421 = vmul.f32 %v1405, %v1405
      %v1422 = vmul.f32 %v1406, %v1406
      %v1423 = vmul.f32 %v1407, %v1407
      %v1424 = vmul.f32 %v1408, %v1408
      %v1425 = vmul.f32 %v1409, %v1409
      %v1426 = vmul.f32 %v1410, %v1410
      %v1427 = vmul.f32 %v1411, %v1411
      %v1428 = vmul.f32 %v1412, %v1412
      %v1429 = vmul.f32 %v1413, %v1413
      %v1430 = vmul.f32 %v1414, %v1414
      %v1431 = vmul.f32 %v1415, %v1415
      %v1432 = vsel %vm1334, %v1416, 0.0
      %1433 = vadd.xlane.f32.xlu0 %v1432
      %v1434 = vpop.xlane.xlu0 %1433
      %v1435 = vsel %vm1334, %v1417, 0.0
      %1436 = vadd.xlane.f32.xlu0 %v1435
      %v1437 = vpop.xlane.xlu0 %1436
      %v1438 = vsel %vm1334, %v1418, 0.0
      %1439 = vadd.xlane.f32.xlu0 %v1438
      %v1440 = vpop.xlane.xlu0 %1439
      %v1441 = vsel %vm1334, %v1419, 0.0
      %1442 = vadd.xlane.f32.xlu0 %v1441
      %v1443 = vpop.xlane.xlu0 %1442
      %v1444 = vsel %vm1334, %v1420, 0.0
      %1445 = vadd.xlane.f32.xlu0 %v1444
      %v1446 = vpop.xlane.xlu0 %1445
      %v1447 = vsel %vm1334, %v1421, 0.0
      %1448 = vadd.xlane.f32.xlu0 %v1447
      %v1449 = vpop.xlane.xlu0 %1448
      %v1450 = vsel %vm1334, %v1422, 0.0
      %1451 = vadd.xlane.f32.xlu0 %v1450
      %v1452 = vpop.xlane.xlu0 %1451
      %v1453 = vsel %vm1334, %v1423, 0.0
      %1454 = vadd.xlane.f32.xlu0 %v1453
      %v1455 = vpop.xlane.xlu0 %1454
      %v1456 = vsel %vm1334, %v1424, 0.0
      %1457 = vadd.xlane.f32.xlu0 %v1456
      %v1458 = vpop.xlane.xlu0 %1457
      %v1459 = vsel %vm1334, %v1425, 0.0
      %1460 = vadd.xlane.f32.xlu0 %v1459
      %v1461 = vpop.xlane.xlu0 %1460
      %v1462 = vsel %vm1334, %v1426, 0.0
      %1463 = vadd.xlane.f32.xlu0 %v1462
      %v1464 = vpop.xlane.xlu0 %1463
      %v1465 = vsel %vm1334, %v1427, 0.0
      %1466 = vadd.xlane.f32.xlu0 %v1465
      %v1467 = vpop.xlane.xlu0 %1466
      %v1468 = vsel %vm1334, %v1428, 0.0
      %1469 = vadd.xlane.f32.xlu0 %v1468
      %v1470 = vpop.xlane.xlu0 %1469
      %v1471 = vsel %vm1334, %v1429, 0.0
      %1472 = vadd.xlane.f32.xlu0 %v1471
      %v1473 = vpop.xlane.xlu0 %1472
      %v1474 = vsel %vm1334, %v1430, 0.0
      %1475 = vadd.xlane.f32.xlu0 %v1474
      %v1476 = vpop.xlane.xlu0 %1475
      %v1477 = vsel %vm1334, %v1431, 0.0
      %1478 = vadd.xlane.f32.xlu0 %v1477
      %v1479 = vpop.xlane.xlu0 %1478
      %v1480 = vmul.f32 %v1434, %v1383
      %v1481 = vmul.f32 %v1437, %v1383
      %v1482 = vmul.f32 %v1440, %v1383
      %v1483 = vmul.f32 %v1443, %v1383
      %v1484 = vmul.f32 %v1446, %v1383
      %v1485 = vmul.f32 %v1449, %v1383
      %v1486 = vmul.f32 %v1452, %v1383
      %v1487 = vmul.f32 %v1455, %v1383
      %v1488 = vmul.f32 %v1458, %v1383
      %v1489 = vmul.f32 %v1461, %v1383
      %v1490 = vmul.f32 %v1464, %v1383
      %v1491 = vmul.f32 %v1467, %v1383
      %v1492 = vmul.f32 %v1470, %v1383
      %v1493 = vmul.f32 %v1473, %v1383
      %v1494 = vmul.f32 %v1476, %v1383
      %v1495 = vmul.f32 %v1479, %v1383
      %v1496 = vadd.f32 %v1480, 1e-05
      %v1497 = vadd.f32 %v1481, 1e-05
      %v1498 = vadd.f32 %v1482, 1e-05
      %v1499 = vadd.f32 %v1483, 1e-05
      %v1500 = vadd.f32 %v1484, 1e-05
      %v1501 = vadd.f32 %v1485, 1e-05
      %v1502 = vadd.f32 %v1486, 1e-05
      %v1503 = vadd.f32 %v1487, 1e-05
      %v1504 = vadd.f32 %v1488, 1e-05
      %v1505 = vadd.f32 %v1489, 1e-05
      %v1506 = vadd.f32 %v1490, 1e-05
      %v1507 = vadd.f32 %v1491, 1e-05
      %v1508 = vadd.f32 %v1492, 1e-05
      %v1509 = vadd.f32 %v1493, 1e-05
      %v1510 = vadd.f32 %v1494, 1e-05
      %v1511 = vadd.f32 %v1495, 1e-05
      %v1512 = vrsqrt.pop %v1496
      %v1513 = vrsqrt.pop %v1497
      %v1514 = vrsqrt.pop %v1498
      %v1515 = vrsqrt.pop %v1499
      %v1516 = vrsqrt.pop %v1500
      %v1517 = vrsqrt.pop %v1501
      %v1518 = vrsqrt.pop %v1502
      %v1519 = vrsqrt.pop %v1503
      %v1520 = vrsqrt.pop %v1504
      %v1521 = vrsqrt.pop %v1505
      %v1522 = vrsqrt.pop %v1506
      %v1523 = vrsqrt.pop %v1507
      %v1524 = vrsqrt.pop %v1508
      %v1525 = vrsqrt.pop %v1509
      %v1526 = vrsqrt.pop %v1510
      %v1527 = vrsqrt.pop %v1511
      %v1528 = vmul.f32 %v1400, %v1512
      %v1529 = vmul.f32 %v1401, %v1513
      %v1530 = vmul.f32 %v1402, %v1514
      %v1531 = vmul.f32 %v1403, %v1515
      %v1532 = vmul.f32 %v1404, %v1516
      %v1533 = vmul.f32 %v1405, %v1517
      %v1534 = vmul.f32 %v1406, %v1518
      %v1535 = vmul.f32 %v1407, %v1519
      %v1536 = vmul.f32 %v1408, %v1520
      %v1537 = vmul.f32 %v1409, %v1521
      %v1538 = vmul.f32 %v1410, %v1522
      %v1539 = vmul.f32 %v1411, %v1523
      %v1540 = vmul.f32 %v1412, %v1524
      %v1541 = vmul.f32 %v1413, %v1525
      %v1542 = vmul.f32 %v1414, %v1526
      %v1543 = vmul.f32 %v1415, %v1527
      %v1545 = vlaneseq
      %v1546 = vshrl.u32 %v1545, 7
      %v1547 = vsub.s32 0, %v1546
      %v1548 = vrot.slane %v1332, %v1547
      %v1550 = vmul.f32 %v1528, %v1548
      %v1551 = vmul.f32 %v1529, %v1548
      %v1552 = vmul.f32 %v1530, %v1548
      %v1553 = vmul.f32 %v1531, %v1548
      %v1554 = vmul.f32 %v1532, %v1548
      %v1555 = vmul.f32 %v1533, %v1548
      %v1556 = vmul.f32 %v1534, %v1548
      %v1557 = vmul.f32 %v1535, %v1548
      %v1558 = vmul.f32 %v1536, %v1548
      %v1559 = vmul.f32 %v1537, %v1548
      %v1560 = vmul.f32 %v1538, %v1548
      %v1561 = vmul.f32 %v1539, %v1548
      %v1562 = vmul.f32 %v1540, %v1548
      %v1563 = vmul.f32 %v1541, %v1548
      %v1564 = vmul.f32 %v1542, %v1548
      %v1565 = vmul.f32 %v1543, %v1548
      %v1567 = vlaneseq
      %v1568 = vshrl.u32 %v1567, 7
      %v1569 = vsub.s32 0, %v1568
      %v1570 = vrot.slane %v1333, %v1569
      %v1572 = vadd.f32 %v1550, %v1570
      %v1573 = vadd.f32 %v1551, %v1570
      %v1574 = vadd.f32 %v1552, %v1570
      %v1575 = vadd.f32 %v1553, %v1570
      %v1576 = vadd.f32 %v1554, %v1570
      %v1577 = vadd.f32 %v1555, %v1570
      %v1578 = vadd.f32 %v1556, %v1570
      %v1579 = vadd.f32 %v1557, %v1570
      %v1580 = vadd.f32 %v1558, %v1570
      %v1581 = vadd.f32 %v1559, %v1570
      %v1582 = vadd.f32 %v1560, %v1570
      %v1583 = vadd.f32 %v1561, %v1570
      %v1584 = vadd.f32 %v1562, %v1570
      %v1585 = vadd.f32 %v1563, %v1570
      %v1586 = vadd.f32 %v1564, %v1570
      %v1587 = vadd.f32 %v1565, %v1570
      %v1588 = vld [vmem:[%s13] sm:$0x1]
      %v1590 = vlaneseq
      %v1591 = vshrl.u32 %v1590, 7
      %v1592 = vsub.s32 0, %v1591
      %v1593 = vrot.slane %v1588, %v1592
      %v1595 = vadd.f32 %v1593, 0.0
      %v1596 = vld [vmem:[%s9] sm:$0xff]
      %v1597 = vld [vmem:[%s9 + $0x8] sm:$0xff]
      %v1598 = vld [vmem:[%s9 + $0x10] sm:$0xff]
      %v1599 = vld [vmem:[%s9 + $0x18] sm:$0xff]
      %v1600 = vld [vmem:[%s9 + $0x20] sm:$0xff]
      %v1601 = vld [vmem:[%s9 + $0x28] sm:$0xff]
      %v1602 = vld [vmem:[%s9 + $0x30] sm:$0xff]
      %v1603 = vld [vmem:[%s9 + $0x38] sm:$0xff]
      %v1605 = vsel %vm1334, %v1572, 0
      %v1608 = vsel %vm1334, %v1573, 0
      %v1611 = vsel %vm1334, %v1574, 0
      %v1614 = vsel %vm1334, %v1575, 0
      %v1617 = vsel %vm1334, %v1576, 0
      %v1620 = vsel %vm1334, %v1577, 0
      %v1623 = vsel %vm1334, %v1578, 0
      %v1626 = vsel %vm1334, %v1579, 0
      %v1629 = vsel %vm1334, %v1580, 0
      %v1632 = vsel %vm1334, %v1581, 0
      %v1635 = vsel %vm1334, %v1582, 0
      %v1638 = vsel %vm1334, %v1583, 0
      %v1641 = vsel %vm1334, %v1584, 0
      %v1644 = vsel %vm1334, %v1585, 0
      %v1647 = vsel %vm1334, %v1586, 0
      %v1650 = vsel %vm1334, %v1587, 0
      %1652 = vmatprep.subr.mxu0 0.0
      %1653 = vmatpush1.msra.mxu0 %v1596
      %1654 = vmatprep.subr.mxu0 0.0
      %1655 = vmatpush1.msra.mxu0 %v1597
      %1656 = vmatprep.subr.mxu0 0.0
      %1657 = vmatpush1.msra.mxu0 %v1598
      %1658 = vmatprep.subr.mxu0 0.0
      %1659 = vmatpush1.msra.mxu0 %v1599
      %1660 = vmatprep.subr.mxu0 0.0
      %1661 = vmatpush1.msra.mxu0 %v1600
      %1662 = vmatprep.subr.mxu0 0.0
      %1663 = vmatpush1.msra.mxu0 %v1601
      %1664 = vmatprep.subr.mxu0 0.0
      %1665 = vmatpush1.msra.mxu0 %v1602
      %1666 = vmatprep.subr.mxu0 0.0
      %1667 = vmatpush1.msra.mxu0 %v1603
      %1668 = vmatprep.subr.mxu0 0.0
      %1669 = vmatpush1.msra.mxu0 0.0
      %1670 = vmatprep.subr.mxu0 0.0
      %1671 = vmatpush1.msra.mxu0 0.0
      %1672 = vmatprep.subr.mxu0 0.0
      %1673 = vmatpush1.msra.mxu0 0.0
      %1674 = vmatprep.subr.mxu0 0.0
      %1675 = vmatpush1.msra.mxu0 0.0
      %1676 = vmatprep.subr.mxu0 0.0
      %1677 = vmatpush1.msra.mxu0 0.0
      %1678 = vmatprep.subr.mxu0 0.0
      %1679 = vmatpush1.msra.mxu0 0.0
      %1680 = vmatprep.subr.mxu0 0.0
      %1681 = vmatpush1.msra.mxu0 0.0
      %1682 = vmatprep.subr.mxu0 0.0
      %1683 = vmatpush1.msra.mxu0 0.0
      %1684 = vmatprep.subr.mxu0 0.0
      %1685 = vmatpush1.msra.mxu0 0.0
      %1686 = vmatprep.subr.mxu0 0.0
      %1687 = vmatpush1.msra.mxu0 0.0
      %1688 = vmatprep.subr.mxu0 0.0
      %1689 = vmatpush1.msra.mxu0 0.0
      %1690 = vmatprep.subr.mxu0 0.0
      %1691 = vmatpush1.msra.mxu0 0.0
      %1692 = vmatprep.subr.mxu0 0.0
      %1693 = vmatpush1.msra.mxu0 0.0
      %1694 = vmatprep.subr.mxu0 0.0
      %1695 = vmatpush1.msra.mxu0 0.0
      %1696 = vmatprep.subr.mxu0 0.0
      %1697 = vmatpush1.msra.mxu0 0.0
      %1698 = vmatprep.subr.mxu0 0.0
      %1699 = vmatpush1.msra.mxu0 0.0
      %1700 = vmatprep.subr.mxu0 0.0
      %1701 = vmatpush1.msra.mxu0 0.0
      %1702 = vmatprep.subr.mxu0 0.0
      %1703 = vmatpush1.msra.mxu0 0.0
      %1704 = vmatprep.subr.mxu0 0.0
      %1705 = vmatpush1.msra.mxu0 0.0
      %1706 = vmatprep.subr.mxu0 0.0
      %1707 = vmatpush1.msra.mxu0 0.0
      %1708 = vmatprep.subr.mxu0 0.0
      %1709 = vmatpush1.msra.mxu0 0.0
      %1710 = vmatprep.subr.mxu0 0.0
      %1711 = vmatpush1.msra.mxu0 0.0
      %1712 = vmatprep.subr.mxu0 0.0
      %1713 = vmatpush1.msra.mxu0 0.0
      %1714 = vmatprep.subr.mxu0 0.0
      %1715 = vmatpush1.msra.mxu0 0.0
      %1716 = vmatprep.mubr.f32.mxu0 0.0
      %1717 = vmatmul.mubr.f32.gmra.mrb[0].mxu0 %v1605
      %v1718 = vpop.f32.mrb[0].mxu0
      %v1719 = vadd.f32 0.0, %v1718
      %v1720 = vpop.f32.mrb[0].mxu0
      %1721 = vmatprep.mubr.f32.mxu0 0.0
      %1722 = vmatmul.mubr.f32.gmra.mrb[0].mxu0 %v1608
      %v1723 = vpop.f32.mrb[0].mxu0
      %v1724 = vadd.f32 0.0, %v1723
      %v1725 = vpop.f32.mrb[0].mxu0
      %1726 = vmatprep.mubr.f32.mxu0 0.0
      %1727 = vmatmul.mubr.f32.gmra.mrb[0].mxu0 %v1611
      %v1728 = vpop.f32.mrb[0].mxu0
      %v1729 = vadd.f32 0.0, %v1728
      %v1730 = vpop.f32.mrb[0].mxu0
      %1731 = vmatprep.mubr.f32.mxu0 0.0
      %1732 = vmatmul.mubr.f32.gmra.mrb[0].mxu0 %v1614
      %v1733 = vpop.f32.mrb[0].mxu0
      %v1734 = vadd.f32 0.0, %v1733
      %v1735 = vpop.f32.mrb[0].mxu0
      %1736 = vmatprep.mubr.f32.mxu0 0.0
      %1737 = vmatmul.mubr.f32.gmra.mrb[0].mxu0 %v1617
      %v1738 = vpop.f32.mrb[0].mxu0
      %v1739 = vadd.f32 0.0, %v1738
      %v1740 = vpop.f32.mrb[0].mxu0
      %1741 = vmatprep.mubr.f32.mxu0 0.0
      %1742 = vmatmul.mubr.f32.gmra.mrb[0].mxu0 %v1620
      %v1743 = vpop.f32.mrb[0].mxu0
      %v1744 = vadd.f32 0.0, %v1743
      %v1745 = vpop.f32.mrb[0].mxu0
      %1746 = vmatprep.mubr.f32.mxu0 0.0
      %1747 = vmatmul.mubr.f32.gmra.mrb[0].mxu0 %v1623
      %v1748 = vpop.f32.mrb[0].mxu0
      %v1749 = vadd.f32 0.0, %v1748
      %v1750 = vpop.f32.mrb[0].mxu0
      %1751 = vmatprep.mubr.f32.mxu0 0.0
      %1752 = vmatmul.mubr.f32.gmra.mrb[0].mxu0 %v1626
      %v1753 = vpop.f32.mrb[0].mxu0
      %v1754 = vadd.f32 0.0, %v1753
      %v1755 = vpop.f32.mrb[0].mxu0
      %1756 = vmatprep.mubr.f32.mxu0 0.0
      %1757 = vmatmul.mubr.f32.gmra.mrb[0].mxu0 %v1629
      %v1758 = vpop.f32.mrb[0].mxu0
      %v1759 = vadd.f32 0.0, %v1758
      %v1760 = vpop.f32.mrb[0].mxu0
      %1761 = vmatprep.mubr.f32.mxu0 0.0
      %1762 = vmatmul.mubr.f32.gmra.mrb[0].mxu0 %v1632
      %v1763 = vpop.f32.mrb[0].mxu0
      %v1764 = vadd.f32 0.0, %v1763
      %v1765 = vpop.f32.mrb[0].mxu0
      %1766 = vmatprep.mubr.f32.mxu0 0.0
      %1767 = vmatmul.mubr.f32.gmra.mrb[0].mxu0 %v1635
      %v1768 = vpop.f32.mrb[0].mxu0
      %v1769 = vadd.f32 0.0, %v1768
      %v1770 = vpop.f32.mrb[0].mxu0
      %1771 = vmatprep.mubr.f32.mxu0 0.0
      %1772 = vmatmul.mubr.f32.gmra.mrb[0].mxu0 %v1638
      %v1773 = vpop.f32.mrb[0].mxu0
      %v1774 = vadd.f32 0.0, %v1773
      %v1775 = vpop.f32.mrb[0].mxu0
      %1776 = vmatprep.mubr.f32.mxu0 0.0
      %1777 = vmatmul.mubr.f32.gmra.mrb[0].mxu0 %v1641
      %v1778 = vpop.f32.mrb[0].mxu0
      %v1779 = vadd.f32 0.0, %v1778
      %v1780 = vpop.f32.mrb[0].mxu0
      %1781 = vmatprep.mubr.f32.mxu0 0.0
      %1782 = vmatmul.mubr.f32.gmra.mrb[0].mxu0 %v1644
      %v1783 = vpop.f32.mrb[0].mxu0
      %v1784 = vadd.f32 0.0, %v1783
      %v1785 = vpop.f32.mrb[0].mxu0
      %1786 = vmatprep.mubr.f32.mxu0 0.0
      %1787 = vmatmul.mubr.f32.gmra.mrb[0].mxu0 %v1647
      %v1788 = vpop.f32.mrb[0].mxu0
      %v1789 = vadd.f32 0.0, %v1788
      %v1790 = vpop.f32.mrb[0].mxu0
      %1791 = vmatprep.mubr.f32.mxu0 0.0
      %1792 = vmatmul.mubr.f32.gmra.mrb[0].mxu0 %v1650
      %v1793 = vpop.f32.mrb[0].mxu0
      %v1794 = vadd.f32 0.0, %v1793
      %v1795 = vpop.f32.mrb[0].mxu0
      %1796 = vdwg.mxu0
      %v1798 = vsel %vm1334, %v1719, 0
      %v1801 = vsel %vm1334, %v1724, 0
      %v1804 = vsel %vm1334, %v1729, 0
      %v1807 = vsel %vm1334, %v1734, 0
      %v1810 = vsel %vm1334, %v1739, 0
      %v1813 = vsel %vm1334, %v1744, 0
      %v1816 = vsel %vm1334, %v1749, 0
      %v1819 = vsel %vm1334, %v1754, 0
      %v1822 = vsel %vm1334, %v1759, 0
      %v1825 = vsel %vm1334, %v1764, 0
      %v1828 = vsel %vm1334, %v1769, 0
      %v1831 = vsel %vm1334, %v1774, 0
      %v1834 = vsel %vm1334, %v1779, 0
      %v1837 = vsel %vm1334, %v1784, 0
      %v1840 = vsel %vm1334, %v1789, 0
      %v1843 = vsel %vm1334, %v1794, 0
      %1845 = vmatprep.subr.mxu0 0.0
      %1846 = vmatpush1.xpose.msra.mxu0 %v1605
      %1847 = vmatprep.subr.mxu0 0.0
      %1848 = vmatpush1.xpose.msra.mxu0 %v1608
      %1849 = vmatprep.subr.mxu0 0.0
      %1850 = vmatpush1.xpose.msra.mxu0 %v1611
      %1851 = vmatprep.subr.mxu0 0.0
      %1852 = vmatpush1.xpose.msra.mxu0 %v1614
      %1853 = vmatprep.subr.mxu0 0.0
      %1854 = vmatpush1.xpose.msra.mxu0 %v1617
      %1855 = vmatprep.subr.mxu0 0.0
      %1856 = vmatpush1.xpose.msra.mxu0 %v1620
      %1857 = vmatprep.subr.mxu0 0.0
      %1858 = vmatpush1.xpose.msra.mxu0 %v1623
      %1859 = vmatprep.subr.mxu0 0.0
      %1860 = vmatpush1.xpose.msra.mxu0 %v1626
      %1861 = vmatprep.subr.mxu0 0.0
      %1862 = vmatpush1.xpose.msra.mxu0 %v1629
      %1863 = vmatprep.subr.mxu0 0.0
      %1864 = vmatpush1.xpose.msra.mxu0 %v1632
      %1865 = vmatprep.subr.mxu0 0.0
      %1866 = vmatpush1.xpose.msra.mxu0 %v1635
      %1867 = vmatprep.subr.mxu0 0.0
      %1868 = vmatpush1.xpose.msra.mxu0 %v1638
      %1869 = vmatprep.subr.mxu0 0.0
      %1870 = vmatpush1.xpose.msra.mxu0 %v1641
      %1871 = vmatprep.subr.mxu0 0.0
      %1872 = vmatpush1.xpose.msra.mxu0 %v1644
      %1873 = vmatprep.subr.mxu0 0.0
      %1874 = vmatpush1.xpose.msra.mxu0 %v1647
      %1875 = vmatprep.subr.mxu0 0.0
      %1876 = vmatpush1.xpose.msra.mxu0 %v1650
      %1877 = vmatprep.subr.mxu0 0.0
      %1878 = vmatpush1.xpose.msra.mxu0 0.0
      %1879 = vmatprep.subr.mxu0 0.0
      %1880 = vmatpush1.xpose.msra.mxu0 0.0
      %1881 = vmatprep.subr.mxu0 0.0
      %1882 = vmatpush1.xpose.msra.mxu0 0.0
      %1883 = vmatprep.subr.mxu0 0.0
      %1884 = vmatpush1.xpose.msra.mxu0 0.0
      %1885 = vmatprep.subr.mxu0 0.0
      %1886 = vmatpush1.xpose.msra.mxu0 0.0
      %1887 = vmatprep.subr.mxu0 0.0
      %1888 = vmatpush1.xpose.msra.mxu0 0.0
      %1889 = vmatprep.subr.mxu0 0.0
      %1890 = vmatpush1.xpose.msra.mxu0 0.0
      %1891 = vmatprep.subr.mxu0 0.0
      %1892 = vmatpush1.xpose.msra.mxu0 0.0
      %1893 = vmatprep.subr.mxu0 0.0
      %1894 = vmatpush1.xpose.msra.mxu0 0.0
      %1895 = vmatprep.subr.mxu0 0.0
      %1896 = vmatpush1.xpose.msra.mxu0 0.0
      %1897 = vmatprep.subr.mxu0 0.0
      %1898 = vmatpush1.xpose.msra.mxu0 0.0
      %1899 = vmatprep.subr.mxu0 0.0
      %1900 = vmatpush1.xpose.msra.mxu0 0.0
      %1901 = vmatprep.subr.mxu0 0.0
      %1902 = vmatpush1.xpose.msra.mxu0 0.0
      %1903 = vmatprep.subr.mxu0 0.0
      %1904 = vmatpush1.xpose.msra.mxu0 0.0
      %1905 = vmatprep.subr.mxu0 0.0
      %1906 = vmatpush1.xpose.msra.mxu0 0.0
      %1907 = vmatprep.subr.mxu0 0.0
      %1908 = vmatpush1.xpose.msra.mxu0 0.0
      %1909 = vmatprep.mubr.f32.mxu0 0.0
      %1910 = vmatmul.mubr.f32.gmra.mrb[0].mxu0 %v1798
      %v1911 = vpop.f32.mrb[0].mxu0
      %v1912 = vadd.f32 0.0, %v1911
      %v1913 = vpop.f32.mrb[0].mxu0
      %1914 = vmatprep.mubr.f32.mxu0 0.0
      %1915 = vmatmul.mubr.f32.gmra.mrb[0].mxu0 %v1801
      %v1916 = vpop.f32.mrb[0].mxu0
      %v1917 = vadd.f32 0.0, %v1916
      %v1918 = vpop.f32.mrb[0].mxu0
      %1919 = vmatprep.mubr.f32.mxu0 0.0
      %1920 = vmatmul.mubr.f32.gmra.mrb[0].mxu0 %v1804
      %v1921 = vpop.f32.mrb[0].mxu0
      %v1922 = vadd.f32 0.0, %v1921
      %v1923 = vpop.f32.mrb[0].mxu0
      %1924 = vmatprep.mubr.f32.mxu0 0.0
      %1925 = vmatmul.mubr.f32.gmra.mrb[0].mxu0 %v1807
      %v1926 = vpop.f32.mrb[0].mxu0
      %v1927 = vadd.f32 0.0, %v1926
      %v1928 = vpop.f32.mrb[0].mxu0
      %1929 = vmatprep.mubr.f32.mxu0 0.0
      %1930 = vmatmul.mubr.f32.gmra.mrb[0].mxu0 %v1810
      %v1931 = vpop.f32.mrb[0].mxu0
      %v1932 = vadd.f32 0.0, %v1931
      %v1933 = vpop.f32.mrb[0].mxu0
      %1934 = vmatprep.mubr.f32.mxu0 0.0
      %1935 = vmatmul.mubr.f32.gmra.mrb[0].mxu0 %v1813
      %v1936 = vpop.f32.mrb[0].mxu0
      %v1937 = vadd.f32 0.0, %v1936
      %v1938 = vpop.f32.mrb[0].mxu0
      %1939 = vmatprep.mubr.f32.mxu0 0.0
      %1940 = vmatmul.mubr.f32.gmra.mrb[0].mxu0 %v1816
      %v1941 = vpop.f32.mrb[0].mxu0
      %v1942 = vadd.f32 0.0, %v1941
      %v1943 = vpop.f32.mrb[0].mxu0
      %1944 = vmatprep.mubr.f32.mxu0 0.0
      %1945 = vmatmul.mubr.f32.gmra.mrb[0].mxu0 %v1819
      %v1946 = vpop.f32.mrb[0].mxu0
      %v1947 = vadd.f32 0.0, %v1946
      %v1948 = vpop.f32.mrb[0].mxu0
      %1949 = vmatprep.mubr.f32.mxu0 0.0
      %1950 = vmatmul.mubr.f32.gmra.mrb[0].mxu0 %v1822
      %v1951 = vpop.f32.mrb[0].mxu0
      %v1952 = vadd.f32 0.0, %v1951
      %v1953 = vpop.f32.mrb[0].mxu0
      %1954 = vmatprep.mubr.f32.mxu0 0.0
      %1955 = vmatmul.mubr.f32.gmra.mrb[0].mxu0 %v1825
      %v1956 = vpop.f32.mrb[0].mxu0
      %v1957 = vadd.f32 0.0, %v1956
      %v1958 = vpop.f32.mrb[0].mxu0
      %1959 = vmatprep.mubr.f32.mxu0 0.0
      %1960 = vmatmul.mubr.f32.gmra.mrb[0].mxu0 %v1828
      %v1961 = vpop.f32.mrb[0].mxu0
      %v1962 = vadd.f32 0.0, %v1961
      %v1963 = vpop.f32.mrb[0].mxu0
      %1964 = vmatprep.mubr.f32.mxu0 0.0
      %1965 = vmatmul.mubr.f32.gmra.mrb[0].mxu0 %v1831
      %v1966 = vpop.f32.mrb[0].mxu0
      %v1967 = vadd.f32 0.0, %v1966
      %v1968 = vpop.f32.mrb[0].mxu0
      %1969 = vmatprep.mubr.f32.mxu0 0.0
      %1970 = vmatmul.mubr.f32.gmra.mrb[0].mxu0 %v1834
      %v1971 = vpop.f32.mrb[0].mxu0
      %v1972 = vadd.f32 0.0, %v1971
      %v1973 = vpop.f32.mrb[0].mxu0
      %1974 = vmatprep.mubr.f32.mxu0 0.0
      %1975 = vmatmul.mubr.f32.gmra.mrb[0].mxu0 %v1837
      %v1976 = vpop.f32.mrb[0].mxu0
      %v1977 = vadd.f32 0.0, %v1976
      %v1978 = vpop.f32.mrb[0].mxu0
      %1979 = vmatprep.mubr.f32.mxu0 0.0
      %1980 = vmatmul.mubr.f32.gmra.mrb[0].mxu0 %v1840
      %v1981 = vpop.f32.mrb[0].mxu0
      %v1982 = vadd.f32 0.0, %v1981
      %v1983 = vpop.f32.mrb[0].mxu0
      %1984 = vmatprep.mubr.f32.mxu0 0.0
      %1985 = vmatmul.mubr.f32.gmra.mrb[0].mxu0 %v1843
      %v1986 = vpop.f32.mrb[0].mxu0
      %v1987 = vadd.f32 0.0, %v1986
      %v1988 = vpop.f32.mrb[0].mxu0
      %1989 = vdwg.mxu0
      %1990 = vmax.xlane.f32.xlu0 %v1912
      %v1991 = vpop.xlane.xlu0 %1990
      %1992 = vmax.xlane.f32.xlu0 %v1917
      %v1993 = vpop.xlane.xlu0 %1992
      %1994 = vmax.xlane.f32.xlu0 %v1922
      %v1995 = vpop.xlane.xlu0 %1994
      %1996 = vmax.xlane.f32.xlu0 %v1927
      %v1997 = vpop.xlane.xlu0 %1996
      %1998 = vmax.xlane.f32.xlu0 %v1932
      %v1999 = vpop.xlane.xlu0 %1998
      %2000 = vmax.xlane.f32.xlu0 %v1937
      %v2001 = vpop.xlane.xlu0 %2000
      %2002 = vmax.xlane.f32.xlu0 %v1942
      %v2003 = vpop.xlane.xlu0 %2002
      %2004 = vmax.xlane.f32.xlu0 %v1947
      %v2005 = vpop.xlane.xlu0 %2004
      %2006 = vmax.xlane.f32.xlu0 %v1952
      %v2007 = vpop.xlane.xlu0 %2006
      %2008 = vmax.xlane.f32.xlu0 %v1957
      %v2009 = vpop.xlane.xlu0 %2008
      %2010 = vmax.xlane.f32.xlu0 %v1962
      %v2011 = vpop.xlane.xlu0 %2010
      %2012 = vmax.xlane.f32.xlu0 %v1967
      %v2013 = vpop.xlane.xlu0 %2012
      %2014 = vmax.xlane.f32.xlu0 %v1972
      %v2015 = vpop.xlane.xlu0 %2014
      %2016 = vmax.xlane.f32.xlu0 %v1977
      %v2017 = vpop.xlane.xlu0 %2016
      %2018 = vmax.xlane.f32.xlu0 %v1982
      %v2019 = vpop.xlane.xlu0 %2018
      %2020 = vmax.xlane.f32.xlu0 %v1987
      %v2021 = vpop.xlane.xlu0 %2020
      %v2022 = vsub.f32 %v1912, %v1991
      %v2023 = vsub.f32 %v1917, %v1993
      %v2024 = vsub.f32 %v1922, %v1995
      %v2025 = vsub.f32 %v1927, %v1997
      %v2026 = vsub.f32 %v1932, %v1999
      %v2027 = vsub.f32 %v1937, %v2001
      %v2028 = vsub.f32 %v1942, %v2003
      %v2029 = vsub.f32 %v1947, %v2005
      %v2030 = vsub.f32 %v1952, %v2007
      %v2031 = vsub.f32 %v1957, %v2009
      %v2032 = vsub.f32 %v1962, %v2011
      %v2033 = vsub.f32 %v1967, %v2013
      %v2034 = vsub.f32 %v1972, %v2015
      %v2035 = vsub.f32 %v1977, %v2017
      %v2036 = vsub.f32 %v1982, %v2019
      %v2037 = vsub.f32 %v1987, %v2021
      %v2038 = vmul.f32 %v2022, 1.442695
      %v2039 = vpow.pop %v2038
      %v2040 = vmul.f32 %v2023, 1.442695
      %v2041 = vpow.pop %v2040
      %v2042 = vmul.f32 %v2024, 1.442695
      %v2043 = vpow.pop %v2042
      %v2044 = vmul.f32 %v2025, 1.442695
      %v2045 = vpow.pop %v2044
      %v2046 = vmul.f32 %v2026, 1.442695
      %v2047 = vpow.pop %v2046
      %v2048 = vmul.f32 %v2027, 1.442695
      %v2049 = vpow.pop %v2048
      %v2050 = vmul.f32 %v2028, 1.442695
      %v2051 = vpow.pop %v2050
      %v2052 = vmul.f32 %v2029, 1.442695
      %v2053 = vpow.pop %v2052
      %v2054 = vmul.f32 %v2030, 1.442695
      %v2055 = vpow.pop %v2054
      %v2056 = vmul.f32 %v2031, 1.442695
      %v2057 = vpow.pop %v2056
      %v2058 = vmul.f32 %v2032, 1.442695
      %v2059 = vpow.pop %v2058
      %v2060 = vmul.f32 %v2033, 1.442695
      %v2061 = vpow.pop %v2060
      %v2062 = vmul.f32 %v2034, 1.442695
      %v2063 = vpow.pop %v2062
      %v2064 = vmul.f32 %v2035, 1.442695
      %v2065 = vpow.pop %v2064
      %v2066 = vmul.f32 %v2036, 1.442695
      %v2067 = vpow.pop %v2066
      %v2068 = vmul.f32 %v2037, 1.442695
      %v2069 = vpow.pop %v2068
      %2070 = vadd.xlane.f32.xlu0 %v2039
      %v2071 = vpop.xlane.xlu0 %2070
      %2072 = vadd.xlane.f32.xlu0 %v2041
      %v2073 = vpop.xlane.xlu0 %2072
      %2074 = vadd.xlane.f32.xlu0 %v2043
      %v2075 = vpop.xlane.xlu0 %2074
      %2076 = vadd.xlane.f32.xlu0 %v2045
      %v2077 = vpop.xlane.xlu0 %2076
      %2078 = vadd.xlane.f32.xlu0 %v2047
      %v2079 = vpop.xlane.xlu0 %2078
      %2080 = vadd.xlane.f32.xlu0 %v2049
      %v2081 = vpop.xlane.xlu0 %2080
      %2082 = vadd.xlane.f32.xlu0 %v2051
      %v2083 = vpop.xlane.xlu0 %2082
      %2084 = vadd.xlane.f32.xlu0 %v2053
      %v2085 = vpop.xlane.xlu0 %2084
      %2086 = vadd.xlane.f32.xlu0 %v2055
      %v2087 = vpop.xlane.xlu0 %2086
      %2088 = vadd.xlane.f32.xlu0 %v2057
      %v2089 = vpop.xlane.xlu0 %2088
      %2090 = vadd.xlane.f32.xlu0 %v2059
      %v2091 = vpop.xlane.xlu0 %2090
      %2092 = vadd.xlane.f32.xlu0 %v2061
      %v2093 = vpop.xlane.xlu0 %2092
      %2094 = vadd.xlane.f32.xlu0 %v2063
      %v2095 = vpop.xlane.xlu0 %2094
      %2096 = vadd.xlane.f32.xlu0 %v2065
      %v2097 = vpop.xlane.xlu0 %2096
      %2098 = vadd.xlane.f32.xlu0 %v2067
      %v2099 = vpop.xlane.xlu0 %2098
      %2100 = vadd.xlane.f32.xlu0 %v2069
      %v2101 = vpop.xlane.xlu0 %2100
      %v2102 = vrcp.pop %v2071
      %v2103 = vrcp.pop %v2073
      %v2104 = vrcp.pop %v2075
      %v2105 = vrcp.pop %v2077
      %v2106 = vrcp.pop %v2079
      %v2107 = vrcp.pop %v2081
      %v2108 = vrcp.pop %v2083
      %v2109 = vrcp.pop %v2085
      %v2110 = vrcp.pop %v2087
      %v2111 = vrcp.pop %v2089
      %v2112 = vrcp.pop %v2091
      %v2113 = vrcp.pop %v2093
      %v2114 = vrcp.pop %v2095
      %v2115 = vrcp.pop %v2097
      %v2116 = vrcp.pop %v2099
      %v2117 = vrcp.pop %v2101
      %v2118 = vmul.f32 %v2039, %v2102
      %v2119 = vmul.f32 %v2041, %v2103
      %v2120 = vmul.f32 %v2043, %v2104
      %v2121 = vmul.f32 %v2045, %v2105
      %v2122 = vmul.f32 %v2047, %v2106
      %v2123 = vmul.f32 %v2049, %v2107
      %v2124 = vmul.f32 %v2051, %v2108
      %v2125 = vmul.f32 %v2053, %v2109
      %v2126 = vmul.f32 %v2055, %v2110
      %v2127 = vmul.f32 %v2057, %v2111
      %v2128 = vmul.f32 %v2059, %v2112
      %v2129 = vmul.f32 %v2061, %v2113
      %v2130 = vmul.f32 %v2063, %v2114
      %v2131 = vmul.f32 %v2065, %v2115
      %v2132 = vmul.f32 %v2067, %v2116
      %v2133 = vmul.f32 %v2069, %v2117
      %v2134 = vld [vmem:[%s11] sm:$0xff]
      %v2135 = vld [vmem:[%s11 + $0x8] sm:$0xff]
      %v2136 = vld [vmem:[%s11 + $0x10] sm:$0xff]
      %v2137 = vld [vmem:[%s11 + $0x18] sm:$0xff]
      %v2138 = vld [vmem:[%s11 + $0x20] sm:$0xff]
      %v2139 = vld [vmem:[%s11 + $0x28] sm:$0xff]
      %v2140 = vld [vmem:[%s11 + $0x30] sm:$0xff]
      %v2141 = vld [vmem:[%s11 + $0x38] sm:$0xff]
      %2142 = vmatprep.subr.mxu0 0.0
      %2143 = vmatpush1.msra.mxu0 %v2134
      %2144 = vmatprep.subr.mxu0 0.0
      %2145 = vmatpush1.msra.mxu0 %v2135
      %2146 = vmatprep.subr.mxu0 0.0
      %2147 = vmatpush1.msra.mxu0 %v2136
      %2148 = vmatprep.subr.mxu0 0.0
      %2149 = vmatpush1.msra.mxu0 %v2137
      %2150 = vmatprep.subr.mxu0 0.0
      %2151 = vmatpush1.msra.mxu0 %v2138
      %2152 = vmatprep.subr.mxu0 0.0
      %2153 = vmatpush1.msra.mxu0 %v2139
      %2154 = vmatprep.subr.mxu0 0.0
      %2155 = vmatpush1.msra.mxu0 %v2140
      %2156 = vmatprep.subr.mxu0 0.0
      %2157 = vmatpush1.msra.mxu0 %v2141
      %2158 = vmatprep.subr.mxu0 0.0
      %2159 = vmatpush1.msra.mxu0 0.0
      %2160 = vmatprep.subr.mxu0 0.0
      %2161 = vmatpush1.msra.mxu0 0.0
      %2162 = vmatprep.subr.mxu0 0.0
      %2163 = vmatpush1.msra.mxu0 0.0
      %2164 = vmatprep.subr.mxu0 0.0
      %2165 = vmatpush1.msra.mxu0 0.0
      %2166 = vmatprep.subr.mxu0 0.0
      %2167 = vmatpush1.msra.mxu0 0.0
      %2168 = vmatprep.subr.mxu0 0.0
      %2169 = vmatpush1.msra.mxu0 0.0
      %2170 = vmatprep.subr.mxu0 0.0
      %2171 = vmatpush1.msra.mxu0 0.0
      %2172 = vmatprep.subr.mxu0 0.0
      %2173 = vmatpush1.msra.mxu0 0.0
      %2174 = vmatprep.subr.mxu0 0.0
      %2175 = vmatpush1.msra.mxu0 0.0
      %2176 = vmatprep.subr.mxu0 0.0
      %2177 = vmatpush1.msra.mxu0 0.0
      %2178 = vmatprep.subr.mxu0 0.0
      %2179 = vmatpush1.msra.mxu0 0.0
      %2180 = vmatprep.subr.mxu0 0.0
      %2181 = vmatpush1.msra.mxu0 0.0
      %2182 = vmatprep.subr.mxu0 0.0
      %2183 = vmatpush1.msra.mxu0 0.0
      %2184 = vmatprep.subr.mxu0 0.0
      %2185 = vmatpush1.msra.mxu0 0.0
      %2186 = vmatprep.subr.mxu0 0.0
      %2187 = vmatpush1.msra.mxu0 0.0
      %2188 = vmatprep.subr.mxu0 0.0
      %2189 = vmatpush1.msra.mxu0 0.0
      %2190 = vmatprep.subr.mxu0 0.0
      %2191 = vmatpush1.msra.mxu0 0.0
      %2192 = vmatprep.subr.mxu0 0.0
      %2193 = vmatpush1.msra.mxu0 0.0
      %2194 = vmatprep.subr.mxu0 0.0
      %2195 = vmatpush1.msra.mxu0 0.0
      %2196 = vmatprep.subr.mxu0 0.0
      %2197 = vmatpush1.msra.mxu0 0.0
      %2198 = vmatprep.subr.mxu0 0.0
      %2199 = vmatpush1.msra.mxu0 0.0
      %2200 = vmatprep.subr.mxu0 0.0
      %2201 = vmatpush1.msra.mxu0 0.0
      %2202 = vmatprep.subr.mxu0 0.0
      %2203 = vmatpush1.msra.mxu0 0.0
      %2204 = vmatprep.subr.mxu0 0.0
      %2205 = vmatpush1.msra.mxu0 0.0
      %2206 = vmatprep.mubr.f32.mxu0 0.0
      %2207 = vmatmul.mubr.f32.gmra.mrb[0].mxu0 %v1605
      %v2208 = vpop.f32.mrb[0].mxu0
      %v2209 = vadd.f32 0.0, %v2208
      %v2210 = vpop.f32.mrb[0].mxu0
      %2211 = vmatprep.mubr.f32.mxu0 0.0
      %2212 = vmatmul.mubr.f32.gmra.mrb[0].mxu0 %v1608
      %v2213 = vpop.f32.mrb[0].mxu0
      %v2214 = vadd.f32 0.0, %v2213
      %v2215 = vpop.f32.mrb[0].mxu0
      %2216 = vmatprep.mubr.f32.mxu0 0.0
      %2217 = vmatmul.mubr.f32.gmra.mrb[0].mxu0 %v1611
      %v2218 = vpop.f32.mrb[0].mxu0
      %v2219 = vadd.f32 0.0, %v2218
      %v2220 = vpop.f32.mrb[0].mxu0
      %2221 = vmatprep.mubr.f32.mxu0 0.0
      %2222 = vmatmul.mubr.f32.gmra.mrb[0].mxu0 %v1614
      %v2223 = vpop.f32.mrb[0].mxu0
      %v2224 = vadd.f32 0.0, %v2223
      %v2225 = vpop.f32.mrb[0].mxu0
      %2226 = vmatprep.mubr.f32.mxu0 0.0
      %2227 = vmatmul.mubr.f32.gmra.mrb[0].mxu0 %v1617
      %v2228 = vpop.f32.mrb[0].mxu0
      %v2229 = vadd.f32 0.0, %v2228
      %v2230 = vpop.f32.mrb[0].mxu0
      %2231 = vmatprep.mubr.f32.mxu0 0.0
      %2232 = vmatmul.mubr.f32.gmra.mrb[0].mxu0 %v1620
      %v2233 = vpop.f32.mrb[0].mxu0
      %v2234 = vadd.f32 0.0, %v2233
      %v2235 = vpop.f32.mrb[0].mxu0
      %2236 = vmatprep.mubr.f32.mxu0 0.0
      %2237 = vmatmul.mubr.f32.gmra.mrb[0].mxu0 %v1623
      %v2238 = vpop.f32.mrb[0].mxu0
      %v2239 = vadd.f32 0.0, %v2238
      %v2240 = vpop.f32.mrb[0].mxu0
      %2241 = vmatprep.mubr.f32.mxu0 0.0
      %2242 = vmatmul.mubr.f32.gmra.mrb[0].mxu0 %v1626
      %v2243 = vpop.f32.mrb[0].mxu0
      %v2244 = vadd.f32 0.0, %v2243
      %v2245 = vpop.f32.mrb[0].mxu0
      %2246 = vmatprep.mubr.f32.mxu0 0.0
      %2247 = vmatmul.mubr.f32.gmra.mrb[0].mxu0 %v1629
      %v2248 = vpop.f32.mrb[0].mxu0
      %v2249 = vadd.f32 0.0, %v2248
      %v2250 = vpop.f32.mrb[0].mxu0
      %2251 = vmatprep.mubr.f32.mxu0 0.0
      %2252 = vmatmul.mubr.f32.gmra.mrb[0].mxu0 %v1632
      %v2253 = vpop.f32.mrb[0].mxu0
      %v2254 = vadd.f32 0.0, %v2253
      %v2255 = vpop.f32.mrb[0].mxu0
      %2256 = vmatprep.mubr.f32.mxu0 0.0
      %2257 = vmatmul.mubr.f32.gmra.mrb[0].mxu0 %v1635
      %v2258 = vpop.f32.mrb[0].mxu0
      %v2259 = vadd.f32 0.0, %v2258
      %v2260 = vpop.f32.mrb[0].mxu0
      %2261 = vmatprep.mubr.f32.mxu0 0.0
      %2262 = vmatmul.mubr.f32.gmra.mrb[0].mxu0 %v1638
      %v2263 = vpop.f32.mrb[0].mxu0
      %v2264 = vadd.f32 0.0, %v2263
      %v2265 = vpop.f32.mrb[0].mxu0
      %2266 = vmatprep.mubr.f32.mxu0 0.0
      %2267 = vmatmul.mubr.f32.gmra.mrb[0].mxu0 %v1641
      %v2268 = vpop.f32.mrb[0].mxu0
      %v2269 = vadd.f32 0.0, %v2268
      %v2270 = vpop.f32.mrb[0].mxu0
      %2271 = vmatprep.mubr.f32.mxu0 0.0
      %2272 = vmatmul.mubr.f32.gmra.mrb[0].mxu0 %v1644
      %v2273 = vpop.f32.mrb[0].mxu0
      %v2274 = vadd.f32 0.0, %v2273
      %v2275 = vpop.f32.mrb[0].mxu0
      %2276 = vmatprep.mubr.f32.mxu0 0.0
      %2277 = vmatmul.mubr.f32.gmra.mrb[0].mxu0 %v1647
      %v2278 = vpop.f32.mrb[0].mxu0
      %v2279 = vadd.f32 0.0, %v2278
      %v2280 = vpop.f32.mrb[0].mxu0
      %2281 = vmatprep.mubr.f32.mxu0 0.0
      %2282 = vmatmul.mubr.f32.gmra.mrb[0].mxu0 %v1650
      %v2283 = vpop.f32.mrb[0].mxu0
      %v2284 = vadd.f32 0.0, %v2283
      %v2285 = vpop.f32.mrb[0].mxu0
      %2286 = vdwg.mxu0
      %2287 = vmatprep.subr.mxu0 0.0
      %2288 = vmatpush1.msra.mxu0 %v2209
      %2289 = vmatprep.subr.mxu0 0.0
      %2290 = vmatpush1.msra.mxu0 %v2214
      %2291 = vmatprep.subr.mxu0 0.0
      %2292 = vmatpush1.msra.mxu0 %v2219
      %2293 = vmatprep.subr.mxu0 0.0
      %2294 = vmatpush1.msra.mxu0 %v2224
      %2295 = vmatprep.subr.mxu0 0.0
      %2296 = vmatpush1.msra.mxu0 %v2229
      %2297 = vmatprep.subr.mxu0 0.0
      %2298 = vmatpush1.msra.mxu0 %v2234
      %2299 = vmatprep.subr.mxu0 0.0
      %2300 = vmatpush1.msra.mxu0 %v2239
      %2301 = vmatprep.subr.mxu0 0.0
      %2302 = vmatpush1.msra.mxu0 %v2244
      %2303 = vmatprep.subr.mxu0 0.0
      %2304 = vmatpush1.msra.mxu0 %v2249
      %2305 = vmatprep.subr.mxu0 0.0
      %2306 = vmatpush1.msra.mxu0 %v2254
      %2307 = vmatprep.subr.mxu0 0.0
      %2308 = vmatpush1.msra.mxu0 %v2259
      %2309 = vmatprep.subr.mxu0 0.0
      %2310 = vmatpush1.msra.mxu0 %v2264
      %2311 = vmatprep.subr.mxu0 0.0
      %2312 = vmatpush1.msra.mxu0 %v2269
      %2313 = vmatprep.subr.mxu0 0.0
      %2314 = vmatpush1.msra.mxu0 %v2274
      %2315 = vmatprep.subr.mxu0 0.0
      %2316 = vmatpush1.msra.mxu0 %v2279
      %2317 = vmatprep.subr.mxu0 0.0
      %2318 = vmatpush1.msra.mxu0 %v2284
      %2319 = vmatprep.subr.mxu0 0.0
      %2320 = vmatpush1.msra.mxu0 0.0
      %2321 = vmatprep.subr.mxu0 0.0
      %2322 = vmatpush1.msra.mxu0 0.0
      %2323 = vmatprep.subr.mxu0 0.0
      %2324 = vmatpush1.msra.mxu0 0.0
      %2325 = vmatprep.subr.mxu0 0.0
      %2326 = vmatpush1.msra.mxu0 0.0
      %2327 = vmatprep.subr.mxu0 0.0
      %2328 = vmatpush1.msra.mxu0 0.0
      %2329 = vmatprep.subr.mxu0 0.0
      %2330 = vmatpush1.msra.mxu0 0.0
      %2331 = vmatprep.subr.mxu0 0.0
      %2332 = vmatpush1.msra.mxu0 0.0
      %2333 = vmatprep.subr.mxu0 0.0
      %2334 = vmatpush1.msra.mxu0 0.0
      %2335 = vmatprep.subr.mxu0 0.0
      %2336 = vmatpush1.msra.mxu0 0.0
      %2337 = vmatprep.subr.mxu0 0.0
      %2338 = vmatpush1.msra.mxu0 0.0
      %2339 = vmatprep.subr.mxu0 0.0
      %2340 = vmatpush1.msra.mxu0 0.0
      %2341 = vmatprep.subr.mxu0 0.0
      %2342 = vmatpush1.msra.mxu0 0.0
      %2343 = vmatprep.subr.mxu0 0.0
      %2344 = vmatpush1.msra.mxu0 0.0
      %2345 = vmatprep.subr.mxu0 0.0
      %2346 = vmatpush1.msra.mxu0 0.0
      %2347 = vmatprep.subr.mxu0 0.0
      %2348 = vmatpush1.msra.mxu0 0.0
      %2349 = vmatprep.subr.mxu0 0.0
      %2350 = vmatpush1.msra.mxu0 0.0
      %2351 = vmatprep.mubr.f32.mxu0 0.0
      %2352 = vmatmul.mubr.f32.gmra.mrb[0].mxu0 %v2118
      %v2353 = vpop.f32.mrb[0].mxu0
      %v2354 = vadd.f32 0.0, %v2353
      %v2355 = vpop.f32.mrb[0].mxu0
      %2356 = vmatprep.mubr.f32.mxu0 0.0
      %2357 = vmatmul.mubr.f32.gmra.mrb[0].mxu0 %v2119
      %v2358 = vpop.f32.mrb[0].mxu0
      %v2359 = vadd.f32 0.0, %v2358
      %v2360 = vpop.f32.mrb[0].mxu0
      %2361 = vmatprep.mubr.f32.mxu0 0.0
      %2362 = vmatmul.mubr.f32.gmra.mrb[0].mxu0 %v2120
      %v2363 = vpop.f32.mrb[0].mxu0
      %v2364 = vadd.f32 0.0, %v2363
      %v2365 = vpop.f32.mrb[0].mxu0
      %2366 = vmatprep.mubr.f32.mxu0 0.0
      %2367 = vmatmul.mubr.f32.gmra.mrb[0].mxu0 %v2121
      %v2368 = vpop.f32.mrb[0].mxu0
      %v2369 = vadd.f32 0.0, %v2368
      %v2370 = vpop.f32.mrb[0].mxu0
      %2371 = vmatprep.mubr.f32.mxu0 0.0
      %2372 = vmatmul.mubr.f32.gmra.mrb[0].mxu0 %v2122
      %v2373 = vpop.f32.mrb[0].mxu0
      %v2374 = vadd.f32 0.0, %v2373
      %v2375 = vpop.f32.mrb[0].mxu0
      %2376 = vmatprep.mubr.f32.mxu0 0.0
      %2377 = vmatmul.mubr.f32.gmra.mrb[0].mxu0 %v2123
      %v2378 = vpop.f32.mrb[0].mxu0
      %v2379 = vadd.f32 0.0, %v2378
      %v2380 = vpop.f32.mrb[0].mxu0
      %2381 = vmatprep.mubr.f32.mxu0 0.0
      %2382 = vmatmul.mubr.f32.gmra.mrb[0].mxu0 %v2124
      %v2383 = vpop.f32.mrb[0].mxu0
      %v2384 = vadd.f32 0.0, %v2383
      %v2385 = vpop.f32.mrb[0].mxu0
      %2386 = vmatprep.mubr.f32.mxu0 0.0
      %2387 = vmatmul.mubr.f32.gmra.mrb[0].mxu0 %v2125
      %v2388 = vpop.f32.mrb[0].mxu0
      %v2389 = vadd.f32 0.0, %v2388
      %v2390 = vpop.f32.mrb[0].mxu0
      %2391 = vmatprep.mubr.f32.mxu0 0.0
      %2392 = vmatmul.mubr.f32.gmra.mrb[0].mxu0 %v2126
      %v2393 = vpop.f32.mrb[0].mxu0
      %v2394 = vadd.f32 0.0, %v2393
      %v2395 = vpop.f32.mrb[0].mxu0
      %2396 = vmatprep.mubr.f32.mxu0 0.0
      %2397 = vmatmul.mubr.f32.gmra.mrb[0].mxu0 %v2127
      %v2398 = vpop.f32.mrb[0].mxu0
      %v2399 = vadd.f32 0.0, %v2398
      %v2400 = vpop.f32.mrb[0].mxu0
      %2401 = vmatprep.mubr.f32.mxu0 0.0
      %2402 = vmatmul.mubr.f32.gmra.mrb[0].mxu0 %v2128
      %v2403 = vpop.f32.mrb[0].mxu0
      %v2404 = vadd.f32 0.0, %v2403
      %v2405 = vpop.f32.mrb[0].mxu0
      %2406 = vmatprep.mubr.f32.mxu0 0.0
      %2407 = vmatmul.mubr.f32.gmra.mrb[0].mxu0 %v2129
      %v2408 = vpop.f32.mrb[0].mxu0
      %v2409 = vadd.f32 0.0, %v2408
      %v2410 = vpop.f32.mrb[0].mxu0
      %2411 = vmatprep.mubr.f32.mxu0 0.0
      %2412 = vmatmul.mubr.f32.gmra.mrb[0].mxu0 %v2130
      %v2413 = vpop.f32.mrb[0].mxu0
      %v2414 = vadd.f32 0.0, %v2413
      %v2415 = vpop.f32.mrb[0].mxu0
      %2416 = vmatprep.mubr.f32.mxu0 0.0
      %2417 = vmatmul.mubr.f32.gmra.mrb[0].mxu0 %v2131
      %v2418 = vpop.f32.mrb[0].mxu0
      %v2419 = vadd.f32 0.0, %v2418
      %v2420 = vpop.f32.mrb[0].mxu0
      %2421 = vmatprep.mubr.f32.mxu0 0.0
      %2422 = vmatmul.mubr.f32.gmra.mrb[0].mxu0 %v2132
      %v2423 = vpop.f32.mrb[0].mxu0
      %v2424 = vadd.f32 0.0, %v2423
      %v2425 = vpop.f32.mrb[0].mxu0
      %2426 = vmatprep.mubr.f32.mxu0 0.0
      %2427 = vmatmul.mubr.f32.gmra.mrb[0].mxu0 %v2133
      %v2428 = vpop.f32.mrb[0].mxu0
      %v2429 = vadd.f32 0.0, %v2428
      %v2430 = vpop.f32.mrb[0].mxu0
      %2431 = vdwg.mxu0
      %v2432 = vadd.f32 %v1595, %v2354
      %v2433 = vadd.f32 %v1595, %v2359
      %v2434 = vadd.f32 %v1595, %v2364
      %v2435 = vadd.f32 %v1595, %v2369
      %v2436 = vadd.f32 %v1595, %v2374
      %v2437 = vadd.f32 %v1595, %v2379
      %v2438 = vadd.f32 %v1595, %v2384
      %v2439 = vadd.f32 %v1595, %v2389
      %v2440 = vadd.f32 %v1595, %v2394
      %v2441 = vadd.f32 %v1595, %v2399
      %v2442 = vadd.f32 %v1595, %v2404
      %v2443 = vadd.f32 %v1595, %v2409
      %v2444 = vadd.f32 %v1595, %v2414
      %v2445 = vadd.f32 %v1595, %v2419
      %v2446 = vadd.f32 %v1595, %v2424
      %v2447 = vadd.f32 %v1595, %v2429
      %s2448 = scalar_lea.vmem %s9, 64
      %v2449 = vld [vmem:[%s2448] sm:$0xff]
      %v2450 = vld [vmem:[%s2448 + $0x8] sm:$0xff]
      %v2451 = vld [vmem:[%s2448 + $0x10] sm:$0xff]
      %v2452 = vld [vmem:[%s2448 + $0x18] sm:$0xff]
      %v2453 = vld [vmem:[%s2448 + $0x20] sm:$0xff]
      %v2454 = vld [vmem:[%s2448 + $0x28] sm:$0xff]
      %v2455 = vld [vmem:[%s2448 + $0x30] sm:$0xff]
      %v2456 = vld [vmem:[%s2448 + $0x38] sm:$0xff]
      %2457 = vmatprep.subr.mxu0 0.0
      %2458 = vmatpush1.msra.mxu0 %v2449
      %2459 = vmatprep.subr.mxu0 0.0
      %2460 = vmatpush1.msra.mxu0 %v2450
      %2461 = vmatprep.subr.mxu0 0.0
      %2462 = vmatpush1.msra.mxu0 %v2451
      %2463 = vmatprep.subr.mxu0 0.0
      %2464 = vmatpush1.msra.mxu0 %v2452
      %2465 = vmatprep.subr.mxu0 0.0
      %2466 = vmatpush1.msra.mxu0 %v2453
      %2467 = vmatprep.subr.mxu0 0.0
      %2468 = vmatpush1.msra.mxu0 %v2454
      %2469 = vmatprep.subr.mxu0 0.0
      %2470 = vmatpush1.msra.mxu0 %v2455
      %2471 = vmatprep.subr.mxu0 0.0
      %2472 = vmatpush1.msra.mxu0 %v2456
      %2473 = vmatprep.subr.mxu0 0.0
      %2474 = vmatpush1.msra.mxu0 0.0
      %2475 = vmatprep.subr.mxu0 0.0
      %2476 = vmatpush1.msra.mxu0 0.0
      %2477 = vmatprep.subr.mxu0 0.0
      %2478 = vmatpush1.msra.mxu0 0.0
      %2479 = vmatprep.subr.mxu0 0.0
      %2480 = vmatpush1.msra.mxu0 0.0
      %2481 = vmatprep.subr.mxu0 0.0
      %2482 = vmatpush1.msra.mxu0 0.0
      %2483 = vmatprep.subr.mxu0 0.0
      %2484 = vmatpush1.msra.mxu0 0.0
      %2485 = vmatprep.subr.mxu0 0.0
      %2486 = vmatpush1.msra.mxu0 0.0
      %2487 = vmatprep.subr.mxu0 0.0
      %2488 = vmatpush1.msra.mxu0 0.0
      %2489 = vmatprep.subr.mxu0 0.0
      %2490 = vmatpush1.msra.mxu0 0.0
      %2491 = vmatprep.subr.mxu0 0.0
      %2492 = vmatpush1.msra.mxu0 0.0
      %2493 = vmatprep.subr.mxu0 0.0
      %2494 = vmatpush1.msra.mxu0 0.0
      %2495 = vmatprep.subr.mxu0 0.0
      %2496 = vmatpush1.msra.mxu0 0.0
      %2497 = vmatprep.subr.mxu0 0.0
      %2498 = vmatpush1.msra.mxu0 0.0
      %2499 = vmatprep.subr.mxu0 0.0
      %2500 = vmatpush1.msra.mxu0 0.0
      %2501 = vmatprep.subr.mxu0 0.0
      %2502 = vmatpush1.msra.mxu0 0.0
      %2503 = vmatprep.subr.mxu0 0.0
      %2504 = vmatpush1.msra.mxu0 0.0
      %2505 = vmatprep.subr.mxu0 0.0
      %2506 = vmatpush1.msra.mxu0 0.0
      %2507 = vmatprep.subr.mxu0 0.0
      %2508 = vmatpush1.msra.mxu0 0.0
      %2509 = vmatprep.subr.mxu0 0.0
      %2510 = vmatpush1.msra.mxu0 0.0
      %2511 = vmatprep.subr.mxu0 0.0
      %2512 = vmatpush1.msra.mxu0 0.0
      %2513 = vmatprep.subr.mxu0 0.0
      %2514 = vmatpush1.msra.mxu0 0.0
      %2515 = vmatprep.subr.mxu0 0.0
      %2516 = vmatpush1.msra.mxu0 0.0
      %2517 = vmatprep.subr.mxu0 0.0
      %2518 = vmatpush1.msra.mxu0 0.0
      %2519 = vmatprep.subr.mxu0 0.0
      %2520 = vmatpush1.msra.mxu0 0.0
      %2521 = vmatprep.mubr.f32.mxu0 0.0
      %2522 = vmatmul.mubr.f32.gmra.mrb[0].mxu0 %v1605
      %v2523 = vpop.f32.mrb[0].mxu0
      %v2524 = vadd.f32 0.0, %v2523
      %v2525 = vpop.f32.mrb[0].mxu0
      %2526 = vmatprep.mubr.f32.mxu0 0.0
      %2527 = vmatmul.mubr.f32.gmra.mrb[0].mxu0 %v1608
      %v2528 = vpop.f32.mrb[0].mxu0
      %v2529 = vadd.f32 0.0, %v2528
      %v2530 = vpop.f32.mrb[0].mxu0
      %2531 = vmatprep.mubr.f32.mxu0 0.0
      %2532 = vmatmul.mubr.f32.gmra.mrb[0].mxu0 %v1611
      %v2533 = vpop.f32.mrb[0].mxu0
      %v2534 = vadd.f32 0.0, %v2533
      %v2535 = vpop.f32.mrb[0].mxu0
      %2536 = vmatprep.mubr.f32.mxu0 0.0
      %2537 = vmatmul.mubr.f32.gmra.mrb[0].mxu0 %v1614
      %v2538 = vpop.f32.mrb[0].mxu0
      %v2539 = vadd.f32 0.0, %v2538
      %v2540 = vpop.f32.mrb[0].mxu0
      %2541 = vmatprep.mubr.f32.mxu0 0.0
      %2542 = vmatmul.mubr.f32.gmra.mrb[0].mxu0 %v1617
      %v2543 = vpop.f32.mrb[0].mxu0
      %v2544 = vadd.f32 0.0, %v2543
      %v2545 = vpop.f32.mrb[0].mxu0
      %2546 = vmatprep.mubr.f32.mxu0 0.0
      %2547 = vmatmul.mubr.f32.gmra.mrb[0].mxu0 %v1620
      %v2548 = vpop.f32.mrb[0].mxu0
      %v2549 = vadd.f32 0.0, %v2548
      %v2550 = vpop.f32.mrb[0].mxu0
      %2551 = vmatprep.mubr.f32.mxu0 0.0
      %2552 = vmatmul.mubr.f32.gmra.mrb[0].mxu0 %v1623
      %v2553 = vpop.f32.mrb[0].mxu0
      %v2554 = vadd.f32 0.0, %v2553
      %v2555 = vpop.f32.mrb[0].mxu0
      %2556 = vmatprep.mubr.f32.mxu0 0.0
      %2557 = vmatmul.mubr.f32.gmra.mrb[0].mxu0 %v1626
      %v2558 = vpop.f32.mrb[0].mxu0
      %v2559 = vadd.f32 0.0, %v2558
      %v2560 = vpop.f32.mrb[0].mxu0
      %2561 = vmatprep.mubr.f32.mxu0 0.0
      %2562 = vmatmul.mubr.f32.gmra.mrb[0].mxu0 %v1629
      %v2563 = vpop.f32.mrb[0].mxu0
      %v2564 = vadd.f32 0.0, %v2563
      %v2565 = vpop.f32.mrb[0].mxu0
      %2566 = vmatprep.mubr.f32.mxu0 0.0
      %2567 = vmatmul.mubr.f32.gmra.mrb[0].mxu0 %v1632
      %v2568 = vpop.f32.mrb[0].mxu0
      %v2569 = vadd.f32 0.0, %v2568
      %v2570 = vpop.f32.mrb[0].mxu0
      %2571 = vmatprep.mubr.f32.mxu0 0.0
      %2572 = vmatmul.mubr.f32.gmra.mrb[0].mxu0 %v1635
      %v2573 = vpop.f32.mrb[0].mxu0
      %v2574 = vadd.f32 0.0, %v2573
      %v2575 = vpop.f32.mrb[0].mxu0
      %2576 = vmatprep.mubr.f32.mxu0 0.0
      %2577 = vmatmul.mubr.f32.gmra.mrb[0].mxu0 %v1638
      %v2578 = vpop.f32.mrb[0].mxu0
      %v2579 = vadd.f32 0.0, %v2578
      %v2580 = vpop.f32.mrb[0].mxu0
      %2581 = vmatprep.mubr.f32.mxu0 0.0
      %2582 = vmatmul.mubr.f32.gmra.mrb[0].mxu0 %v1641
      %v2583 = vpop.f32.mrb[0].mxu0
      %v2584 = vadd.f32 0.0, %v2583
      %v2585 = vpop.f32.mrb[0].mxu0
      %2586 = vmatprep.mubr.f32.mxu0 0.0
      %2587 = vmatmul.mubr.f32.gmra.mrb[0].mxu0 %v1644
      %v2588 = vpop.f32.mrb[0].mxu0
      %v2589 = vadd.f32 0.0, %v2588
      %v2590 = vpop.f32.mrb[0].mxu0
      %2591 = vmatprep.mubr.f32.mxu0 0.0
      %2592 = vmatmul.mubr.f32.gmra.mrb[0].mxu0 %v1647
      %v2593 = vpop.f32.mrb[0].mxu0
      %v2594 = vadd.f32 0.0, %v2593
      %v2595 = vpop.f32.mrb[0].mxu0
      %2596 = vmatprep.mubr.f32.mxu0 0.0
      %2597 = vmatmul.mubr.f32.gmra.mrb[0].mxu0 %v1650
      %v2598 = vpop.f32.mrb[0].mxu0
      %v2599 = vadd.f32 0.0, %v2598
      %v2600 = vpop.f32.mrb[0].mxu0
      %2601 = vdwg.mxu0
      %v2603 = vsel %vm1334, %v2524, 0
      %v2606 = vsel %vm1334, %v2529, 0
      %v2609 = vsel %vm1334, %v2534, 0
      %v2612 = vsel %vm1334, %v2539, 0
      %v2615 = vsel %vm1334, %v2544, 0
      %v2618 = vsel %vm1334, %v2549, 0
      %v2621 = vsel %vm1334, %v2554, 0
      %v2624 = vsel %vm1334, %v2559, 0
      %v2627 = vsel %vm1334, %v2564, 0
      %v2630 = vsel %vm1334, %v2569, 0
      %v2633 = vsel %vm1334, %v2574, 0
      %v2636 = vsel %vm1334, %v2579, 0
      %v2639 = vsel %vm1334, %v2584, 0
      %v2642 = vsel %vm1334, %v2589, 0
      %v2645 = vsel %vm1334, %v2594, 0
      %v2648 = vsel %vm1334, %v2599, 0
      %2650 = vmatprep.subr.mxu0 0.0
      %2651 = vmatpush1.xpose.msra.mxu0 %v1605
      %2652 = vmatprep.subr.mxu0 0.0
      %2653 = vmatpush1.xpose.msra.mxu0 %v1608
      %2654 = vmatprep.subr.mxu0 0.0
      %2655 = vmatpush1.xpose.msra.mxu0 %v1611
      %2656 = vmatprep.subr.mxu0 0.0
      %2657 = vmatpush1.xpose.msra.mxu0 %v1614
      %2658 = vmatprep.subr.mxu0 0.0
      %2659 = vmatpush1.xpose.msra.mxu0 %v1617
      %2660 = vmatprep.subr.mxu0 0.0
      %2661 = vmatpush1.xpose.msra.mxu0 %v1620
      %2662 = vmatprep.subr.mxu0 0.0
      %2663 = vmatpush1.xpose.msra.mxu0 %v1623
      %2664 = vmatprep.subr.mxu0 0.0
      %2665 = vmatpush1.xpose.msra.mxu0 %v1626
      %2666 = vmatprep.subr.mxu0 0.0
      %2667 = vmatpush1.xpose.msra.mxu0 %v1629
      %2668 = vmatprep.subr.mxu0 0.0
      %2669 = vmatpush1.xpose.msra.mxu0 %v1632
      %2670 = vmatprep.subr.mxu0 0.0
      %2671 = vmatpush1.xpose.msra.mxu0 %v1635
      %2672 = vmatprep.subr.mxu0 0.0
      %2673 = vmatpush1.xpose.msra.mxu0 %v1638
      %2674 = vmatprep.subr.mxu0 0.0
      %2675 = vmatpush1.xpose.msra.mxu0 %v1641
      %2676 = vmatprep.subr.mxu0 0.0
      %2677 = vmatpush1.xpose.msra.mxu0 %v1644
      %2678 = vmatprep.subr.mxu0 0.0
      %2679 = vmatpush1.xpose.msra.mxu0 %v1647
      %2680 = vmatprep.subr.mxu0 0.0
      %2681 = vmatpush1.xpose.msra.mxu0 %v1650
      %2682 = vmatprep.subr.mxu0 0.0
      %2683 = vmatpush1.xpose.msra.mxu0 0.0
      %2684 = vmatprep.subr.mxu0 0.0
      %2685 = vmatpush1.xpose.msra.mxu0 0.0
      %2686 = vmatprep.subr.mxu0 0.0
      %2687 = vmatpush1.xpose.msra.mxu0 0.0
      %2688 = vmatprep.subr.mxu0 0.0
      %2689 = vmatpush1.xpose.msra.mxu0 0.0
      %2690 = vmatprep.subr.mxu0 0.0
      %2691 = vmatpush1.xpose.msra.mxu0 0.0
      %2692 = vmatprep.subr.mxu0 0.0
      %2693 = vmatpush1.xpose.msra.mxu0 0.0
      %2694 = vmatprep.subr.mxu0 0.0
      %2695 = vmatpush1.xpose.msra.mxu0 0.0
      %2696 = vmatprep.subr.mxu0 0.0
      %2697 = vmatpush1.xpose.msra.mxu0 0.0
      %2698 = vmatprep.subr.mxu0 0.0
      %2699 = vmatpush1.xpose.msra.mxu0 0.0
      %2700 = vmatprep.subr.mxu0 0.0
      %2701 = vmatpush1.xpose.msra.mxu0 0.0
      %2702 = vmatprep.subr.mxu0 0.0
      %2703 = vmatpush1.xpose.msra.mxu0 0.0
      %2704 = vmatprep.subr.mxu0 0.0
      %2705 = vmatpush1.xpose.msra.mxu0 0.0
      %2706 = vmatprep.subr.mxu0 0.0
      %2707 = vmatpush1.xpose.msra.mxu0 0.0
      %2708 = vmatprep.subr.mxu0 0.0
      %2709 = vmatpush1.xpose.msra.mxu0 0.0
      %2710 = vmatprep.subr.mxu0 0.0
      %2711 = vmatpush1.xpose.msra.mxu0 0.0
      %2712 = vmatprep.subr.mxu0 0.0
      %2713 = vmatpush1.xpose.msra.mxu0 0.0
      %2714 = vmatprep.mubr.f32.mxu0 0.0
      %2715 = vmatmul.mubr.f32.gmra.mrb[0].mxu0 %v2603
      %v2716 = vpop.f32.mrb[0].mxu0
      %v2717 = vadd.f32 0.0, %v2716
      %v2718 = vpop.f32.mrb[0].mxu0
      %2719 = vmatprep.mubr.f32.mxu0 0.0
      %2720 = vmatmul.mubr.f32.gmra.mrb[0].mxu0 %v2606
      %v2721 = vpop.f32.mrb[0].mxu0
      %v2722 = vadd.f32 0.0, %v2721
      %v2723 = vpop.f32.mrb[0].mxu0
      %2724 = vmatprep.mubr.f32.mxu0 0.0
      %2725 = vmatmul.mubr.f32.gmra.mrb[0].mxu0 %v2609
      %v2726 = vpop.f32.mrb[0].mxu0
      %v2727 = vadd.f32 0.0, %v2726
      %v2728 = vpop.f32.mrb[0].mxu0
      %2729 = vmatprep.mubr.f32.mxu0 0.0
      %2730 = vmatmul.mubr.f32.gmra.mrb[0].mxu0 %v2612
      %v2731 = vpop.f32.mrb[0].mxu0
      %v2732 = vadd.f32 0.0, %v2731
      %v2733 = vpop.f32.mrb[0].mxu0
      %2734 = vmatprep.mubr.f32.mxu0 0.0
      %2735 = vmatmul.mubr.f32.gmra.mrb[0].mxu0 %v2615
      %v2736 = vpop.f32.mrb[0].mxu0
      %v2737 = vadd.f32 0.0, %v2736
      %v2738 = vpop.f32.mrb[0].mxu0
      %2739 = vmatprep.mubr.f32.mxu0 0.0
      %2740 = vmatmul.mubr.f32.gmra.mrb[0].mxu0 %v2618
      %v2741 = vpop.f32.mrb[0].mxu0
      %v2742 = vadd.f32 0.0, %v2741
      %v2743 = vpop.f32.mrb[0].mxu0
      %2744 = vmatprep.mubr.f32.mxu0 0.0
      %2745 = vmatmul.mubr.f32.gmra.mrb[0].mxu0 %v2621
      %v2746 = vpop.f32.mrb[0].mxu0
      %v2747 = vadd.f32 0.0, %v2746
      %v2748 = vpop.f32.mrb[0].mxu0
      %2749 = vmatprep.mubr.f32.mxu0 0.0
      %2750 = vmatmul.mubr.f32.gmra.mrb[0].mxu0 %v2624
      %v2751 = vpop.f32.mrb[0].mxu0
      %v2752 = vadd.f32 0.0, %v2751
      %v2753 = vpop.f32.mrb[0].mxu0
      %2754 = vmatprep.mubr.f32.mxu0 0.0
      %2755 = vmatmul.mubr.f32.gmra.mrb[0].mxu0 %v2627
      %v2756 = vpop.f32.mrb[0].mxu0
      %v2757 = vadd.f32 0.0, %v2756
      %v2758 = vpop.f32.mrb[0].mxu0
      %2759 = vmatprep.mubr.f32.mxu0 0.0
      %2760 = vmatmul.mubr.f32.gmra.mrb[0].mxu0 %v2630
      %v2761 = vpop.f32.mrb[0].mxu0
      %v2762 = vadd.f32 0.0, %v2761
      %v2763 = vpop.f32.mrb[0].mxu0
      %2764 = vmatprep.mubr.f32.mxu0 0.0
      %2765 = vmatmul.mubr.f32.gmra.mrb[0].mxu0 %v2633
      %v2766 = vpop.f32.mrb[0].mxu0
      %v2767 = vadd.f32 0.0, %v2766
      %v2768 = vpop.f32.mrb[0].mxu0
      %2769 = vmatprep.mubr.f32.mxu0 0.0
      %2770 = vmatmul.mubr.f32.gmra.mrb[0].mxu0 %v2636
      %v2771 = vpop.f32.mrb[0].mxu0
      %v2772 = vadd.f32 0.0, %v2771
      %v2773 = vpop.f32.mrb[0].mxu0
      %2774 = vmatprep.mubr.f32.mxu0 0.0
      %2775 = vmatmul.mubr.f32.gmra.mrb[0].mxu0 %v2639
      %v2776 = vpop.f32.mrb[0].mxu0
      %v2777 = vadd.f32 0.0, %v2776
      %v2778 = vpop.f32.mrb[0].mxu0
      %2779 = vmatprep.mubr.f32.mxu0 0.0
      %2780 = vmatmul.mubr.f32.gmra.mrb[0].mxu0 %v2642
      %v2781 = vpop.f32.mrb[0].mxu0
      %v2782 = vadd.f32 0.0, %v2781
      %v2783 = vpop.f32.mrb[0].mxu0
      %2784 = vmatprep.mubr.f32.mxu0 0.0
      %2785 = vmatmul.mubr.f32.gmra.mrb[0].mxu0 %v2645
      %v2786 = vpop.f32.mrb[0].mxu0
      %v2787 = vadd.f32 0.0, %v2786
      %v2788 = vpop.f32.mrb[0].mxu0
      %2789 = vmatprep.mubr.f32.mxu0 0.0
      %2790 = vmatmul.mubr.f32.gmra.mrb[0].mxu0 %v2648
      %v2791 = vpop.f32.mrb[0].mxu0
      %v2792 = vadd.f32 0.0, %v2791
      %v2793 = vpop.f32.mrb[0].mxu0
      %2794 = vdwg.mxu0
      %2795 = vmax.xlane.f32.xlu0 %v2717
      %v2796 = vpop.xlane.xlu0 %2795
      %2797 = vmax.xlane.f32.xlu0 %v2722
      %v2798 = vpop.xlane.xlu0 %2797
      %2799 = vmax.xlane.f32.xlu0 %v2727
      %v2800 = vpop.xlane.xlu0 %2799
      %2801 = vmax.xlane.f32.xlu0 %v2732
      %v2802 = vpop.xlane.xlu0 %2801
      %2803 = vmax.xlane.f32.xlu0 %v2737
      %v2804 = vpop.xlane.xlu0 %2803
      %2805 = vmax.xlane.f32.xlu0 %v2742
      %v2806 = vpop.xlane.xlu0 %2805
      %2807 = vmax.xlane.f32.xlu0 %v2747
      %v2808 = vpop.xlane.xlu0 %2807
      %2809 = vmax.xlane.f32.xlu0 %v2752
      %v2810 = vpop.xlane.xlu0 %2809
      %2811 = vmax.xlane.f32.xlu0 %v2757
      %v2812 = vpop.xlane.xlu0 %2811
      %2813 = vmax.xlane.f32.xlu0 %v2762
      %v2814 = vpop.xlane.xlu0 %2813
      %2815 = vmax.xlane.f32.xlu0 %v2767
      %v2816 = vpop.xlane.xlu0 %2815
      %2817 = vmax.xlane.f32.xlu0 %v2772
      %v2818 = vpop.xlane.xlu0 %2817
      %2819 = vmax.xlane.f32.xlu0 %v2777
      %v2820 = vpop.xlane.xlu0 %2819
      %2821 = vmax.xlane.f32.xlu0 %v2782
      %v2822 = vpop.xlane.xlu0 %2821
      %2823 = vmax.xlane.f32.xlu0 %v2787
      %v2824 = vpop.xlane.xlu0 %2823
      %2825 = vmax.xlane.f32.xlu0 %v2792
      %v2826 = vpop.xlane.xlu0 %2825
      %v2827 = vsub.f32 %v2717, %v2796
      %v2828 = vsub.f32 %v2722, %v2798
      %v2829 = vsub.f32 %v2727, %v2800
      %v2830 = vsub.f32 %v2732, %v2802
      %v2831 = vsub.f32 %v2737, %v2804
      %v2832 = vsub.f32 %v2742, %v2806
      %v2833 = vsub.f32 %v2747, %v2808
      %v2834 = vsub.f32 %v2752, %v2810
      %v2835 = vsub.f32 %v2757, %v2812
      %v2836 = vsub.f32 %v2762, %v2814
      %v2837 = vsub.f32 %v2767, %v2816
      %v2838 = vsub.f32 %v2772, %v2818
      %v2839 = vsub.f32 %v2777, %v2820
      %v2840 = vsub.f32 %v2782, %v2822
      %v2841 = vsub.f32 %v2787, %v2824
      %v2842 = vsub.f32 %v2792, %v2826
      %v2843 = vmul.f32 %v2827, 1.442695
      %v2844 = vpow.pop %v2843
      %v2845 = vmul.f32 %v2828, 1.442695
      %v2846 = vpow.pop %v2845
      %v2847 = vmul.f32 %v2829, 1.442695
      %v2848 = vpow.pop %v2847
      %v2849 = vmul.f32 %v2830, 1.442695
      %v2850 = vpow.pop %v2849
      %v2851 = vmul.f32 %v2831, 1.442695
      %v2852 = vpow.pop %v2851
      %v2853 = vmul.f32 %v2832, 1.442695
      %v2854 = vpow.pop %v2853
      %v2855 = vmul.f32 %v2833, 1.442695
      %v2856 = vpow.pop %v2855
      %v2857 = vmul.f32 %v2834, 1.442695
      %v2858 = vpow.pop %v2857
      %v2859 = vmul.f32 %v2835, 1.442695
      %v2860 = vpow.pop %v2859
      %v2861 = vmul.f32 %v2836, 1.442695
      %v2862 = vpow.pop %v2861
      %v2863 = vmul.f32 %v2837, 1.442695
      %v2864 = vpow.pop %v2863
      %v2865 = vmul.f32 %v2838, 1.442695
      %v2866 = vpow.pop %v2865
      %v2867 = vmul.f32 %v2839, 1.442695
      %v2868 = vpow.pop %v2867
      %v2869 = vmul.f32 %v2840, 1.442695
      %v2870 = vpow.pop %v2869
      %v2871 = vmul.f32 %v2841, 1.442695
      %v2872 = vpow.pop %v2871
      %v2873 = vmul.f32 %v2842, 1.442695
      %v2874 = vpow.pop %v2873
      %2875 = vadd.xlane.f32.xlu0 %v2844
      %v2876 = vpop.xlane.xlu0 %2875
      %2877 = vadd.xlane.f32.xlu0 %v2846
      %v2878 = vpop.xlane.xlu0 %2877
      %2879 = vadd.xlane.f32.xlu0 %v2848
      %v2880 = vpop.xlane.xlu0 %2879
      %2881 = vadd.xlane.f32.xlu0 %v2850
      %v2882 = vpop.xlane.xlu0 %2881
      %2883 = vadd.xlane.f32.xlu0 %v2852
      %v2884 = vpop.xlane.xlu0 %2883
      %2885 = vadd.xlane.f32.xlu0 %v2854
      %v2886 = vpop.xlane.xlu0 %2885
      %2887 = vadd.xlane.f32.xlu0 %v2856
      %v2888 = vpop.xlane.xlu0 %2887
      %2889 = vadd.xlane.f32.xlu0 %v2858
      %v2890 = vpop.xlane.xlu0 %2889
      %2891 = vadd.xlane.f32.xlu0 %v2860
      %v2892 = vpop.xlane.xlu0 %2891
      %2893 = vadd.xlane.f32.xlu0 %v2862
      %v2894 = vpop.xlane.xlu0 %2893
      %2895 = vadd.xlane.f32.xlu0 %v2864
      %v2896 = vpop.xlane.xlu0 %2895
      %2897 = vadd.xlane.f32.xlu0 %v2866
      %v2898 = vpop.xlane.xlu0 %2897
      %2899 = vadd.xlane.f32.xlu0 %v2868
      %v2900 = vpop.xlane.xlu0 %2899
      %2901 = vadd.xlane.f32.xlu0 %v2870
      %v2902 = vpop.xlane.xlu0 %2901
      %2903 = vadd.xlane.f32.xlu0 %v2872
      %v2904 = vpop.xlane.xlu0 %2903
      %2905 = vadd.xlane.f32.xlu0 %v2874
      %v2906 = vpop.xlane.xlu0 %2905
      %v2907 = vrcp.pop %v2876
      %v2908 = vrcp.pop %v2878
      %v2909 = vrcp.pop %v2880
      %v2910 = vrcp.pop %v2882
      %v2911 = vrcp.pop %v2884
      %v2912 = vrcp.pop %v2886
      %v2913 = vrcp.pop %v2888
      %v2914 = vrcp.pop %v2890
      %v2915 = vrcp.pop %v2892
      %v2916 = vrcp.pop %v2894
      %v2917 = vrcp.pop %v2896
      %v2918 = vrcp.pop %v2898
      %v2919 = vrcp.pop %v2900
      %v2920 = vrcp.pop %v2902
      %v2921 = vrcp.pop %v2904
      %v2922 = vrcp.pop %v2906
      %v2923 = vmul.f32 %v2844, %v2907
      %v2924 = vmul.f32 %v2846, %v2908
      %v2925 = vmul.f32 %v2848, %v2909
      %v2926 = vmul.f32 %v2850, %v2910
      %v2927 = vmul.f32 %v2852, %v2911
      %v2928 = vmul.f32 %v2854, %v2912
      %v2929 = vmul.f32 %v2856, %v2913
      %v2930 = vmul.f32 %v2858, %v2914
      %v2931 = vmul.f32 %v2860, %v2915
      %v2932 = vmul.f32 %v2862, %v2916
      %v2933 = vmul.f32 %v2864, %v2917
      %v2934 = vmul.f32 %v2866, %v2918
      %v2935 = vmul.f32 %v2868, %v2919
      %v2936 = vmul.f32 %v2870, %v2920
      %v2937 = vmul.f32 %v2872, %v2921
      %v2938 = vmul.f32 %v2874, %v2922
      %s2939 = scalar_lea.vmem %s11, 64
      %v2940 = vld [vmem:[%s2939] sm:$0xff]
      %v2941 = vld [vmem:[%s2939 + $0x8] sm:$0xff]
      %v2942 = vld [vmem:[%s2939 + $0x10] sm:$0xff]
      %v2943 = vld [vmem:[%s2939 + $0x18] sm:$0xff]
      %v2944 = vld [vmem:[%s2939 + $0x20] sm:$0xff]
      %v2945 = vld [vmem:[%s2939 + $0x28] sm:$0xff]
      %v2946 = vld [vmem:[%s2939 + $0x30] sm:$0xff]
      %v2947 = vld [vmem:[%s2939 + $0x38] sm:$0xff]
      %2948 = vmatprep.subr.mxu0 0.0
      %2949 = vmatpush1.msra.mxu0 %v2940
      %2950 = vmatprep.subr.mxu0 0.0
      %2951 = vmatpush1.msra.mxu0 %v2941
      %2952 = vmatprep.subr.mxu0 0.0
      %2953 = vmatpush1.msra.mxu0 %v2942
      %2954 = vmatprep.subr.mxu0 0.0
      %2955 = vmatpush1.msra.mxu0 %v2943
      %2956 = vmatprep.subr.mxu0 0.0
      %2957 = vmatpush1.msra.mxu0 %v2944
      %2958 = vmatprep.subr.mxu0 0.0
      %2959 = vmatpush1.msra.mxu0 %v2945
      %2960 = vmatprep.subr.mxu0 0.0
      %2961 = vmatpush1.msra.mxu0 %v2946
      %2962 = vmatprep.subr.mxu0 0.0
      %2963 = vmatpush1.msra.mxu0 %v2947
      %2964 = vmatprep.subr.mxu0 0.0
      %2965 = vmatpush1.msra.mxu0 0.0
      %2966 = vmatprep.subr.mxu0 0.0
      %2967 = vmatpush1.msra.mxu0 0.0
      %2968 = vmatprep.subr.mxu0 0.0
      %2969 = vmatpush1.msra.mxu0 0.0
      %2970 = vmatprep.subr.mxu0 0.0
      %2971 = vmatpush1.msra.mxu0 0.0
      %2972 = vmatprep.subr.mxu0 0.0
      %2973 = vmatpush1.msra.mxu0 0.0
      %2974 = vmatprep.subr.mxu0 0.0
      %2975 = vmatpush1.msra.mxu0 0.0
      %2976 = vmatprep.subr.mxu0 0.0
      %2977 = vmatpush1.msra.mxu0 0.0
      %2978 = vmatprep.subr.mxu0 0.0
      %2979 = vmatpush1.msra.mxu0 0.0
      %2980 = vmatprep.subr.mxu0 0.0
      %2981 = vmatpush1.msra.mxu0 0.0
      %2982 = vmatprep.subr.mxu0 0.0
      %2983 = vmatpush1.msra.mxu0 0.0
      %2984 = vmatprep.subr.mxu0 0.0
      %2985 = vmatpush1.msra.mxu0 0.0
      %2986 = vmatprep.subr.mxu0 0.0
      %2987 = vmatpush1.msra.mxu0 0.0
      %2988 = vmatprep.subr.mxu0 0.0
      %2989 = vmatpush1.msra.mxu0 0.0
      %2990 = vmatprep.subr.mxu0 0.0
      %2991 = vmatpush1.msra.mxu0 0.0
      %2992 = vmatprep.subr.mxu0 0.0
      %2993 = vmatpush1.msra.mxu0 0.0
      %2994 = vmatprep.subr.mxu0 0.0
      %2995 = vmatpush1.msra.mxu0 0.0
      %2996 = vmatprep.subr.mxu0 0.0
      %2997 = vmatpush1.msra.mxu0 0.0
      %2998 = vmatprep.subr.mxu0 0.0
      %2999 = vmatpush1.msra.mxu0 0.0
      %3000 = vmatprep.subr.mxu0 0.0
      %3001 = vmatpush1.msra.mxu0 0.0
      %3002 = vmatprep.subr.mxu0 0.0
      %3003 = vmatpush1.msra.mxu0 0.0
      %3004 = vmatprep.subr.mxu0 0.0
      %3005 = vmatpush1.msra.mxu0 0.0
      %3006 = vmatprep.subr.mxu0 0.0
      %3007 = vmatpush1.msra.mxu0 0.0
      %3008 = vmatprep.subr.mxu0 0.0
      %3009 = vmatpush1.msra.mxu0 0.0
      %3010 = vmatprep.subr.mxu0 0.0
      %3011 = vmatpush1.msra.mxu0 0.0
      %3012 = vmatprep.mubr.f32.mxu0 0.0
      %3013 = vmatmul.mubr.f32.gmra.mrb[0].mxu0 %v1605
      %v3014 = vpop.f32.mrb[0].mxu0
      %v3015 = vadd.f32 0.0, %v3014
      %v3016 = vpop.f32.mrb[0].mxu0
      %3017 = vmatprep.mubr.f32.mxu0 0.0
      %3018 = vmatmul.mubr.f32.gmra.mrb[0].mxu0 %v1608
      %v3019 = vpop.f32.mrb[0].mxu0
      %v3020 = vadd.f32 0.0, %v3019
      %v3021 = vpop.f32.mrb[0].mxu0
      %3022 = vmatprep.mubr.f32.mxu0 0.0
      %3023 = vmatmul.mubr.f32.gmra.mrb[0].mxu0 %v1611
      %v3024 = vpop.f32.mrb[0].mxu0
      %v3025 = vadd.f32 0.0, %v3024
      %v3026 = vpop.f32.mrb[0].mxu0
      %3027 = vmatprep.mubr.f32.mxu0 0.0
      %3028 = vmatmul.mubr.f32.gmra.mrb[0].mxu0 %v1614
      %v3029 = vpop.f32.mrb[0].mxu0
      %v3030 = vadd.f32 0.0, %v3029
      %v3031 = vpop.f32.mrb[0].mxu0
      %3032 = vmatprep.mubr.f32.mxu0 0.0
      %3033 = vmatmul.mubr.f32.gmra.mrb[0].mxu0 %v1617
      %v3034 = vpop.f32.mrb[0].mxu0
      %v3035 = vadd.f32 0.0, %v3034
      %v3036 = vpop.f32.mrb[0].mxu0
      %3037 = vmatprep.mubr.f32.mxu0 0.0
      %3038 = vmatmul.mubr.f32.gmra.mrb[0].mxu0 %v1620
      %v3039 = vpop.f32.mrb[0].mxu0
      %v3040 = vadd.f32 0.0, %v3039
      %v3041 = vpop.f32.mrb[0].mxu0
      %3042 = vmatprep.mubr.f32.mxu0 0.0
      %3043 = vmatmul.mubr.f32.gmra.mrb[0].mxu0 %v1623
      %v3044 = vpop.f32.mrb[0].mxu0
      %v3045 = vadd.f32 0.0, %v3044
      %v3046 = vpop.f32.mrb[0].mxu0
      %3047 = vmatprep.mubr.f32.mxu0 0.0
      %3048 = vmatmul.mubr.f32.gmra.mrb[0].mxu0 %v1626
      %v3049 = vpop.f32.mrb[0].mxu0
      %v3050 = vadd.f32 0.0, %v3049
      %v3051 = vpop.f32.mrb[0].mxu0
      %3052 = vmatprep.mubr.f32.mxu0 0.0
      %3053 = vmatmul.mubr.f32.gmra.mrb[0].mxu0 %v1629
      %v3054 = vpop.f32.mrb[0].mxu0
      %v3055 = vadd.f32 0.0, %v3054
      %v3056 = vpop.f32.mrb[0].mxu0
      %3057 = vmatprep.mubr.f32.mxu0 0.0
      %3058 = vmatmul.mubr.f32.gmra.mrb[0].mxu0 %v1632
      %v3059 = vpop.f32.mrb[0].mxu0
      %v3060 = vadd.f32 0.0, %v3059
      %v3061 = vpop.f32.mrb[0].mxu0
      %3062 = vmatprep.mubr.f32.mxu0 0.0
      %3063 = vmatmul.mubr.f32.gmra.mrb[0].mxu0 %v1635
      %v3064 = vpop.f32.mrb[0].mxu0
      %v3065 = vadd.f32 0.0, %v3064
      %v3066 = vpop.f32.mrb[0].mxu0
      %3067 = vmatprep.mubr.f32.mxu0 0.0
      %3068 = vmatmul.mubr.f32.gmra.mrb[0].mxu0 %v1638
      %v3069 = vpop.f32.mrb[0].mxu0
      %v3070 = vadd.f32 0.0, %v3069
      %v3071 = vpop.f32.mrb[0].mxu0
      %3072 = vmatprep.mubr.f32.mxu0 0.0
      %3073 = vmatmul.mubr.f32.gmra.mrb[0].mxu0 %v1641
      %v3074 = vpop.f32.mrb[0].mxu0
      %v3075 = vadd.f32 0.0, %v3074
      %v3076 = vpop.f32.mrb[0].mxu0
      %3077 = vmatprep.mubr.f32.mxu0 0.0
      %3078 = vmatmul.mubr.f32.gmra.mrb[0].mxu0 %v1644
      %v3079 = vpop.f32.mrb[0].mxu0
      %v3080 = vadd.f32 0.0, %v3079
      %v3081 = vpop.f32.mrb[0].mxu0
      %3082 = vmatprep.mubr.f32.mxu0 0.0
      %3083 = vmatmul.mubr.f32.gmra.mrb[0].mxu0 %v1647
      %v3084 = vpop.f32.mrb[0].mxu0
      %v3085 = vadd.f32 0.0, %v3084
      %v3086 = vpop.f32.mrb[0].mxu0
      %3087 = vmatprep.mubr.f32.mxu0 0.0
      %3088 = vmatmul.mubr.f32.gmra.mrb[0].mxu0 %v1650
      %v3089 = vpop.f32.mrb[0].mxu0
      %v3090 = vadd.f32 0.0, %v3089
      %v3091 = vpop.f32.mrb[0].mxu0
      %3092 = vdwg.mxu0
      %3093 = vmatprep.subr.mxu0 0.0
      %3094 = vmatpush1.msra.mxu0 %v3015
      %3095 = vmatprep.subr.mxu0 0.0
      %3096 = vmatpush1.msra.mxu0 %v3020
      %3097 = vmatprep.subr.mxu0 0.0
      %3098 = vmatpush1.msra.mxu0 %v3025
      %3099 = vmatprep.subr.mxu0 0.0
      %3100 = vmatpush1.msra.mxu0 %v3030
      %3101 = vmatprep.subr.mxu0 0.0
      %3102 = vmatpush1.msra.mxu0 %v3035
      %3103 = vmatprep.subr.mxu0 0.0
      %3104 = vmatpush1.msra.mxu0 %v3040
      %3105 = vmatprep.subr.mxu0 0.0
      %3106 = vmatpush1.msra.mxu0 %v3045
      %3107 = vmatprep.subr.mxu0 0.0
      %3108 = vmatpush1.msra.mxu0 %v3050
      %3109 = vmatprep.subr.mxu0 0.0
      %3110 = vmatpush1.msra.mxu0 %v3055
      %3111 = vmatprep.subr.mxu0 0.0
      %3112 = vmatpush1.msra.mxu0 %v3060
      %3113 = vmatprep.subr.mxu0 0.0
      %3114 = vmatpush1.msra.mxu0 %v3065
      %3115 = vmatprep.subr.mxu0 0.0
      %3116 = vmatpush1.msra.mxu0 %v3070
      %3117 = vmatprep.subr.mxu0 0.0
      %3118 = vmatpush1.msra.mxu0 %v3075
      %3119 = vmatprep.subr.mxu0 0.0
      %3120 = vmatpush1.msra.mxu0 %v3080
      %3121 = vmatprep.subr.mxu0 0.0
      %3122 = vmatpush1.msra.mxu0 %v3085
      %3123 = vmatprep.subr.mxu0 0.0
      %3124 = vmatpush1.msra.mxu0 %v3090
      %3125 = vmatprep.subr.mxu0 0.0
      %3126 = vmatpush1.msra.mxu0 0.0
      %3127 = vmatprep.subr.mxu0 0.0
      %3128 = vmatpush1.msra.mxu0 0.0
      %3129 = vmatprep.subr.mxu0 0.0
      %3130 = vmatpush1.msra.mxu0 0.0
      %3131 = vmatprep.subr.mxu0 0.0
      %3132 = vmatpush1.msra.mxu0 0.0
      %3133 = vmatprep.subr.mxu0 0.0
      %3134 = vmatpush1.msra.mxu0 0.0
      %3135 = vmatprep.subr.mxu0 0.0
      %3136 = vmatpush1.msra.mxu0 0.0
      %3137 = vmatprep.subr.mxu0 0.0
      %3138 = vmatpush1.msra.mxu0 0.0
      %3139 = vmatprep.subr.mxu0 0.0
      %3140 = vmatpush1.msra.mxu0 0.0
      %3141 = vmatprep.subr.mxu0 0.0
      %3142 = vmatpush1.msra.mxu0 0.0
      %3143 = vmatprep.subr.mxu0 0.0
      %3144 = vmatpush1.msra.mxu0 0.0
      %3145 = vmatprep.subr.mxu0 0.0
      %3146 = vmatpush1.msra.mxu0 0.0
      %3147 = vmatprep.subr.mxu0 0.0
      %3148 = vmatpush1.msra.mxu0 0.0
      %3149 = vmatprep.subr.mxu0 0.0
      %3150 = vmatpush1.msra.mxu0 0.0
      %3151 = vmatprep.subr.mxu0 0.0
      %3152 = vmatpush1.msra.mxu0 0.0
      %3153 = vmatprep.subr.mxu0 0.0
      %3154 = vmatpush1.msra.mxu0 0.0
      %3155 = vmatprep.subr.mxu0 0.0
      %3156 = vmatpush1.msra.mxu0 0.0
      %3157 = vmatprep.mubr.f32.mxu0 0.0
      %3158 = vmatmul.mubr.f32.gmra.mrb[0].mxu0 %v2923
      %v3159 = vpop.f32.mrb[0].mxu0
      %v3160 = vadd.f32 0.0, %v3159
      %v3161 = vpop.f32.mrb[0].mxu0
      %3162 = vmatprep.mubr.f32.mxu0 0.0
      %3163 = vmatmul.mubr.f32.gmra.mrb[0].mxu0 %v2924
      %v3164 = vpop.f32.mrb[0].mxu0
      %v3165 = vadd.f32 0.0, %v3164
      %v3166 = vpop.f32.mrb[0].mxu0
      %3167 = vmatprep.mubr.f32.mxu0 0.0
      %3168 = vmatmul.mubr.f32.gmra.mrb[0].mxu0 %v2925
      %v3169 = vpop.f32.mrb[0].mxu0
      %v3170 = vadd.f32 0.0, %v3169
      %v3171 = vpop.f32.mrb[0].mxu0
      %3172 = vmatprep.mubr.f32.mxu0 0.0
      %3173 = vmatmul.mubr.f32.gmra.mrb[0].mxu0 %v2926
      %v3174 = vpop.f32.mrb[0].mxu0
      %v3175 = vadd.f32 0.0, %v3174
      %v3176 = vpop.f32.mrb[0].mxu0
      %3177 = vmatprep.mubr.f32.mxu0 0.0
      %3178 = vmatmul.mubr.f32.gmra.mrb[0].mxu0 %v2927
      %v3179 = vpop.f32.mrb[0].mxu0
      %v3180 = vadd.f32 0.0, %v3179
      %v3181 = vpop.f32.mrb[0].mxu0
      %3182 = vmatprep.mubr.f32.mxu0 0.0
      %3183 = vmatmul.mubr.f32.gmra.mrb[0].mxu0 %v2928
      %v3184 = vpop.f32.mrb[0].mxu0
      %v3185 = vadd.f32 0.0, %v3184
      %v3186 = vpop.f32.mrb[0].mxu0
      %3187 = vmatprep.mubr.f32.mxu0 0.0
      %3188 = vmatmul.mubr.f32.gmra.mrb[0].mxu0 %v2929
      %v3189 = vpop.f32.mrb[0].mxu0
      %v3190 = vadd.f32 0.0, %v3189
      %v3191 = vpop.f32.mrb[0].mxu0
      %3192 = vmatprep.mubr.f32.mxu0 0.0
      %3193 = vmatmul.mubr.f32.gmra.mrb[0].mxu0 %v2930
      %v3194 = vpop.f32.mrb[0].mxu0
      %v3195 = vadd.f32 0.0, %v3194
      %v3196 = vpop.f32.mrb[0].mxu0
      %3197 = vmatprep.mubr.f32.mxu0 0.0
      %3198 = vmatmul.mubr.f32.gmra.mrb[0].mxu0 %v2931
      %v3199 = vpop.f32.mrb[0].mxu0
      %v3200 = vadd.f32 0.0, %v3199
      %v3201 = vpop.f32.mrb[0].mxu0
      %3202 = vmatprep.mubr.f32.mxu0 0.0
      %3203 = vmatmul.mubr.f32.gmra.mrb[0].mxu0 %v2932
      %v3204 = vpop.f32.mrb[0].mxu0
      %v3205 = vadd.f32 0.0, %v3204
      %v3206 = vpop.f32.mrb[0].mxu0
      %3207 = vmatprep.mubr.f32.mxu0 0.0
      %3208 = vmatmul.mubr.f32.gmra.mrb[0].mxu0 %v2933
      %v3209 = vpop.f32.mrb[0].mxu0
      %v3210 = vadd.f32 0.0, %v3209
      %v3211 = vpop.f32.mrb[0].mxu0
      %3212 = vmatprep.mubr.f32.mxu0 0.0
      %3213 = vmatmul.mubr.f32.gmra.mrb[0].mxu0 %v2934
      %v3214 = vpop.f32.mrb[0].mxu0
      %v3215 = vadd.f32 0.0, %v3214
      %v3216 = vpop.f32.mrb[0].mxu0
      %3217 = vmatprep.mubr.f32.mxu0 0.0
      %3218 = vmatmul.mubr.f32.gmra.mrb[0].mxu0 %v2935
      %v3219 = vpop.f32.mrb[0].mxu0
      %v3220 = vadd.f32 0.0, %v3219
      %v3221 = vpop.f32.mrb[0].mxu0
      %3222 = vmatprep.mubr.f32.mxu0 0.0
      %3223 = vmatmul.mubr.f32.gmra.mrb[0].mxu0 %v2936
      %v3224 = vpop.f32.mrb[0].mxu0
      %v3225 = vadd.f32 0.0, %v3224
      %v3226 = vpop.f32.mrb[0].mxu0
      %3227 = vmatprep.mubr.f32.mxu0 0.0
      %3228 = vmatmul.mubr.f32.gmra.mrb[0].mxu0 %v2937
      %v3229 = vpop.f32.mrb[0].mxu0
      %v3230 = vadd.f32 0.0, %v3229
      %v3231 = vpop.f32.mrb[0].mxu0
      %3232 = vmatprep.mubr.f32.mxu0 0.0
      %3233 = vmatmul.mubr.f32.gmra.mrb[0].mxu0 %v2938
      %v3234 = vpop.f32.mrb[0].mxu0
      %v3235 = vadd.f32 0.0, %v3234
      %v3236 = vpop.f32.mrb[0].mxu0
      %3237 = vdwg.mxu0
      %v3238 = vadd.f32 %v2432, %v3160
      %v3239 = vadd.f32 %v2433, %v3165
      %v3240 = vadd.f32 %v2434, %v3170
      %v3241 = vadd.f32 %v2435, %v3175
      %v3242 = vadd.f32 %v2436, %v3180
      %v3243 = vadd.f32 %v2437, %v3185
      %v3244 = vadd.f32 %v2438, %v3190
      %v3245 = vadd.f32 %v2439, %v3195
      %v3246 = vadd.f32 %v2440, %v3200
      %v3247 = vadd.f32 %v2441, %v3205
      %v3248 = vadd.f32 %v2442, %v3210
      %v3249 = vadd.f32 %v2443, %v3215
      %v3250 = vadd.f32 %v2444, %v3220
      %v3251 = vadd.f32 %v2445, %v3225
      %v3252 = vadd.f32 %v2446, %v3230
      %v3253 = vadd.f32 %v2447, %v3235
      %s3254 = scalar_lea.vmem %s9, 128
      %v3255 = vld [vmem:[%s3254] sm:$0xff]
      %v3256 = vld [vmem:[%s3254 + $0x8] sm:$0xff]
      %v3257 = vld [vmem:[%s3254 + $0x10] sm:$0xff]
      %v3258 = vld [vmem:[%s3254 + $0x18] sm:$0xff]
      %v3259 = vld [vmem:[%s3254 + $0x20] sm:$0xff]
      %v3260 = vld [vmem:[%s3254 + $0x28] sm:$0xff]
      %v3261 = vld [vmem:[%s3254 + $0x30] sm:$0xff]
      %v3262 = vld [vmem:[%s3254 + $0x38] sm:$0xff]
      %3263 = vmatprep.subr.mxu0 0.0
      %3264 = vmatpush1.msra.mxu0 %v3255
      %3265 = vmatprep.subr.mxu0 0.0
      %3266 = vmatpush1.msra.mxu0 %v3256
      %3267 = vmatprep.subr.mxu0 0.0
      %3268 = vmatpush1.msra.mxu0 %v3257
      %3269 = vmatprep.subr.mxu0 0.0
      %3270 = vmatpush1.msra.mxu0 %v3258
      %3271 = vmatprep.subr.mxu0 0.0
      %3272 = vmatpush1.msra.mxu0 %v3259
      %3273 = vmatprep.subr.mxu0 0.0
      %3274 = vmatpush1.msra.mxu0 %v3260
      %3275 = vmatprep.subr.mxu0 0.0
      %3276 = vmatpush1.msra.mxu0 %v3261
      %3277 = vmatprep.subr.mxu0 0.0
      %3278 = vmatpush1.msra.mxu0 %v3262
      %3279 = vmatprep.subr.mxu0 0.0
      %3280 = vmatpush1.msra.mxu0 0.0
      %3281 = vmatprep.subr.mxu0 0.0
      %3282 = vmatpush1.msra.mxu0 0.0
      %3283 = vmatprep.subr.mxu0 0.0
      %3284 = vmatpush1.msra.mxu0 0.0
      %3285 = vmatprep.subr.mxu0 0.0
      %3286 = vmatpush1.msra.mxu0 0.0
      %3287 = vmatprep.subr.mxu0 0.0
      %3288 = vmatpush1.msra.mxu0 0.0
      %3289 = vmatprep.subr.mxu0 0.0
      %3290 = vmatpush1.msra.mxu0 0.0
      %3291 = vmatprep.subr.mxu0 0.0
      %3292 = vmatpush1.msra.mxu0 0.0
      %3293 = vmatprep.subr.mxu0 0.0
      %3294 = vmatpush1.msra.mxu0 0.0
      %3295 = vmatprep.subr.mxu0 0.0
      %3296 = vmatpush1.msra.mxu0 0.0
      %3297 = vmatprep.subr.mxu0 0.0
      %3298 = vmatpush1.msra.mxu0 0.0
      %3299 = vmatprep.subr.mxu0 0.0
      %3300 = vmatpush1.msra.mxu0 0.0
      %3301 = vmatprep.subr.mxu0 0.0
      %3302 = vmatpush1.msra.mxu0 0.0
      %3303 = vmatprep.subr.mxu0 0.0
      %3304 = vmatpush1.msra.mxu0 0.0
      %3305 = vmatprep.subr.mxu0 0.0
      %3306 = vmatpush1.msra.mxu0 0.0
      %3307 = vmatprep.subr.mxu0 0.0
      %3308 = vmatpush1.msra.mxu0 0.0
      %3309 = vmatprep.subr.mxu0 0.0
      %3310 = vmatpush1.msra.mxu0 0.0
      %3311 = vmatprep.subr.mxu0 0.0
      %3312 = vmatpush1.msra.mxu0 0.0
      %3313 = vmatprep.subr.mxu0 0.0
      %3314 = vmatpush1.msra.mxu0 0.0
      %3315 = vmatprep.subr.mxu0 0.0
      %3316 = vmatpush1.msra.mxu0 0.0
      %3317 = vmatprep.subr.mxu0 0.0
      %3318 = vmatpush1.msra.mxu0 0.0
      %3319 = vmatprep.subr.mxu0 0.0
      %3320 = vmatpush1.msra.mxu0 0.0
      %3321 = vmatprep.subr.mxu0 0.0
      %3322 = vmatpush1.msra.mxu0 0.0
      %3323 = vmatprep.subr.mxu0 0.0
      %3324 = vmatpush1.msra.mxu0 0.0
      %3325 = vmatprep.subr.mxu0 0.0
      %3326 = vmatpush1.msra.mxu0 0.0
      %3327 = vmatprep.mubr.f32.mxu0 0.0
      %3328 = vmatmul.mubr.f32.gmra.mrb[0].mxu0 %v1605
      %v3329 = vpop.f32.mrb[0].mxu0
      %v3330 = vadd.f32 0.0, %v3329
      %v3331 = vpop.f32.mrb[0].mxu0
      %3332 = vmatprep.mubr.f32.mxu0 0.0
      %3333 = vmatmul.mubr.f32.gmra.mrb[0].mxu0 %v1608
      %v3334 = vpop.f32.mrb[0].mxu0
      %v3335 = vadd.f32 0.0, %v3334
      %v3336 = vpop.f32.mrb[0].mxu0
      %3337 = vmatprep.mubr.f32.mxu0 0.0
      %3338 = vmatmul.mubr.f32.gmra.mrb[0].mxu0 %v1611
      %v3339 = vpop.f32.mrb[0].mxu0
      %v3340 = vadd.f32 0.0, %v3339
      %v3341 = vpop.f32.mrb[0].mxu0
      %3342 = vmatprep.mubr.f32.mxu0 0.0
      %3343 = vmatmul.mubr.f32.gmra.mrb[0].mxu0 %v1614
      %v3344 = vpop.f32.mrb[0].mxu0
      %v3345 = vadd.f32 0.0, %v3344
      %v3346 = vpop.f32.mrb[0].mxu0
      %3347 = vmatprep.mubr.f32.mxu0 0.0
      %3348 = vmatmul.mubr.f32.gmra.mrb[0].mxu0 %v1617
      %v3349 = vpop.f32.mrb[0].mxu0
      %v3350 = vadd.f32 0.0, %v3349
      %v3351 = vpop.f32.mrb[0].mxu0
      %3352 = vmatprep.mubr.f32.mxu0 0.0
      %3353 = vmatmul.mubr.f32.gmra.mrb[0].mxu0 %v1620
      %v3354 = vpop.f32.mrb[0].mxu0
      %v3355 = vadd.f32 0.0, %v3354
      %v3356 = vpop.f32.mrb[0].mxu0
      %3357 = vmatprep.mubr.f32.mxu0 0.0
      %3358 = vmatmul.mubr.f32.gmra.mrb[0].mxu0 %v1623
      %v3359 = vpop.f32.mrb[0].mxu0
      %v3360 = vadd.f32 0.0, %v3359
      %v3361 = vpop.f32.mrb[0].mxu0
      %3362 = vmatprep.mubr.f32.mxu0 0.0
      %3363 = vmatmul.mubr.f32.gmra.mrb[0].mxu0 %v1626
      %v3364 = vpop.f32.mrb[0].mxu0
      %v3365 = vadd.f32 0.0, %v3364
      %v3366 = vpop.f32.mrb[0].mxu0
      %3367 = vmatprep.mubr.f32.mxu0 0.0
      %3368 = vmatmul.mubr.f32.gmra.mrb[0].mxu0 %v1629
      %v3369 = vpop.f32.mrb[0].mxu0
      %v3370 = vadd.f32 0.0, %v3369
      %v3371 = vpop.f32.mrb[0].mxu0
      %3372 = vmatprep.mubr.f32.mxu0 0.0
      %3373 = vmatmul.mubr.f32.gmra.mrb[0].mxu0 %v1632
      %v3374 = vpop.f32.mrb[0].mxu0
      %v3375 = vadd.f32 0.0, %v3374
      %v3376 = vpop.f32.mrb[0].mxu0
      %3377 = vmatprep.mubr.f32.mxu0 0.0
      %3378 = vmatmul.mubr.f32.gmra.mrb[0].mxu0 %v1635
      %v3379 = vpop.f32.mrb[0].mxu0
      %v3380 = vadd.f32 0.0, %v3379
      %v3381 = vpop.f32.mrb[0].mxu0
      %3382 = vmatprep.mubr.f32.mxu0 0.0
      %3383 = vmatmul.mubr.f32.gmra.mrb[0].mxu0 %v1638
      %v3384 = vpop.f32.mrb[0].mxu0
      %v3385 = vadd.f32 0.0, %v3384
      %v3386 = vpop.f32.mrb[0].mxu0
      %3387 = vmatprep.mubr.f32.mxu0 0.0
      %3388 = vmatmul.mubr.f32.gmra.mrb[0].mxu0 %v1641
      %v3389 = vpop.f32.mrb[0].mxu0
      %v3390 = vadd.f32 0.0, %v3389
      %v3391 = vpop.f32.mrb[0].mxu0
      %3392 = vmatprep.mubr.f32.mxu0 0.0
      %3393 = vmatmul.mubr.f32.gmra.mrb[0].mxu0 %v1644
      %v3394 = vpop.f32.mrb[0].mxu0
      %v3395 = vadd.f32 0.0, %v3394
      %v3396 = vpop.f32.mrb[0].mxu0
      %3397 = vmatprep.mubr.f32.mxu0 0.0
      %3398 = vmatmul.mubr.f32.gmra.mrb[0].mxu0 %v1647
      %v3399 = vpop.f32.mrb[0].mxu0
      %v3400 = vadd.f32 0.0, %v3399
      %v3401 = vpop.f32.mrb[0].mxu0
      %3402 = vmatprep.mubr.f32.mxu0 0.0
      %3403 = vmatmul.mubr.f32.gmra.mrb[0].mxu0 %v1650
      %v3404 = vpop.f32.mrb[0].mxu0
      %v3405 = vadd.f32 0.0, %v3404
      %v3406 = vpop.f32.mrb[0].mxu0
      %3407 = vdwg.mxu0
      %v3409 = vsel %vm1334, %v3330, 0
      %v3412 = vsel %vm1334, %v3335, 0
      %v3415 = vsel %vm1334, %v3340, 0
      %v3418 = vsel %vm1334, %v3345, 0
      %v3421 = vsel %vm1334, %v3350, 0
      %v3424 = vsel %vm1334, %v3355, 0
      %v3427 = vsel %vm1334, %v3360, 0
      %v3430 = vsel %vm1334, %v3365, 0
      %v3433 = vsel %vm1334, %v3370, 0
      %v3436 = vsel %vm1334, %v3375, 0
      %v3439 = vsel %vm1334, %v3380, 0
      %v3442 = vsel %vm1334, %v3385, 0
      %v3445 = vsel %vm1334, %v3390, 0
      %v3448 = vsel %vm1334, %v3395, 0
      %v3451 = vsel %vm1334, %v3400, 0
      %v3454 = vsel %vm1334, %v3405, 0
      %3456 = vmatprep.subr.mxu0 0.0
      %3457 = vmatpush1.xpose.msra.mxu0 %v1605
      %3458 = vmatprep.subr.mxu0 0.0
      %3459 = vmatpush1.xpose.msra.mxu0 %v1608
      %3460 = vmatprep.subr.mxu0 0.0
      %3461 = vmatpush1.xpose.msra.mxu0 %v1611
      %3462 = vmatprep.subr.mxu0 0.0
      %3463 = vmatpush1.xpose.msra.mxu0 %v1614
      %3464 = vmatprep.subr.mxu0 0.0
      %3465 = vmatpush1.xpose.msra.mxu0 %v1617
      %3466 = vmatprep.subr.mxu0 0.0
      %3467 = vmatpush1.xpose.msra.mxu0 %v1620
      %3468 = vmatprep.subr.mxu0 0.0
      %3469 = vmatpush1.xpose.msra.mxu0 %v1623
      %3470 = vmatprep.subr.mxu0 0.0
      %3471 = vmatpush1.xpose.msra.mxu0 %v1626
      %3472 = vmatprep.subr.mxu0 0.0
      %3473 = vmatpush1.xpose.msra.mxu0 %v1629
      %3474 = vmatprep.subr.mxu0 0.0
      %3475 = vmatpush1.xpose.msra.mxu0 %v1632
      %3476 = vmatprep.subr.mxu0 0.0
      %3477 = vmatpush1.xpose.msra.mxu0 %v1635
      %3478 = vmatprep.subr.mxu0 0.0
      %3479 = vmatpush1.xpose.msra.mxu0 %v1638
      %3480 = vmatprep.subr.mxu0 0.0
      %3481 = vmatpush1.xpose.msra.mxu0 %v1641
      %3482 = vmatprep.subr.mxu0 0.0
      %3483 = vmatpush1.xpose.msra.mxu0 %v1644
      %3484 = vmatprep.subr.mxu0 0.0
      %3485 = vmatpush1.xpose.msra.mxu0 %v1647
      %3486 = vmatprep.subr.mxu0 0.0
      %3487 = vmatpush1.xpose.msra.mxu0 %v1650
      %3488 = vmatprep.subr.mxu0 0.0
      %3489 = vmatpush1.xpose.msra.mxu0 0.0
      %3490 = vmatprep.subr.mxu0 0.0
      %3491 = vmatpush1.xpose.msra.mxu0 0.0
      %3492 = vmatprep.subr.mxu0 0.0
      %3493 = vmatpush1.xpose.msra.mxu0 0.0
      %3494 = vmatprep.subr.mxu0 0.0
      %3495 = vmatpush1.xpose.msra.mxu0 0.0
      %3496 = vmatprep.subr.mxu0 0.0
      %3497 = vmatpush1.xpose.msra.mxu0 0.0
      %3498 = vmatprep.subr.mxu0 0.0
      %3499 = vmatpush1.xpose.msra.mxu0 0.0
      %3500 = vmatprep.subr.mxu0 0.0
      %3501 = vmatpush1.xpose.msra.mxu0 0.0
      %3502 = vmatprep.subr.mxu0 0.0
      %3503 = vmatpush1.xpose.msra.mxu0 0.0
      %3504 = vmatprep.subr.mxu0 0.0
      %3505 = vmatpush1.xpose.msra.mxu0 0.0
      %3506 = vmatprep.subr.mxu0 0.0
      %3507 = vmatpush1.xpose.msra.mxu0 0.0
      %3508 = vmatprep.subr.mxu0 0.0
      %3509 = vmatpush1.xpose.msra.mxu0 0.0
      %3510 = vmatprep.subr.mxu0 0.0
      %3511 = vmatpush1.xpose.msra.mxu0 0.0
      %3512 = vmatprep.subr.mxu0 0.0
      %3513 = vmatpush1.xpose.msra.mxu0 0.0
      %3514 = vmatprep.subr.mxu0 0.0
      %3515 = vmatpush1.xpose.msra.mxu0 0.0
      %3516 = vmatprep.subr.mxu0 0.0
      %3517 = vmatpush1.xpose.msra.mxu0 0.0
      %3518 = vmatprep.subr.mxu0 0.0
      %3519 = vmatpush1.xpose.msra.mxu0 0.0
      %3520 = vmatprep.mubr.f32.mxu0 0.0
      %3521 = vmatmul.mubr.f32.gmra.mrb[0].mxu0 %v3409
      %v3522 = vpop.f32.mrb[0].mxu0
      %v3523 = vadd.f32 0.0, %v3522
      %v3524 = vpop.f32.mrb[0].mxu0
      %3525 = vmatprep.mubr.f32.mxu0 0.0
      %3526 = vmatmul.mubr.f32.gmra.mrb[0].mxu0 %v3412
      %v3527 = vpop.f32.mrb[0].mxu0
      %v3528 = vadd.f32 0.0, %v3527
      %v3529 = vpop.f32.mrb[0].mxu0
      %3530 = vmatprep.mubr.f32.mxu0 0.0
      %3531 = vmatmul.mubr.f32.gmra.mrb[0].mxu0 %v3415
      %v3532 = vpop.f32.mrb[0].mxu0
      %v3533 = vadd.f32 0.0, %v3532
      %v3534 = vpop.f32.mrb[0].mxu0
      %3535 = vmatprep.mubr.f32.mxu0 0.0
      %3536 = vmatmul.mubr.f32.gmra.mrb[0].mxu0 %v3418
      %v3537 = vpop.f32.mrb[0].mxu0
      %v3538 = vadd.f32 0.0, %v3537
      %v3539 = vpop.f32.mrb[0].mxu0
      %3540 = vmatprep.mubr.f32.mxu0 0.0
      %3541 = vmatmul.mubr.f32.gmra.mrb[0].mxu0 %v3421
      %v3542 = vpop.f32.mrb[0].mxu0
      %v3543 = vadd.f32 0.0, %v3542
      %v3544 = vpop.f32.mrb[0].mxu0
      %3545 = vmatprep.mubr.f32.mxu0 0.0
      %3546 = vmatmul.mubr.f32.gmra.mrb[0].mxu0 %v3424
      %v3547 = vpop.f32.mrb[0].mxu0
      %v3548 = vadd.f32 0.0, %v3547
      %v3549 = vpop.f32.mrb[0].mxu0
      %3550 = vmatprep.mubr.f32.mxu0 0.0
      %3551 = vmatmul.mubr.f32.gmra.mrb[0].mxu0 %v3427
      %v3552 = vpop.f32.mrb[0].mxu0
      %v3553 = vadd.f32 0.0, %v3552
      %v3554 = vpop.f32.mrb[0].mxu0
      %3555 = vmatprep.mubr.f32.mxu0 0.0
      %3556 = vmatmul.mubr.f32.gmra.mrb[0].mxu0 %v3430
      %v3557 = vpop.f32.mrb[0].mxu0
      %v3558 = vadd.f32 0.0, %v3557
      %v3559 = vpop.f32.mrb[0].mxu0
      %3560 = vmatprep.mubr.f32.mxu0 0.0
      %3561 = vmatmul.mubr.f32.gmra.mrb[0].mxu0 %v3433
      %v3562 = vpop.f32.mrb[0].mxu0
      %v3563 = vadd.f32 0.0, %v3562
      %v3564 = vpop.f32.mrb[0].mxu0
      %3565 = vmatprep.mubr.f32.mxu0 0.0
      %3566 = vmatmul.mubr.f32.gmra.mrb[0].mxu0 %v3436
      %v3567 = vpop.f32.mrb[0].mxu0
      %v3568 = vadd.f32 0.0, %v3567
      %v3569 = vpop.f32.mrb[0].mxu0
      %3570 = vmatprep.mubr.f32.mxu0 0.0
      %3571 = vmatmul.mubr.f32.gmra.mrb[0].mxu0 %v3439
      %v3572 = vpop.f32.mrb[0].mxu0
      %v3573 = vadd.f32 0.0, %v3572
      %v3574 = vpop.f32.mrb[0].mxu0
      %3575 = vmatprep.mubr.f32.mxu0 0.0
      %3576 = vmatmul.mubr.f32.gmra.mrb[0].mxu0 %v3442
      %v3577 = vpop.f32.mrb[0].mxu0
      %v3578 = vadd.f32 0.0, %v3577
      %v3579 = vpop.f32.mrb[0].mxu0
      %3580 = vmatprep.mubr.f32.mxu0 0.0
      %3581 = vmatmul.mubr.f32.gmra.mrb[0].mxu0 %v3445
      %v3582 = vpop.f32.mrb[0].mxu0
      %v3583 = vadd.f32 0.0, %v3582
      %v3584 = vpop.f32.mrb[0].mxu0
      %3585 = vmatprep.mubr.f32.mxu0 0.0
      %3586 = vmatmul.mubr.f32.gmra.mrb[0].mxu0 %v3448
      %v3587 = vpop.f32.mrb[0].mxu0
      %v3588 = vadd.f32 0.0, %v3587
      %v3589 = vpop.f32.mrb[0].mxu0
      %3590 = vmatprep.mubr.f32.mxu0 0.0
      %3591 = vmatmul.mubr.f32.gmra.mrb[0].mxu0 %v3451
      %v3592 = vpop.f32.mrb[0].mxu0
      %v3593 = vadd.f32 0.0, %v3592
      %v3594 = vpop.f32.mrb[0].mxu0
      %3595 = vmatprep.mubr.f32.mxu0 0.0
      %3596 = vmatmul.mubr.f32.gmra.mrb[0].mxu0 %v3454
      %v3597 = vpop.f32.mrb[0].mxu0
      %v3598 = vadd.f32 0.0, %v3597
      %v3599 = vpop.f32.mrb[0].mxu0
      %3600 = vdwg.mxu0
      %3601 = vmax.xlane.f32.xlu0 %v3523
      %v3602 = vpop.xlane.xlu0 %3601
      %3603 = vmax.xlane.f32.xlu0 %v3528
      %v3604 = vpop.xlane.xlu0 %3603
      %3605 = vmax.xlane.f32.xlu0 %v3533
      %v3606 = vpop.xlane.xlu0 %3605
      %3607 = vmax.xlane.f32.xlu0 %v3538
      %v3608 = vpop.xlane.xlu0 %3607
      %3609 = vmax.xlane.f32.xlu0 %v3543
      %v3610 = vpop.xlane.xlu0 %3609
      %3611 = vmax.xlane.f32.xlu0 %v3548
      %v3612 = vpop.xlane.xlu0 %3611
      %3613 = vmax.xlane.f32.xlu0 %v3553
      %v3614 = vpop.xlane.xlu0 %3613
      %3615 = vmax.xlane.f32.xlu0 %v3558
      %v3616 = vpop.xlane.xlu0 %3615
      %3617 = vmax.xlane.f32.xlu0 %v3563
      %v3618 = vpop.xlane.xlu0 %3617
      %3619 = vmax.xlane.f32.xlu0 %v3568
      %v3620 = vpop.xlane.xlu0 %3619
      %3621 = vmax.xlane.f32.xlu0 %v3573
      %v3622 = vpop.xlane.xlu0 %3621
      %3623 = vmax.xlane.f32.xlu0 %v3578
      %v3624 = vpop.xlane.xlu0 %3623
      %3625 = vmax.xlane.f32.xlu0 %v3583
      %v3626 = vpop.xlane.xlu0 %3625
      %3627 = vmax.xlane.f32.xlu0 %v3588
      %v3628 = vpop.xlane.xlu0 %3627
      %3629 = vmax.xlane.f32.xlu0 %v3593
      %v3630 = vpop.xlane.xlu0 %3629
      %3631 = vmax.xlane.f32.xlu0 %v3598
      %v3632 = vpop.xlane.xlu0 %3631
      %v3633 = vsub.f32 %v3523, %v3602
      %v3634 = vsub.f32 %v3528, %v3604
      %v3635 = vsub.f32 %v3533, %v3606
      %v3636 = vsub.f32 %v3538, %v3608
      %v3637 = vsub.f32 %v3543, %v3610
      %v3638 = vsub.f32 %v3548, %v3612
      %v3639 = vsub.f32 %v3553, %v3614
      %v3640 = vsub.f32 %v3558, %v3616
      %v3641 = vsub.f32 %v3563, %v3618
      %v3642 = vsub.f32 %v3568, %v3620
      %v3643 = vsub.f32 %v3573, %v3622
      %v3644 = vsub.f32 %v3578, %v3624
      %v3645 = vsub.f32 %v3583, %v3626
      %v3646 = vsub.f32 %v3588, %v3628
      %v3647 = vsub.f32 %v3593, %v3630
      %v3648 = vsub.f32 %v3598, %v3632
      %v3649 = vmul.f32 %v3633, 1.442695
      %v3650 = vpow.pop %v3649
      %v3651 = vmul.f32 %v3634, 1.442695
      %v3652 = vpow.pop %v3651
      %v3653 = vmul.f32 %v3635, 1.442695
      %v3654 = vpow.pop %v3653
      %v3655 = vmul.f32 %v3636, 1.442695
      %v3656 = vpow.pop %v3655
      %v3657 = vmul.f32 %v3637, 1.442695
      %v3658 = vpow.pop %v3657
      %v3659 = vmul.f32 %v3638, 1.442695
      %v3660 = vpow.pop %v3659
      %v3661 = vmul.f32 %v3639, 1.442695
      %v3662 = vpow.pop %v3661
      %v3663 = vmul.f32 %v3640, 1.442695
      %v3664 = vpow.pop %v3663
      %v3665 = vmul.f32 %v3641, 1.442695
      %v3666 = vpow.pop %v3665
      %v3667 = vmul.f32 %v3642, 1.442695
      %v3668 = vpow.pop %v3667
      %v3669 = vmul.f32 %v3643, 1.442695
      %v3670 = vpow.pop %v3669
      %v3671 = vmul.f32 %v3644, 1.442695
      %v3672 = vpow.pop %v3671
      %v3673 = vmul.f32 %v3645, 1.442695
      %v3674 = vpow.pop %v3673
      %v3675 = vmul.f32 %v3646, 1.442695
      %v3676 = vpow.pop %v3675
      %v3677 = vmul.f32 %v3647, 1.442695
      %v3678 = vpow.pop %v3677
      %v3679 = vmul.f32 %v3648, 1.442695
      %v3680 = vpow.pop %v3679
      %3681 = vadd.xlane.f32.xlu0 %v3650
      %v3682 = vpop.xlane.xlu0 %3681
      %3683 = vadd.xlane.f32.xlu0 %v3652
      %v3684 = vpop.xlane.xlu0 %3683
      %3685 = vadd.xlane.f32.xlu0 %v3654
      %v3686 = vpop.xlane.xlu0 %3685
      %3687 = vadd.xlane.f32.xlu0 %v3656
      %v3688 = vpop.xlane.xlu0 %3687
      %3689 = vadd.xlane.f32.xlu0 %v3658
      %v3690 = vpop.xlane.xlu0 %3689
      %3691 = vadd.xlane.f32.xlu0 %v3660
      %v3692 = vpop.xlane.xlu0 %3691
      %3693 = vadd.xlane.f32.xlu0 %v3662
      %v3694 = vpop.xlane.xlu0 %3693
      %3695 = vadd.xlane.f32.xlu0 %v3664
      %v3696 = vpop.xlane.xlu0 %3695
      %3697 = vadd.xlane.f32.xlu0 %v3666
      %v3698 = vpop.xlane.xlu0 %3697
      %3699 = vadd.xlane.f32.xlu0 %v3668
      %v3700 = vpop.xlane.xlu0 %3699
      %3701 = vadd.xlane.f32.xlu0 %v3670
      %v3702 = vpop.xlane.xlu0 %3701
      %3703 = vadd.xlane.f32.xlu0 %v3672
      %v3704 = vpop.xlane.xlu0 %3703
      %3705 = vadd.xlane.f32.xlu0 %v3674
      %v3706 = vpop.xlane.xlu0 %3705
      %3707 = vadd.xlane.f32.xlu0 %v3676
      %v3708 = vpop.xlane.xlu0 %3707
      %3709 = vadd.xlane.f32.xlu0 %v3678
      %v3710 = vpop.xlane.xlu0 %3709
      %3711 = vadd.xlane.f32.xlu0 %v3680
      %v3712 = vpop.xlane.xlu0 %3711
      %v3713 = vrcp.pop %v3682
      %v3714 = vrcp.pop %v3684
      %v3715 = vrcp.pop %v3686
      %v3716 = vrcp.pop %v3688
      %v3717 = vrcp.pop %v3690
      %v3718 = vrcp.pop %v3692
      %v3719 = vrcp.pop %v3694
      %v3720 = vrcp.pop %v3696
      %v3721 = vrcp.pop %v3698
      %v3722 = vrcp.pop %v3700
      %v3723 = vrcp.pop %v3702
      %v3724 = vrcp.pop %v3704
      %v3725 = vrcp.pop %v3706
      %v3726 = vrcp.pop %v3708
      %v3727 = vrcp.pop %v3710
      %v3728 = vrcp.pop %v3712
      %v3729 = vmul.f32 %v3650, %v3713
      %v3730 = vmul.f32 %v3652, %v3714
      %v3731 = vmul.f32 %v3654, %v3715
      %v3732 = vmul.f32 %v3656, %v3716
      %v3733 = vmul.f32 %v3658, %v3717
      %v3734 = vmul.f32 %v3660, %v3718
      %v3735 = vmul.f32 %v3662, %v3719
      %v3736 = vmul.f32 %v3664, %v3720
      %v3737 = vmul.f32 %v3666, %v3721
      %v3738 = vmul.f32 %v3668, %v3722
      %v3739 = vmul.f32 %v3670, %v3723
      %v3740 = vmul.f32 %v3672, %v3724
      %v3741 = vmul.f32 %v3674, %v3725
      %v3742 = vmul.f32 %v3676, %v3726
      %v3743 = vmul.f32 %v3678, %v3727
      %v3744 = vmul.f32 %v3680, %v3728
      %s3745 = scalar_lea.vmem %s11, 128
      %v3746 = vld [vmem:[%s3745] sm:$0xff]
      %v3747 = vld [vmem:[%s3745 + $0x8] sm:$0xff]
      %v3748 = vld [vmem:[%s3745 + $0x10] sm:$0xff]
      %v3749 = vld [vmem:[%s3745 + $0x18] sm:$0xff]
      %v3750 = vld [vmem:[%s3745 + $0x20] sm:$0xff]
      %v3751 = vld [vmem:[%s3745 + $0x28] sm:$0xff]
      %v3752 = vld [vmem:[%s3745 + $0x30] sm:$0xff]
      %v3753 = vld [vmem:[%s3745 + $0x38] sm:$0xff]
      %3754 = vmatprep.subr.mxu0 0.0
      %3755 = vmatpush1.msra.mxu0 %v3746
      %3756 = vmatprep.subr.mxu0 0.0
      %3757 = vmatpush1.msra.mxu0 %v3747
      %3758 = vmatprep.subr.mxu0 0.0
      %3759 = vmatpush1.msra.mxu0 %v3748
      %3760 = vmatprep.subr.mxu0 0.0
      %3761 = vmatpush1.msra.mxu0 %v3749
      %3762 = vmatprep.subr.mxu0 0.0
      %3763 = vmatpush1.msra.mxu0 %v3750
      %3764 = vmatprep.subr.mxu0 0.0
      %3765 = vmatpush1.msra.mxu0 %v3751
      %3766 = vmatprep.subr.mxu0 0.0
      %3767 = vmatpush1.msra.mxu0 %v3752
      %3768 = vmatprep.subr.mxu0 0.0
      %3769 = vmatpush1.msra.mxu0 %v3753
      %3770 = vmatprep.subr.mxu0 0.0
      %3771 = vmatpush1.msra.mxu0 0.0
      %3772 = vmatprep.subr.mxu0 0.0
      %3773 = vmatpush1.msra.mxu0 0.0
      %3774 = vmatprep.subr.mxu0 0.0
      %3775 = vmatpush1.msra.mxu0 0.0
      %3776 = vmatprep.subr.mxu0 0.0
      %3777 = vmatpush1.msra.mxu0 0.0
      %3778 = vmatprep.subr.mxu0 0.0
      %3779 = vmatpush1.msra.mxu0 0.0
      %3780 = vmatprep.subr.mxu0 0.0
      %3781 = vmatpush1.msra.mxu0 0.0
      %3782 = vmatprep.subr.mxu0 0.0
      %3783 = vmatpush1.msra.mxu0 0.0
      %3784 = vmatprep.subr.mxu0 0.0
      %3785 = vmatpush1.msra.mxu0 0.0
      %3786 = vmatprep.subr.mxu0 0.0
      %3787 = vmatpush1.msra.mxu0 0.0
      %3788 = vmatprep.subr.mxu0 0.0
      %3789 = vmatpush1.msra.mxu0 0.0
      %3790 = vmatprep.subr.mxu0 0.0
      %3791 = vmatpush1.msra.mxu0 0.0
      %3792 = vmatprep.subr.mxu0 0.0
      %3793 = vmatpush1.msra.mxu0 0.0
      %3794 = vmatprep.subr.mxu0 0.0
      %3795 = vmatpush1.msra.mxu0 0.0
      %3796 = vmatprep.subr.mxu0 0.0
      %3797 = vmatpush1.msra.mxu0 0.0
      %3798 = vmatprep.subr.mxu0 0.0
      %3799 = vmatpush1.msra.mxu0 0.0
      %3800 = vmatprep.subr.mxu0 0.0
      %3801 = vmatpush1.msra.mxu0 0.0
      %3802 = vmatprep.subr.mxu0 0.0
      %3803 = vmatpush1.msra.mxu0 0.0
      %3804 = vmatprep.subr.mxu0 0.0
      %3805 = vmatpush1.msra.mxu0 0.0
      %3806 = vmatprep.subr.mxu0 0.0
      %3807 = vmatpush1.msra.mxu0 0.0
      %3808 = vmatprep.subr.mxu0 0.0
      %3809 = vmatpush1.msra.mxu0 0.0
      %3810 = vmatprep.subr.mxu0 0.0
      %3811 = vmatpush1.msra.mxu0 0.0
      %3812 = vmatprep.subr.mxu0 0.0
      %3813 = vmatpush1.msra.mxu0 0.0
      %3814 = vmatprep.subr.mxu0 0.0
      %3815 = vmatpush1.msra.mxu0 0.0
      %3816 = vmatprep.subr.mxu0 0.0
      %3817 = vmatpush1.msra.mxu0 0.0
      %3818 = vmatprep.mubr.f32.mxu0 0.0
      %3819 = vmatmul.mubr.f32.gmra.mrb[0].mxu0 %v1605
      %v3820 = vpop.f32.mrb[0].mxu0
      %v3821 = vadd.f32 0.0, %v3820
      %v3822 = vpop.f32.mrb[0].mxu0
      %3823 = vmatprep.mubr.f32.mxu0 0.0
      %3824 = vmatmul.mubr.f32.gmra.mrb[0].mxu0 %v1608
      %v3825 = vpop.f32.mrb[0].mxu0
      %v3826 = vadd.f32 0.0, %v3825
      %v3827 = vpop.f32.mrb[0].mxu0
      %3828 = vmatprep.mubr.f32.mxu0 0.0
      %3829 = vmatmul.mubr.f32.gmra.mrb[0].mxu0 %v1611
      %v3830 = vpop.f32.mrb[0].mxu0
      %v3831 = vadd.f32 0.0, %v3830
      %v3832 = vpop.f32.mrb[0].mxu0
      %3833 = vmatprep.mubr.f32.mxu0 0.0
      %3834 = vmatmul.mubr.f32.gmra.mrb[0].mxu0 %v1614
      %v3835 = vpop.f32.mrb[0].mxu0
      %v3836 = vadd.f32 0.0, %v3835
      %v3837 = vpop.f32.mrb[0].mxu0
      %3838 = vmatprep.mubr.f32.mxu0 0.0
      %3839 = vmatmul.mubr.f32.gmra.mrb[0].mxu0 %v1617
      %v3840 = vpop.f32.mrb[0].mxu0
      %v3841 = vadd.f32 0.0, %v3840
      %v3842 = vpop.f32.mrb[0].mxu0
      %3843 = vmatprep.mubr.f32.mxu0 0.0
      %3844 = vmatmul.mubr.f32.gmra.mrb[0].mxu0 %v1620
      %v3845 = vpop.f32.mrb[0].mxu0
      %v3846 = vadd.f32 0.0, %v3845
      %v3847 = vpop.f32.mrb[0].mxu0
      %3848 = vmatprep.mubr.f32.mxu0 0.0
      %3849 = vmatmul.mubr.f32.gmra.mrb[0].mxu0 %v1623
      %v3850 = vpop.f32.mrb[0].mxu0
      %v3851 = vadd.f32 0.0, %v3850
      %v3852 = vpop.f32.mrb[0].mxu0
      %3853 = vmatprep.mubr.f32.mxu0 0.0
      %3854 = vmatmul.mubr.f32.gmra.mrb[0].mxu0 %v1626
      %v3855 = vpop.f32.mrb[0].mxu0
      %v3856 = vadd.f32 0.0, %v3855
      %v3857 = vpop.f32.mrb[0].mxu0
      %3858 = vmatprep.mubr.f32.mxu0 0.0
      %3859 = vmatmul.mubr.f32.gmra.mrb[0].mxu0 %v1629
      %v3860 = vpop.f32.mrb[0].mxu0
      %v3861 = vadd.f32 0.0, %v3860
      %v3862 = vpop.f32.mrb[0].mxu0
      %3863 = vmatprep.mubr.f32.mxu0 0.0
      %3864 = vmatmul.mubr.f32.gmra.mrb[0].mxu0 %v1632
      %v3865 = vpop.f32.mrb[0].mxu0
      %v3866 = vadd.f32 0.0, %v3865
      %v3867 = vpop.f32.mrb[0].mxu0
      %3868 = vmatprep.mubr.f32.mxu0 0.0
      %3869 = vmatmul.mubr.f32.gmra.mrb[0].mxu0 %v1635
      %v3870 = vpop.f32.mrb[0].mxu0
      %v3871 = vadd.f32 0.0, %v3870
      %v3872 = vpop.f32.mrb[0].mxu0
      %3873 = vmatprep.mubr.f32.mxu0 0.0
      %3874 = vmatmul.mubr.f32.gmra.mrb[0].mxu0 %v1638
      %v3875 = vpop.f32.mrb[0].mxu0
      %v3876 = vadd.f32 0.0, %v3875
      %v3877 = vpop.f32.mrb[0].mxu0
      %3878 = vmatprep.mubr.f32.mxu0 0.0
      %3879 = vmatmul.mubr.f32.gmra.mrb[0].mxu0 %v1641
      %v3880 = vpop.f32.mrb[0].mxu0
      %v3881 = vadd.f32 0.0, %v3880
      %v3882 = vpop.f32.mrb[0].mxu0
      %3883 = vmatprep.mubr.f32.mxu0 0.0
      %3884 = vmatmul.mubr.f32.gmra.mrb[0].mxu0 %v1644
      %v3885 = vpop.f32.mrb[0].mxu0
      %v3886 = vadd.f32 0.0, %v3885
      %v3887 = vpop.f32.mrb[0].mxu0
      %3888 = vmatprep.mubr.f32.mxu0 0.0
      %3889 = vmatmul.mubr.f32.gmra.mrb[0].mxu0 %v1647
      %v3890 = vpop.f32.mrb[0].mxu0
      %v3891 = vadd.f32 0.0, %v3890
      %v3892 = vpop.f32.mrb[0].mxu0
      %3893 = vmatprep.mubr.f32.mxu0 0.0
      %3894 = vmatmul.mubr.f32.gmra.mrb[0].mxu0 %v1650
      %v3895 = vpop.f32.mrb[0].mxu0
      %v3896 = vadd.f32 0.0, %v3895
      %v3897 = vpop.f32.mrb[0].mxu0
      %3898 = vdwg.mxu0
      %3899 = vmatprep.subr.mxu0 0.0
      %3900 = vmatpush1.msra.mxu0 %v3821
      %3901 = vmatprep.subr.mxu0 0.0
      %3902 = vmatpush1.msra.mxu0 %v3826
      %3903 = vmatprep.subr.mxu0 0.0
      %3904 = vmatpush1.msra.mxu0 %v3831
      %3905 = vmatprep.subr.mxu0 0.0
      %3906 = vmatpush1.msra.mxu0 %v3836
      %3907 = vmatprep.subr.mxu0 0.0
      %3908 = vmatpush1.msra.mxu0 %v3841
      %3909 = vmatprep.subr.mxu0 0.0
      %3910 = vmatpush1.msra.mxu0 %v3846
      %3911 = vmatprep.subr.mxu0 0.0
      %3912 = vmatpush1.msra.mxu0 %v3851
      %3913 = vmatprep.subr.mxu0 0.0
      %3914 = vmatpush1.msra.mxu0 %v3856
      %3915 = vmatprep.subr.mxu0 0.0
      %3916 = vmatpush1.msra.mxu0 %v3861
      %3917 = vmatprep.subr.mxu0 0.0
      %3918 = vmatpush1.msra.mxu0 %v3866
      %3919 = vmatprep.subr.mxu0 0.0
      %3920 = vmatpush1.msra.mxu0 %v3871
      %3921 = vmatprep.subr.mxu0 0.0
      %3922 = vmatpush1.msra.mxu0 %v3876
      %3923 = vmatprep.subr.mxu0 0.0
      %3924 = vmatpush1.msra.mxu0 %v3881
      %3925 = vmatprep.subr.mxu0 0.0
      %3926 = vmatpush1.msra.mxu0 %v3886
      %3927 = vmatprep.subr.mxu0 0.0
      %3928 = vmatpush1.msra.mxu0 %v3891
      %3929 = vmatprep.subr.mxu0 0.0
      %3930 = vmatpush1.msra.mxu0 %v3896
      %3931 = vmatprep.subr.mxu0 0.0
      %3932 = vmatpush1.msra.mxu0 0.0
      %3933 = vmatprep.subr.mxu0 0.0
      %3934 = vmatpush1.msra.mxu0 0.0
      %3935 = vmatprep.subr.mxu0 0.0
      %3936 = vmatpush1.msra.mxu0 0.0
      %3937 = vmatprep.subr.mxu0 0.0
      %3938 = vmatpush1.msra.mxu0 0.0
      %3939 = vmatprep.subr.mxu0 0.0
      %3940 = vmatpush1.msra.mxu0 0.0
      %3941 = vmatprep.subr.mxu0 0.0
      %3942 = vmatpush1.msra.mxu0 0.0
      %3943 = vmatprep.subr.mxu0 0.0
      %3944 = vmatpush1.msra.mxu0 0.0
      %3945 = vmatprep.subr.mxu0 0.0
      %3946 = vmatpush1.msra.mxu0 0.0
      %3947 = vmatprep.subr.mxu0 0.0
      %3948 = vmatpush1.msra.mxu0 0.0
      %3949 = vmatprep.subr.mxu0 0.0
      %3950 = vmatpush1.msra.mxu0 0.0
      %3951 = vmatprep.subr.mxu0 0.0
      %3952 = vmatpush1.msra.mxu0 0.0
      %3953 = vmatprep.subr.mxu0 0.0
      %3954 = vmatpush1.msra.mxu0 0.0
      %3955 = vmatprep.subr.mxu0 0.0
      %3956 = vmatpush1.msra.mxu0 0.0
      %3957 = vmatprep.subr.mxu0 0.0
      %3958 = vmatpush1.msra.mxu0 0.0
      %3959 = vmatprep.subr.mxu0 0.0
      %3960 = vmatpush1.msra.mxu0 0.0
      %3961 = vmatprep.subr.mxu0 0.0
      %3962 = vmatpush1.msra.mxu0 0.0
      %3963 = vmatprep.mubr.f32.mxu0 0.0
      %3964 = vmatmul.mubr.f32.gmra.mrb[0].mxu0 %v3729
      %v3965 = vpop.f32.mrb[0].mxu0
      %v3966 = vadd.f32 0.0, %v3965
      %v3967 = vpop.f32.mrb[0].mxu0
      %3968 = vmatprep.mubr.f32.mxu0 0.0
      %3969 = vmatmul.mubr.f32.gmra.mrb[0].mxu0 %v3730
      %v3970 = vpop.f32.mrb[0].mxu0
      %v3971 = vadd.f32 0.0, %v3970
      %v3972 = vpop.f32.mrb[0].mxu0
      %3973 = vmatprep.mubr.f32.mxu0 0.0
      %3974 = vmatmul.mubr.f32.gmra.mrb[0].mxu0 %v3731
      %v3975 = vpop.f32.mrb[0].mxu0
      %v3976 = vadd.f32 0.0, %v3975
      %v3977 = vpop.f32.mrb[0].mxu0
      %3978 = vmatprep.mubr.f32.mxu0 0.0
      %3979 = vmatmul.mubr.f32.gmra.mrb[0].mxu0 %v3732
      %v3980 = vpop.f32.mrb[0].mxu0
      %v3981 = vadd.f32 0.0, %v3980
      %v3982 = vpop.f32.mrb[0].mxu0
      %3983 = vmatprep.mubr.f32.mxu0 0.0
      %3984 = vmatmul.mubr.f32.gmra.mrb[0].mxu0 %v3733
      %v3985 = vpop.f32.mrb[0].mxu0
      %v3986 = vadd.f32 0.0, %v3985
      %v3987 = vpop.f32.mrb[0].mxu0
      %3988 = vmatprep.mubr.f32.mxu0 0.0
      %3989 = vmatmul.mubr.f32.gmra.mrb[0].mxu0 %v3734
      %v3990 = vpop.f32.mrb[0].mxu0
      %v3991 = vadd.f32 0.0, %v3990
      %v3992 = vpop.f32.mrb[0].mxu0
      %3993 = vmatprep.mubr.f32.mxu0 0.0
      %3994 = vmatmul.mubr.f32.gmra.mrb[0].mxu0 %v3735
      %v3995 = vpop.f32.mrb[0].mxu0
      %v3996 = vadd.f32 0.0, %v3995
      %v3997 = vpop.f32.mrb[0].mxu0
      %3998 = vmatprep.mubr.f32.mxu0 0.0
      %3999 = vmatmul.mubr.f32.gmra.mrb[0].mxu0 %v3736
      %v4000 = vpop.f32.mrb[0].mxu0
      %v4001 = vadd.f32 0.0, %v4000
      %v4002 = vpop.f32.mrb[0].mxu0
      %4003 = vmatprep.mubr.f32.mxu0 0.0
      %4004 = vmatmul.mubr.f32.gmra.mrb[0].mxu0 %v3737
      %v4005 = vpop.f32.mrb[0].mxu0
      %v4006 = vadd.f32 0.0, %v4005
      %v4007 = vpop.f32.mrb[0].mxu0
      %4008 = vmatprep.mubr.f32.mxu0 0.0
      %4009 = vmatmul.mubr.f32.gmra.mrb[0].mxu0 %v3738
      %v4010 = vpop.f32.mrb[0].mxu0
      %v4011 = vadd.f32 0.0, %v4010
      %v4012 = vpop.f32.mrb[0].mxu0
      %4013 = vmatprep.mubr.f32.mxu0 0.0
      %4014 = vmatmul.mubr.f32.gmra.mrb[0].mxu0 %v3739
      %v4015 = vpop.f32.mrb[0].mxu0
      %v4016 = vadd.f32 0.0, %v4015
      %v4017 = vpop.f32.mrb[0].mxu0
      %4018 = vmatprep.mubr.f32.mxu0 0.0
      %4019 = vmatmul.mubr.f32.gmra.mrb[0].mxu0 %v3740
      %v4020 = vpop.f32.mrb[0].mxu0
      %v4021 = vadd.f32 0.0, %v4020
      %v4022 = vpop.f32.mrb[0].mxu0
      %4023 = vmatprep.mubr.f32.mxu0 0.0
      %4024 = vmatmul.mubr.f32.gmra.mrb[0].mxu0 %v3741
      %v4025 = vpop.f32.mrb[0].mxu0
      %v4026 = vadd.f32 0.0, %v4025
      %v4027 = vpop.f32.mrb[0].mxu0
      %4028 = vmatprep.mubr.f32.mxu0 0.0
      %4029 = vmatmul.mubr.f32.gmra.mrb[0].mxu0 %v3742
      %v4030 = vpop.f32.mrb[0].mxu0
      %v4031 = vadd.f32 0.0, %v4030
      %v4032 = vpop.f32.mrb[0].mxu0
      %4033 = vmatprep.mubr.f32.mxu0 0.0
      %4034 = vmatmul.mubr.f32.gmra.mrb[0].mxu0 %v3743
      %v4035 = vpop.f32.mrb[0].mxu0
      %v4036 = vadd.f32 0.0, %v4035
      %v4037 = vpop.f32.mrb[0].mxu0
      %4038 = vmatprep.mubr.f32.mxu0 0.0
      %4039 = vmatmul.mubr.f32.gmra.mrb[0].mxu0 %v3744
      %v4040 = vpop.f32.mrb[0].mxu0
      %v4041 = vadd.f32 0.0, %v4040
      %v4042 = vpop.f32.mrb[0].mxu0
      %4043 = vdwg.mxu0
      %v4044 = vadd.f32 %v3238, %v3966
      %v4045 = vadd.f32 %v3239, %v3971
      %v4046 = vadd.f32 %v3240, %v3976
      %v4047 = vadd.f32 %v3241, %v3981
      %v4048 = vadd.f32 %v3242, %v3986
      %v4049 = vadd.f32 %v3243, %v3991
      %v4050 = vadd.f32 %v3244, %v3996
      %v4051 = vadd.f32 %v3245, %v4001
      %v4052 = vadd.f32 %v3246, %v4006
      %v4053 = vadd.f32 %v3247, %v4011
      %v4054 = vadd.f32 %v3248, %v4016
      %v4055 = vadd.f32 %v3249, %v4021
      %v4056 = vadd.f32 %v3250, %v4026
      %v4057 = vadd.f32 %v3251, %v4031
      %v4058 = vadd.f32 %v3252, %v4036
      %v4059 = vadd.f32 %v3253, %v4041
      %s4060 = scalar_lea.vmem %s9, 192
      %v4061 = vld [vmem:[%s4060] sm:$0xff]
      %v4062 = vld [vmem:[%s4060 + $0x8] sm:$0xff]
      %v4063 = vld [vmem:[%s4060 + $0x10] sm:$0xff]
      %v4064 = vld [vmem:[%s4060 + $0x18] sm:$0xff]
      %v4065 = vld [vmem:[%s4060 + $0x20] sm:$0xff]
      %v4066 = vld [vmem:[%s4060 + $0x28] sm:$0xff]
      %v4067 = vld [vmem:[%s4060 + $0x30] sm:$0xff]
      %v4068 = vld [vmem:[%s4060 + $0x38] sm:$0xff]
      %4069 = vmatprep.subr.mxu0 0.0
      %4070 = vmatpush1.msra.mxu0 %v4061
      %4071 = vmatprep.subr.mxu0 0.0
      %4072 = vmatpush1.msra.mxu0 %v4062
      %4073 = vmatprep.subr.mxu0 0.0
      %4074 = vmatpush1.msra.mxu0 %v4063
      %4075 = vmatprep.subr.mxu0 0.0
      %4076 = vmatpush1.msra.mxu0 %v4064
      %4077 = vmatprep.subr.mxu0 0.0
      %4078 = vmatpush1.msra.mxu0 %v4065
      %4079 = vmatprep.subr.mxu0 0.0
      %4080 = vmatpush1.msra.mxu0 %v4066
      %4081 = vmatprep.subr.mxu0 0.0
      %4082 = vmatpush1.msra.mxu0 %v4067
      %4083 = vmatprep.subr.mxu0 0.0
      %4084 = vmatpush1.msra.mxu0 %v4068
      %4085 = vmatprep.subr.mxu0 0.0
      %4086 = vmatpush1.msra.mxu0 0.0
      %4087 = vmatprep.subr.mxu0 0.0
      %4088 = vmatpush1.msra.mxu0 0.0
      %4089 = vmatprep.subr.mxu0 0.0
      %4090 = vmatpush1.msra.mxu0 0.0
      %4091 = vmatprep.subr.mxu0 0.0
      %4092 = vmatpush1.msra.mxu0 0.0
      %4093 = vmatprep.subr.mxu0 0.0
      %4094 = vmatpush1.msra.mxu0 0.0
      %4095 = vmatprep.subr.mxu0 0.0
      %4096 = vmatpush1.msra.mxu0 0.0
      %4097 = vmatprep.subr.mxu0 0.0
      %4098 = vmatpush1.msra.mxu0 0.0
      %4099 = vmatprep.subr.mxu0 0.0
      %4100 = vmatpush1.msra.mxu0 0.0
      %4101 = vmatprep.subr.mxu0 0.0
      %4102 = vmatpush1.msra.mxu0 0.0
      %4103 = vmatprep.subr.mxu0 0.0
      %4104 = vmatpush1.msra.mxu0 0.0
      %4105 = vmatprep.subr.mxu0 0.0
      %4106 = vmatpush1.msra.mxu0 0.0
      %4107 = vmatprep.subr.mxu0 0.0
      %4108 = vmatpush1.msra.mxu0 0.0
      %4109 = vmatprep.subr.mxu0 0.0
      %4110 = vmatpush1.msra.mxu0 0.0
      %4111 = vmatprep.subr.mxu0 0.0
      %4112 = vmatpush1.msra.mxu0 0.0
      %4113 = vmatprep.subr.mxu0 0.0
      %4114 = vmatpush1.msra.mxu0 0.0
      %4115 = vmatprep.subr.mxu0 0.0
      %4116 = vmatpush1.msra.mxu0 0.0
      %4117 = vmatprep.subr.mxu0 0.0
      %4118 = vmatpush1.msra.mxu0 0.0
      %4119 = vmatprep.subr.mxu0 0.0
      %4120 = vmatpush1.msra.mxu0 0.0
      %4121 = vmatprep.subr.mxu0 0.0
      %4122 = vmatpush1.msra.mxu0 0.0
      %4123 = vmatprep.subr.mxu0 0.0
      %4124 = vmatpush1.msra.mxu0 0.0
      %4125 = vmatprep.subr.mxu0 0.0
      %4126 = vmatpush1.msra.mxu0 0.0
      %4127 = vmatprep.subr.mxu0 0.0
      %4128 = vmatpush1.msra.mxu0 0.0
      %4129 = vmatprep.subr.mxu0 0.0
      %4130 = vmatpush1.msra.mxu0 0.0
      %4131 = vmatprep.subr.mxu0 0.0
      %4132 = vmatpush1.msra.mxu0 0.0
      %4133 = vmatprep.mubr.f32.mxu0 0.0
      %4134 = vmatmul.mubr.f32.gmra.mrb[0].mxu0 %v1605
      %v4135 = vpop.f32.mrb[0].mxu0
      %v4136 = vadd.f32 0.0, %v4135
      %v4137 = vpop.f32.mrb[0].mxu0
      %4138 = vmatprep.mubr.f32.mxu0 0.0
      %4139 = vmatmul.mubr.f32.gmra.mrb[0].mxu0 %v1608
      %v4140 = vpop.f32.mrb[0].mxu0
      %v4141 = vadd.f32 0.0, %v4140
      %v4142 = vpop.f32.mrb[0].mxu0
      %4143 = vmatprep.mubr.f32.mxu0 0.0
      %4144 = vmatmul.mubr.f32.gmra.mrb[0].mxu0 %v1611
      %v4145 = vpop.f32.mrb[0].mxu0
      %v4146 = vadd.f32 0.0, %v4145
      %v4147 = vpop.f32.mrb[0].mxu0
      %4148 = vmatprep.mubr.f32.mxu0 0.0
      %4149 = vmatmul.mubr.f32.gmra.mrb[0].mxu0 %v1614
      %v4150 = vpop.f32.mrb[0].mxu0
      %v4151 = vadd.f32 0.0, %v4150
      %v4152 = vpop.f32.mrb[0].mxu0
      %4153 = vmatprep.mubr.f32.mxu0 0.0
      %4154 = vmatmul.mubr.f32.gmra.mrb[0].mxu0 %v1617
      %v4155 = vpop.f32.mrb[0].mxu0
      %v4156 = vadd.f32 0.0, %v4155
      %v4157 = vpop.f32.mrb[0].mxu0
      %4158 = vmatprep.mubr.f32.mxu0 0.0
      %4159 = vmatmul.mubr.f32.gmra.mrb[0].mxu0 %v1620
      %v4160 = vpop.f32.mrb[0].mxu0
      %v4161 = vadd.f32 0.0, %v4160
      %v4162 = vpop.f32.mrb[0].mxu0
      %4163 = vmatprep.mubr.f32.mxu0 0.0
      %4164 = vmatmul.mubr.f32.gmra.mrb[0].mxu0 %v1623
      %v4165 = vpop.f32.mrb[0].mxu0
      %v4166 = vadd.f32 0.0, %v4165
      %v4167 = vpop.f32.mrb[0].mxu0
      %4168 = vmatprep.mubr.f32.mxu0 0.0
      %4169 = vmatmul.mubr.f32.gmra.mrb[0].mxu0 %v1626
      %v4170 = vpop.f32.mrb[0].mxu0
      %v4171 = vadd.f32 0.0, %v4170
      %v4172 = vpop.f32.mrb[0].mxu0
      %4173 = vmatprep.mubr.f32.mxu0 0.0
      %4174 = vmatmul.mubr.f32.gmra.mrb[0].mxu0 %v1629
      %v4175 = vpop.f32.mrb[0].mxu0
      %v4176 = vadd.f32 0.0, %v4175
      %v4177 = vpop.f32.mrb[0].mxu0
      %4178 = vmatprep.mubr.f32.mxu0 0.0
      %4179 = vmatmul.mubr.f32.gmra.mrb[0].mxu0 %v1632
      %v4180 = vpop.f32.mrb[0].mxu0
      %v4181 = vadd.f32 0.0, %v4180
      %v4182 = vpop.f32.mrb[0].mxu0
      %4183 = vmatprep.mubr.f32.mxu0 0.0
      %4184 = vmatmul.mubr.f32.gmra.mrb[0].mxu0 %v1635
      %v4185 = vpop.f32.mrb[0].mxu0
      %v4186 = vadd.f32 0.0, %v4185
      %v4187 = vpop.f32.mrb[0].mxu0
      %4188 = vmatprep.mubr.f32.mxu0 0.0
      %4189 = vmatmul.mubr.f32.gmra.mrb[0].mxu0 %v1638
      %v4190 = vpop.f32.mrb[0].mxu0
      %v4191 = vadd.f32 0.0, %v4190
      %v4192 = vpop.f32.mrb[0].mxu0
      %4193 = vmatprep.mubr.f32.mxu0 0.0
      %4194 = vmatmul.mubr.f32.gmra.mrb[0].mxu0 %v1641
      %v4195 = vpop.f32.mrb[0].mxu0
      %v4196 = vadd.f32 0.0, %v4195
      %v4197 = vpop.f32.mrb[0].mxu0
      %4198 = vmatprep.mubr.f32.mxu0 0.0
      %4199 = vmatmul.mubr.f32.gmra.mrb[0].mxu0 %v1644
      %v4200 = vpop.f32.mrb[0].mxu0
      %v4201 = vadd.f32 0.0, %v4200
      %v4202 = vpop.f32.mrb[0].mxu0
      %4203 = vmatprep.mubr.f32.mxu0 0.0
      %4204 = vmatmul.mubr.f32.gmra.mrb[0].mxu0 %v1647
      %v4205 = vpop.f32.mrb[0].mxu0
      %v4206 = vadd.f32 0.0, %v4205
      %v4207 = vpop.f32.mrb[0].mxu0
      %4208 = vmatprep.mubr.f32.mxu0 0.0
      %4209 = vmatmul.mubr.f32.gmra.mrb[0].mxu0 %v1650
      %v4210 = vpop.f32.mrb[0].mxu0
      %v4211 = vadd.f32 0.0, %v4210
      %v4212 = vpop.f32.mrb[0].mxu0
      %4213 = vdwg.mxu0
      %v4215 = vsel %vm1334, %v4136, 0
      %v4218 = vsel %vm1334, %v4141, 0
      %v4221 = vsel %vm1334, %v4146, 0
      %v4224 = vsel %vm1334, %v4151, 0
      %v4227 = vsel %vm1334, %v4156, 0
      %v4230 = vsel %vm1334, %v4161, 0
      %v4233 = vsel %vm1334, %v4166, 0
      %v4236 = vsel %vm1334, %v4171, 0
      %v4239 = vsel %vm1334, %v4176, 0
      %v4242 = vsel %vm1334, %v4181, 0
      %v4245 = vsel %vm1334, %v4186, 0
      %v4248 = vsel %vm1334, %v4191, 0
      %v4251 = vsel %vm1334, %v4196, 0
      %v4254 = vsel %vm1334, %v4201, 0
      %v4257 = vsel %vm1334, %v4206, 0
      %v4260 = vsel %vm1334, %v4211, 0
      %4262 = vmatprep.subr.mxu0 0.0
      %4263 = vmatpush1.xpose.msra.mxu0 %v1605
      %4264 = vmatprep.subr.mxu0 0.0
      %4265 = vmatpush1.xpose.msra.mxu0 %v1608
      %4266 = vmatprep.subr.mxu0 0.0
      %4267 = vmatpush1.xpose.msra.mxu0 %v1611
      %4268 = vmatprep.subr.mxu0 0.0
      %4269 = vmatpush1.xpose.msra.mxu0 %v1614
      %4270 = vmatprep.subr.mxu0 0.0
      %4271 = vmatpush1.xpose.msra.mxu0 %v1617
      %4272 = vmatprep.subr.mxu0 0.0
      %4273 = vmatpush1.xpose.msra.mxu0 %v1620
      %4274 = vmatprep.subr.mxu0 0.0
      %4275 = vmatpush1.xpose.msra.mxu0 %v1623
      %4276 = vmatprep.subr.mxu0 0.0
      %4277 = vmatpush1.xpose.msra.mxu0 %v1626
      %4278 = vmatprep.subr.mxu0 0.0
      %4279 = vmatpush1.xpose.msra.mxu0 %v1629
      %4280 = vmatprep.subr.mxu0 0.0
      %4281 = vmatpush1.xpose.msra.mxu0 %v1632
      %4282 = vmatprep.subr.mxu0 0.0
      %4283 = vmatpush1.xpose.msra.mxu0 %v1635
      %4284 = vmatprep.subr.mxu0 0.0
      %4285 = vmatpush1.xpose.msra.mxu0 %v1638
      %4286 = vmatprep.subr.mxu0 0.0
      %4287 = vmatpush1.xpose.msra.mxu0 %v1641
      %4288 = vmatprep.subr.mxu0 0.0
      %4289 = vmatpush1.xpose.msra.mxu0 %v1644
      %4290 = vmatprep.subr.mxu0 0.0
      %4291 = vmatpush1.xpose.msra.mxu0 %v1647
      %4292 = vmatprep.subr.mxu0 0.0
      %4293 = vmatpush1.xpose.msra.mxu0 %v1650
      %4294 = vmatprep.subr.mxu0 0.0
      %4295 = vmatpush1.xpose.msra.mxu0 0.0
      %4296 = vmatprep.subr.mxu0 0.0
      %4297 = vmatpush1.xpose.msra.mxu0 0.0
      %4298 = vmatprep.subr.mxu0 0.0
      %4299 = vmatpush1.xpose.msra.mxu0 0.0
      %4300 = vmatprep.subr.mxu0 0.0
      %4301 = vmatpush1.xpose.msra.mxu0 0.0
      %4302 = vmatprep.subr.mxu0 0.0
      %4303 = vmatpush1.xpose.msra.mxu0 0.0
      %4304 = vmatprep.subr.mxu0 0.0
      %4305 = vmatpush1.xpose.msra.mxu0 0.0
      %4306 = vmatprep.subr.mxu0 0.0
      %4307 = vmatpush1.xpose.msra.mxu0 0.0
      %4308 = vmatprep.subr.mxu0 0.0
      %4309 = vmatpush1.xpose.msra.mxu0 0.0
      %4310 = vmatprep.subr.mxu0 0.0
      %4311 = vmatpush1.xpose.msra.mxu0 0.0
      %4312 = vmatprep.subr.mxu0 0.0
      %4313 = vmatpush1.xpose.msra.mxu0 0.0
      %4314 = vmatprep.subr.mxu0 0.0
      %4315 = vmatpush1.xpose.msra.mxu0 0.0
      %4316 = vmatprep.subr.mxu0 0.0
      %4317 = vmatpush1.xpose.msra.mxu0 0.0
      %4318 = vmatprep.subr.mxu0 0.0
      %4319 = vmatpush1.xpose.msra.mxu0 0.0
      %4320 = vmatprep.subr.mxu0 0.0
      %4321 = vmatpush1.xpose.msra.mxu0 0.0
      %4322 = vmatprep.subr.mxu0 0.0
      %4323 = vmatpush1.xpose.msra.mxu0 0.0
      %4324 = vmatprep.subr.mxu0 0.0
      %4325 = vmatpush1.xpose.msra.mxu0 0.0
      %4326 = vmatprep.mubr.f32.mxu0 0.0
      %4327 = vmatmul.mubr.f32.gmra.mrb[0].mxu0 %v4215
      %v4328 = vpop.f32.mrb[0].mxu0
      %v4329 = vadd.f32 0.0, %v4328
      %v4330 = vpop.f32.mrb[0].mxu0
      %4331 = vmatprep.mubr.f32.mxu0 0.0
      %4332 = vmatmul.mubr.f32.gmra.mrb[0].mxu0 %v4218
      %v4333 = vpop.f32.mrb[0].mxu0
      %v4334 = vadd.f32 0.0, %v4333
      %v4335 = vpop.f32.mrb[0].mxu0
      %4336 = vmatprep.mubr.f32.mxu0 0.0
      %4337 = vmatmul.mubr.f32.gmra.mrb[0].mxu0 %v4221
      %v4338 = vpop.f32.mrb[0].mxu0
      %v4339 = vadd.f32 0.0, %v4338
      %v4340 = vpop.f32.mrb[0].mxu0
      %4341 = vmatprep.mubr.f32.mxu0 0.0
      %4342 = vmatmul.mubr.f32.gmra.mrb[0].mxu0 %v4224
      %v4343 = vpop.f32.mrb[0].mxu0
      %v4344 = vadd.f32 0.0, %v4343
      %v4345 = vpop.f32.mrb[0].mxu0
      %4346 = vmatprep.mubr.f32.mxu0 0.0
      %4347 = vmatmul.mubr.f32.gmra.mrb[0].mxu0 %v4227
      %v4348 = vpop.f32.mrb[0].mxu0
      %v4349 = vadd.f32 0.0, %v4348
      %v4350 = vpop.f32.mrb[0].mxu0
      %4351 = vmatprep.mubr.f32.mxu0 0.0
      %4352 = vmatmul.mubr.f32.gmra.mrb[0].mxu0 %v4230
      %v4353 = vpop.f32.mrb[0].mxu0
      %v4354 = vadd.f32 0.0, %v4353
      %v4355 = vpop.f32.mrb[0].mxu0
      %4356 = vmatprep.mubr.f32.mxu0 0.0
      %4357 = vmatmul.mubr.f32.gmra.mrb[0].mxu0 %v4233
      %v4358 = vpop.f32.mrb[0].mxu0
      %v4359 = vadd.f32 0.0, %v4358
      %v4360 = vpop.f32.mrb[0].mxu0
      %4361 = vmatprep.mubr.f32.mxu0 0.0
      %4362 = vmatmul.mubr.f32.gmra.mrb[0].mxu0 %v4236
      %v4363 = vpop.f32.mrb[0].mxu0
      %v4364 = vadd.f32 0.0, %v4363
      %v4365 = vpop.f32.mrb[0].mxu0
      %4366 = vmatprep.mubr.f32.mxu0 0.0
      %4367 = vmatmul.mubr.f32.gmra.mrb[0].mxu0 %v4239
      %v4368 = vpop.f32.mrb[0].mxu0
      %v4369 = vadd.f32 0.0, %v4368
      %v4370 = vpop.f32.mrb[0].mxu0
      %4371 = vmatprep.mubr.f32.mxu0 0.0
      %4372 = vmatmul.mubr.f32.gmra.mrb[0].mxu0 %v4242
      %v4373 = vpop.f32.mrb[0].mxu0
      %v4374 = vadd.f32 0.0, %v4373
      %v4375 = vpop.f32.mrb[0].mxu0
      %4376 = vmatprep.mubr.f32.mxu0 0.0
      %4377 = vmatmul.mubr.f32.gmra.mrb[0].mxu0 %v4245
      %v4378 = vpop.f32.mrb[0].mxu0
      %v4379 = vadd.f32 0.0, %v4378
      %v4380 = vpop.f32.mrb[0].mxu0
      %4381 = vmatprep.mubr.f32.mxu0 0.0
      %4382 = vmatmul.mubr.f32.gmra.mrb[0].mxu0 %v4248
      %v4383 = vpop.f32.mrb[0].mxu0
      %v4384 = vadd.f32 0.0, %v4383
      %v4385 = vpop.f32.mrb[0].mxu0
      %4386 = vmatprep.mubr.f32.mxu0 0.0
      %4387 = vmatmul.mubr.f32.gmra.mrb[0].mxu0 %v4251
      %v4388 = vpop.f32.mrb[0].mxu0
      %v4389 = vadd.f32 0.0, %v4388
      %v4390 = vpop.f32.mrb[0].mxu0
      %4391 = vmatprep.mubr.f32.mxu0 0.0
      %4392 = vmatmul.mubr.f32.gmra.mrb[0].mxu0 %v4254
      %v4393 = vpop.f32.mrb[0].mxu0
      %v4394 = vadd.f32 0.0, %v4393
      %v4395 = vpop.f32.mrb[0].mxu0
      %4396 = vmatprep.mubr.f32.mxu0 0.0
      %4397 = vmatmul.mubr.f32.gmra.mrb[0].mxu0 %v4257
      %v4398 = vpop.f32.mrb[0].mxu0
      %v4399 = vadd.f32 0.0, %v4398
      %v4400 = vpop.f32.mrb[0].mxu0
      %4401 = vmatprep.mubr.f32.mxu0 0.0
      %4402 = vmatmul.mubr.f32.gmra.mrb[0].mxu0 %v4260
      %v4403 = vpop.f32.mrb[0].mxu0
      %v4404 = vadd.f32 0.0, %v4403
      %v4405 = vpop.f32.mrb[0].mxu0
      %4406 = vdwg.mxu0
      %4407 = vmax.xlane.f32.xlu0 %v4329
      %v4408 = vpop.xlane.xlu0 %4407
      %4409 = vmax.xlane.f32.xlu0 %v4334
      %v4410 = vpop.xlane.xlu0 %4409
      %4411 = vmax.xlane.f32.xlu0 %v4339
      %v4412 = vpop.xlane.xlu0 %4411
      %4413 = vmax.xlane.f32.xlu0 %v4344
      %v4414 = vpop.xlane.xlu0 %4413
      %4415 = vmax.xlane.f32.xlu0 %v4349
      %v4416 = vpop.xlane.xlu0 %4415
      %4417 = vmax.xlane.f32.xlu0 %v4354
      %v4418 = vpop.xlane.xlu0 %4417
      %4419 = vmax.xlane.f32.xlu0 %v4359
      %v4420 = vpop.xlane.xlu0 %4419
      %4421 = vmax.xlane.f32.xlu0 %v4364
      %v4422 = vpop.xlane.xlu0 %4421
      %4423 = vmax.xlane.f32.xlu0 %v4369
      %v4424 = vpop.xlane.xlu0 %4423
      %4425 = vmax.xlane.f32.xlu0 %v4374
      %v4426 = vpop.xlane.xlu0 %4425
      %4427 = vmax.xlane.f32.xlu0 %v4379
      %v4428 = vpop.xlane.xlu0 %4427
      %4429 = vmax.xlane.f32.xlu0 %v4384
      %v4430 = vpop.xlane.xlu0 %4429
      %4431 = vmax.xlane.f32.xlu0 %v4389
      %v4432 = vpop.xlane.xlu0 %4431
      %4433 = vmax.xlane.f32.xlu0 %v4394
      %v4434 = vpop.xlane.xlu0 %4433
      %4435 = vmax.xlane.f32.xlu0 %v4399
      %v4436 = vpop.xlane.xlu0 %4435
      %4437 = vmax.xlane.f32.xlu0 %v4404
      %v4438 = vpop.xlane.xlu0 %4437
      %v4439 = vsub.f32 %v4329, %v4408
      %v4440 = vsub.f32 %v4334, %v4410
      %v4441 = vsub.f32 %v4339, %v4412
      %v4442 = vsub.f32 %v4344, %v4414
      %v4443 = vsub.f32 %v4349, %v4416
      %v4444 = vsub.f32 %v4354, %v4418
      %v4445 = vsub.f32 %v4359, %v4420
      %v4446 = vsub.f32 %v4364, %v4422
      %v4447 = vsub.f32 %v4369, %v4424
      %v4448 = vsub.f32 %v4374, %v4426
      %v4449 = vsub.f32 %v4379, %v4428
      %v4450 = vsub.f32 %v4384, %v4430
      %v4451 = vsub.f32 %v4389, %v4432
      %v4452 = vsub.f32 %v4394, %v4434
      %v4453 = vsub.f32 %v4399, %v4436
      %v4454 = vsub.f32 %v4404, %v4438
      %v4455 = vmul.f32 %v4439, 1.442695
      %v4456 = vpow.pop %v4455
      %v4457 = vmul.f32 %v4440, 1.442695
      %v4458 = vpow.pop %v4457
      %v4459 = vmul.f32 %v4441, 1.442695
      %v4460 = vpow.pop %v4459
      %v4461 = vmul.f32 %v4442, 1.442695
      %v4462 = vpow.pop %v4461
      %v4463 = vmul.f32 %v4443, 1.442695
      %v4464 = vpow.pop %v4463
      %v4465 = vmul.f32 %v4444, 1.442695
      %v4466 = vpow.pop %v4465
      %v4467 = vmul.f32 %v4445, 1.442695
      %v4468 = vpow.pop %v4467
      %v4469 = vmul.f32 %v4446, 1.442695
      %v4470 = vpow.pop %v4469
      %v4471 = vmul.f32 %v4447, 1.442695
      %v4472 = vpow.pop %v4471
      %v4473 = vmul.f32 %v4448, 1.442695
      %v4474 = vpow.pop %v4473
      %v4475 = vmul.f32 %v4449, 1.442695
      %v4476 = vpow.pop %v4475
      %v4477 = vmul.f32 %v4450, 1.442695
      %v4478 = vpow.pop %v4477
      %v4479 = vmul.f32 %v4451, 1.442695
      %v4480 = vpow.pop %v4479
      %v4481 = vmul.f32 %v4452, 1.442695
      %v4482 = vpow.pop %v4481
      %v4483 = vmul.f32 %v4453, 1.442695
      %v4484 = vpow.pop %v4483
      %v4485 = vmul.f32 %v4454, 1.442695
      %v4486 = vpow.pop %v4485
      %4487 = vadd.xlane.f32.xlu0 %v4456
      %v4488 = vpop.xlane.xlu0 %4487
      %4489 = vadd.xlane.f32.xlu0 %v4458
      %v4490 = vpop.xlane.xlu0 %4489
      %4491 = vadd.xlane.f32.xlu0 %v4460
      %v4492 = vpop.xlane.xlu0 %4491
      %4493 = vadd.xlane.f32.xlu0 %v4462
      %v4494 = vpop.xlane.xlu0 %4493
      %4495 = vadd.xlane.f32.xlu0 %v4464
      %v4496 = vpop.xlane.xlu0 %4495
      %4497 = vadd.xlane.f32.xlu0 %v4466
      %v4498 = vpop.xlane.xlu0 %4497
      %4499 = vadd.xlane.f32.xlu0 %v4468
      %v4500 = vpop.xlane.xlu0 %4499
      %4501 = vadd.xlane.f32.xlu0 %v4470
      %v4502 = vpop.xlane.xlu0 %4501
      %4503 = vadd.xlane.f32.xlu0 %v4472
      %v4504 = vpop.xlane.xlu0 %4503
      %4505 = vadd.xlane.f32.xlu0 %v4474
      %v4506 = vpop.xlane.xlu0 %4505
      %4507 = vadd.xlane.f32.xlu0 %v4476
      %v4508 = vpop.xlane.xlu0 %4507
      %4509 = vadd.xlane.f32.xlu0 %v4478
      %v4510 = vpop.xlane.xlu0 %4509
      %4511 = vadd.xlane.f32.xlu0 %v4480
      %v4512 = vpop.xlane.xlu0 %4511
      %4513 = vadd.xlane.f32.xlu0 %v4482
      %v4514 = vpop.xlane.xlu0 %4513
      %4515 = vadd.xlane.f32.xlu0 %v4484
      %v4516 = vpop.xlane.xlu0 %4515
      %4517 = vadd.xlane.f32.xlu0 %v4486
      %v4518 = vpop.xlane.xlu0 %4517
      %v4519 = vrcp.pop %v4488
      %v4520 = vrcp.pop %v4490
      %v4521 = vrcp.pop %v4492
      %v4522 = vrcp.pop %v4494
      %v4523 = vrcp.pop %v4496
      %v4524 = vrcp.pop %v4498
      %v4525 = vrcp.pop %v4500
      %v4526 = vrcp.pop %v4502
      %v4527 = vrcp.pop %v4504
      %v4528 = vrcp.pop %v4506
      %v4529 = vrcp.pop %v4508
      %v4530 = vrcp.pop %v4510
      %v4531 = vrcp.pop %v4512
      %v4532 = vrcp.pop %v4514
      %v4533 = vrcp.pop %v4516
      %v4534 = vrcp.pop %v4518
      %v4535 = vmul.f32 %v4456, %v4519
      %v4536 = vmul.f32 %v4458, %v4520
      %v4537 = vmul.f32 %v4460, %v4521
      %v4538 = vmul.f32 %v4462, %v4522
      %v4539 = vmul.f32 %v4464, %v4523
      %v4540 = vmul.f32 %v4466, %v4524
      %v4541 = vmul.f32 %v4468, %v4525
      %v4542 = vmul.f32 %v4470, %v4526
      %v4543 = vmul.f32 %v4472, %v4527
      %v4544 = vmul.f32 %v4474, %v4528
      %v4545 = vmul.f32 %v4476, %v4529
      %v4546 = vmul.f32 %v4478, %v4530
      %v4547 = vmul.f32 %v4480, %v4531
      %v4548 = vmul.f32 %v4482, %v4532
      %v4549 = vmul.f32 %v4484, %v4533
      %v4550 = vmul.f32 %v4486, %v4534
      %s4551 = scalar_lea.vmem %s11, 192
      %v4552 = vld [vmem:[%s4551] sm:$0xff]
      %v4553 = vld [vmem:[%s4551 + $0x8] sm:$0xff]
      %v4554 = vld [vmem:[%s4551 + $0x10] sm:$0xff]
      %v4555 = vld [vmem:[%s4551 + $0x18] sm:$0xff]
      %v4556 = vld [vmem:[%s4551 + $0x20] sm:$0xff]
      %v4557 = vld [vmem:[%s4551 + $0x28] sm:$0xff]
      %v4558 = vld [vmem:[%s4551 + $0x30] sm:$0xff]
      %v4559 = vld [vmem:[%s4551 + $0x38] sm:$0xff]
      %4560 = vmatprep.subr.mxu0 0.0
      %4561 = vmatpush1.msra.mxu0 %v4552
      %4562 = vmatprep.subr.mxu0 0.0
      %4563 = vmatpush1.msra.mxu0 %v4553
      %4564 = vmatprep.subr.mxu0 0.0
      %4565 = vmatpush1.msra.mxu0 %v4554
      %4566 = vmatprep.subr.mxu0 0.0
      %4567 = vmatpush1.msra.mxu0 %v4555
      %4568 = vmatprep.subr.mxu0 0.0
      %4569 = vmatpush1.msra.mxu0 %v4556
      %4570 = vmatprep.subr.mxu0 0.0
      %4571 = vmatpush1.msra.mxu0 %v4557
      %4572 = vmatprep.subr.mxu0 0.0
      %4573 = vmatpush1.msra.mxu0 %v4558
      %4574 = vmatprep.subr.mxu0 0.0
      %4575 = vmatpush1.msra.mxu0 %v4559
      %4576 = vmatprep.subr.mxu0 0.0
      %4577 = vmatpush1.msra.mxu0 0.0
      %4578 = vmatprep.subr.mxu0 0.0
      %4579 = vmatpush1.msra.mxu0 0.0
      %4580 = vmatprep.subr.mxu0 0.0
      %4581 = vmatpush1.msra.mxu0 0.0
      %4582 = vmatprep.subr.mxu0 0.0
      %4583 = vmatpush1.msra.mxu0 0.0
      %4584 = vmatprep.subr.mxu0 0.0
      %4585 = vmatpush1.msra.mxu0 0.0
      %4586 = vmatprep.subr.mxu0 0.0
      %4587 = vmatpush1.msra.mxu0 0.0
      %4588 = vmatprep.subr.mxu0 0.0
      %4589 = vmatpush1.msra.mxu0 0.0
      %4590 = vmatprep.subr.mxu0 0.0
      %4591 = vmatpush1.msra.mxu0 0.0
      %4592 = vmatprep.subr.mxu0 0.0
      %4593 = vmatpush1.msra.mxu0 0.0
      %4594 = vmatprep.subr.mxu0 0.0
      %4595 = vmatpush1.msra.mxu0 0.0
      %4596 = vmatprep.subr.mxu0 0.0
      %4597 = vmatpush1.msra.mxu0 0.0
      %4598 = vmatprep.subr.mxu0 0.0
      %4599 = vmatpush1.msra.mxu0 0.0
      %4600 = vmatprep.subr.mxu0 0.0
      %4601 = vmatpush1.msra.mxu0 0.0
      %4602 = vmatprep.subr.mxu0 0.0
      %4603 = vmatpush1.msra.mxu0 0.0
      %4604 = vmatprep.subr.mxu0 0.0
      %4605 = vmatpush1.msra.mxu0 0.0
      %4606 = vmatprep.subr.mxu0 0.0
      %4607 = vmatpush1.msra.mxu0 0.0
      %4608 = vmatprep.subr.mxu0 0.0
      %4609 = vmatpush1.msra.mxu0 0.0
      %4610 = vmatprep.subr.mxu0 0.0
      %4611 = vmatpush1.msra.mxu0 0.0
      %4612 = vmatprep.subr.mxu0 0.0
      %4613 = vmatpush1.msra.mxu0 0.0
      %4614 = vmatprep.subr.mxu0 0.0
      %4615 = vmatpush1.msra.mxu0 0.0
      %4616 = vmatprep.subr.mxu0 0.0
      %4617 = vmatpush1.msra.mxu0 0.0
      %4618 = vmatprep.subr.mxu0 0.0
      %4619 = vmatpush1.msra.mxu0 0.0
      %4620 = vmatprep.subr.mxu0 0.0
      %4621 = vmatpush1.msra.mxu0 0.0
      %4622 = vmatprep.subr.mxu0 0.0
      %4623 = vmatpush1.msra.mxu0 0.0
      %4624 = vmatprep.mubr.f32.mxu0 0.0
      %4625 = vmatmul.mubr.f32.gmra.mrb[0].mxu0 %v1605
      %v4626 = vpop.f32.mrb[0].mxu0
      %v4627 = vadd.f32 0.0, %v4626
      %v4628 = vpop.f32.mrb[0].mxu0
      %4629 = vmatprep.mubr.f32.mxu0 0.0
      %4630 = vmatmul.mubr.f32.gmra.mrb[0].mxu0 %v1608
      %v4631 = vpop.f32.mrb[0].mxu0
      %v4632 = vadd.f32 0.0, %v4631
      %v4633 = vpop.f32.mrb[0].mxu0
      %4634 = vmatprep.mubr.f32.mxu0 0.0
      %4635 = vmatmul.mubr.f32.gmra.mrb[0].mxu0 %v1611
      %v4636 = vpop.f32.mrb[0].mxu0
      %v4637 = vadd.f32 0.0, %v4636
      %v4638 = vpop.f32.mrb[0].mxu0
      %4639 = vmatprep.mubr.f32.mxu0 0.0
      %4640 = vmatmul.mubr.f32.gmra.mrb[0].mxu0 %v1614
      %v4641 = vpop.f32.mrb[0].mxu0
      %v4642 = vadd.f32 0.0, %v4641
      %v4643 = vpop.f32.mrb[0].mxu0
      %4644 = vmatprep.mubr.f32.mxu0 0.0
      %4645 = vmatmul.mubr.f32.gmra.mrb[0].mxu0 %v1617
      %v4646 = vpop.f32.mrb[0].mxu0
      %v4647 = vadd.f32 0.0, %v4646
      %v4648 = vpop.f32.mrb[0].mxu0
      %4649 = vmatprep.mubr.f32.mxu0 0.0
      %4650 = vmatmul.mubr.f32.gmra.mrb[0].mxu0 %v1620
      %v4651 = vpop.f32.mrb[0].mxu0
      %v4652 = vadd.f32 0.0, %v4651
      %v4653 = vpop.f32.mrb[0].mxu0
      %4654 = vmatprep.mubr.f32.mxu0 0.0
      %4655 = vmatmul.mubr.f32.gmra.mrb[0].mxu0 %v1623
      %v4656 = vpop.f32.mrb[0].mxu0
      %v4657 = vadd.f32 0.0, %v4656
      %v4658 = vpop.f32.mrb[0].mxu0
      %4659 = vmatprep.mubr.f32.mxu0 0.0
      %4660 = vmatmul.mubr.f32.gmra.mrb[0].mxu0 %v1626
      %v4661 = vpop.f32.mrb[0].mxu0
      %v4662 = vadd.f32 0.0, %v4661
      %v4663 = vpop.f32.mrb[0].mxu0
      %4664 = vmatprep.mubr.f32.mxu0 0.0
      %4665 = vmatmul.mubr.f32.gmra.mrb[0].mxu0 %v1629
      %v4666 = vpop.f32.mrb[0].mxu0
      %v4667 = vadd.f32 0.0, %v4666
      %v4668 = vpop.f32.mrb[0].mxu0
      %4669 = vmatprep.mubr.f32.mxu0 0.0
      %4670 = vmatmul.mubr.f32.gmra.mrb[0].mxu0 %v1632
      %v4671 = vpop.f32.mrb[0].mxu0
      %v4672 = vadd.f32 0.0, %v4671
      %v4673 = vpop.f32.mrb[0].mxu0
      %4674 = vmatprep.mubr.f32.mxu0 0.0
      %4675 = vmatmul.mubr.f32.gmra.mrb[0].mxu0 %v1635
      %v4676 = vpop.f32.mrb[0].mxu0
      %v4677 = vadd.f32 0.0, %v4676
      %v4678 = vpop.f32.mrb[0].mxu0
      %4679 = vmatprep.mubr.f32.mxu0 0.0
      %4680 = vmatmul.mubr.f32.gmra.mrb[0].mxu0 %v1638
      %v4681 = vpop.f32.mrb[0].mxu0
      %v4682 = vadd.f32 0.0, %v4681
      %v4683 = vpop.f32.mrb[0].mxu0
      %4684 = vmatprep.mubr.f32.mxu0 0.0
      %4685 = vmatmul.mubr.f32.gmra.mrb[0].mxu0 %v1641
      %v4686 = vpop.f32.mrb[0].mxu0
      %v4687 = vadd.f32 0.0, %v4686
      %v4688 = vpop.f32.mrb[0].mxu0
      %4689 = vmatprep.mubr.f32.mxu0 0.0
      %4690 = vmatmul.mubr.f32.gmra.mrb[0].mxu0 %v1644
      %v4691 = vpop.f32.mrb[0].mxu0
      %v4692 = vadd.f32 0.0, %v4691
      %v4693 = vpop.f32.mrb[0].mxu0
      %4694 = vmatprep.mubr.f32.mxu0 0.0
      %4695 = vmatmul.mubr.f32.gmra.mrb[0].mxu0 %v1647
      %v4696 = vpop.f32.mrb[0].mxu0
      %v4697 = vadd.f32 0.0, %v4696
      %v4698 = vpop.f32.mrb[0].mxu0
      %4699 = vmatprep.mubr.f32.mxu0 0.0
      %4700 = vmatmul.mubr.f32.gmra.mrb[0].mxu0 %v1650
      %v4701 = vpop.f32.mrb[0].mxu0
      %v4702 = vadd.f32 0.0, %v4701
      %v4703 = vpop.f32.mrb[0].mxu0
      %4704 = vdwg.mxu0
      %4705 = vmatprep.subr.mxu0 0.0
      %4706 = vmatpush1.msra.mxu0 %v4627
      %4707 = vmatprep.subr.mxu0 0.0
      %4708 = vmatpush1.msra.mxu0 %v4632
      %4709 = vmatprep.subr.mxu0 0.0
      %4710 = vmatpush1.msra.mxu0 %v4637
      %4711 = vmatprep.subr.mxu0 0.0
      %4712 = vmatpush1.msra.mxu0 %v4642
      %4713 = vmatprep.subr.mxu0 0.0
      %4714 = vmatpush1.msra.mxu0 %v4647
      %4715 = vmatprep.subr.mxu0 0.0
      %4716 = vmatpush1.msra.mxu0 %v4652
      %4717 = vmatprep.subr.mxu0 0.0
      %4718 = vmatpush1.msra.mxu0 %v4657
      %4719 = vmatprep.subr.mxu0 0.0
      %4720 = vmatpush1.msra.mxu0 %v4662
      %4721 = vmatprep.subr.mxu0 0.0
      %4722 = vmatpush1.msra.mxu0 %v4667
      %4723 = vmatprep.subr.mxu0 0.0
      %4724 = vmatpush1.msra.mxu0 %v4672
      %4725 = vmatprep.subr.mxu0 0.0
      %4726 = vmatpush1.msra.mxu0 %v4677
      %4727 = vmatprep.subr.mxu0 0.0
      %4728 = vmatpush1.msra.mxu0 %v4682
      %4729 = vmatprep.subr.mxu0 0.0
      %4730 = vmatpush1.msra.mxu0 %v4687
      %4731 = vmatprep.subr.mxu0 0.0
      %4732 = vmatpush1.msra.mxu0 %v4692
      %4733 = vmatprep.subr.mxu0 0.0
      %4734 = vmatpush1.msra.mxu0 %v4697
      %4735 = vmatprep.subr.mxu0 0.0
      %4736 = vmatpush1.msra.mxu0 %v4702
      %4737 = vmatprep.subr.mxu0 0.0
      %4738 = vmatpush1.msra.mxu0 0.0
      %4739 = vmatprep.subr.mxu0 0.0
      %4740 = vmatpush1.msra.mxu0 0.0
      %4741 = vmatprep.subr.mxu0 0.0
      %4742 = vmatpush1.msra.mxu0 0.0
      %4743 = vmatprep.subr.mxu0 0.0
      %4744 = vmatpush1.msra.mxu0 0.0
      %4745 = vmatprep.subr.mxu0 0.0
      %4746 = vmatpush1.msra.mxu0 0.0
      %4747 = vmatprep.subr.mxu0 0.0
      %4748 = vmatpush1.msra.mxu0 0.0
      %4749 = vmatprep.subr.mxu0 0.0
      %4750 = vmatpush1.msra.mxu0 0.0
      %4751 = vmatprep.subr.mxu0 0.0
      %4752 = vmatpush1.msra.mxu0 0.0
      %4753 = vmatprep.subr.mxu0 0.0
      %4754 = vmatpush1.msra.mxu0 0.0
      %4755 = vmatprep.subr.mxu0 0.0
      %4756 = vmatpush1.msra.mxu0 0.0
      %4757 = vmatprep.subr.mxu0 0.0
      %4758 = vmatpush1.msra.mxu0 0.0
      %4759 = vmatprep.subr.mxu0 0.0
      %4760 = vmatpush1.msra.mxu0 0.0
      %4761 = vmatprep.subr.mxu0 0.0
      %4762 = vmatpush1.msra.mxu0 0.0
      %4763 = vmatprep.subr.mxu0 0.0
      %4764 = vmatpush1.msra.mxu0 0.0
      %4765 = vmatprep.subr.mxu0 0.0
      %4766 = vmatpush1.msra.mxu0 0.0
      %4767 = vmatprep.subr.mxu0 0.0
      %4768 = vmatpush1.msra.mxu0 0.0
      %4769 = vmatprep.mubr.f32.mxu0 0.0
      %4770 = vmatmul.mubr.f32.gmra.mrb[0].mxu0 %v4535
      %v4771 = vpop.f32.mrb[0].mxu0
      %v4772 = vadd.f32 0.0, %v4771
      %v4773 = vpop.f32.mrb[0].mxu0
      %4774 = vmatprep.mubr.f32.mxu0 0.0
      %4775 = vmatmul.mubr.f32.gmra.mrb[0].mxu0 %v4536
      %v4776 = vpop.f32.mrb[0].mxu0
      %v4777 = vadd.f32 0.0, %v4776
      %v4778 = vpop.f32.mrb[0].mxu0
      %4779 = vmatprep.mubr.f32.mxu0 0.0
      %4780 = vmatmul.mubr.f32.gmra.mrb[0].mxu0 %v4537
      %v4781 = vpop.f32.mrb[0].mxu0
      %v4782 = vadd.f32 0.0, %v4781
      %v4783 = vpop.f32.mrb[0].mxu0
      %4784 = vmatprep.mubr.f32.mxu0 0.0
      %4785 = vmatmul.mubr.f32.gmra.mrb[0].mxu0 %v4538
      %v4786 = vpop.f32.mrb[0].mxu0
      %v4787 = vadd.f32 0.0, %v4786
      %v4788 = vpop.f32.mrb[0].mxu0
      %4789 = vmatprep.mubr.f32.mxu0 0.0
      %4790 = vmatmul.mubr.f32.gmra.mrb[0].mxu0 %v4539
      %v4791 = vpop.f32.mrb[0].mxu0
      %v4792 = vadd.f32 0.0, %v4791
      %v4793 = vpop.f32.mrb[0].mxu0
      %4794 = vmatprep.mubr.f32.mxu0 0.0
      %4795 = vmatmul.mubr.f32.gmra.mrb[0].mxu0 %v4540
      %v4796 = vpop.f32.mrb[0].mxu0
      %v4797 = vadd.f32 0.0, %v4796
      %v4798 = vpop.f32.mrb[0].mxu0
      %4799 = vmatprep.mubr.f32.mxu0 0.0
      %4800 = vmatmul.mubr.f32.gmra.mrb[0].mxu0 %v4541
      %v4801 = vpop.f32.mrb[0].mxu0
      %v4802 = vadd.f32 0.0, %v4801
      %v4803 = vpop.f32.mrb[0].mxu0
      %4804 = vmatprep.mubr.f32.mxu0 0.0
      %4805 = vmatmul.mubr.f32.gmra.mrb[0].mxu0 %v4542
      %v4806 = vpop.f32.mrb[0].mxu0
      %v4807 = vadd.f32 0.0, %v4806
      %v4808 = vpop.f32.mrb[0].mxu0
      %4809 = vmatprep.mubr.f32.mxu0 0.0
      %4810 = vmatmul.mubr.f32.gmra.mrb[0].mxu0 %v4543
      %v4811 = vpop.f32.mrb[0].mxu0
      %v4812 = vadd.f32 0.0, %v4811
      %v4813 = vpop.f32.mrb[0].mxu0
      %4814 = vmatprep.mubr.f32.mxu0 0.0
      %4815 = vmatmul.mubr.f32.gmra.mrb[0].mxu0 %v4544
      %v4816 = vpop.f32.mrb[0].mxu0
      %v4817 = vadd.f32 0.0, %v4816
      %v4818 = vpop.f32.mrb[0].mxu0
      %4819 = vmatprep.mubr.f32.mxu0 0.0
      %4820 = vmatmul.mubr.f32.gmra.mrb[0].mxu0 %v4545
      %v4821 = vpop.f32.mrb[0].mxu0
      %v4822 = vadd.f32 0.0, %v4821
      %v4823 = vpop.f32.mrb[0].mxu0
      %4824 = vmatprep.mubr.f32.mxu0 0.0
      %4825 = vmatmul.mubr.f32.gmra.mrb[0].mxu0 %v4546
      %v4826 = vpop.f32.mrb[0].mxu0
      %v4827 = vadd.f32 0.0, %v4826
      %v4828 = vpop.f32.mrb[0].mxu0
      %4829 = vmatprep.mubr.f32.mxu0 0.0
      %4830 = vmatmul.mubr.f32.gmra.mrb[0].mxu0 %v4547
      %v4831 = vpop.f32.mrb[0].mxu0
      %v4832 = vadd.f32 0.0, %v4831
      %v4833 = vpop.f32.mrb[0].mxu0
      %4834 = vmatprep.mubr.f32.mxu0 0.0
      %4835 = vmatmul.mubr.f32.gmra.mrb[0].mxu0 %v4548
      %v4836 = vpop.f32.mrb[0].mxu0
      %v4837 = vadd.f32 0.0, %v4836
      %v4838 = vpop.f32.mrb[0].mxu0
      %4839 = vmatprep.mubr.f32.mxu0 0.0
      %4840 = vmatmul.mubr.f32.gmra.mrb[0].mxu0 %v4549
      %v4841 = vpop.f32.mrb[0].mxu0
      %v4842 = vadd.f32 0.0, %v4841
      %v4843 = vpop.f32.mrb[0].mxu0
      %4844 = vmatprep.mubr.f32.mxu0 0.0
      %4845 = vmatmul.mubr.f32.gmra.mrb[0].mxu0 %v4550
      %v4846 = vpop.f32.mrb[0].mxu0
      %v4847 = vadd.f32 0.0, %v4846
      %v4848 = vpop.f32.mrb[0].mxu0
      %4849 = vdwg.mxu0
      %v4850 = vadd.f32 %v4044, %v4772
      %v4851 = vadd.f32 %v4045, %v4777
      %v4852 = vadd.f32 %v4046, %v4782
      %v4853 = vadd.f32 %v4047, %v4787
      %v4854 = vadd.f32 %v4048, %v4792
      %v4855 = vadd.f32 %v4049, %v4797
      %v4856 = vadd.f32 %v4050, %v4802
      %v4857 = vadd.f32 %v4051, %v4807
      %v4858 = vadd.f32 %v4052, %v4812
      %v4859 = vadd.f32 %v4053, %v4817
      %v4860 = vadd.f32 %v4054, %v4822
      %v4861 = vadd.f32 %v4055, %v4827
      %v4862 = vadd.f32 %v4056, %v4832
      %v4863 = vadd.f32 %v4057, %v4837
      %v4864 = vadd.f32 %v4058, %v4842
      %v4865 = vadd.f32 %v4059, %v4847
      %v4866 = vadd.f32 %v1300, %v4850
      %v4867 = vadd.f32 %v1301, %v4851
      %v4868 = vadd.f32 %v1302, %v4852
      %v4869 = vadd.f32 %v1303, %v4853
      %v4870 = vadd.f32 %v1304, %v4854
      %v4871 = vadd.f32 %v1305, %v4855
      %v4872 = vadd.f32 %v1306, %v4856
      %v4873 = vadd.f32 %v1307, %v4857
      %v4874 = vadd.f32 %v1308, %v4858
      %v4875 = vadd.f32 %v1309, %v4859
      %v4876 = vadd.f32 %v1310, %v4860
      %v4877 = vadd.f32 %v1311, %v4861
      %v4878 = vadd.f32 %v1312, %v4862
      %v4879 = vadd.f32 %v1313, %v4863
      %v4880 = vadd.f32 %v1314, %v4864
      %v4881 = vadd.f32 %v1315, %v4865
      %v4882 = vld [vmem:[%s15] sm:$0x1]
      %v4883 = vld [vmem:[%s17] sm:$0x1]
      %v4884 = vsel %vm1334, %v4866, 0.0
      %4885 = vadd.xlane.f32.xlu0 %v4884
      %v4886 = vpop.xlane.xlu0 %4885
      %v4887 = vsel %vm1334, %v4867, 0.0
      %4888 = vadd.xlane.f32.xlu0 %v4887
      %v4889 = vpop.xlane.xlu0 %4888
      %v4890 = vsel %vm1334, %v4868, 0.0
      %4891 = vadd.xlane.f32.xlu0 %v4890
      %v4892 = vpop.xlane.xlu0 %4891
      %v4893 = vsel %vm1334, %v4869, 0.0
      %4894 = vadd.xlane.f32.xlu0 %v4893
      %v4895 = vpop.xlane.xlu0 %4894
      %v4896 = vsel %vm1334, %v4870, 0.0
      %4897 = vadd.xlane.f32.xlu0 %v4896
      %v4898 = vpop.xlane.xlu0 %4897
      %v4899 = vsel %vm1334, %v4871, 0.0
      %4900 = vadd.xlane.f32.xlu0 %v4899
      %v4901 = vpop.xlane.xlu0 %4900
      %v4902 = vsel %vm1334, %v4872, 0.0
      %4903 = vadd.xlane.f32.xlu0 %v4902
      %v4904 = vpop.xlane.xlu0 %4903
      %v4905 = vsel %vm1334, %v4873, 0.0
      %4906 = vadd.xlane.f32.xlu0 %v4905
      %v4907 = vpop.xlane.xlu0 %4906
      %v4908 = vsel %vm1334, %v4874, 0.0
      %4909 = vadd.xlane.f32.xlu0 %v4908
      %v4910 = vpop.xlane.xlu0 %4909
      %v4911 = vsel %vm1334, %v4875, 0.0
      %4912 = vadd.xlane.f32.xlu0 %v4911
      %v4913 = vpop.xlane.xlu0 %4912
      %v4914 = vsel %vm1334, %v4876, 0.0
      %4915 = vadd.xlane.f32.xlu0 %v4914
      %v4916 = vpop.xlane.xlu0 %4915
      %v4917 = vsel %vm1334, %v4877, 0.0
      %4918 = vadd.xlane.f32.xlu0 %v4917
      %v4919 = vpop.xlane.xlu0 %4918
      %v4920 = vsel %vm1334, %v4878, 0.0
      %4921 = vadd.xlane.f32.xlu0 %v4920
      %v4922 = vpop.xlane.xlu0 %4921
      %v4923 = vsel %vm1334, %v4879, 0.0
      %4924 = vadd.xlane.f32.xlu0 %v4923
      %v4925 = vpop.xlane.xlu0 %4924
      %v4926 = vsel %vm1334, %v4880, 0.0
      %4927 = vadd.xlane.f32.xlu0 %v4926
      %v4928 = vpop.xlane.xlu0 %4927
      %v4929 = vsel %vm1334, %v4881, 0.0
      %4930 = vadd.xlane.f32.xlu0 %v4929
      %v4931 = vpop.xlane.xlu0 %4930
      %v4932 = vmul.f32 %v4886, %v1383
      %v4933 = vmul.f32 %v4889, %v1383
      %v4934 = vmul.f32 %v4892, %v1383
      %v4935 = vmul.f32 %v4895, %v1383
      %v4936 = vmul.f32 %v4898, %v1383
      %v4937 = vmul.f32 %v4901, %v1383
      %v4938 = vmul.f32 %v4904, %v1383
      %v4939 = vmul.f32 %v4907, %v1383
      %v4940 = vmul.f32 %v4910, %v1383
      %v4941 = vmul.f32 %v4913, %v1383
      %v4942 = vmul.f32 %v4916, %v1383
      %v4943 = vmul.f32 %v4919, %v1383
      %v4944 = vmul.f32 %v4922, %v1383
      %v4945 = vmul.f32 %v4925, %v1383
      %v4946 = vmul.f32 %v4928, %v1383
      %v4947 = vmul.f32 %v4931, %v1383
      %v4948 = vsub.f32 %v4866, %v4932
      %v4949 = vsub.f32 %v4867, %v4933
      %v4950 = vsub.f32 %v4868, %v4934
      %v4951 = vsub.f32 %v4869, %v4935
      %v4952 = vsub.f32 %v4870, %v4936
      %v4953 = vsub.f32 %v4871, %v4937
      %v4954 = vsub.f32 %v4872, %v4938
      %v4955 = vsub.f32 %v4873, %v4939
      %v4956 = vsub.f32 %v4874, %v4940
      %v4957 = vsub.f32 %v4875, %v4941
      %v4958 = vsub.f32 %v4876, %v4942
      %v4959 = vsub.f32 %v4877, %v4943
      %v4960 = vsub.f32 %v4878, %v4944
      %v4961 = vsub.f32 %v4879, %v4945
      %v4962 = vsub.f32 %v4880, %v4946
      %v4963 = vsub.f32 %v4881, %v4947
      %v4964 = vmul.f32 %v4948, %v4948
      %v4965 = vmul.f32 %v4949, %v4949
      %v4966 = vmul.f32 %v4950, %v4950
      %v4967 = vmul.f32 %v4951, %v4951
      %v4968 = vmul.f32 %v4952, %v4952
      %v4969 = vmul.f32 %v4953, %v4953
      %v4970 = vmul.f32 %v4954, %v4954
      %v4971 = vmul.f32 %v4955, %v4955
      %v4972 = vmul.f32 %v4956, %v4956
      %v4973 = vmul.f32 %v4957, %v4957
      %v4974 = vmul.f32 %v4958, %v4958
      %v4975 = vmul.f32 %v4959, %v4959
      %v4976 = vmul.f32 %v4960, %v4960
      %v4977 = vmul.f32 %v4961, %v4961
      %v4978 = vmul.f32 %v4962, %v4962
      %v4979 = vmul.f32 %v4963, %v4963
      %v4980 = vsel %vm1334, %v4964, 0.0
      %4981 = vadd.xlane.f32.xlu0 %v4980
      %v4982 = vpop.xlane.xlu0 %4981
      %v4983 = vsel %vm1334, %v4965, 0.0
      %4984 = vadd.xlane.f32.xlu0 %v4983
      %v4985 = vpop.xlane.xlu0 %4984
      %v4986 = vsel %vm1334, %v4966, 0.0
      %4987 = vadd.xlane.f32.xlu0 %v4986
      %v4988 = vpop.xlane.xlu0 %4987
      %v4989 = vsel %vm1334, %v4967, 0.0
      %4990 = vadd.xlane.f32.xlu0 %v4989
      %v4991 = vpop.xlane.xlu0 %4990
      %v4992 = vsel %vm1334, %v4968, 0.0
      %4993 = vadd.xlane.f32.xlu0 %v4992
      %v4994 = vpop.xlane.xlu0 %4993
      %v4995 = vsel %vm1334, %v4969, 0.0
      %4996 = vadd.xlane.f32.xlu0 %v4995
      %v4997 = vpop.xlane.xlu0 %4996
      %v4998 = vsel %vm1334, %v4970, 0.0
      %4999 = vadd.xlane.f32.xlu0 %v4998
      %v5000 = vpop.xlane.xlu0 %4999
      %v5001 = vsel %vm1334, %v4971, 0.0
      %5002 = vadd.xlane.f32.xlu0 %v5001
      %v5003 = vpop.xlane.xlu0 %5002
      %v5004 = vsel %vm1334, %v4972, 0.0
      %5005 = vadd.xlane.f32.xlu0 %v5004
      %v5006 = vpop.xlane.xlu0 %5005
      %v5007 = vsel %vm1334, %v4973, 0.0
      %5008 = vadd.xlane.f32.xlu0 %v5007
      %v5009 = vpop.xlane.xlu0 %5008
      %v5010 = vsel %vm1334, %v4974, 0.0
      %5011 = vadd.xlane.f32.xlu0 %v5010
      %v5012 = vpop.xlane.xlu0 %5011
      %v5013 = vsel %vm1334, %v4975, 0.0
      %5014 = vadd.xlane.f32.xlu0 %v5013
      %v5015 = vpop.xlane.xlu0 %5014
      %v5016 = vsel %vm1334, %v4976, 0.0
      %5017 = vadd.xlane.f32.xlu0 %v5016
      %v5018 = vpop.xlane.xlu0 %5017
      %v5019 = vsel %vm1334, %v4977, 0.0
      %5020 = vadd.xlane.f32.xlu0 %v5019
      %v5021 = vpop.xlane.xlu0 %5020
      %v5022 = vsel %vm1334, %v4978, 0.0
      %5023 = vadd.xlane.f32.xlu0 %v5022
      %v5024 = vpop.xlane.xlu0 %5023
      %v5025 = vsel %vm1334, %v4979, 0.0
      %5026 = vadd.xlane.f32.xlu0 %v5025
      %v5027 = vpop.xlane.xlu0 %5026
      %v5028 = vmul.f32 %v4982, %v1383
      %v5029 = vmul.f32 %v4985, %v1383
      %v5030 = vmul.f32 %v4988, %v1383
      %v5031 = vmul.f32 %v4991, %v1383
      %v5032 = vmul.f32 %v4994, %v1383
      %v5033 = vmul.f32 %v4997, %v1383
      %v5034 = vmul.f32 %v5000, %v1383
      %v5035 = vmul.f32 %v5003, %v1383
      %v5036 = vmul.f32 %v5006, %v1383
      %v5037 = vmul.f32 %v5009, %v1383
      %v5038 = vmul.f32 %v5012, %v1383
      %v5039 = vmul.f32 %v5015, %v1383
      %v5040 = vmul.f32 %v5018, %v1383
      %v5041 = vmul.f32 %v5021, %v1383
      %v5042 = vmul.f32 %v5024, %v1383
      %v5043 = vmul.f32 %v5027, %v1383
      %v5044 = vadd.f32 %v5028, 1e-05
      %v5045 = vadd.f32 %v5029, 1e-05
      %v5046 = vadd.f32 %v5030, 1e-05
      %v5047 = vadd.f32 %v5031, 1e-05
      %v5048 = vadd.f32 %v5032, 1e-05
      %v5049 = vadd.f32 %v5033, 1e-05
      %v5050 = vadd.f32 %v5034, 1e-05
      %v5051 = vadd.f32 %v5035, 1e-05
      %v5052 = vadd.f32 %v5036, 1e-05
      %v5053 = vadd.f32 %v5037, 1e-05
      %v5054 = vadd.f32 %v5038, 1e-05
      %v5055 = vadd.f32 %v5039, 1e-05
      %v5056 = vadd.f32 %v5040, 1e-05
      %v5057 = vadd.f32 %v5041, 1e-05
      %v5058 = vadd.f32 %v5042, 1e-05
      %v5059 = vadd.f32 %v5043, 1e-05
      %v5060 = vrsqrt.pop %v5044
      %v5061 = vrsqrt.pop %v5045
      %v5062 = vrsqrt.pop %v5046
      %v5063 = vrsqrt.pop %v5047
      %v5064 = vrsqrt.pop %v5048
      %v5065 = vrsqrt.pop %v5049
      %v5066 = vrsqrt.pop %v5050
      %v5067 = vrsqrt.pop %v5051
      %v5068 = vrsqrt.pop %v5052
      %v5069 = vrsqrt.pop %v5053
      %v5070 = vrsqrt.pop %v5054
      %v5071 = vrsqrt.pop %v5055
      %v5072 = vrsqrt.pop %v5056
      %v5073 = vrsqrt.pop %v5057
      %v5074 = vrsqrt.pop %v5058
      %v5075 = vrsqrt.pop %v5059
      %v5076 = vmul.f32 %v4948, %v5060
      %v5077 = vmul.f32 %v4949, %v5061
      %v5078 = vmul.f32 %v4950, %v5062
      %v5079 = vmul.f32 %v4951, %v5063
      %v5080 = vmul.f32 %v4952, %v5064
      %v5081 = vmul.f32 %v4953, %v5065
      %v5082 = vmul.f32 %v4954, %v5066
      %v5083 = vmul.f32 %v4955, %v5067
      %v5084 = vmul.f32 %v4956, %v5068
      %v5085 = vmul.f32 %v4957, %v5069
      %v5086 = vmul.f32 %v4958, %v5070
      %v5087 = vmul.f32 %v4959, %v5071
      %v5088 = vmul.f32 %v4960, %v5072
      %v5089 = vmul.f32 %v4961, %v5073
      %v5090 = vmul.f32 %v4962, %v5074
      %v5091 = vmul.f32 %v4963, %v5075
      %v5093 = vlaneseq
      %v5094 = vshrl.u32 %v5093, 7
      %v5095 = vsub.s32 0, %v5094
      %v5096 = vrot.slane %v4882, %v5095
      %v5098 = vmul.f32 %v5076, %v5096
      %v5099 = vmul.f32 %v5077, %v5096
      %v5100 = vmul.f32 %v5078, %v5096
      %v5101 = vmul.f32 %v5079, %v5096
      %v5102 = vmul.f32 %v5080, %v5096
      %v5103 = vmul.f32 %v5081, %v5096
      %v5104 = vmul.f32 %v5082, %v5096
      %v5105 = vmul.f32 %v5083, %v5096
      %v5106 = vmul.f32 %v5084, %v5096
      %v5107 = vmul.f32 %v5085, %v5096
      %v5108 = vmul.f32 %v5086, %v5096
      %v5109 = vmul.f32 %v5087, %v5096
      %v5110 = vmul.f32 %v5088, %v5096
      %v5111 = vmul.f32 %v5089, %v5096
      %v5112 = vmul.f32 %v5090, %v5096
      %v5113 = vmul.f32 %v5091, %v5096
      %v5115 = vlaneseq
      %v5116 = vshrl.u32 %v5115, 7
      %v5117 = vsub.s32 0, %v5116
      %v5118 = vrot.slane %v4883, %v5117
      %v5120 = vadd.f32 %v5098, %v5118
      %v5121 = vadd.f32 %v5099, %v5118
      %v5122 = vadd.f32 %v5100, %v5118
      %v5123 = vadd.f32 %v5101, %v5118
      %v5124 = vadd.f32 %v5102, %v5118
      %v5125 = vadd.f32 %v5103, %v5118
      %v5126 = vadd.f32 %v5104, %v5118
      %v5127 = vadd.f32 %v5105, %v5118
      %v5128 = vadd.f32 %v5106, %v5118
      %v5129 = vadd.f32 %v5107, %v5118
      %v5130 = vadd.f32 %v5108, %v5118
      %v5131 = vadd.f32 %v5109, %v5118
      %v5132 = vadd.f32 %v5110, %v5118
      %v5133 = vadd.f32 %v5111, %v5118
      %v5134 = vadd.f32 %v5112, %v5118
      %v5135 = vadd.f32 %v5113, %v5118
      %v5136 = vld [vmem:[%s19] sm:$0xff]
      %v5137 = vld [vmem:[%s19 + $0x8] sm:$0xff]
      %v5138 = vld [vmem:[%s19 + $0x10] sm:$0xff]
      %v5139 = vld [vmem:[%s19 + $0x18] sm:$0xff]
      %v5140 = vld [vmem:[%s19 + $0x20] sm:$0xff]
      %v5141 = vld [vmem:[%s19 + $0x28] sm:$0xff]
      %v5142 = vld [vmem:[%s19 + $0x30] sm:$0xff]
      %v5143 = vld [vmem:[%s19 + $0x38] sm:$0xff]
      %v5144 = vld [vmem:[%s19 + $0x40] sm:$0xff]
      %v5145 = vld [vmem:[%s19 + $0x48] sm:$0xff]
      %v5146 = vld [vmem:[%s19 + $0x50] sm:$0xff]
      %v5147 = vld [vmem:[%s19 + $0x58] sm:$0xff]
      %v5148 = vld [vmem:[%s19 + $0x60] sm:$0xff]
      %v5149 = vld [vmem:[%s19 + $0x68] sm:$0xff]
      %v5150 = vld [vmem:[%s19 + $0x70] sm:$0xff]
      %v5151 = vld [vmem:[%s19 + $0x78] sm:$0xff]
      %v5152 = vld [vmem:[%s21] sm:$0x3]
      %v5154 = vlaneseq
      %v5155 = vshrl.u32 %v5154, 7
      %v5156 = vsub.s32 0, %v5155
      %v5157 = vrot.slane %v5152, %v5156
      %v5158 = vlaneseq
      %v5159 = vshrl.u32 %v5158, 7
      %v5160 = vsub.s32 1, %v5159
      %v5161 = vrot.slane %v5152, %v5160
      %v5165 = vsel %vm1334, %v5120, 0
      %v5168 = vsel %vm1334, %v5121, 0
      %v5171 = vsel %vm1334, %v5122, 0
      %v5174 = vsel %vm1334, %v5123, 0
      %v5177 = vsel %vm1334, %v5124, 0
      %v5180 = vsel %vm1334, %v5125, 0
      %v5183 = vsel %vm1334, %v5126, 0
      %v5186 = vsel %vm1334, %v5127, 0
      %v5189 = vsel %vm1334, %v5128, 0
      %v5192 = vsel %vm1334, %v5129, 0
      %v5195 = vsel %vm1334, %v5130, 0
      %v5198 = vsel %vm1334, %v5131, 0
      %v5201 = vsel %vm1334, %v5132, 0
      %v5204 = vsel %vm1334, %v5133, 0
      %v5207 = vsel %vm1334, %v5134, 0
      %v5210 = vsel %vm1334, %v5135, 0
      %5212 = vmatprep.subr.mxu0 %v5137
      %5213 = vmatpush1.msra.mxu0 %v5136
      %5214 = vmatprep.subr.mxu0 %v5139
      %5215 = vmatpush1.msra.mxu0 %v5138
      %5216 = vmatprep.subr.mxu0 %v5141
      %5217 = vmatpush1.msra.mxu0 %v5140
      %5218 = vmatprep.subr.mxu0 %v5143
      %5219 = vmatpush1.msra.mxu0 %v5142
      %5220 = vmatprep.subr.mxu0 %v5145
      %5221 = vmatpush1.msra.mxu0 %v5144
      %5222 = vmatprep.subr.mxu0 %v5147
      %5223 = vmatpush1.msra.mxu0 %v5146
      %5224 = vmatprep.subr.mxu0 %v5149
      %5225 = vmatpush1.msra.mxu0 %v5148
      %5226 = vmatprep.subr.mxu0 %v5151
      %5227 = vmatpush1.msra.mxu0 %v5150
      %5228 = vmatprep.subr.mxu0 0.0
      %5229 = vmatpush1.msra.mxu0 0.0
      %5230 = vmatprep.subr.mxu0 0.0
      %5231 = vmatpush1.msra.mxu0 0.0
      %5232 = vmatprep.subr.mxu0 0.0
      %5233 = vmatpush1.msra.mxu0 0.0
      %5234 = vmatprep.subr.mxu0 0.0
      %5235 = vmatpush1.msra.mxu0 0.0
      %5236 = vmatprep.subr.mxu0 0.0
      %5237 = vmatpush1.msra.mxu0 0.0
      %5238 = vmatprep.subr.mxu0 0.0
      %5239 = vmatpush1.msra.mxu0 0.0
      %5240 = vmatprep.subr.mxu0 0.0
      %5241 = vmatpush1.msra.mxu0 0.0
      %5242 = vmatprep.subr.mxu0 0.0
      %5243 = vmatpush1.msra.mxu0 0.0
      %5244 = vmatprep.subr.mxu0 0.0
      %5245 = vmatpush1.msra.mxu0 0.0
      %5246 = vmatprep.subr.mxu0 0.0
      %5247 = vmatpush1.msra.mxu0 0.0
      %5248 = vmatprep.subr.mxu0 0.0
      %5249 = vmatpush1.msra.mxu0 0.0
      %5250 = vmatprep.subr.mxu0 0.0
      %5251 = vmatpush1.msra.mxu0 0.0
      %5252 = vmatprep.subr.mxu0 0.0
      %5253 = vmatpush1.msra.mxu0 0.0
      %5254 = vmatprep.subr.mxu0 0.0
      %5255 = vmatpush1.msra.mxu0 0.0
      %5256 = vmatprep.subr.mxu0 0.0
      %5257 = vmatpush1.msra.mxu0 0.0
      %5258 = vmatprep.subr.mxu0 0.0
      %5259 = vmatpush1.msra.mxu0 0.0
      %5260 = vmatprep.subr.mxu0 0.0
      %5261 = vmatpush1.msra.mxu0 0.0
      %5262 = vmatprep.subr.mxu0 0.0
      %5263 = vmatpush1.msra.mxu0 0.0
      %5264 = vmatprep.subr.mxu0 0.0
      %5265 = vmatpush1.msra.mxu0 0.0
      %5266 = vmatprep.subr.mxu0 0.0
      %5267 = vmatpush1.msra.mxu0 0.0
      %5268 = vmatprep.subr.mxu0 0.0
      %5269 = vmatpush1.msra.mxu0 0.0
      %5270 = vmatprep.subr.mxu0 0.0
      %5271 = vmatpush1.msra.mxu0 0.0
      %5272 = vmatprep.subr.mxu0 0.0
      %5273 = vmatpush1.msra.mxu0 0.0
      %5274 = vmatprep.subr.mxu0 0.0
      %5275 = vmatpush1.msra.mxu0 0.0
      %5276 = vmatprep.mubr.f32.mxu0 0.0
      %5277 = vmatmul.mubr.f32.gmra.mrb[0].mxu0 %v5165
      %v5278 = vpop.f32.mrb[0].mxu0
      %v5279 = vadd.f32 %v5157, %v5278
      %v5280 = vpop.f32.mrb[0].mxu0
      %v5281 = vadd.f32 %v5161, %v5280
      %5282 = vmatprep.mubr.f32.mxu0 0.0
      %5283 = vmatmul.mubr.f32.gmra.mrb[0].mxu0 %v5168
      %v5284 = vpop.f32.mrb[0].mxu0
      %v5285 = vadd.f32 %v5157, %v5284
      %v5286 = vpop.f32.mrb[0].mxu0
      %v5287 = vadd.f32 %v5161, %v5286
      %5288 = vmatprep.mubr.f32.mxu0 0.0
      %5289 = vmatmul.mubr.f32.gmra.mrb[0].mxu0 %v5171
      %v5290 = vpop.f32.mrb[0].mxu0
      %v5291 = vadd.f32 %v5157, %v5290
      %v5292 = vpop.f32.mrb[0].mxu0
      %v5293 = vadd.f32 %v5161, %v5292
      %5294 = vmatprep.mubr.f32.mxu0 0.0
      %5295 = vmatmul.mubr.f32.gmra.mrb[0].mxu0 %v5174
      %v5296 = vpop.f32.mrb[0].mxu0
      %v5297 = vadd.f32 %v5157, %v5296
      %v5298 = vpop.f32.mrb[0].mxu0
      %v5299 = vadd.f32 %v5161, %v5298
      %5300 = vmatprep.mubr.f32.mxu0 0.0
      %5301 = vmatmul.mubr.f32.gmra.mrb[0].mxu0 %v5177
      %v5302 = vpop.f32.mrb[0].mxu0
      %v5303 = vadd.f32 %v5157, %v5302
      %v5304 = vpop.f32.mrb[0].mxu0
      %v5305 = vadd.f32 %v5161, %v5304
      %5306 = vmatprep.mubr.f32.mxu0 0.0
      %5307 = vmatmul.mubr.f32.gmra.mrb[0].mxu0 %v5180
      %v5308 = vpop.f32.mrb[0].mxu0
      %v5309 = vadd.f32 %v5157, %v5308
      %v5310 = vpop.f32.mrb[0].mxu0
      %v5311 = vadd.f32 %v5161, %v5310
      %5312 = vmatprep.mubr.f32.mxu0 0.0
      %5313 = vmatmul.mubr.f32.gmra.mrb[0].mxu0 %v5183
      %v5314 = vpop.f32.mrb[0].mxu0
      %v5315 = vadd.f32 %v5157, %v5314
      %v5316 = vpop.f32.mrb[0].mxu0
      %v5317 = vadd.f32 %v5161, %v5316
      %5318 = vmatprep.mubr.f32.mxu0 0.0
      %5319 = vmatmul.mubr.f32.gmra.mrb[0].mxu0 %v5186
      %v5320 = vpop.f32.mrb[0].mxu0
      %v5321 = vadd.f32 %v5157, %v5320
      %v5322 = vpop.f32.mrb[0].mxu0
      %v5323 = vadd.f32 %v5161, %v5322
      %5324 = vmatprep.mubr.f32.mxu0 0.0
      %5325 = vmatmul.mubr.f32.gmra.mrb[0].mxu0 %v5189
      %v5326 = vpop.f32.mrb[0].mxu0
      %v5327 = vadd.f32 %v5157, %v5326
      %v5328 = vpop.f32.mrb[0].mxu0
      %v5329 = vadd.f32 %v5161, %v5328
      %5330 = vmatprep.mubr.f32.mxu0 0.0
      %5331 = vmatmul.mubr.f32.gmra.mrb[0].mxu0 %v5192
      %v5332 = vpop.f32.mrb[0].mxu0
      %v5333 = vadd.f32 %v5157, %v5332
      %v5334 = vpop.f32.mrb[0].mxu0
      %v5335 = vadd.f32 %v5161, %v5334
      %5336 = vmatprep.mubr.f32.mxu0 0.0
      %5337 = vmatmul.mubr.f32.gmra.mrb[0].mxu0 %v5195
      %v5338 = vpop.f32.mrb[0].mxu0
      %v5339 = vadd.f32 %v5157, %v5338
      %v5340 = vpop.f32.mrb[0].mxu0
      %v5341 = vadd.f32 %v5161, %v5340
      %5342 = vmatprep.mubr.f32.mxu0 0.0
      %5343 = vmatmul.mubr.f32.gmra.mrb[0].mxu0 %v5198
      %v5344 = vpop.f32.mrb[0].mxu0
      %v5345 = vadd.f32 %v5157, %v5344
      %v5346 = vpop.f32.mrb[0].mxu0
      %v5347 = vadd.f32 %v5161, %v5346
      %5348 = vmatprep.mubr.f32.mxu0 0.0
      %5349 = vmatmul.mubr.f32.gmra.mrb[0].mxu0 %v5201
      %v5350 = vpop.f32.mrb[0].mxu0
      %v5351 = vadd.f32 %v5157, %v5350
      %v5352 = vpop.f32.mrb[0].mxu0
      %v5353 = vadd.f32 %v5161, %v5352
      %5354 = vmatprep.mubr.f32.mxu0 0.0
      %5355 = vmatmul.mubr.f32.gmra.mrb[0].mxu0 %v5204
      %v5356 = vpop.f32.mrb[0].mxu0
      %v5357 = vadd.f32 %v5157, %v5356
      %v5358 = vpop.f32.mrb[0].mxu0
      %v5359 = vadd.f32 %v5161, %v5358
      %5360 = vmatprep.mubr.f32.mxu0 0.0
      %5361 = vmatmul.mubr.f32.gmra.mrb[0].mxu0 %v5207
      %v5362 = vpop.f32.mrb[0].mxu0
      %v5363 = vadd.f32 %v5157, %v5362
      %v5364 = vpop.f32.mrb[0].mxu0
      %v5365 = vadd.f32 %v5161, %v5364
      %5366 = vmatprep.mubr.f32.mxu0 0.0
      %5367 = vmatmul.mubr.f32.gmra.mrb[0].mxu0 %v5210
      %v5368 = vpop.f32.mrb[0].mxu0
      %v5369 = vadd.f32 %v5157, %v5368
      %v5370 = vpop.f32.mrb[0].mxu0
      %v5371 = vadd.f32 %v5161, %v5370
      %5372 = vdwg.mxu0
      %v5373 = vmul.f32 %v5279, 0.5
      %v5374 = vmul.f32 %v5281, 0.5
      %v5375 = vmul.f32 %v5285, 0.5
      %v5376 = vmul.f32 %v5287, 0.5
      %v5377 = vmul.f32 %v5291, 0.5
      %v5378 = vmul.f32 %v5293, 0.5
      %v5379 = vmul.f32 %v5297, 0.5
      %v5380 = vmul.f32 %v5299, 0.5
      %v5381 = vmul.f32 %v5303, 0.5
      %v5382 = vmul.f32 %v5305, 0.5
      %v5383 = vmul.f32 %v5309, 0.5
      %v5384 = vmul.f32 %v5311, 0.5
      %v5385 = vmul.f32 %v5315, 0.5
      %v5386 = vmul.f32 %v5317, 0.5
      %v5387 = vmul.f32 %v5321, 0.5
      %v5388 = vmul.f32 %v5323, 0.5
      %v5389 = vmul.f32 %v5327, 0.5
      %v5390 = vmul.f32 %v5329, 0.5
      %v5391 = vmul.f32 %v5333, 0.5
      %v5392 = vmul.f32 %v5335, 0.5
      %v5393 = vmul.f32 %v5339, 0.5
      %v5394 = vmul.f32 %v5341, 0.5
      %v5395 = vmul.f32 %v5345, 0.5
      %v5396 = vmul.f32 %v5347, 0.5
      %v5397 = vmul.f32 %v5351, 0.5
      %v5398 = vmul.f32 %v5353, 0.5
      %v5399 = vmul.f32 %v5357, 0.5
      %v5400 = vmul.f32 %v5359, 0.5
      %v5401 = vmul.f32 %v5363, 0.5
      %v5402 = vmul.f32 %v5365, 0.5
      %v5403 = vmul.f32 %v5369, 0.5
      %v5404 = vmul.f32 %v5371, 0.5
      %v5405 = vmul.f32 %v5279, 0.044715
      %v5406 = vmul.f32 %v5281, 0.044715
      %v5407 = vmul.f32 %v5285, 0.044715
      %v5408 = vmul.f32 %v5287, 0.044715
      %v5409 = vmul.f32 %v5291, 0.044715
      %v5410 = vmul.f32 %v5293, 0.044715
      %v5411 = vmul.f32 %v5297, 0.044715
      %v5412 = vmul.f32 %v5299, 0.044715
      %v5413 = vmul.f32 %v5303, 0.044715
      %v5414 = vmul.f32 %v5305, 0.044715
      %v5415 = vmul.f32 %v5309, 0.044715
      %v5416 = vmul.f32 %v5311, 0.044715
      %v5417 = vmul.f32 %v5315, 0.044715
      %v5418 = vmul.f32 %v5317, 0.044715
      %v5419 = vmul.f32 %v5321, 0.044715
      %v5420 = vmul.f32 %v5323, 0.044715
      %v5421 = vmul.f32 %v5327, 0.044715
      %v5422 = vmul.f32 %v5329, 0.044715
      %v5423 = vmul.f32 %v5333, 0.044715
      %v5424 = vmul.f32 %v5335, 0.044715
      %v5425 = vmul.f32 %v5339, 0.044715
      %v5426 = vmul.f32 %v5341, 0.044715
      %v5427 = vmul.f32 %v5345, 0.044715
      %v5428 = vmul.f32 %v5347, 0.044715
      %v5429 = vmul.f32 %v5351, 0.044715
      %v5430 = vmul.f32 %v5353, 0.044715
      %v5431 = vmul.f32 %v5357, 0.044715
      %v5432 = vmul.f32 %v5359, 0.044715
      %v5433 = vmul.f32 %v5363, 0.044715
      %v5434 = vmul.f32 %v5365, 0.044715
      %v5435 = vmul.f32 %v5369, 0.044715
      %v5436 = vmul.f32 %v5371, 0.044715
      %v5437 = vmul.f32 %v5405, %v5279
      %v5438 = vmul.f32 %v5406, %v5281
      %v5439 = vmul.f32 %v5407, %v5285
      %v5440 = vmul.f32 %v5408, %v5287
      %v5441 = vmul.f32 %v5409, %v5291
      %v5442 = vmul.f32 %v5410, %v5293
      %v5443 = vmul.f32 %v5411, %v5297
      %v5444 = vmul.f32 %v5412, %v5299
      %v5445 = vmul.f32 %v5413, %v5303
      %v5446 = vmul.f32 %v5414, %v5305
      %v5447 = vmul.f32 %v5415, %v5309
      %v5448 = vmul.f32 %v5416, %v5311
      %v5449 = vmul.f32 %v5417, %v5315
      %v5450 = vmul.f32 %v5418, %v5317
      %v5451 = vmul.f32 %v5419, %v5321
      %v5452 = vmul.f32 %v5420, %v5323
      %v5453 = vmul.f32 %v5421, %v5327
      %v5454 = vmul.f32 %v5422, %v5329
      %v5455 = vmul.f32 %v5423, %v5333
      %v5456 = vmul.f32 %v5424, %v5335
      %v5457 = vmul.f32 %v5425, %v5339
      %v5458 = vmul.f32 %v5426, %v5341
      %v5459 = vmul.f32 %v5427, %v5345
      %v5460 = vmul.f32 %v5428, %v5347
      %v5461 = vmul.f32 %v5429, %v5351
      %v5462 = vmul.f32 %v5430, %v5353
      %v5463 = vmul.f32 %v5431, %v5357
      %v5464 = vmul.f32 %v5432, %v5359
      %v5465 = vmul.f32 %v5433, %v5363
      %v5466 = vmul.f32 %v5434, %v5365
      %v5467 = vmul.f32 %v5435, %v5369
      %v5468 = vmul.f32 %v5436, %v5371
      %v5469 = vmul.f32 %v5437, %v5279
      %v5470 = vmul.f32 %v5438, %v5281
      %v5471 = vmul.f32 %v5439, %v5285
      %v5472 = vmul.f32 %v5440, %v5287
      %v5473 = vmul.f32 %v5441, %v5291
      %v5474 = vmul.f32 %v5442, %v5293
      %v5475 = vmul.f32 %v5443, %v5297
      %v5476 = vmul.f32 %v5444, %v5299
      %v5477 = vmul.f32 %v5445, %v5303
      %v5478 = vmul.f32 %v5446, %v5305
      %v5479 = vmul.f32 %v5447, %v5309
      %v5480 = vmul.f32 %v5448, %v5311
      %v5481 = vmul.f32 %v5449, %v5315
      %v5482 = vmul.f32 %v5450, %v5317
      %v5483 = vmul.f32 %v5451, %v5321
      %v5484 = vmul.f32 %v5452, %v5323
      %v5485 = vmul.f32 %v5453, %v5327
      %v5486 = vmul.f32 %v5454, %v5329
      %v5487 = vmul.f32 %v5455, %v5333
      %v5488 = vmul.f32 %v5456, %v5335
      %v5489 = vmul.f32 %v5457, %v5339
      %v5490 = vmul.f32 %v5458, %v5341
      %v5491 = vmul.f32 %v5459, %v5345
      %v5492 = vmul.f32 %v5460, %v5347
      %v5493 = vmul.f32 %v5461, %v5351
      %v5494 = vmul.f32 %v5462, %v5353
      %v5495 = vmul.f32 %v5463, %v5357
      %v5496 = vmul.f32 %v5464, %v5359
      %v5497 = vmul.f32 %v5465, %v5363
      %v5498 = vmul.f32 %v5466, %v5365
      %v5499 = vmul.f32 %v5467, %v5369
      %v5500 = vmul.f32 %v5468, %v5371
      %v5501 = vadd.f32 %v5279, %v5469
      %v5502 = vadd.f32 %v5281, %v5470
      %v5503 = vadd.f32 %v5285, %v5471
      %v5504 = vadd.f32 %v5287, %v5472
      %v5505 = vadd.f32 %v5291, %v5473
      %v5506 = vadd.f32 %v5293, %v5474
      %v5507 = vadd.f32 %v5297, %v5475
      %v5508 = vadd.f32 %v5299, %v5476
      %v5509 = vadd.f32 %v5303, %v5477
      %v5510 = vadd.f32 %v5305, %v5478
      %v5511 = vadd.f32 %v5309, %v5479
      %v5512 = vadd.f32 %v5311, %v5480
      %v5513 = vadd.f32 %v5315, %v5481
      %v5514 = vadd.f32 %v5317, %v5482
      %v5515 = vadd.f32 %v5321, %v5483
      %v5516 = vadd.f32 %v5323, %v5484
      %v5517 = vadd.f32 %v5327, %v5485
      %v5518 = vadd.f32 %v5329, %v5486
      %v5519 = vadd.f32 %v5333, %v5487
      %v5520 = vadd.f32 %v5335, %v5488
      %v5521 = vadd.f32 %v5339, %v5489
      %v5522 = vadd.f32 %v5341, %v5490
      %v5523 = vadd.f32 %v5345, %v5491
      %v5524 = vadd.f32 %v5347, %v5492
      %v5525 = vadd.f32 %v5351, %v5493
      %v5526 = vadd.f32 %v5353, %v5494
      %v5527 = vadd.f32 %v5357, %v5495
      %v5528 = vadd.f32 %v5359, %v5496
      %v5529 = vadd.f32 %v5363, %v5497
      %v5530 = vadd.f32 %v5365, %v5498
      %v5531 = vadd.f32 %v5369, %v5499
      %v5532 = vadd.f32 %v5371, %v5500
      %v5533 = vmul.f32 %v5501, 0.7978846
      %v5534 = vmul.f32 %v5502, 0.7978846
      %v5535 = vmul.f32 %v5503, 0.7978846
      %v5536 = vmul.f32 %v5504, 0.7978846
      %v5537 = vmul.f32 %v5505, 0.7978846
      %v5538 = vmul.f32 %v5506, 0.7978846
      %v5539 = vmul.f32 %v5507, 0.7978846
      %v5540 = vmul.f32 %v5508, 0.7978846
      %v5541 = vmul.f32 %v5509, 0.7978846
      %v5542 = vmul.f32 %v5510, 0.7978846
      %v5543 = vmul.f32 %v5511, 0.7978846
      %v5544 = vmul.f32 %v5512, 0.7978846
      %v5545 = vmul.f32 %v5513, 0.7978846
      %v5546 = vmul.f32 %v5514, 0.7978846
      %v5547 = vmul.f32 %v5515, 0.7978846
      %v5548 = vmul.f32 %v5516, 0.7978846
      %v5549 = vmul.f32 %v5517, 0.7978846
      %v5550 = vmul.f32 %v5518, 0.7978846
      %v5551 = vmul.f32 %v5519, 0.7978846
      %v5552 = vmul.f32 %v5520, 0.7978846
      %v5553 = vmul.f32 %v5521, 0.7978846
      %v5554 = vmul.f32 %v5522, 0.7978846
      %v5555 = vmul.f32 %v5523, 0.7978846
      %v5556 = vmul.f32 %v5524, 0.7978846
      %v5557 = vmul.f32 %v5525, 0.7978846
      %v5558 = vmul.f32 %v5526, 0.7978846
      %v5559 = vmul.f32 %v5527, 0.7978846
      %v5560 = vmul.f32 %v5528, 0.7978846
      %v5561 = vmul.f32 %v5529, 0.7978846
      %v5562 = vmul.f32 %v5530, 0.7978846
      %v5563 = vmul.f32 %v5531, 0.7978846
      %v5564 = vmul.f32 %v5532, 0.7978846
      %v5565 = vtanh.pop %v5533
      %v5566 = vtanh.pop %v5534
      %v5567 = vtanh.pop %v5535
      %v5568 = vtanh.pop %v5536
      %v5569 = vtanh.pop %v5537
      %v5570 = vtanh.pop %v5538
      %v5571 = vtanh.pop %v5539
      %v5572 = vtanh.pop %v5540
      %v5573 = vtanh.pop %v5541
      %v5574 = vtanh.pop %v5542
      %v5575 = vtanh.pop %v5543
      %v5576 = vtanh.pop %v5544
      %v5577 = vtanh.pop %v5545
      %v5578 = vtanh.pop %v5546
      %v5579 = vtanh.pop %v5547
      %v5580 = vtanh.pop %v5548
      %v5581 = vtanh.pop %v5549
      %v5582 = vtanh.pop %v5550
      %v5583 = vtanh.pop %v5551
      %v5584 = vtanh.pop %v5552
      %v5585 = vtanh.pop %v5553
      %v5586 = vtanh.pop %v5554
      %v5587 = vtanh.pop %v5555
      %v5588 = vtanh.pop %v5556
      %v5589 = vtanh.pop %v5557
      %v5590 = vtanh.pop %v5558
      %v5591 = vtanh.pop %v5559
      %v5592 = vtanh.pop %v5560
      %v5593 = vtanh.pop %v5561
      %v5594 = vtanh.pop %v5562
      %v5595 = vtanh.pop %v5563
      %v5596 = vtanh.pop %v5564
      %v5597 = vadd.f32 %v5565, 1.0
      %v5598 = vadd.f32 %v5566, 1.0
      %v5599 = vadd.f32 %v5567, 1.0
      %v5600 = vadd.f32 %v5568, 1.0
      %v5601 = vadd.f32 %v5569, 1.0
      %v5602 = vadd.f32 %v5570, 1.0
      %v5603 = vadd.f32 %v5571, 1.0
      %v5604 = vadd.f32 %v5572, 1.0
      %v5605 = vadd.f32 %v5573, 1.0
      %v5606 = vadd.f32 %v5574, 1.0
      %v5607 = vadd.f32 %v5575, 1.0
      %v5608 = vadd.f32 %v5576, 1.0
      %v5609 = vadd.f32 %v5577, 1.0
      %v5610 = vadd.f32 %v5578, 1.0
      %v5611 = vadd.f32 %v5579, 1.0
      %v5612 = vadd.f32 %v5580, 1.0
      %v5613 = vadd.f32 %v5581, 1.0
      %v5614 = vadd.f32 %v5582, 1.0
      %v5615 = vadd.f32 %v5583, 1.0
      %v5616 = vadd.f32 %v5584, 1.0
      %v5617 = vadd.f32 %v5585, 1.0
      %v5618 = vadd.f32 %v5586, 1.0
      %v5619 = vadd.f32 %v5587, 1.0
      %v5620 = vadd.f32 %v5588, 1.0
      %v5621 = vadd.f32 %v5589, 1.0
      %v5622 = vadd.f32 %v5590, 1.0
      %v5623 = vadd.f32 %v5591, 1.0
      %v5624 = vadd.f32 %v5592, 1.0
      %v5625 = vadd.f32 %v5593, 1.0
      %v5626 = vadd.f32 %v5594, 1.0
      %v5627 = vadd.f32 %v5595, 1.0
      %v5628 = vadd.f32 %v5596, 1.0
      %v5629 = vmul.f32 %v5373, %v5597
      %v5630 = vmul.f32 %v5374, %v5598
      %v5631 = vmul.f32 %v5375, %v5599
      %v5632 = vmul.f32 %v5376, %v5600
      %v5633 = vmul.f32 %v5377, %v5601
      %v5634 = vmul.f32 %v5378, %v5602
      %v5635 = vmul.f32 %v5379, %v5603
      %v5636 = vmul.f32 %v5380, %v5604
      %v5637 = vmul.f32 %v5381, %v5605
      %v5638 = vmul.f32 %v5382, %v5606
      %v5639 = vmul.f32 %v5383, %v5607
      %v5640 = vmul.f32 %v5384, %v5608
      %v5641 = vmul.f32 %v5385, %v5609
      %v5642 = vmul.f32 %v5386, %v5610
      %v5643 = vmul.f32 %v5387, %v5611
      %v5644 = vmul.f32 %v5388, %v5612
      %v5645 = vmul.f32 %v5389, %v5613
      %v5646 = vmul.f32 %v5390, %v5614
      %v5647 = vmul.f32 %v5391, %v5615
      %v5648 = vmul.f32 %v5392, %v5616
      %v5649 = vmul.f32 %v5393, %v5617
      %v5650 = vmul.f32 %v5394, %v5618
      %v5651 = vmul.f32 %v5395, %v5619
      %v5652 = vmul.f32 %v5396, %v5620
      %v5653 = vmul.f32 %v5397, %v5621
      %v5654 = vmul.f32 %v5398, %v5622
      %v5655 = vmul.f32 %v5399, %v5623
      %v5656 = vmul.f32 %v5400, %v5624
      %v5657 = vmul.f32 %v5401, %v5625
      %v5658 = vmul.f32 %v5402, %v5626
      %v5659 = vmul.f32 %v5403, %v5627
      %v5660 = vmul.f32 %v5404, %v5628
      %v5661 = vld [vmem:[%s23] sm:$0xff]
      %v5662 = vld [vmem:[%s23 + $0x8] sm:$0xff]
      %v5663 = vld [vmem:[%s23 + $0x10] sm:$0xff]
      %v5664 = vld [vmem:[%s23 + $0x18] sm:$0xff]
      %v5665 = vld [vmem:[%s23 + $0x20] sm:$0xff]
      %v5666 = vld [vmem:[%s23 + $0x28] sm:$0xff]
      %v5667 = vld [vmem:[%s23 + $0x30] sm:$0xff]
      %v5668 = vld [vmem:[%s23 + $0x38] sm:$0xff]
      %v5669 = vld [vmem:[%s23 + $0x40] sm:$0xff]
      %v5670 = vld [vmem:[%s23 + $0x48] sm:$0xff]
      %v5671 = vld [vmem:[%s23 + $0x50] sm:$0xff]
      %v5672 = vld [vmem:[%s23 + $0x58] sm:$0xff]
      %v5673 = vld [vmem:[%s23 + $0x60] sm:$0xff]
      %v5674 = vld [vmem:[%s23 + $0x68] sm:$0xff]
      %v5675 = vld [vmem:[%s23 + $0x70] sm:$0xff]
      %v5676 = vld [vmem:[%s23 + $0x78] sm:$0xff]
      %v5677 = vld [vmem:[%s23 + $0x80] sm:$0xff]
      %v5678 = vld [vmem:[%s23 + $0x88] sm:$0xff]
      %v5679 = vld [vmem:[%s23 + $0x90] sm:$0xff]
      %v5680 = vld [vmem:[%s23 + $0x98] sm:$0xff]
      %v5681 = vld [vmem:[%s23 + $0xa0] sm:$0xff]
      %v5682 = vld [vmem:[%s23 + $0xa8] sm:$0xff]
      %v5683 = vld [vmem:[%s23 + $0xb0] sm:$0xff]
      %v5684 = vld [vmem:[%s23 + $0xb8] sm:$0xff]
      %v5685 = vld [vmem:[%s23 + $0xc0] sm:$0xff]
      %v5686 = vld [vmem:[%s23 + $0xc8] sm:$0xff]
      %v5687 = vld [vmem:[%s23 + $0xd0] sm:$0xff]
      %v5688 = vld [vmem:[%s23 + $0xd8] sm:$0xff]
      %v5689 = vld [vmem:[%s23 + $0xe0] sm:$0xff]
      %v5690 = vld [vmem:[%s23 + $0xe8] sm:$0xff]
      %v5691 = vld [vmem:[%s23 + $0xf0] sm:$0xff]
      %v5692 = vld [vmem:[%s23 + $0xf8] sm:$0xff]
      %5693 = vmatprep.subr.mxu0 0.0
      %5694 = vmatpush1.msra.mxu0 %v5661
      %5695 = vmatprep.subr.mxu0 0.0
      %5696 = vmatpush1.msra.mxu0 %v5662
      %5697 = vmatprep.subr.mxu0 0.0
      %5698 = vmatpush1.msra.mxu0 %v5663
      %5699 = vmatprep.subr.mxu0 0.0
      %5700 = vmatpush1.msra.mxu0 %v5664
      %5701 = vmatprep.subr.mxu0 0.0
      %5702 = vmatpush1.msra.mxu0 %v5665
      %5703 = vmatprep.subr.mxu0 0.0
      %5704 = vmatpush1.msra.mxu0 %v5666
      %5705 = vmatprep.subr.mxu0 0.0
      %5706 = vmatpush1.msra.mxu0 %v5667
      %5707 = vmatprep.subr.mxu0 0.0
      %5708 = vmatpush1.msra.mxu0 %v5668
      %5709 = vmatprep.subr.mxu0 0.0
      %5710 = vmatpush1.msra.mxu0 %v5669
      %5711 = vmatprep.subr.mxu0 0.0
      %5712 = vmatpush1.msra.mxu0 %v5670
      %5713 = vmatprep.subr.mxu0 0.0
      %5714 = vmatpush1.msra.mxu0 %v5671
      %5715 = vmatprep.subr.mxu0 0.0
      %5716 = vmatpush1.msra.mxu0 %v5672
      %5717 = vmatprep.subr.mxu0 0.0
      %5718 = vmatpush1.msra.mxu0 %v5673
      %5719 = vmatprep.subr.mxu0 0.0
      %5720 = vmatpush1.msra.mxu0 %v5674
      %5721 = vmatprep.subr.mxu0 0.0
      %5722 = vmatpush1.msra.mxu0 %v5675
      %5723 = vmatprep.subr.mxu0 0.0
      %5724 = vmatpush1.msra.mxu0 %v5676
      %5725 = vmatprep.subr.mxu0 0.0
      %5726 = vmatpush1.msra.mxu0 %v5677
      %5727 = vmatprep.subr.mxu0 0.0
      %5728 = vmatpush1.msra.mxu0 %v5678
      %5729 = vmatprep.subr.mxu0 0.0
      %5730 = vmatpush1.msra.mxu0 %v5679
      %5731 = vmatprep.subr.mxu0 0.0
      %5732 = vmatpush1.msra.mxu0 %v5680
      %5733 = vmatprep.subr.mxu0 0.0
      %5734 = vmatpush1.msra.mxu0 %v5681
      %5735 = vmatprep.subr.mxu0 0.0
      %5736 = vmatpush1.msra.mxu0 %v5682
      %5737 = vmatprep.subr.mxu0 0.0
      %5738 = vmatpush1.msra.mxu0 %v5683
      %5739 = vmatprep.subr.mxu0 0.0
      %5740 = vmatpush1.msra.mxu0 %v5684
      %5741 = vmatprep.subr.mxu0 0.0
      %5742 = vmatpush1.msra.mxu0 %v5685
      %5743 = vmatprep.subr.mxu0 0.0
      %5744 = vmatpush1.msra.mxu0 %v5686
      %5745 = vmatprep.subr.mxu0 0.0
      %5746 = vmatpush1.msra.mxu0 %v5687
      %5747 = vmatprep.subr.mxu0 0.0
      %5748 = vmatpush1.msra.mxu0 %v5688
      %5749 = vmatprep.subr.mxu0 0.0
      %5750 = vmatpush1.msra.mxu0 %v5689
      %5751 = vmatprep.subr.mxu0 0.0
      %5752 = vmatpush1.msra.mxu0 %v5690
      %5753 = vmatprep.subr.mxu0 0.0
      %5754 = vmatpush1.msra.mxu0 %v5691
      %5755 = vmatprep.subr.mxu0 0.0
      %5756 = vmatpush1.msra.mxu0 %v5692
      %5757 = vmatprep.mubr.f32.mxu0 %v5630
      %5758 = vmatmul.mubr.f32.gmra.mrb[0].mxu0 %v5629
      %v5759 = vpop.f32.mrb[0].mxu0
      %v5760 = vadd.f32 0.0, %v5759
      %v5761 = vpop.f32.mrb[0].mxu0
      %5762 = vmatprep.mubr.f32.mxu0 %v5632
      %5763 = vmatmul.mubr.f32.gmra.mrb[0].mxu0 %v5631
      %v5764 = vpop.f32.mrb[0].mxu0
      %v5765 = vadd.f32 0.0, %v5764
      %v5766 = vpop.f32.mrb[0].mxu0
      %5767 = vmatprep.mubr.f32.mxu0 %v5634
      %5768 = vmatmul.mubr.f32.gmra.mrb[0].mxu0 %v5633
      %v5769 = vpop.f32.mrb[0].mxu0
      %v5770 = vadd.f32 0.0, %v5769
      %v5771 = vpop.f32.mrb[0].mxu0
      %5772 = vmatprep.mubr.f32.mxu0 %v5636
      %5773 = vmatmul.mubr.f32.gmra.mrb[0].mxu0 %v5635
      %v5774 = vpop.f32.mrb[0].mxu0
      %v5775 = vadd.f32 0.0, %v5774
      %v5776 = vpop.f32.mrb[0].mxu0
      %5777 = vmatprep.mubr.f32.mxu0 %v5638
      %5778 = vmatmul.mubr.f32.gmra.mrb[0].mxu0 %v5637
      %v5779 = vpop.f32.mrb[0].mxu0
      %v5780 = vadd.f32 0.0, %v5779
      %v5781 = vpop.f32.mrb[0].mxu0
      %5782 = vmatprep.mubr.f32.mxu0 %v5640
      %5783 = vmatmul.mubr.f32.gmra.mrb[0].mxu0 %v5639
      %v5784 = vpop.f32.mrb[0].mxu0
      %v5785 = vadd.f32 0.0, %v5784
      %v5786 = vpop.f32.mrb[0].mxu0
      %5787 = vmatprep.mubr.f32.mxu0 %v5642
      %5788 = vmatmul.mubr.f32.gmra.mrb[0].mxu0 %v5641
      %v5789 = vpop.f32.mrb[0].mxu0
      %v5790 = vadd.f32 0.0, %v5789
      %v5791 = vpop.f32.mrb[0].mxu0
      %5792 = vmatprep.mubr.f32.mxu0 %v5644
      %5793 = vmatmul.mubr.f32.gmra.mrb[0].mxu0 %v5643
      %v5794 = vpop.f32.mrb[0].mxu0
      %v5795 = vadd.f32 0.0, %v5794
      %v5796 = vpop.f32.mrb[0].mxu0
      %5797 = vmatprep.mubr.f32.mxu0 %v5646
      %5798 = vmatmul.mubr.f32.gmra.mrb[0].mxu0 %v5645
      %v5799 = vpop.f32.mrb[0].mxu0
      %v5800 = vadd.f32 0.0, %v5799
      %v5801 = vpop.f32.mrb[0].mxu0
      %5802 = vmatprep.mubr.f32.mxu0 %v5648
      %5803 = vmatmul.mubr.f32.gmra.mrb[0].mxu0 %v5647
      %v5804 = vpop.f32.mrb[0].mxu0
      %v5805 = vadd.f32 0.0, %v5804
      %v5806 = vpop.f32.mrb[0].mxu0
      %5807 = vmatprep.mubr.f32.mxu0 %v5650
      %5808 = vmatmul.mubr.f32.gmra.mrb[0].mxu0 %v5649
      %v5809 = vpop.f32.mrb[0].mxu0
      %v5810 = vadd.f32 0.0, %v5809
      %v5811 = vpop.f32.mrb[0].mxu0
      %5812 = vmatprep.mubr.f32.mxu0 %v5652
      %5813 = vmatmul.mubr.f32.gmra.mrb[0].mxu0 %v5651
      %v5814 = vpop.f32.mrb[0].mxu0
      %v5815 = vadd.f32 0.0, %v5814
      %v5816 = vpop.f32.mrb[0].mxu0
      %5817 = vmatprep.mubr.f32.mxu0 %v5654
      %5818 = vmatmul.mubr.f32.gmra.mrb[0].mxu0 %v5653
      %v5819 = vpop.f32.mrb[0].mxu0
      %v5820 = vadd.f32 0.0, %v5819
      %v5821 = vpop.f32.mrb[0].mxu0
      %5822 = vmatprep.mubr.f32.mxu0 %v5656
      %5823 = vmatmul.mubr.f32.gmra.mrb[0].mxu0 %v5655
      %v5824 = vpop.f32.mrb[0].mxu0
      %v5825 = vadd.f32 0.0, %v5824
      %v5826 = vpop.f32.mrb[0].mxu0
      %5827 = vmatprep.mubr.f32.mxu0 %v5658
      %5828 = vmatmul.mubr.f32.gmra.mrb[0].mxu0 %v5657
      %v5829 = vpop.f32.mrb[0].mxu0
      %v5830 = vadd.f32 0.0, %v5829
      %v5831 = vpop.f32.mrb[0].mxu0
      %5832 = vmatprep.mubr.f32.mxu0 %v5660
      %5833 = vmatmul.mubr.f32.gmra.mrb[0].mxu0 %v5659
      %v5834 = vpop.f32.mrb[0].mxu0
      %v5835 = vadd.f32 0.0, %v5834
      %v5836 = vpop.f32.mrb[0].mxu0
      %5837 = vdwg.mxu0
      %v5838 = vadd.f32 %v4866, %v5760
      %v5839 = vadd.f32 %v4867, %v5765
      %v5840 = vadd.f32 %v4868, %v5770
      %v5841 = vadd.f32 %v4869, %v5775
      %v5842 = vadd.f32 %v4870, %v5780
      %v5843 = vadd.f32 %v4871, %v5785
      %v5844 = vadd.f32 %v4872, %v5790
      %v5845 = vadd.f32 %v4873, %v5795
      %v5846 = vadd.f32 %v4874, %v5800
      %v5847 = vadd.f32 %v4875, %v5805
      %v5848 = vadd.f32 %v4876, %v5810
      %v5849 = vadd.f32 %v4877, %v5815
      %v5850 = vadd.f32 %v4878, %v5820
      %v5851 = vadd.f32 %v4879, %v5825
      %v5852 = vadd.f32 %v4880, %v5830
      %v5853 = vadd.f32 %v4881, %v5835
      %v5854 = vld [vmem:[%s25] sm:$0x1]
      %v5856 = vlaneseq
      %v5857 = vshrl.u32 %v5856, 7
      %v5858 = vsub.s32 0, %v5857
      %v5859 = vrot.slane %v5854, %v5858
      %v5861 = vadd.f32 %v5838, %v5859
      %v5862 = vadd.f32 %v5839, %v5859
      %v5863 = vadd.f32 %v5840, %v5859
      %v5864 = vadd.f32 %v5841, %v5859
      %v5865 = vadd.f32 %v5842, %v5859
      %v5866 = vadd.f32 %v5843, %v5859
      %v5867 = vadd.f32 %v5844, %v5859
      %v5868 = vadd.f32 %v5845, %v5859
      %v5869 = vadd.f32 %v5846, %v5859
      %v5870 = vadd.f32 %v5847, %v5859
      %v5871 = vadd.f32 %v5848, %v5859
      %v5872 = vadd.f32 %v5849, %v5859
      %v5873 = vadd.f32 %v5850, %v5859
      %v5874 = vadd.f32 %v5851, %v5859
      %v5875 = vadd.f32 %v5852, %v5859
      %v5876 = vadd.f32 %v5853, %v5859
      %5877 = vxpose.xlu0.b32.start [1/16] %v5861, 128
      %5878 = vxpose.xlu0.b32.cont [2/16] %v5862, 128
      %5879 = vxpose.xlu0.b32.cont [3/16] %v5863, 128
      %5880 = vxpose.xlu0.b32.cont [4/16] %v5864, 128
      %5881 = vxpose.xlu0.b32.cont [5/16] %v5865, 128
      %5882 = vxpose.xlu0.b32.cont [6/16] %v5866, 128
      %5883 = vxpose.xlu0.b32.cont [7/16] %v5867, 128
      %5884 = vxpose.xlu0.b32.cont [8/16] %v5868, 128
      %5885 = vxpose.xlu0.b32.cont [9/16] %v5869, 128
      %5886 = vxpose.xlu0.b32.cont [10/16] %v5870, 128
      %5887 = vxpose.xlu0.b32.cont [11/16] %v5871, 128
      %5888 = vxpose.xlu0.b32.cont [12/16] %v5872, 128
      %5889 = vxpose.xlu0.b32.cont [13/16] %v5873, 128
      %5890 = vxpose.xlu0.b32.cont [14/16] %v5874, 128
      %5891 = vxpose.xlu0.b32.cont [15/16] %v5875, 128
      %5892 = vxpose.xlu0.b32.end [16/16] %v5876, 128
      %v5893 = vpop.trf.xlu0
      %v5894 = vpop.trf.xlu0
      %v5895 = vpop.trf.xlu0
      %v5896 = vpop.trf.xlu0
      %v5897 = vpop.trf.xlu0
      %v5898 = vpop.trf.xlu0
      %v5899 = vpop.trf.xlu0
      %v5900 = vpop.trf.xlu0
      %v5901 = vpop.trf.xlu0
      %v5902 = vpop.trf.xlu0
      %v5903 = vpop.trf.xlu0
      %v5904 = vpop.trf.xlu0
      %v5905 = vpop.trf.xlu0
      %v5906 = vpop.trf.xlu0
      %v5907 = vpop.trf.xlu0
      %v5908 = vpop.trf.xlu0
      %v5909 = vsel %vm1334, %v5861, -inf
      %v5910 = vsel %vm1334, %v5862, -inf
      %v5911 = vsel %vm1334, %v5863, -inf
      %v5912 = vsel %vm1334, %v5864, -inf
      %v5913 = vsel %vm1334, %v5865, -inf
      %v5914 = vmax.f32 %v5909, %v5913
      %v5915 = vsel %vm1334, %v5866, -inf
      %v5916 = vmax.f32 %v5910, %v5915
      %v5917 = vsel %vm1334, %v5867, -inf
      %v5918 = vmax.f32 %v5911, %v5917
      %v5919 = vsel %vm1334, %v5868, -inf
      %v5920 = vmax.f32 %v5912, %v5919
      %v5921 = vsel %vm1334, %v5869, -inf
      %v5922 = vmax.f32 %v5914, %v5921
      %v5923 = vsel %vm1334, %v5870, -inf
      %v5924 = vmax.f32 %v5916, %v5923
      %v5925 = vsel %vm1334, %v5871, -inf
      %v5926 = vmax.f32 %v5918, %v5925
      %v5927 = vsel %vm1334, %v5872, -inf
      %v5928 = vmax.f32 %v5920, %v5927
      %v5929 = vsel %vm1334, %v5873, -inf
      %v5930 = vmax.f32 %v5922, %v5929
      %v5931 = vsel %vm1334, %v5874, -inf
      %v5932 = vmax.f32 %v5924, %v5931
      %v5933 = vsel %vm1334, %v5875, -inf
      %v5934 = vmax.f32 %v5926, %v5933
      %v5935 = vsel %vm1334, %v5876, -inf
      %v5936 = vmax.f32 %v5928, %v5935
      %v5937 = vmax.f32 %v5930, %v5932
      %v5938 = vmax.f32 %v5934, %v5936
      %v5939 = vmax.f32 %v5937, %v5938
      %v5940 = vrot.slane %v5939, 4
      %v5941 = vmax.f32 %v5939, %v5940
      %v5942 = vrot.slane %v5941, 2
      %v5943 = vmax.f32 %v5941, %v5942
      %v5944 = vrot.slane %v5943, 1
      %v5945 = vmax.f32 %v5943, %v5944
      %5946 = vmax.xlane.f32.xlu0 %v5893
      %v5947 = vpop.xlane.xlu0 %5946
      %5948 = vmax.xlane.f32.xlu0 %v5894
      %v5949 = vpop.xlane.xlu0 %5948
      %5950 = vmax.xlane.f32.xlu0 %v5895
      %v5951 = vpop.xlane.xlu0 %5950
      %5952 = vmax.xlane.f32.xlu0 %v5896
      %v5953 = vpop.xlane.xlu0 %5952
      %5954 = vmax.xlane.f32.xlu0 %v5897
      %v5955 = vpop.xlane.xlu0 %5954
      %5956 = vmax.xlane.f32.xlu0 %v5898
      %v5957 = vpop.xlane.xlu0 %5956
      %5958 = vmax.xlane.f32.xlu0 %v5899
      %v5959 = vpop.xlane.xlu0 %5958
      %5960 = vmax.xlane.f32.xlu0 %v5900
      %v5961 = vpop.xlane.xlu0 %5960
      %v5962 = vsub.f32 %v5947, %v5893
      %v5963 = vsub.f32 %v5949, %v5894
      %v5964 = vsub.f32 %v5951, %v5895
      %v5965 = vsub.f32 %v5953, %v5896
      %v5966 = vsub.f32 %v5955, %v5897
      %v5967 = vsub.f32 %v5957, %v5898
      %v5968 = vsub.f32 %v5959, %v5899
      %v5969 = vsub.f32 %v5961, %v5900
      %v5970 = vld [vmem:[%s27] sm:$0xff]
      %v5971 = vld [vmem:[%s27 + $0x8] sm:$0xff]
      %v5972 = vld [vmem:[%s27 + $0x10] sm:$0xff]
      %v5973 = vld [vmem:[%s27 + $0x18] sm:$0xff]
      %v5974 = vld [vmem:[%s27 + $0x20] sm:$0xff]
      %v5975 = vld [vmem:[%s27 + $0x28] sm:$0xff]
      %v5976 = vld [vmem:[%s27 + $0x30] sm:$0xff]
      %v5977 = vld [vmem:[%s27 + $0x38] sm:$0xff]
      %v5978 = vld [vmem:[%s27 + $0x40] sm:$0xff]
      %v5979 = vld [vmem:[%s27 + $0x48] sm:$0xff]
      %v5980 = vld [vmem:[%s27 + $0x50] sm:$0xff]
      %v5981 = vld [vmem:[%s27 + $0x58] sm:$0xff]
      %v5982 = vld [vmem:[%s27 + $0x60] sm:$0xff]
      %v5983 = vld [vmem:[%s27 + $0x68] sm:$0xff]
      %v5984 = vld [vmem:[%s27 + $0x70] sm:$0xff]
      %v5985 = vld [vmem:[%s27 + $0x78] sm:$0xff]
      %v5986 = vld [vmem:[%s27 + $0x80] sm:$0xff]
      %v5987 = vld [vmem:[%s27 + $0x88] sm:$0xff]
      %v5988 = vld [vmem:[%s27 + $0x90] sm:$0xff]
      %v5989 = vld [vmem:[%s27 + $0x98] sm:$0xff]
      %v5990 = vld [vmem:[%s27 + $0xa0] sm:$0xff]
      %v5991 = vld [vmem:[%s27 + $0xa8] sm:$0xff]
      %v5992 = vld [vmem:[%s27 + $0xb0] sm:$0xff]
      %v5993 = vld [vmem:[%s27 + $0xb8] sm:$0xff]
      %v5994 = vld [vmem:[%s27 + $0xc0] sm:$0xff]
      %v5995 = vld [vmem:[%s27 + $0xc8] sm:$0xff]
      %v5996 = vld [vmem:[%s27 + $0xd0] sm:$0xff]
      %v5997 = vld [vmem:[%s27 + $0xd8] sm:$0xff]
      %v5998 = vld [vmem:[%s27 + $0xe0] sm:$0xff]
      %v5999 = vld [vmem:[%s27 + $0xe8] sm:$0xff]
      %v6000 = vld [vmem:[%s27 + $0xf0] sm:$0xff]
      %v6001 = vld [vmem:[%s27 + $0xf8] sm:$0xff]
      %v6002 = vld [vmem:[%s29] sm:$0x3]
      %v6004 = vlaneseq
      %v6005 = vshrl.u32 %v6004, 7
      %v6006 = vsub.s32 0, %v6005
      %v6007 = vrot.slane %v6002, %v6006
      %v6008 = vlaneseq
      %v6009 = vshrl.u32 %v6008, 7
      %v6010 = vsub.s32 1, %v6009
      %v6011 = vrot.slane %v6002, %v6010
      %6014 = vmatprep.subr.mxu0 %v5971
      %6015 = vmatpush1.msra.mxu0 %v5970
      %6016 = vmatprep.subr.mxu0 %v5973
      %6017 = vmatpush1.msra.mxu0 %v5972
      %6018 = vmatprep.subr.mxu0 %v5975
      %6019 = vmatpush1.msra.mxu0 %v5974
      %6020 = vmatprep.subr.mxu0 %v5977
      %6021 = vmatpush1.msra.mxu0 %v5976
      %6022 = vmatprep.subr.mxu0 %v5979
      %6023 = vmatpush1.msra.mxu0 %v5978
      %6024 = vmatprep.subr.mxu0 %v5981
      %6025 = vmatpush1.msra.mxu0 %v5980
      %6026 = vmatprep.subr.mxu0 %v5983
      %6027 = vmatpush1.msra.mxu0 %v5982
      %6028 = vmatprep.subr.mxu0 %v5985
      %6029 = vmatpush1.msra.mxu0 %v5984
      %6030 = vmatprep.subr.mxu0 %v5987
      %6031 = vmatpush1.msra.mxu0 %v5986
      %6032 = vmatprep.subr.mxu0 %v5989
      %6033 = vmatpush1.msra.mxu0 %v5988
      %6034 = vmatprep.subr.mxu0 %v5991
      %6035 = vmatpush1.msra.mxu0 %v5990
      %6036 = vmatprep.subr.mxu0 %v5993
      %6037 = vmatpush1.msra.mxu0 %v5992
      %6038 = vmatprep.subr.mxu0 %v5995
      %6039 = vmatpush1.msra.mxu0 %v5994
      %6040 = vmatprep.subr.mxu0 %v5997
      %6041 = vmatpush1.msra.mxu0 %v5996
      %6042 = vmatprep.subr.mxu0 %v5999
      %6043 = vmatpush1.msra.mxu0 %v5998
      %6044 = vmatprep.subr.mxu0 %v6001
      %6045 = vmatpush1.msra.mxu0 %v6000
      %6046 = vmatprep.subr.mxu0 0.0
      %6047 = vmatpush1.msra.mxu0 0.0
      %6048 = vmatprep.subr.mxu0 0.0
      %6049 = vmatpush1.msra.mxu0 0.0
      %6050 = vmatprep.subr.mxu0 0.0
      %6051 = vmatpush1.msra.mxu0 0.0
      %6052 = vmatprep.subr.mxu0 0.0
      %6053 = vmatpush1.msra.mxu0 0.0
      %6054 = vmatprep.subr.mxu0 0.0
      %6055 = vmatpush1.msra.mxu0 0.0
      %6056 = vmatprep.subr.mxu0 0.0
      %6057 = vmatpush1.msra.mxu0 0.0
      %6058 = vmatprep.subr.mxu0 0.0
      %6059 = vmatpush1.msra.mxu0 0.0
      %6060 = vmatprep.subr.mxu0 0.0
      %6061 = vmatpush1.msra.mxu0 0.0
      %6062 = vmatprep.subr.mxu0 0.0
      %6063 = vmatpush1.msra.mxu0 0.0
      %6064 = vmatprep.subr.mxu0 0.0
      %6065 = vmatpush1.msra.mxu0 0.0
      %6066 = vmatprep.subr.mxu0 0.0
      %6067 = vmatpush1.msra.mxu0 0.0
      %6068 = vmatprep.subr.mxu0 0.0
      %6069 = vmatpush1.msra.mxu0 0.0
      %6070 = vmatprep.subr.mxu0 0.0
      %6071 = vmatpush1.msra.mxu0 0.0
      %6072 = vmatprep.subr.mxu0 0.0
      %6073 = vmatpush1.msra.mxu0 0.0
      %6074 = vmatprep.subr.mxu0 0.0
      %6075 = vmatpush1.msra.mxu0 0.0
      %6076 = vmatprep.subr.mxu0 0.0
      %6077 = vmatpush1.msra.mxu0 0.0
      %6078 = vmatprep.mubr.f32.mxu0 0.0
      %6079 = vmatmul.mubr.f32.gmra.mrb[0].mxu0 %v5962
      %v6080 = vpop.f32.mrb[0].mxu0
      %v6081 = vadd.f32 %v6007, %v6080
      %v6082 = vpop.f32.mrb[0].mxu0
      %v6083 = vadd.f32 %v6011, %v6082
      %6084 = vmatprep.mubr.f32.mxu0 0.0
      %6085 = vmatmul.mubr.f32.gmra.mrb[0].mxu0 %v5963
      %v6086 = vpop.f32.mrb[0].mxu0
      %v6087 = vadd.f32 %v6007, %v6086
      %v6088 = vpop.f32.mrb[0].mxu0
      %v6089 = vadd.f32 %v6011, %v6088
      %6090 = vmatprep.mubr.f32.mxu0 0.0
      %6091 = vmatmul.mubr.f32.gmra.mrb[0].mxu0 %v5964
      %v6092 = vpop.f32.mrb[0].mxu0
      %v6093 = vadd.f32 %v6007, %v6092
      %v6094 = vpop.f32.mrb[0].mxu0
      %v6095 = vadd.f32 %v6011, %v6094
      %6096 = vmatprep.mubr.f32.mxu0 0.0
      %6097 = vmatmul.mubr.f32.gmra.mrb[0].mxu0 %v5965
      %v6098 = vpop.f32.mrb[0].mxu0
      %v6099 = vadd.f32 %v6007, %v6098
      %v6100 = vpop.f32.mrb[0].mxu0
      %v6101 = vadd.f32 %v6011, %v6100
      %6102 = vmatprep.mubr.f32.mxu0 0.0
      %6103 = vmatmul.mubr.f32.gmra.mrb[0].mxu0 %v5966
      %v6104 = vpop.f32.mrb[0].mxu0
      %v6105 = vadd.f32 %v6007, %v6104
      %v6106 = vpop.f32.mrb[0].mxu0
      %v6107 = vadd.f32 %v6011, %v6106
      %6108 = vmatprep.mubr.f32.mxu0 0.0
      %6109 = vmatmul.mubr.f32.gmra.mrb[0].mxu0 %v5967
      %v6110 = vpop.f32.mrb[0].mxu0
      %v6111 = vadd.f32 %v6007, %v6110
      %v6112 = vpop.f32.mrb[0].mxu0
      %v6113 = vadd.f32 %v6011, %v6112
      %6114 = vmatprep.mubr.f32.mxu0 0.0
      %6115 = vmatmul.mubr.f32.gmra.mrb[0].mxu0 %v5968
      %v6116 = vpop.f32.mrb[0].mxu0
      %v6117 = vadd.f32 %v6007, %v6116
      %v6118 = vpop.f32.mrb[0].mxu0
      %v6119 = vadd.f32 %v6011, %v6118
      %6120 = vmatprep.mubr.f32.mxu0 0.0
      %6121 = vmatmul.mubr.f32.gmra.mrb[0].mxu0 %v5969
      %v6122 = vpop.f32.mrb[0].mxu0
      %v6123 = vadd.f32 %v6007, %v6122
      %v6124 = vpop.f32.mrb[0].mxu0
      %v6125 = vadd.f32 %v6011, %v6124
      %6126 = vdwg.mxu0
      %vm6127 = vcmp.ge.f32.partialorder %v6081, 0.0
      %vm6128 = vcmp.ge.f32.partialorder %v6083, 0.0
      %vm6129 = vcmp.ge.f32.partialorder %v6087, 0.0
      %vm6130 = vcmp.ge.f32.partialorder %v6089, 0.0
      %vm6131 = vcmp.ge.f32.partialorder %v6093, 0.0
      %vm6132 = vcmp.ge.f32.partialorder %v6095, 0.0
      %vm6133 = vcmp.ge.f32.partialorder %v6099, 0.0
      %vm6134 = vcmp.ge.f32.partialorder %v6101, 0.0
      %vm6135 = vcmp.ge.f32.partialorder %v6105, 0.0
      %vm6136 = vcmp.ge.f32.partialorder %v6107, 0.0
      %vm6137 = vcmp.ge.f32.partialorder %v6111, 0.0
      %vm6138 = vcmp.ge.f32.partialorder %v6113, 0.0
      %vm6139 = vcmp.ge.f32.partialorder %v6117, 0.0
      %vm6140 = vcmp.ge.f32.partialorder %v6119, 0.0
      %vm6141 = vcmp.ge.f32.partialorder %v6123, 0.0
      %vm6142 = vcmp.ge.f32.partialorder %v6125, 0.0
      %v6143 = vmul.f32 %v6081, 0.2
      %v6144 = vmul.f32 %v6083, 0.2
      %v6145 = vmul.f32 %v6087, 0.2
      %v6146 = vmul.f32 %v6089, 0.2
      %v6147 = vmul.f32 %v6093, 0.2
      %v6148 = vmul.f32 %v6095, 0.2
      %v6149 = vmul.f32 %v6099, 0.2
      %v6150 = vmul.f32 %v6101, 0.2
      %v6151 = vmul.f32 %v6105, 0.2
      %v6152 = vmul.f32 %v6107, 0.2
      %v6153 = vmul.f32 %v6111, 0.2
      %v6154 = vmul.f32 %v6113, 0.2
      %v6155 = vmul.f32 %v6117, 0.2
      %v6156 = vmul.f32 %v6119, 0.2
      %v6157 = vmul.f32 %v6123, 0.2
      %v6158 = vmul.f32 %v6125, 0.2
      %v6159 = vsel %vm6127, %v6081, %v6143
      %v6160 = vsel %vm6128, %v6083, %v6144
      %v6161 = vsel %vm6129, %v6087, %v6145
      %v6162 = vsel %vm6130, %v6089, %v6146
      %v6163 = vsel %vm6131, %v6093, %v6147
      %v6164 = vsel %vm6132, %v6095, %v6148
      %v6165 = vsel %vm6133, %v6099, %v6149
      %v6166 = vsel %vm6134, %v6101, %v6150
      %v6167 = vsel %vm6135, %v6105, %v6151
      %v6168 = vsel %vm6136, %v6107, %v6152
      %v6169 = vsel %vm6137, %v6111, %v6153
      %v6170 = vsel %vm6138, %v6113, %v6154
      %v6171 = vsel %vm6139, %v6117, %v6155
      %v6172 = vsel %vm6140, %v6119, %v6156
      %v6173 = vsel %vm6141, %v6123, %v6157
      %v6174 = vsel %vm6142, %v6125, %v6158
      %v6175 = vld [vmem:[%s31] sm:$0xff]
      %v6176 = vld [vmem:[%s31 + $0x8] sm:$0xff]
      %v6177 = vld [vmem:[%s31 + $0x10] sm:$0xff]
      %v6178 = vld [vmem:[%s31 + $0x18] sm:$0xff]
      %v6179 = vld [vmem:[%s31 + $0x20] sm:$0xff]
      %v6180 = vld [vmem:[%s31 + $0x28] sm:$0xff]
      %v6181 = vld [vmem:[%s31 + $0x30] sm:$0xff]
      %v6182 = vld [vmem:[%s31 + $0x38] sm:$0xff]
      %v6183 = vld [vmem:[%s31 + $0x40] sm:$0xff]
      %v6184 = vld [vmem:[%s31 + $0x48] sm:$0xff]
      %v6185 = vld [vmem:[%s31 + $0x50] sm:$0xff]
      %v6186 = vld [vmem:[%s31 + $0x58] sm:$0xff]
      %v6187 = vld [vmem:[%s31 + $0x60] sm:$0xff]
      %v6188 = vld [vmem:[%s31 + $0x68] sm:$0xff]
      %v6189 = vld [vmem:[%s31 + $0x70] sm:$0xff]
      %v6190 = vld [vmem:[%s31 + $0x78] sm:$0xff]
      %v6191 = vld [vmem:[%s31 + $0x80] sm:$0xff]
      %v6192 = vld [vmem:[%s31 + $0x88] sm:$0xff]
      %v6193 = vld [vmem:[%s31 + $0x90] sm:$0xff]
      %v6194 = vld [vmem:[%s31 + $0x98] sm:$0xff]
      %v6195 = vld [vmem:[%s31 + $0xa0] sm:$0xff]
      %v6196 = vld [vmem:[%s31 + $0xa8] sm:$0xff]
      %v6197 = vld [vmem:[%s31 + $0xb0] sm:$0xff]
      %v6198 = vld [vmem:[%s31 + $0xb8] sm:$0xff]
      %v6199 = vld [vmem:[%s31 + $0xc0] sm:$0xff]
      %v6200 = vld [vmem:[%s31 + $0xc8] sm:$0xff]
      %v6201 = vld [vmem:[%s31 + $0xd0] sm:$0xff]
      %v6202 = vld [vmem:[%s31 + $0xd8] sm:$0xff]
      %v6203 = vld [vmem:[%s31 + $0xe0] sm:$0xff]
      %v6204 = vld [vmem:[%s31 + $0xe8] sm:$0xff]
      %v6205 = vld [vmem:[%s31 + $0xf0] sm:$0xff]
      %v6206 = vld [vmem:[%s31 + $0xf8] sm:$0xff]
      %v6207 = vld [vmem:[%s33] sm:$0x1]
      %v6209 = vlaneseq
      %v6210 = vshrl.u32 %v6209, 7
      %v6211 = vsub.s32 0, %v6210
      %v6212 = vrot.slane %v6207, %v6211
      %6214 = vmatprep.subr.mxu0 0.0
      %6215 = vmatpush1.msra.mxu0 %v6175
      %6216 = vmatprep.subr.mxu0 0.0
      %6217 = vmatpush1.msra.mxu0 %v6176
      %6218 = vmatprep.subr.mxu0 0.0
      %6219 = vmatpush1.msra.mxu0 %v6177
      %6220 = vmatprep.subr.mxu0 0.0
      %6221 = vmatpush1.msra.mxu0 %v6178
      %6222 = vmatprep.subr.mxu0 0.0
      %6223 = vmatpush1.msra.mxu0 %v6179
      %6224 = vmatprep.subr.mxu0 0.0
      %6225 = vmatpush1.msra.mxu0 %v6180
      %6226 = vmatprep.subr.mxu0 0.0
      %6227 = vmatpush1.msra.mxu0 %v6181
      %6228 = vmatprep.subr.mxu0 0.0
      %6229 = vmatpush1.msra.mxu0 %v6182
      %6230 = vmatprep.subr.mxu0 0.0
      %6231 = vmatpush1.msra.mxu0 %v6183
      %6232 = vmatprep.subr.mxu0 0.0
      %6233 = vmatpush1.msra.mxu0 %v6184
      %6234 = vmatprep.subr.mxu0 0.0
      %6235 = vmatpush1.msra.mxu0 %v6185
      %6236 = vmatprep.subr.mxu0 0.0
      %6237 = vmatpush1.msra.mxu0 %v6186
      %6238 = vmatprep.subr.mxu0 0.0
      %6239 = vmatpush1.msra.mxu0 %v6187
      %6240 = vmatprep.subr.mxu0 0.0
      %6241 = vmatpush1.msra.mxu0 %v6188
      %6242 = vmatprep.subr.mxu0 0.0
      %6243 = vmatpush1.msra.mxu0 %v6189
      %6244 = vmatprep.subr.mxu0 0.0
      %6245 = vmatpush1.msra.mxu0 %v6190
      %6246 = vmatprep.subr.mxu0 0.0
      %6247 = vmatpush1.msra.mxu0 %v6191
      %6248 = vmatprep.subr.mxu0 0.0
      %6249 = vmatpush1.msra.mxu0 %v6192
      %6250 = vmatprep.subr.mxu0 0.0
      %6251 = vmatpush1.msra.mxu0 %v6193
      %6252 = vmatprep.subr.mxu0 0.0
      %6253 = vmatpush1.msra.mxu0 %v6194
      %6254 = vmatprep.subr.mxu0 0.0
      %6255 = vmatpush1.msra.mxu0 %v6195
      %6256 = vmatprep.subr.mxu0 0.0
      %6257 = vmatpush1.msra.mxu0 %v6196
      %6258 = vmatprep.subr.mxu0 0.0
      %6259 = vmatpush1.msra.mxu0 %v6197
      %6260 = vmatprep.subr.mxu0 0.0
      %6261 = vmatpush1.msra.mxu0 %v6198
      %6262 = vmatprep.subr.mxu0 0.0
      %6263 = vmatpush1.msra.mxu0 %v6199
      %6264 = vmatprep.subr.mxu0 0.0
      %6265 = vmatpush1.msra.mxu0 %v6200
      %6266 = vmatprep.subr.mxu0 0.0
      %6267 = vmatpush1.msra.mxu0 %v6201
      %6268 = vmatprep.subr.mxu0 0.0
      %6269 = vmatpush1.msra.mxu0 %v6202
      %6270 = vmatprep.subr.mxu0 0.0
      %6271 = vmatpush1.msra.mxu0 %v6203
      %6272 = vmatprep.subr.mxu0 0.0
      %6273 = vmatpush1.msra.mxu0 %v6204
      %6274 = vmatprep.subr.mxu0 0.0
      %6275 = vmatpush1.msra.mxu0 %v6205
      %6276 = vmatprep.subr.mxu0 0.0
      %6277 = vmatpush1.msra.mxu0 %v6206
      %6278 = vmatprep.mubr.f32.mxu0 %v6160
      %6279 = vmatmul.mubr.f32.gmra.mrb[0].mxu0 %v6159
      %v6280 = vpop.f32.mrb[0].mxu0
      %v6281 = vadd.f32 %v6212, %v6280
      %v6282 = vpop.f32.mrb[0].mxu0
      %6283 = vmatprep.mubr.f32.mxu0 %v6162
      %6284 = vmatmul.mubr.f32.gmra.mrb[0].mxu0 %v6161
      %v6285 = vpop.f32.mrb[0].mxu0
      %v6286 = vadd.f32 %v6212, %v6285
      %v6287 = vpop.f32.mrb[0].mxu0
      %6288 = vmatprep.mubr.f32.mxu0 %v6164
      %6289 = vmatmul.mubr.f32.gmra.mrb[0].mxu0 %v6163
      %v6290 = vpop.f32.mrb[0].mxu0
      %v6291 = vadd.f32 %v6212, %v6290
      %v6292 = vpop.f32.mrb[0].mxu0
      %6293 = vmatprep.mubr.f32.mxu0 %v6166
      %6294 = vmatmul.mubr.f32.gmra.mrb[0].mxu0 %v6165
      %v6295 = vpop.f32.mrb[0].mxu0
      %v6296 = vadd.f32 %v6212, %v6295
      %v6297 = vpop.f32.mrb[0].mxu0
      %6298 = vmatprep.mubr.f32.mxu0 %v6168
      %6299 = vmatmul.mubr.f32.gmra.mrb[0].mxu0 %v6167
      %v6300 = vpop.f32.mrb[0].mxu0
      %v6301 = vadd.f32 %v6212, %v6300
      %v6302 = vpop.f32.mrb[0].mxu0
      %6303 = vmatprep.mubr.f32.mxu0 %v6170
      %6304 = vmatmul.mubr.f32.gmra.mrb[0].mxu0 %v6169
      %v6305 = vpop.f32.mrb[0].mxu0
      %v6306 = vadd.f32 %v6212, %v6305
      %v6307 = vpop.f32.mrb[0].mxu0
      %6308 = vmatprep.mubr.f32.mxu0 %v6172
      %6309 = vmatmul.mubr.f32.gmra.mrb[0].mxu0 %v6171
      %v6310 = vpop.f32.mrb[0].mxu0
      %v6311 = vadd.f32 %v6212, %v6310
      %v6312 = vpop.f32.mrb[0].mxu0
      %6313 = vmatprep.mubr.f32.mxu0 %v6174
      %6314 = vmatmul.mubr.f32.gmra.mrb[0].mxu0 %v6173
      %v6315 = vpop.f32.mrb[0].mxu0
      %v6316 = vadd.f32 %v6212, %v6315
      %v6317 = vpop.f32.mrb[0].mxu0
      %6318 = vdwg.mxu0
      %vm6319 = vcmp.ge.f32.partialorder %v6281, 0.0
      %vm6320 = vcmp.ge.f32.partialorder %v6286, 0.0
      %vm6321 = vcmp.ge.f32.partialorder %v6291, 0.0
      %vm6322 = vcmp.ge.f32.partialorder %v6296, 0.0
      %vm6323 = vcmp.ge.f32.partialorder %v6301, 0.0
      %vm6324 = vcmp.ge.f32.partialorder %v6306, 0.0
      %vm6325 = vcmp.ge.f32.partialorder %v6311, 0.0
      %vm6326 = vcmp.ge.f32.partialorder %v6316, 0.0
      %v6327 = vmul.f32 %v6281, 0.2
      %v6328 = vmul.f32 %v6286, 0.2
      %v6329 = vmul.f32 %v6291, 0.2
      %v6330 = vmul.f32 %v6296, 0.2
      %v6331 = vmul.f32 %v6301, 0.2
      %v6332 = vmul.f32 %v6306, 0.2
      %v6333 = vmul.f32 %v6311, 0.2
      %v6334 = vmul.f32 %v6316, 0.2
      %v6335 = vsel %vm6319, %v6281, %v6327
      %v6336 = vsel %vm6320, %v6286, %v6328
      %v6337 = vsel %vm6321, %v6291, %v6329
      %v6338 = vsel %vm6322, %v6296, %v6330
      %v6339 = vsel %vm6323, %v6301, %v6331
      %v6340 = vsel %vm6324, %v6306, %v6332
      %v6341 = vsel %vm6325, %v6311, %v6333
      %v6342 = vsel %vm6326, %v6316, %v6334
      %v6343 = vld [vmem:[%s35] sm:$0xff]
      %v6344 = vld [vmem:[%s35 + $0x8] sm:$0xff]
      %v6345 = vld [vmem:[%s37] sm:$0xff]
      %v6346 = vld [vmem:[%s37 + $0x8] sm:$0xff]
      %6348 = vset.pattern.permute.xlu0 0
      %6349 = vperm.xlu0 %6348, %v6345
      %v6350 = vpop.permute.xlu0 %6349
      %6353 = vset.pattern.permute.xlu0 0
      %6354 = vperm.xlu0 %6353, %v6346
      %v6355 = vpop.permute.xlu0 %6354
      %v6358 = vsel %vm1334, %v6343, 0
      %v6361 = vsel %vm1334, %v6344, 0
      %v6364 = vsel %vm1334, %v6335, 0
      %v6367 = vsel %vm1334, %v6336, 0
      %v6370 = vsel %vm1334, %v6337, 0
      %v6373 = vsel %vm1334, %v6338, 0
      %v6376 = vsel %vm1334, %v6339, 0
      %v6379 = vsel %vm1334, %v6340, 0
      %v6382 = vsel %vm1334, %v6341, 0
      %v6385 = vsel %vm1334, %v6342, 0
      %6387 = vmatprep.subr.mxu0 0.0
      %6388 = vmatpush1.xpose.msra.mxu0 %v6364
      %6389 = vmatprep.subr.mxu0 0.0
      %6390 = vmatpush1.xpose.msra.mxu0 %v6367
      %6391 = vmatprep.subr.mxu0 0.0
      %6392 = vmatpush1.xpose.msra.mxu0 %v6370
      %6393 = vmatprep.subr.mxu0 0.0
      %6394 = vmatpush1.xpose.msra.mxu0 %v6373
      %6395 = vmatprep.subr.mxu0 0.0
      %6396 = vmatpush1.xpose.msra.mxu0 %v6376
      %6397 = vmatprep.subr.mxu0 0.0
      %6398 = vmatpush1.xpose.msra.mxu0 %v6379
      %6399 = vmatprep.subr.mxu0 0.0
      %6400 = vmatpush1.xpose.msra.mxu0 %v6382
      %6401 = vmatprep.subr.mxu0 0.0
      %6402 = vmatpush1.xpose.msra.mxu0 %v6385
      %6403 = vmatprep.subr.mxu0 0.0
      %6404 = vmatpush1.xpose.msra.mxu0 0.0
      %6405 = vmatprep.subr.mxu0 0.0
      %6406 = vmatpush1.xpose.msra.mxu0 0.0
      %6407 = vmatprep.subr.mxu0 0.0
      %6408 = vmatpush1.xpose.msra.mxu0 0.0
      %6409 = vmatprep.subr.mxu0 0.0
      %6410 = vmatpush1.xpose.msra.mxu0 0.0
      %6411 = vmatprep.subr.mxu0 0.0
      %6412 = vmatpush1.xpose.msra.mxu0 0.0
      %6413 = vmatprep.subr.mxu0 0.0
      %6414 = vmatpush1.xpose.msra.mxu0 0.0
      %6415 = vmatprep.subr.mxu0 0.0
      %6416 = vmatpush1.xpose.msra.mxu0 0.0
      %6417 = vmatprep.subr.mxu0 0.0
      %6418 = vmatpush1.xpose.msra.mxu0 0.0
      %6419 = vmatprep.subr.mxu0 0.0
      %6420 = vmatpush1.xpose.msra.mxu0 0.0
      %6421 = vmatprep.subr.mxu0 0.0
      %6422 = vmatpush1.xpose.msra.mxu0 0.0
      %6423 = vmatprep.subr.mxu0 0.0
      %6424 = vmatpush1.xpose.msra.mxu0 0.0
      %6425 = vmatprep.subr.mxu0 0.0
      %6426 = vmatpush1.xpose.msra.mxu0 0.0
      %6427 = vmatprep.subr.mxu0 0.0
      %6428 = vmatpush1.xpose.msra.mxu0 0.0
      %6429 = vmatprep.subr.mxu0 0.0
      %6430 = vmatpush1.xpose.msra.mxu0 0.0
      %6431 = vmatprep.subr.mxu0 0.0
      %6432 = vmatpush1.xpose.msra.mxu0 0.0
      %6433 = vmatprep.subr.mxu0 0.0
      %6434 = vmatpush1.xpose.msra.mxu0 0.0
      %6435 = vmatprep.subr.mxu0 0.0
      %6436 = vmatpush1.xpose.msra.mxu0 0.0
      %6437 = vmatprep.subr.mxu0 0.0
      %6438 = vmatpush1.xpose.msra.mxu0 0.0
      %6439 = vmatprep.subr.mxu0 0.0
      %6440 = vmatpush1.xpose.msra.mxu0 0.0
      %6441 = vmatprep.subr.mxu0 0.0
      %6442 = vmatpush1.xpose.msra.mxu0 0.0
      %6443 = vmatprep.subr.mxu0 0.0
      %6444 = vmatpush1.xpose.msra.mxu0 0.0
      %6445 = vmatprep.subr.mxu0 0.0
      %6446 = vmatpush1.xpose.msra.mxu0 0.0
      %6447 = vmatprep.subr.mxu0 0.0
      %6448 = vmatpush1.xpose.msra.mxu0 0.0
      %6449 = vmatprep.subr.mxu0 0.0
      %6450 = vmatpush1.xpose.msra.mxu0 0.0
      %6451 = vmatprep.mubr.f32.mxu0 0.0
      %6452 = vmatmul.mubr.f32.gmra.mrb[0].mxu0 %v6358
      %v6453 = vpop.f32.mrb[0].mxu0
      %v6454 = vadd.f32 %v6350, %v6453
      %v6455 = vpop.f32.mrb[0].mxu0
      %6456 = vmatprep.mubr.f32.mxu0 0.0
      %6457 = vmatmul.mubr.f32.gmra.mrb[0].mxu0 %v6361
      %v6458 = vpop.f32.mrb[0].mxu0
      %v6459 = vadd.f32 %v6355, %v6458
      %v6460 = vpop.f32.mrb[0].mxu0
      %6461 = vdwg.mxu0
      %v6463 = vsel %vm1334, %v6454, 0
      %v6466 = vsel %vm1334, %v6459, 0
      %6468 = vmatprep.subr.mxu0 0.0
      %6469 = vmatpush1.msra.mxu0 %v5893
      %6470 = vmatprep.subr.mxu0 0.0
      %6471 = vmatpush1.msra.mxu0 %v5894
      %6472 = vmatprep.subr.mxu0 0.0
      %6473 = vmatpush1.msra.mxu0 %v5895
      %6474 = vmatprep.subr.mxu0 0.0
      %6475 = vmatpush1.msra.mxu0 %v5896
      %6476 = vmatprep.subr.mxu0 0.0
      %6477 = vmatpush1.msra.mxu0 %v5897
      %6478 = vmatprep.subr.mxu0 0.0
      %6479 = vmatpush1.msra.mxu0 %v5898
      %6480 = vmatprep.subr.mxu0 0.0
      %6481 = vmatpush1.msra.mxu0 %v5899
      %6482 = vmatprep.subr.mxu0 0.0
      %6483 = vmatpush1.msra.mxu0 %v5900
      %6484 = vmatprep.subr.mxu0 0.0
      %6485 = vmatpush1.msra.mxu0 0.0
      %6486 = vmatprep.subr.mxu0 0.0
      %6487 = vmatpush1.msra.mxu0 0.0
      %6488 = vmatprep.subr.mxu0 0.0
      %6489 = vmatpush1.msra.mxu0 0.0
      %6490 = vmatprep.subr.mxu0 0.0
      %6491 = vmatpush1.msra.mxu0 0.0
      %6492 = vmatprep.subr.mxu0 0.0
      %6493 = vmatpush1.msra.mxu0 0.0
      %6494 = vmatprep.subr.mxu0 0.0
      %6495 = vmatpush1.msra.mxu0 0.0
      %6496 = vmatprep.subr.mxu0 0.0
      %6497 = vmatpush1.msra.mxu0 0.0
      %6498 = vmatprep.subr.mxu0 0.0
      %6499 = vmatpush1.msra.mxu0 0.0
      %6500 = vmatprep.subr.mxu0 0.0
      %6501 = vmatpush1.msra.mxu0 0.0
      %6502 = vmatprep.subr.mxu0 0.0
      %6503 = vmatpush1.msra.mxu0 0.0
      %6504 = vmatprep.subr.mxu0 0.0
      %6505 = vmatpush1.msra.mxu0 0.0
      %6506 = vmatprep.subr.mxu0 0.0
      %6507 = vmatpush1.msra.mxu0 0.0
      %6508 = vmatprep.subr.mxu0 0.0
      %6509 = vmatpush1.msra.mxu0 0.0
      %6510 = vmatprep.subr.mxu0 0.0
      %6511 = vmatpush1.msra.mxu0 0.0
      %6512 = vmatprep.subr.mxu0 0.0
      %6513 = vmatpush1.msra.mxu0 0.0
      %6514 = vmatprep.subr.mxu0 0.0
      %6515 = vmatpush1.msra.mxu0 0.0
      %6516 = vmatprep.subr.mxu0 0.0
      %6517 = vmatpush1.msra.mxu0 0.0
      %6518 = vmatprep.subr.mxu0 0.0
      %6519 = vmatpush1.msra.mxu0 0.0
      %6520 = vmatprep.subr.mxu0 0.0
      %6521 = vmatpush1.msra.mxu0 0.0
      %6522 = vmatprep.subr.mxu0 0.0
      %6523 = vmatpush1.msra.mxu0 0.0
      %6524 = vmatprep.subr.mxu0 0.0
      %6525 = vmatpush1.msra.mxu0 0.0
      %6526 = vmatprep.subr.mxu0 0.0
      %6527 = vmatpush1.msra.mxu0 0.0
      %6528 = vmatprep.subr.mxu0 0.0
      %6529 = vmatpush1.msra.mxu0 0.0
      %6530 = vmatprep.subr.mxu0 0.0
      %6531 = vmatpush1.msra.mxu0 0.0
      %6532 = vmatprep.mubr.f32.mxu0 0.0
      %6533 = vmatmul.mubr.f32.gmra.mrb[0].mxu0 %v6463
      %v6534 = vpop.f32.mrb[0].mxu0
      %v6535 = vadd.f32 0.0, %v6534
      %v6536 = vpop.f32.mrb[0].mxu0
      %6537 = vmatprep.mubr.f32.mxu0 0.0
      %6538 = vmatmul.mubr.f32.gmra.mrb[0].mxu0 %v6466
      %v6539 = vpop.f32.mrb[0].mxu0
      %v6540 = vadd.f32 0.0, %v6539
      %v6541 = vpop.f32.mrb[0].mxu0
      %6542 = vdwg.mxu0
      %v6543 = vmul.f32 %v6535, 0.125
      %v6544 = vmul.f32 %v6540, 0.125
      %6545 = vmax.xlane.f32.xlu0 %v6543
      %v6546 = vpop.xlane.xlu0 %6545
      %6547 = vmax.xlane.f32.xlu0 %v6544
      %v6548 = vpop.xlane.xlu0 %6547
      %v6549 = vsub.f32 %v6543, %v6546
      %v6550 = vsub.f32 %v6544, %v6548
      %v6551 = vmul.f32 %v6549, 1.442695
      %v6552 = vpow.pop %v6551
      %v6553 = vmul.f32 %v6550, 1.442695
      %v6554 = vpow.pop %v6553
      %6555 = vadd.xlane.f32.xlu0 %v6552
      %v6556 = vpop.xlane.xlu0 %6555
      %6557 = vadd.xlane.f32.xlu0 %v6554
      %v6558 = vpop.xlane.xlu0 %6557
      %v6559 = vrcp.pop %v6556
      %v6560 = vrcp.pop %v6558
      %v6561 = vmul.f32 %v6552, %v6559
      %v6562 = vmul.f32 %v6554, %v6560
      %6563 = vmatprep.subr.mxu0 0.0
      %6564 = vmatpush1.msra.mxu0 %v1316
      %6565 = vmatprep.subr.mxu0 0.0
      %6566 = vmatpush1.msra.mxu0 %v1317
      %6567 = vmatprep.subr.mxu0 0.0
      %6568 = vmatpush1.msra.mxu0 %v1318
      %6569 = vmatprep.subr.mxu0 0.0
      %6570 = vmatpush1.msra.mxu0 %v1319
      %6571 = vmatprep.subr.mxu0 0.0
      %6572 = vmatpush1.msra.mxu0 %v1320
      %6573 = vmatprep.subr.mxu0 0.0
      %6574 = vmatpush1.msra.mxu0 %v1321
      %6575 = vmatprep.subr.mxu0 0.0
      %6576 = vmatpush1.msra.mxu0 %v1322
      %6577 = vmatprep.subr.mxu0 0.0
      %6578 = vmatpush1.msra.mxu0 %v1323
      %6579 = vmatprep.subr.mxu0 0.0
      %6580 = vmatpush1.msra.mxu0 %v1324
      %6581 = vmatprep.subr.mxu0 0.0
      %6582 = vmatpush1.msra.mxu0 %v1325
      %6583 = vmatprep.subr.mxu0 0.0
      %6584 = vmatpush1.msra.mxu0 %v1326
      %6585 = vmatprep.subr.mxu0 0.0
      %6586 = vmatpush1.msra.mxu0 %v1327
      %6587 = vmatprep.subr.mxu0 0.0
      %6588 = vmatpush1.msra.mxu0 %v1328
      %6589 = vmatprep.subr.mxu0 0.0
      %6590 = vmatpush1.msra.mxu0 %v1329
      %6591 = vmatprep.subr.mxu0 0.0
      %6592 = vmatpush1.msra.mxu0 %v1330
      %6593 = vmatprep.subr.mxu0 0.0
      %6594 = vmatpush1.msra.mxu0 %v1331
      %6595 = vmatprep.subr.mxu0 0.0
      %6596 = vmatpush1.msra.mxu0 0.0
      %6597 = vmatprep.subr.mxu0 0.0
      %6598 = vmatpush1.msra.mxu0 0.0
      %6599 = vmatprep.subr.mxu0 0.0
      %6600 = vmatpush1.msra.mxu0 0.0
      %6601 = vmatprep.subr.mxu0 0.0
      %6602 = vmatpush1.msra.mxu0 0.0
      %6603 = vmatprep.subr.mxu0 0.0
      %6604 = vmatpush1.msra.mxu0 0.0
      %6605 = vmatprep.subr.mxu0 0.0
      %6606 = vmatpush1.msra.mxu0 0.0
      %6607 = vmatprep.subr.mxu0 0.0
      %6608 = vmatpush1.msra.mxu0 0.0
      %6609 = vmatprep.subr.mxu0 0.0
      %6610 = vmatpush1.msra.mxu0 0.0
      %6611 = vmatprep.subr.mxu0 0.0
      %6612 = vmatpush1.msra.mxu0 0.0
      %6613 = vmatprep.subr.mxu0 0.0
      %6614 = vmatpush1.msra.mxu0 0.0
      %6615 = vmatprep.subr.mxu0 0.0
      %6616 = vmatpush1.msra.mxu0 0.0
      %6617 = vmatprep.subr.mxu0 0.0
      %6618 = vmatpush1.msra.mxu0 0.0
      %6619 = vmatprep.subr.mxu0 0.0
      %6620 = vmatpush1.msra.mxu0 0.0
      %6621 = vmatprep.subr.mxu0 0.0
      %6622 = vmatpush1.msra.mxu0 0.0
      %6623 = vmatprep.subr.mxu0 0.0
      %6624 = vmatpush1.msra.mxu0 0.0
      %6625 = vmatprep.subr.mxu0 0.0
      %6626 = vmatpush1.msra.mxu0 0.0
      %6627 = vmatprep.mubr.f32.mxu0 0.0
      %6628 = vmatmul.mubr.f32.gmra.mrb[0].mxu0 %v6561
      %v6629 = vpop.f32.mrb[0].mxu0
      %v6630 = vadd.f32 0.0, %v6629
      %v6631 = vpop.f32.mrb[0].mxu0
      %6632 = vmatprep.mubr.f32.mxu0 0.0
      %6633 = vmatmul.mubr.f32.gmra.mrb[0].mxu0 %v6562
      %v6634 = vpop.f32.mrb[0].mxu0
      %v6635 = vadd.f32 0.0, %v6634
      %v6636 = vpop.f32.mrb[0].mxu0
      %6637 = vdwg.mxu0
      %v6638 = vld [vmem:[%s39] sm:$0x7]
      %v6639 = vld [vmem:[%s41] sm:$0xff]
      %v6640 = vld [vmem:[%s41 + $0x8] sm:$0xff]
      %v6641 = vld [vmem:[%s41 + $0x10] sm:$0xff]
      %v6642 = vld [vmem:[%s41 + $0x18] sm:$0xff]
      %v6643 = vld [vmem:[%s41 + $0x20] sm:$0xff]
      %v6644 = vld [vmem:[%s41 + $0x28] sm:$0xff]
      %v6645 = vld [vmem:[%s41 + $0x30] sm:$0xff]
      %v6646 = vld [vmem:[%s41 + $0x38] sm:$0xff]
      %v6648 = vsel %vm1334, %v5945, 0
      %6650 = vmatprep.subr.mxu0 0.0
      %6651 = vmatpush1.msra.mxu0 %v6639
      %6652 = vmatprep.subr.mxu0 0.0
      %6653 = vmatpush1.msra.mxu0 %v6640
      %6654 = vmatprep.subr.mxu0 0.0
      %6655 = vmatpush1.msra.mxu0 %v6641
      %6656 = vmatprep.subr.mxu0 0.0
      %6657 = vmatpush1.msra.mxu0 %v6642
      %6658 = vmatprep.subr.mxu0 0.0
      %6659 = vmatpush1.msra.mxu0 %v6643
      %6660 = vmatprep.subr.mxu0 0.0
      %6661 = vmatpush1.msra.mxu0 %v6644
      %6662 = vmatprep.subr.mxu0 0.0
      %6663 = vmatpush1.msra.mxu0 %v6645
      %6664 = vmatprep.subr.mxu0 0.0
      %6665 = vmatpush1.msra.mxu0 %v6646
      %6666 = vmatprep.subr.mxu0 0.0
      %6667 = vmatpush1.msra.mxu0 0.0
      %6668 = vmatprep.subr.mxu0 0.0
      %6669 = vmatpush1.msra.mxu0 0.0
      %6670 = vmatprep.subr.mxu0 0.0
      %6671 = vmatpush1.msra.mxu0 0.0
      %6672 = vmatprep.subr.mxu0 0.0
      %6673 = vmatpush1.msra.mxu0 0.0
      %6674 = vmatprep.subr.mxu0 0.0
      %6675 = vmatpush1.msra.mxu0 0.0
      %6676 = vmatprep.subr.mxu0 0.0
      %6677 = vmatpush1.msra.mxu0 0.0
      %6678 = vmatprep.subr.mxu0 0.0
      %6679 = vmatpush1.msra.mxu0 0.0
      %6680 = vmatprep.subr.mxu0 0.0
      %6681 = vmatpush1.msra.mxu0 0.0
      %6682 = vmatprep.subr.mxu0 0.0
      %6683 = vmatpush1.msra.mxu0 0.0
      %6684 = vmatprep.subr.mxu0 0.0
      %6685 = vmatpush1.msra.mxu0 0.0
      %6686 = vmatprep.subr.mxu0 0.0
      %6687 = vmatpush1.msra.mxu0 0.0
      %6688 = vmatprep.subr.mxu0 0.0
      %6689 = vmatpush1.msra.mxu0 0.0
      %6690 = vmatprep.subr.mxu0 0.0
      %6691 = vmatpush1.msra.mxu0 0.0
      %6692 = vmatprep.subr.mxu0 0.0
      %6693 = vmatpush1.msra.mxu0 0.0
      %6694 = vmatprep.subr.mxu0 0.0
      %6695 = vmatpush1.msra.mxu0 0.0
      %6696 = vmatprep.subr.mxu0 0.0
      %6697 = vmatpush1.msra.mxu0 0.0
      %6698 = vmatprep.subr.mxu0 0.0
      %6699 = vmatpush1.msra.mxu0 0.0
      %6700 = vmatprep.subr.mxu0 0.0
      %6701 = vmatpush1.msra.mxu0 0.0
      %6702 = vmatprep.subr.mxu0 0.0
      %6703 = vmatpush1.msra.mxu0 0.0
      %6704 = vmatprep.subr.mxu0 0.0
      %6705 = vmatpush1.msra.mxu0 0.0
      %6706 = vmatprep.subr.mxu0 0.0
      %6707 = vmatpush1.msra.mxu0 0.0
      %6708 = vmatprep.subr.mxu0 0.0
      %6709 = vmatpush1.msra.mxu0 0.0
      %6710 = vmatprep.subr.mxu0 0.0
      %6711 = vmatpush1.msra.mxu0 0.0
      %6712 = vmatprep.subr.mxu0 0.0
      %6713 = vmatpush1.msra.mxu0 0.0
      %6714 = vmatprep.mubr.f32.mxu0 0.0
      %6715 = vmatmul.mubr.f32.gmra.mrb[0].mxu0 %v6648
      %v6716 = vpop.f32.mrb[0].mxu0
      %v6717 = vadd.f32 0.0, %v6716
      %v6718 = vpop.f32.mrb[0].mxu0
      %6719 = vmatprep.mubr.f32.mxu0 0.0
      %6720 = vmatmul.mubr.f32.gmra.mrb[0].mxu0 %v6648
      %v6721 = vpop.f32.mrb[0].mxu0
      %v6722 = vadd.f32 0.0, %v6721
      %v6723 = vpop.f32.mrb[0].mxu0
      %6724 = vdwg.mxu0
      %vm6725 = vcmask 23552
      %v6727 = vsel %vm6725, %v6630, 0
      %v6730 = vsel %vm6725, %v6635, 0
      %vm6732 = vcmask 1042432
      %v6734 = vsel %vm6732, %v6638, 0
      %6736 = vmatprep.subr.mxu0 0.0
      %6737 = vmatpush1.msra.mxu0 %v6734
      %6738 = vmatprep.subr.mxu0 0.0
      %6739 = vmatpush1.msra.mxu0 0.0
      %6740 = vmatprep.subr.mxu0 0.0
      %6741 = vmatpush1.msra.mxu0 0.0
      %6742 = vmatprep.subr.mxu0 0.0
      %6743 = vmatpush1.msra.mxu0 0.0
      %6744 = vmatprep.subr.mxu0 0.0
      %6745 = vmatpush1.msra.mxu0 0.0
      %6746 = vmatprep.subr.mxu0 0.0
      %6747 = vmatpush1.msra.mxu0 0.0
      %6748 = vmatprep.subr.mxu0 0.0
      %6749 = vmatpush1.msra.mxu0 0.0
      %6750 = vmatprep.subr.mxu0 0.0
      %6751 = vmatpush1.msra.mxu0 0.0
      %6752 = vmatprep.subr.mxu0 0.0
      %6753 = vmatpush1.msra.mxu0 0.0
      %6754 = vmatprep.subr.mxu0 0.0
      %6755 = vmatpush1.msra.mxu0 0.0
      %6756 = vmatprep.subr.mxu0 0.0
      %6757 = vmatpush1.msra.mxu0 0.0
      %6758 = vmatprep.subr.mxu0 0.0
      %6759 = vmatpush1.msra.mxu0 0.0
      %6760 = vmatprep.subr.mxu0 0.0
      %6761 = vmatpush1.msra.mxu0 0.0
      %6762 = vmatprep.subr.mxu0 0.0
      %6763 = vmatpush1.msra.mxu0 0.0
      %6764 = vmatprep.subr.mxu0 0.0
      %6765 = vmatpush1.msra.mxu0 0.0
      %6766 = vmatprep.subr.mxu0 0.0
      %6767 = vmatpush1.msra.mxu0 0.0
      %6768 = vmatprep.subr.mxu0 0.0
      %6769 = vmatpush1.msra.mxu0 0.0
      %6770 = vmatprep.subr.mxu0 0.0
      %6771 = vmatpush1.msra.mxu0 0.0
      %6772 = vmatprep.subr.mxu0 0.0
      %6773 = vmatpush1.msra.mxu0 0.0
      %6774 = vmatprep.subr.mxu0 0.0
      %6775 = vmatpush1.msra.mxu0 0.0
      %6776 = vmatprep.subr.mxu0 0.0
      %6777 = vmatpush1.msra.mxu0 0.0
      %6778 = vmatprep.subr.mxu0 0.0
      %6779 = vmatpush1.msra.mxu0 0.0
      %6780 = vmatprep.subr.mxu0 0.0
      %6781 = vmatpush1.msra.mxu0 0.0
      %6782 = vmatprep.subr.mxu0 0.0
      %6783 = vmatpush1.msra.mxu0 0.0
      %6784 = vmatprep.subr.mxu0 0.0
      %6785 = vmatpush1.msra.mxu0 0.0
      %6786 = vmatprep.subr.mxu0 0.0
      %6787 = vmatpush1.msra.mxu0 0.0
      %6788 = vmatprep.subr.mxu0 0.0
      %6789 = vmatpush1.msra.mxu0 0.0
      %6790 = vmatprep.subr.mxu0 0.0
      %6791 = vmatpush1.msra.mxu0 0.0
      %6792 = vmatprep.subr.mxu0 0.0
      %6793 = vmatpush1.msra.mxu0 0.0
      %6794 = vmatprep.subr.mxu0 0.0
      %6795 = vmatpush1.msra.mxu0 0.0
      %6796 = vmatprep.subr.mxu0 0.0
      %6797 = vmatpush1.msra.mxu0 0.0
      %6798 = vmatprep.subr.mxu0 0.0
      %6799 = vmatpush1.msra.mxu0 0.0
      %6800 = vmatprep.mubr.f32.mxu0 0.0
      %6801 = vmatmul.mubr.f32.gmra.mrb[0].mxu0 %v6727
      %v6802 = vpop.f32.mrb[0].mxu0
      %v6803 = vadd.f32 %v6717, %v6802
      %v6804 = vpop.f32.mrb[0].mxu0
      %6805 = vmatprep.mubr.f32.mxu0 0.0
      %6806 = vmatmul.mubr.f32.gmra.mrb[0].mxu0 %v6730
      %v6807 = vpop.f32.mrb[0].mxu0
      %v6808 = vadd.f32 %v6722, %v6807
      %v6809 = vpop.f32.mrb[0].mxu0
      %6810 = vdwg.mxu0
      %v6811 = vld [vmem:[%s43] sm:$0x1]
      %v6813 = vlaneseq
      %v6814 = vshrl.u32 %v6813, 7
      %v6815 = vsub.s32 0, %v6814
      %v6816 = vrot.slane %v6811, %v6815
      %v6818 = vadd.f32 %v6803, %v6816
      %v6819 = vadd.f32 %v6808, %v6816
      %v6820 = vld [vmem:[%s45] sm:$0x1]
      %v6822 = vlaneseq
      %v6823 = vshrl.u32 %v6822, 7
      %v6824 = vsub.s32 0, %v6823
      %v6825 = vrot.slane %v6820, %v6824
      %v6827 = vmul.f32 %v6818, %v6825
      %v6828 = vmul.f32 %v6819, %v6825
      %v6829 = vld [vmem:[%s47] sm:$0x1]
      %v6831 = vlaneseq
      %v6832 = vshrl.u32 %v6831, 7
      %v6833 = vsub.s32 0, %v6832
      %v6834 = vrot.slane %v6829, %v6833
      %v6836 = vadd.f32 %v6827, %v6834
      %v6837 = vadd.f32 %v6828, %v6834
      %v6838 = vmax.f32 %v6836, 0.0
      %v6839 = vmax.f32 %v6837, 0.0
      %v6840 = vld [vmem:[%s49] sm:$0xff]
      %v6841 = vld [vmem:[%s49 + $0x8] sm:$0xff]
      %v6842 = vld [vmem:[%s49 + $0x10] sm:$0xff]
      %v6843 = vld [vmem:[%s49 + $0x18] sm:$0xff]
      %v6844 = vld [vmem:[%s51] sm:$0x1]
      %v6846 = vlaneseq
      %v6847 = vshrl.u32 %v6846, 7
      %v6848 = vsub.s32 0, %v6847
      %v6849 = vrot.slane %v6844, %v6848
      %vm6851 = vcmask 261120
      %v6853 = vsel %vm6851, %v6838, 0
      %v6856 = vsel %vm6851, %v6839, 0
      %6858 = vmatprep.subr.mxu0 0.0
      %6859 = vmatpush1.msra.mxu0 %v6840
      %6860 = vmatprep.subr.mxu0 0.0
      %6861 = vmatpush1.msra.mxu0 %v6841
      %6862 = vmatprep.subr.mxu0 0.0
      %6863 = vmatpush1.msra.mxu0 %v6842
      %6864 = vmatprep.subr.mxu0 0.0
      %6865 = vmatpush1.msra.mxu0 %v6843
      %6866 = vmatprep.subr.mxu0 0.0
      %6867 = vmatpush1.msra.mxu0 0.0
      %6868 = vmatprep.subr.mxu0 0.0
      %6869 = vmatpush1.msra.mxu0 0.0
      %6870 = vmatprep.subr.mxu0 0.0
      %6871 = vmatpush1.msra.mxu0 0.0
      %6872 = vmatprep.subr.mxu0 0.0
      %6873 = vmatpush1.msra.mxu0 0.0
      %6874 = vmatprep.subr.mxu0 0.0
      %6875 = vmatpush1.msra.mxu0 0.0
      %6876 = vmatprep.subr.mxu0 0.0
      %6877 = vmatpush1.msra.mxu0 0.0
      %6878 = vmatprep.subr.mxu0 0.0
      %6879 = vmatpush1.msra.mxu0 0.0
      %6880 = vmatprep.subr.mxu0 0.0
      %6881 = vmatpush1.msra.mxu0 0.0
      %6882 = vmatprep.subr.mxu0 0.0
      %6883 = vmatpush1.msra.mxu0 0.0
      %6884 = vmatprep.subr.mxu0 0.0
      %6885 = vmatpush1.msra.mxu0 0.0
      %6886 = vmatprep.subr.mxu0 0.0
      %6887 = vmatpush1.msra.mxu0 0.0
      %6888 = vmatprep.subr.mxu0 0.0
      %6889 = vmatpush1.msra.mxu0 0.0
      %6890 = vmatprep.subr.mxu0 0.0
      %6891 = vmatpush1.msra.mxu0 0.0
      %6892 = vmatprep.subr.mxu0 0.0
      %6893 = vmatpush1.msra.mxu0 0.0
      %6894 = vmatprep.subr.mxu0 0.0
      %6895 = vmatpush1.msra.mxu0 0.0
      %6896 = vmatprep.subr.mxu0 0.0
      %6897 = vmatpush1.msra.mxu0 0.0
      %6898 = vmatprep.subr.mxu0 0.0
      %6899 = vmatpush1.msra.mxu0 0.0
      %6900 = vmatprep.subr.mxu0 0.0
      %6901 = vmatpush1.msra.mxu0 0.0
      %6902 = vmatprep.subr.mxu0 0.0
      %6903 = vmatpush1.msra.mxu0 0.0
      %6904 = vmatprep.subr.mxu0 0.0
      %6905 = vmatpush1.msra.mxu0 0.0
      %6906 = vmatprep.subr.mxu0 0.0
      %6907 = vmatpush1.msra.mxu0 0.0
      %6908 = vmatprep.subr.mxu0 0.0
      %6909 = vmatpush1.msra.mxu0 0.0
      %6910 = vmatprep.subr.mxu0 0.0
      %6911 = vmatpush1.msra.mxu0 0.0
      %6912 = vmatprep.subr.mxu0 0.0
      %6913 = vmatpush1.msra.mxu0 0.0
      %6914 = vmatprep.subr.mxu0 0.0
      %6915 = vmatpush1.msra.mxu0 0.0
      %6916 = vmatprep.subr.mxu0 0.0
      %6917 = vmatpush1.msra.mxu0 0.0
      %6918 = vmatprep.subr.mxu0 0.0
      %6919 = vmatpush1.msra.mxu0 0.0
      %6920 = vmatprep.subr.mxu0 0.0
      %6921 = vmatpush1.msra.mxu0 0.0
      %6922 = vmatprep.mubr.f32.mxu0 0.0
      %6923 = vmatmul.mubr.f32.gmra.mrb[0].mxu0 %v6853
      %v6924 = vpop.f32.mrb[0].mxu0
      %v6925 = vadd.f32 %v6849, %v6924
      %v6926 = vpop.f32.mrb[0].mxu0
      %6927 = vmatprep.mubr.f32.mxu0 0.0
      %6928 = vmatmul.mubr.f32.gmra.mrb[0].mxu0 %v6856
      %v6929 = vpop.f32.mrb[0].mxu0
      %v6930 = vadd.f32 %v6849, %v6929
      %v6931 = vpop.f32.mrb[0].mxu0
      %6932 = vdwg.mxu0
      %v6933 = vld [vmem:[%s53] sm:$0x1]
      %v6935 = vlaneseq
      %v6936 = vshrl.u32 %v6935, 7
      %v6937 = vsub.s32 0, %v6936
      %v6938 = vrot.slane %v6933, %v6937
      %v6940 = vmul.f32 %v6925, %v6938
      %v6941 = vmul.f32 %v6930, %v6938
      %v6942 = vld [vmem:[%s55] sm:$0x1]
      %v6944 = vlaneseq
      %v6945 = vshrl.u32 %v6944, 7
      %v6946 = vsub.s32 0, %v6945
      %v6947 = vrot.slane %v6942, %v6946
      %v6949 = vadd.f32 %v6940, %v6947
      %v6950 = vadd.f32 %v6941, %v6947
      %v6951 = vmax.f32 %v6949, 0.0
      %v6952 = vmax.f32 %v6950, 0.0
      %v6953 = vld [vmem:[%s57] sm:$0xff]
      %v6954 = vld [vmem:[%s57 + $0x8] sm:$0xff]
      %v6955 = vld [vmem:[%s59] sm:$0x1]
      %v6957 = vlaneseq
      %v6958 = vshrl.u32 %v6957, 7
      %v6959 = vsub.s32 0, %v6958
      %v6960 = vrot.slane %v6955, %v6959
      %vm6962 = vcmask 130048
      %v6964 = vsel %vm6962, %v6951, 0
      %v6967 = vsel %vm6962, %v6952, 0
      %6969 = vmatprep.subr.mxu0 0.0
      %6970 = vmatpush1.msra.mxu0 %v6953
      %6971 = vmatprep.subr.mxu0 0.0
      %6972 = vmatpush1.msra.mxu0 %v6954
      %6973 = vmatprep.subr.mxu0 0.0
      %6974 = vmatpush1.msra.mxu0 0.0
      %6975 = vmatprep.subr.mxu0 0.0
      %6976 = vmatpush1.msra.mxu0 0.0
      %6977 = vmatprep.subr.mxu0 0.0
      %6978 = vmatpush1.msra.mxu0 0.0
      %6979 = vmatprep.subr.mxu0 0.0
      %6980 = vmatpush1.msra.mxu0 0.0
      %6981 = vmatprep.subr.mxu0 0.0
      %6982 = vmatpush1.msra.mxu0 0.0
      %6983 = vmatprep.subr.mxu0 0.0
      %6984 = vmatpush1.msra.mxu0 0.0
      %6985 = vmatprep.subr.mxu0 0.0
      %6986 = vmatpush1.msra.mxu0 0.0
      %6987 = vmatprep.subr.mxu0 0.0
      %6988 = vmatpush1.msra.mxu0 0.0
      %6989 = vmatprep.subr.mxu0 0.0
      %6990 = vmatpush1.msra.mxu0 0.0
      %6991 = vmatprep.subr.mxu0 0.0
      %6992 = vmatpush1.msra.mxu0 0.0
      %6993 = vmatprep.subr.mxu0 0.0
      %6994 = vmatpush1.msra.mxu0 0.0
      %6995 = vmatprep.subr.mxu0 0.0
      %6996 = vmatpush1.msra.mxu0 0.0
      %6997 = vmatprep.subr.mxu0 0.0
      %6998 = vmatpush1.msra.mxu0 0.0
      %6999 = vmatprep.subr.mxu0 0.0
      %7000 = vmatpush1.msra.mxu0 0.0
      %7001 = vmatprep.subr.mxu0 0.0
      %7002 = vmatpush1.msra.mxu0 0.0
      %7003 = vmatprep.subr.mxu0 0.0
      %7004 = vmatpush1.msra.mxu0 0.0
      %7005 = vmatprep.subr.mxu0 0.0
      %7006 = vmatpush1.msra.mxu0 0.0
      %7007 = vmatprep.subr.mxu0 0.0
      %7008 = vmatpush1.msra.mxu0 0.0
      %7009 = vmatprep.subr.mxu0 0.0
      %7010 = vmatpush1.msra.mxu0 0.0
      %7011 = vmatprep.subr.mxu0 0.0
      %7012 = vmatpush1.msra.mxu0 0.0
      %7013 = vmatprep.subr.mxu0 0.0
      %7014 = vmatpush1.msra.mxu0 0.0
      %7015 = vmatprep.subr.mxu0 0.0
      %7016 = vmatpush1.msra.mxu0 0.0
      %7017 = vmatprep.subr.mxu0 0.0
      %7018 = vmatpush1.msra.mxu0 0.0
      %7019 = vmatprep.subr.mxu0 0.0
      %7020 = vmatpush1.msra.mxu0 0.0
      %7021 = vmatprep.subr.mxu0 0.0
      %7022 = vmatpush1.msra.mxu0 0.0
      %7023 = vmatprep.subr.mxu0 0.0
      %7024 = vmatpush1.msra.mxu0 0.0
      %7025 = vmatprep.subr.mxu0 0.0
      %7026 = vmatpush1.msra.mxu0 0.0
      %7027 = vmatprep.subr.mxu0 0.0
      %7028 = vmatpush1.msra.mxu0 0.0
      %7029 = vmatprep.subr.mxu0 0.0
      %7030 = vmatpush1.msra.mxu0 0.0
      %7031 = vmatprep.subr.mxu0 0.0
      %7032 = vmatpush1.msra.mxu0 0.0
      %7033 = vmatprep.mubr.f32.mxu0 0.0
      %7034 = vmatmul.mubr.f32.gmra.mrb[0].mxu0 %v6964
      %v7035 = vpop.f32.mrb[0].mxu0
      %v7036 = vadd.f32 %v6960, %v7035
      %v7037 = vpop.f32.mrb[0].mxu0
      %7038 = vmatprep.mubr.f32.mxu0 0.0
      %7039 = vmatmul.mubr.f32.gmra.mrb[0].mxu0 %v6967
      %v7040 = vpop.f32.mrb[0].mxu0
      %v7041 = vadd.f32 %v6960, %v7040
      %v7042 = vpop.f32.mrb[0].mxu0
      %7043 = vdwg.mxu0
      %v7044 = vld [vmem:[%s61] sm:$0x7]
      %v7045 = vld [vmem:[%s63] sm:$0xff]
      %v7046 = vld [vmem:[%s63 + $0x8] sm:$0xff]
      %v7047 = vld [vmem:[%s63 + $0x10] sm:$0xff]
      %v7048 = vld [vmem:[%s63 + $0x18] sm:$0xff]
      %v7049 = vld [vmem:[%s63 + $0x20] sm:$0xff]
      %v7050 = vld [vmem:[%s63 + $0x28] sm:$0xff]
      %v7051 = vld [vmem:[%s63 + $0x30] sm:$0xff]
      %v7052 = vld [vmem:[%s63 + $0x38] sm:$0xff]
      %7053 = vmatprep.subr.mxu0 0.0
      %7054 = vmatpush1.msra.mxu0 %v7045
      %7055 = vmatprep.subr.mxu0 0.0
      %7056 = vmatpush1.msra.mxu0 %v7046
      %7057 = vmatprep.subr.mxu0 0.0
      %7058 = vmatpush1.msra.mxu0 %v7047
      %7059 = vmatprep.subr.mxu0 0.0
      %7060 = vmatpush1.msra.mxu0 %v7048
      %7061 = vmatprep.subr.mxu0 0.0
      %7062 = vmatpush1.msra.mxu0 %v7049
      %7063 = vmatprep.subr.mxu0 0.0
      %7064 = vmatpush1.msra.mxu0 %v7050
      %7065 = vmatprep.subr.mxu0 0.0
      %7066 = vmatpush1.msra.mxu0 %v7051
      %7067 = vmatprep.subr.mxu0 0.0
      %7068 = vmatpush1.msra.mxu0 %v7052
      %7069 = vmatprep.subr.mxu0 0.0
      %7070 = vmatpush1.msra.mxu0 0.0
      %7071 = vmatprep.subr.mxu0 0.0
      %7072 = vmatpush1.msra.mxu0 0.0
      %7073 = vmatprep.subr.mxu0 0.0
      %7074 = vmatpush1.msra.mxu0 0.0
      %7075 = vmatprep.subr.mxu0 0.0
      %7076 = vmatpush1.msra.mxu0 0.0
      %7077 = vmatprep.subr.mxu0 0.0
      %7078 = vmatpush1.msra.mxu0 0.0
      %7079 = vmatprep.subr.mxu0 0.0
      %7080 = vmatpush1.msra.mxu0 0.0
      %7081 = vmatprep.subr.mxu0 0.0
      %7082 = vmatpush1.msra.mxu0 0.0
      %7083 = vmatprep.subr.mxu0 0.0
      %7084 = vmatpush1.msra.mxu0 0.0
      %7085 = vmatprep.subr.mxu0 0.0
      %7086 = vmatpush1.msra.mxu0 0.0
      %7087 = vmatprep.subr.mxu0 0.0
      %7088 = vmatpush1.msra.mxu0 0.0
      %7089 = vmatprep.subr.mxu0 0.0
      %7090 = vmatpush1.msra.mxu0 0.0
      %7091 = vmatprep.subr.mxu0 0.0
      %7092 = vmatpush1.msra.mxu0 0.0
      %7093 = vmatprep.subr.mxu0 0.0
      %7094 = vmatpush1.msra.mxu0 0.0
      %7095 = vmatprep.subr.mxu0 0.0
      %7096 = vmatpush1.msra.mxu0 0.0
      %7097 = vmatprep.subr.mxu0 0.0
      %7098 = vmatpush1.msra.mxu0 0.0
      %7099 = vmatprep.subr.mxu0 0.0
      %7100 = vmatpush1.msra.mxu0 0.0
      %7101 = vmatprep.subr.mxu0 0.0
      %7102 = vmatpush1.msra.mxu0 0.0
      %7103 = vmatprep.subr.mxu0 0.0
      %7104 = vmatpush1.msra.mxu0 0.0
      %7105 = vmatprep.subr.mxu0 0.0
      %7106 = vmatpush1.msra.mxu0 0.0
      %7107 = vmatprep.subr.mxu0 0.0
      %7108 = vmatpush1.msra.mxu0 0.0
      %7109 = vmatprep.subr.mxu0 0.0
      %7110 = vmatpush1.msra.mxu0 0.0
      %7111 = vmatprep.subr.mxu0 0.0
      %7112 = vmatpush1.msra.mxu0 0.0
      %7113 = vmatprep.subr.mxu0 0.0
      %7114 = vmatpush1.msra.mxu0 0.0
      %7115 = vmatprep.subr.mxu0 0.0
      %7116 = vmatpush1.msra.mxu0 0.0
      %7117 = vmatprep.mubr.f32.mxu0 0.0
      %7118 = vmatmul.mubr.f32.gmra.mrb[0].mxu0 %v6648
      %v7119 = vpop.f32.mrb[0].mxu0
      %v7120 = vadd.f32 0.0, %v7119
      %v7121 = vpop.f32.mrb[0].mxu0
      %7122 = vmatprep.mubr.f32.mxu0 0.0
      %7123 = vmatmul.mubr.f32.gmra.mrb[0].mxu0 %v6648
      %v7124 = vpop.f32.mrb[0].mxu0
      %v7125 = vadd.f32 0.0, %v7124
      %v7126 = vpop.f32.mrb[0].mxu0
      %7127 = vdwg.mxu0
      %v7129 = vsel %vm6725, %v7036, 0
      %v7132 = vsel %vm6725, %v7041, 0
      %v7135 = vsel %vm6732, %v7044, 0
      %7137 = vmatprep.subr.mxu0 0.0
      %7138 = vmatpush1.msra.mxu0 %v7135
      %7139 = vmatprep.subr.mxu0 0.0
      %7140 = vmatpush1.msra.mxu0 0.0
      %7141 = vmatprep.subr.mxu0 0.0
      %7142 = vmatpush1.msra.mxu0 0.0
      %7143 = vmatprep.subr.mxu0 0.0
      %7144 = vmatpush1.msra.mxu0 0.0
      %7145 = vmatprep.subr.mxu0 0.0
      %7146 = vmatpush1.msra.mxu0 0.0
      %7147 = vmatprep.subr.mxu0 0.0
      %7148 = vmatpush1.msra.mxu0 0.0
      %7149 = vmatprep.subr.mxu0 0.0
      %7150 = vmatpush1.msra.mxu0 0.0
      %7151 = vmatprep.subr.mxu0 0.0
      %7152 = vmatpush1.msra.mxu0 0.0
      %7153 = vmatprep.subr.mxu0 0.0
      %7154 = vmatpush1.msra.mxu0 0.0
      %7155 = vmatprep.subr.mxu0 0.0
      %7156 = vmatpush1.msra.mxu0 0.0
      %7157 = vmatprep.subr.mxu0 0.0
      %7158 = vmatpush1.msra.mxu0 0.0
      %7159 = vmatprep.subr.mxu0 0.0
      %7160 = vmatpush1.msra.mxu0 0.0
      %7161 = vmatprep.subr.mxu0 0.0
      %7162 = vmatpush1.msra.mxu0 0.0
      %7163 = vmatprep.subr.mxu0 0.0
      %7164 = vmatpush1.msra.mxu0 0.0
      %7165 = vmatprep.subr.mxu0 0.0
      %7166 = vmatpush1.msra.mxu0 0.0
      %7167 = vmatprep.subr.mxu0 0.0
      %7168 = vmatpush1.msra.mxu0 0.0
      %7169 = vmatprep.subr.mxu0 0.0
      %7170 = vmatpush1.msra.mxu0 0.0
      %7171 = vmatprep.subr.mxu0 0.0
      %7172 = vmatpush1.msra.mxu0 0.0
      %7173 = vmatprep.subr.mxu0 0.0
      %7174 = vmatpush1.msra.mxu0 0.0
      %7175 = vmatprep.subr.mxu0 0.0
      %7176 = vmatpush1.msra.mxu0 0.0
      %7177 = vmatprep.subr.mxu0 0.0
      %7178 = vmatpush1.msra.mxu0 0.0
      %7179 = vmatprep.subr.mxu0 0.0
      %7180 = vmatpush1.msra.mxu0 0.0
      %7181 = vmatprep.subr.mxu0 0.0
      %7182 = vmatpush1.msra.mxu0 0.0
      %7183 = vmatprep.subr.mxu0 0.0
      %7184 = vmatpush1.msra.mxu0 0.0
      %7185 = vmatprep.subr.mxu0 0.0
      %7186 = vmatpush1.msra.mxu0 0.0
      %7187 = vmatprep.subr.mxu0 0.0
      %7188 = vmatpush1.msra.mxu0 0.0
      %7189 = vmatprep.subr.mxu0 0.0
      %7190 = vmatpush1.msra.mxu0 0.0
      %7191 = vmatprep.subr.mxu0 0.0
      %7192 = vmatpush1.msra.mxu0 0.0
      %7193 = vmatprep.subr.mxu0 0.0
      %7194 = vmatpush1.msra.mxu0 0.0
      %7195 = vmatprep.subr.mxu0 0.0
      %7196 = vmatpush1.msra.mxu0 0.0
      %7197 = vmatprep.subr.mxu0 0.0
      %7198 = vmatpush1.msra.mxu0 0.0
      %7199 = vmatprep.subr.mxu0 0.0
      %7200 = vmatpush1.msra.mxu0 0.0
      %7201 = vmatprep.mubr.f32.mxu0 0.0
      %7202 = vmatmul.mubr.f32.gmra.mrb[0].mxu0 %v7129
      %v7203 = vpop.f32.mrb[0].mxu0
      %v7204 = vadd.f32 %v7120, %v7203
      %v7205 = vpop.f32.mrb[0].mxu0
      %7206 = vmatprep.mubr.f32.mxu0 0.0
      %7207 = vmatmul.mubr.f32.gmra.mrb[0].mxu0 %v7132
      %v7208 = vpop.f32.mrb[0].mxu0
      %v7209 = vadd.f32 %v7125, %v7208
      %v7210 = vpop.f32.mrb[0].mxu0
      %7211 = vdwg.mxu0
      %v7212 = vld [vmem:[%s65] sm:$0x1]
      %v7214 = vlaneseq
      %v7215 = vshrl.u32 %v7214, 7
      %v7216 = vsub.s32 0, %v7215
      %v7217 = vrot.slane %v7212, %v7216
      %v7219 = vadd.f32 %v7204, %v7217
      %v7220 = vadd.f32 %v7209, %v7217
      %v7221 = vld [vmem:[%s67] sm:$0x1]
      %v7223 = vlaneseq
      %v7224 = vshrl.u32 %v7223, 7
      %v7225 = vsub.s32 0, %v7224
      %v7226 = vrot.slane %v7221, %v7225
      %v7228 = vmul.f32 %v7219, %v7226
      %v7229 = vmul.f32 %v7220, %v7226
      %v7230 = vld [vmem:[%s69] sm:$0x1]
      %v7232 = vlaneseq
      %v7233 = vshrl.u32 %v7232, 7
      %v7234 = vsub.s32 0, %v7233
      %v7235 = vrot.slane %v7230, %v7234
      %v7237 = vadd.f32 %v7228, %v7235
      %v7238 = vadd.f32 %v7229, %v7235
      %v7239 = vmax.f32 %v7237, 0.0
      %v7240 = vmax.f32 %v7238, 0.0
      %v7241 = vld [vmem:[%s71] sm:$0xff]
      %v7242 = vld [vmem:[%s71 + $0x8] sm:$0xff]
      %v7243 = vld [vmem:[%s71 + $0x10] sm:$0xff]
      %v7244 = vld [vmem:[%s71 + $0x18] sm:$0xff]
      %v7245 = vld [vmem:[%s73] sm:$0x1]
      %v7247 = vlaneseq
      %v7248 = vshrl.u32 %v7247, 7
      %v7249 = vsub.s32 0, %v7248
      %v7250 = vrot.slane %v7245, %v7249
      %v7253 = vsel %vm6851, %v7239, 0
      %v7256 = vsel %vm6851, %v7240, 0
      %7258 = vmatprep.subr.mxu0 0.0
      %7259 = vmatpush1.msra.mxu0 %v7241
      %7260 = vmatprep.subr.mxu0 0.0
      %7261 = vmatpush1.msra.mxu0 %v7242
      %7262 = vmatprep.subr.mxu0 0.0
      %7263 = vmatpush1.msra.mxu0 %v7243
      %7264 = vmatprep.subr.mxu0 0.0
      %7265 = vmatpush1.msra.mxu0 %v7244
      %7266 = vmatprep.subr.mxu0 0.0
      %7267 = vmatpush1.msra.mxu0 0.0
      %7268 = vmatprep.subr.mxu0 0.0
      %7269 = vmatpush1.msra.mxu0 0.0
      %7270 = vmatprep.subr.mxu0 0.0
      %7271 = vmatpush1.msra.mxu0 0.0
      %7272 = vmatprep.subr.mxu0 0.0
      %7273 = vmatpush1.msra.mxu0 0.0
      %7274 = vmatprep.subr.mxu0 0.0
      %7275 = vmatpush1.msra.mxu0 0.0
      %7276 = vmatprep.subr.mxu0 0.0
      %7277 = vmatpush1.msra.mxu0 0.0
      %7278 = vmatprep.subr.mxu0 0.0
      %7279 = vmatpush1.msra.mxu0 0.0
      %7280 = vmatprep.subr.mxu0 0.0
      %7281 = vmatpush1.msra.mxu0 0.0
      %7282 = vmatprep.subr.mxu0 0.0
      %7283 = vmatpush1.msra.mxu0 0.0
      %7284 = vmatprep.subr.mxu0 0.0
      %7285 = vmatpush1.msra.mxu0 0.0
      %7286 = vmatprep.subr.mxu0 0.0
      %7287 = vmatpush1.msra.mxu0 0.0
      %7288 = vmatprep.subr.mxu0 0.0
      %7289 = vmatpush1.msra.mxu0 0.0
      %7290 = vmatprep.subr.mxu0 0.0
      %7291 = vmatpush1.msra.mxu0 0.0
      %7292 = vmatprep.subr.mxu0 0.0
      %7293 = vmatpush1.msra.mxu0 0.0
      %7294 = vmatprep.subr.mxu0 0.0
      %7295 = vmatpush1.msra.mxu0 0.0
      %7296 = vmatprep.subr.mxu0 0.0
      %7297 = vmatpush1.msra.mxu0 0.0
      %7298 = vmatprep.subr.mxu0 0.0
      %7299 = vmatpush1.msra.mxu0 0.0
      %7300 = vmatprep.subr.mxu0 0.0
      %7301 = vmatpush1.msra.mxu0 0.0
      %7302 = vmatprep.subr.mxu0 0.0
      %7303 = vmatpush1.msra.mxu0 0.0
      %7304 = vmatprep.subr.mxu0 0.0
      %7305 = vmatpush1.msra.mxu0 0.0
      %7306 = vmatprep.subr.mxu0 0.0
      %7307 = vmatpush1.msra.mxu0 0.0
      %7308 = vmatprep.subr.mxu0 0.0
      %7309 = vmatpush1.msra.mxu0 0.0
      %7310 = vmatprep.subr.mxu0 0.0
      %7311 = vmatpush1.msra.mxu0 0.0
      %7312 = vmatprep.subr.mxu0 0.0
      %7313 = vmatpush1.msra.mxu0 0.0
      %7314 = vmatprep.subr.mxu0 0.0
      %7315 = vmatpush1.msra.mxu0 0.0
      %7316 = vmatprep.subr.mxu0 0.0
      %7317 = vmatpush1.msra.mxu0 0.0
      %7318 = vmatprep.subr.mxu0 0.0
      %7319 = vmatpush1.msra.mxu0 0.0
      %7320 = vmatprep.subr.mxu0 0.0
      %7321 = vmatpush1.msra.mxu0 0.0
      %7322 = vmatprep.mubr.f32.mxu0 0.0
      %7323 = vmatmul.mubr.f32.gmra.mrb[0].mxu0 %v7253
      %v7324 = vpop.f32.mrb[0].mxu0
      %v7325 = vadd.f32 %v7250, %v7324
      %v7326 = vpop.f32.mrb[0].mxu0
      %7327 = vmatprep.mubr.f32.mxu0 0.0
      %7328 = vmatmul.mubr.f32.gmra.mrb[0].mxu0 %v7256
      %v7329 = vpop.f32.mrb[0].mxu0
      %v7330 = vadd.f32 %v7250, %v7329
      %v7331 = vpop.f32.mrb[0].mxu0
      %7332 = vdwg.mxu0
      %v7333 = vld [vmem:[%s75] sm:$0x1]
      %v7335 = vlaneseq
      %v7336 = vshrl.u32 %v7335, 7
      %v7337 = vsub.s32 0, %v7336
      %v7338 = vrot.slane %v7333, %v7337
      %v7340 = vmul.f32 %v7325, %v7338
      %v7341 = vmul.f32 %v7330, %v7338
      %v7342 = vld [vmem:[%s77] sm:$0x1]
      %v7344 = vlaneseq
      %v7345 = vshrl.u32 %v7344, 7
      %v7346 = vsub.s32 0, %v7345
      %v7347 = vrot.slane %v7342, %v7346
      %v7349 = vadd.f32 %v7340, %v7347
      %v7350 = vadd.f32 %v7341, %v7347
      %v7351 = vmax.f32 %v7349, 0.0
      %v7352 = vmax.f32 %v7350, 0.0
      %v7353 = vld [vmem:[%s79] sm:$0xff]
      %v7354 = vld [vmem:[%s79 + $0x8] sm:$0xff]
      %v7355 = vld [vmem:[%s81] sm:$0x1]
      %v7357 = vlaneseq
      %v7358 = vshrl.u32 %v7357, 7
      %v7359 = vsub.s32 0, %v7358
      %v7360 = vrot.slane %v7355, %v7359
      %v7363 = vsel %vm6962, %v7351, 0
      %v7366 = vsel %vm6962, %v7352, 0
      %7368 = vmatprep.subr.mxu0 0.0
      %7369 = vmatpush1.msra.mxu0 %v7353
      %7370 = vmatprep.subr.mxu0 0.0
      %7371 = vmatpush1.msra.mxu0 %v7354
      %7372 = vmatprep.subr.mxu0 0.0
      %7373 = vmatpush1.msra.mxu0 0.0
      %7374 = vmatprep.subr.mxu0 0.0
      %7375 = vmatpush1.msra.mxu0 0.0
      %7376 = vmatprep.subr.mxu0 0.0
      %7377 = vmatpush1.msra.mxu0 0.0
      %7378 = vmatprep.subr.mxu0 0.0
      %7379 = vmatpush1.msra.mxu0 0.0
      %7380 = vmatprep.subr.mxu0 0.0
      %7381 = vmatpush1.msra.mxu0 0.0
      %7382 = vmatprep.subr.mxu0 0.0
      %7383 = vmatpush1.msra.mxu0 0.0
      %7384 = vmatprep.subr.mxu0 0.0
      %7385 = vmatpush1.msra.mxu0 0.0
      %7386 = vmatprep.subr.mxu0 0.0
      %7387 = vmatpush1.msra.mxu0 0.0
      %7388 = vmatprep.subr.mxu0 0.0
      %7389 = vmatpush1.msra.mxu0 0.0
      %7390 = vmatprep.subr.mxu0 0.0
      %7391 = vmatpush1.msra.mxu0 0.0
      %7392 = vmatprep.subr.mxu0 0.0
      %7393 = vmatpush1.msra.mxu0 0.0
      %7394 = vmatprep.subr.mxu0 0.0
      %7395 = vmatpush1.msra.mxu0 0.0
      %7396 = vmatprep.subr.mxu0 0.0
      %7397 = vmatpush1.msra.mxu0 0.0
      %7398 = vmatprep.subr.mxu0 0.0
      %7399 = vmatpush1.msra.mxu0 0.0
      %7400 = vmatprep.subr.mxu0 0.0
      %7401 = vmatpush1.msra.mxu0 0.0
      %7402 = vmatprep.subr.mxu0 0.0
      %7403 = vmatpush1.msra.mxu0 0.0
      %7404 = vmatprep.subr.mxu0 0.0
      %7405 = vmatpush1.msra.mxu0 0.0
      %7406 = vmatprep.subr.mxu0 0.0
      %7407 = vmatpush1.msra.mxu0 0.0
      %7408 = vmatprep.subr.mxu0 0.0
      %7409 = vmatpush1.msra.mxu0 0.0
      %7410 = vmatprep.subr.mxu0 0.0
      %7411 = vmatpush1.msra.mxu0 0.0
      %7412 = vmatprep.subr.mxu0 0.0
      %7413 = vmatpush1.msra.mxu0 0.0
      %7414 = vmatprep.subr.mxu0 0.0
      %7415 = vmatpush1.msra.mxu0 0.0
      %7416 = vmatprep.subr.mxu0 0.0
      %7417 = vmatpush1.msra.mxu0 0.0
      %7418 = vmatprep.subr.mxu0 0.0
      %7419 = vmatpush1.msra.mxu0 0.0
      %7420 = vmatprep.subr.mxu0 0.0
      %7421 = vmatpush1.msra.mxu0 0.0
      %7422 = vmatprep.subr.mxu0 0.0
      %7423 = vmatpush1.msra.mxu0 0.0
      %7424 = vmatprep.subr.mxu0 0.0
      %7425 = vmatpush1.msra.mxu0 0.0
      %7426 = vmatprep.subr.mxu0 0.0
      %7427 = vmatpush1.msra.mxu0 0.0
      %7428 = vmatprep.subr.mxu0 0.0
      %7429 = vmatpush1.msra.mxu0 0.0
      %7430 = vmatprep.subr.mxu0 0.0
      %7431 = vmatpush1.msra.mxu0 0.0
      %7432 = vmatprep.mubr.f32.mxu0 0.0
      %7433 = vmatmul.mubr.f32.gmra.mrb[0].mxu0 %v7363
      %v7434 = vpop.f32.mrb[0].mxu0
      %v7435 = vadd.f32 %v7360, %v7434
      %v7436 = vpop.f32.mrb[0].mxu0
      %7437 = vmatprep.mubr.f32.mxu0 0.0
      %7438 = vmatmul.mubr.f32.gmra.mrb[0].mxu0 %v7366
      %v7439 = vpop.f32.mrb[0].mxu0
      %v7440 = vadd.f32 %v7360, %v7439
      %v7441 = vpop.f32.mrb[0].mxu0
      %7442 = vdwg.mxu0
      %7443 = vst.msk [vmem:[%s1294] sm:$0xff] %vm1334, %v5861
      %7444 = vst.msk [vmem:[%s1294 + $0x8] sm:$0xff] %vm1334, %v5862
      %7445 = vst.msk [vmem:[%s1294 + $0x10] sm:$0xff] %vm1334, %v5863
      %7446 = vst.msk [vmem:[%s1294 + $0x18] sm:$0xff] %vm1334, %v5864
      %7447 = vst.msk [vmem:[%s1294 + $0x20] sm:$0xff] %vm1334, %v5865
      %7448 = vst.msk [vmem:[%s1294 + $0x28] sm:$0xff] %vm1334, %v5866
      %7449 = vst.msk [vmem:[%s1294 + $0x30] sm:$0xff] %vm1334, %v5867
      %7450 = vst.msk [vmem:[%s1294 + $0x38] sm:$0xff] %vm1334, %v5868
      %7451 = vst.msk [vmem:[%s1294 + $0x40] sm:$0xff] %vm1334, %v5869
      %7452 = vst.msk [vmem:[%s1294 + $0x48] sm:$0xff] %vm1334, %v5870
      %7453 = vst.msk [vmem:[%s1294 + $0x50] sm:$0xff] %vm1334, %v5871
      %7454 = vst.msk [vmem:[%s1294 + $0x58] sm:$0xff] %vm1334, %v5872
      %7455 = vst.msk [vmem:[%s1294 + $0x60] sm:$0xff] %vm1334, %v5873
      %7456 = vst.msk [vmem:[%s1294 + $0x68] sm:$0xff] %vm1334, %v5874
      %7457 = vst.msk [vmem:[%s1294 + $0x70] sm:$0xff] %vm1334, %v5875
      %7458 = vst.msk [vmem:[%s1294 + $0x78] sm:$0xff] %vm1334, %v5876
      %7459 = vst.msk [vmem:[%s1294 + $0x80] sm:$0xff] %vm1334, %v6454
      %7460 = vst.msk [vmem:[%s1294 + $0x88] sm:$0xff] %vm1334, %v6459
      %7461 = vst.msk [vmem:[%s1299] sm:$0xff] %vm6725, %v1316
      %7462 = vst.msk [vmem:[%s1299 + $0x8] sm:$0xff] %vm6725, %v1317
      %7463 = vst.msk [vmem:[%s1299 + $0x10] sm:$0xff] %vm6725, %v1318
      %7464 = vst.msk [vmem:[%s1299 + $0x18] sm:$0xff] %vm6725, %v1319
      %7465 = vst.msk [vmem:[%s1299 + $0x20] sm:$0xff] %vm6725, %v1320
      %7466 = vst.msk [vmem:[%s1299 + $0x28] sm:$0xff] %vm6725, %v1321
      %7467 = vst.msk [vmem:[%s1299 + $0x30] sm:$0xff] %vm6725, %v1322
      %7468 = vst.msk [vmem:[%s1299 + $0x38] sm:$0xff] %vm6725, %v1323
      %7469 = vst.msk [vmem:[%s1299 + $0x40] sm:$0xff] %vm6725, %v1324
      %7470 = vst.msk [vmem:[%s1299 + $0x48] sm:$0xff] %vm6725, %v1325
      %7471 = vst.msk [vmem:[%s1299 + $0x50] sm:$0xff] %vm6725, %v1326
      %7472 = vst.msk [vmem:[%s1299 + $0x58] sm:$0xff] %vm6725, %v1327
      %7473 = vst.msk [vmem:[%s1299 + $0x60] sm:$0xff] %vm6725, %v1328
      %7474 = vst.msk [vmem:[%s1299 + $0x68] sm:$0xff] %vm6725, %v1329
      %7475 = vst.msk [vmem:[%s1299 + $0x70] sm:$0xff] %vm6725, %v1330
      %7476 = vst.msk [vmem:[%s1299 + $0x78] sm:$0xff] %vm6725, %v1331
      %7477 = vst.msk [vmem:[%s1299 + $0x80] sm:$0xff] %vm6725, %v7435
      %7478 = vst.msk [vmem:[%s1299 + $0x88] sm:$0xff] %vm6725, %v7440
      %p7479 = scmp.lt.s32.totalorder %s97, 1
      %s7480 = scalar_select %p7479, %s97, 1
      %s7481 = smul.addr %s7480, 18
      %s7482 = smul.addr %s7481, 8
      %s7483 = scalar_lea.vmem %s83, %s7482
      %p7484 = scmp.lt.s32.totalorder %s97, 1
      %s7485 = scalar_select %p7484, %s97, 1
      %s7486 = smul.addr %s7485, 18
      %s7487 = smul.addr %s7486, 8
      %s7488 = scalar_lea.vmem %s85, %s7487
      // Predicated region
      $region185: #{encoder_block_forward.1} parent=183 // pred_check
        %p7489 = pneg %p986
      $region186: #{encoder_block_forward.1} parent=183 // pred_check_branch
        %7491 = sbr.rel (%p7489) target = $region188
      $region187: #{encoder_block_forward.1} parent=183 // pred_region
        _
      $region188: #{encoder_block_forward.1} parent=183 // pred_fallthru
        _
      // Predicated region
      $region189: #{encoder_block_forward.1} parent=183 // pred_check
        %p7492 = pneg %p1012
      $region190: #{encoder_block_forward.1} parent=183 // pred_check_branch
        %7494 = sbr.rel (%p7492) target = $region192
      $region191: #{encoder_block_forward.1} parent=183 // pred_region
        _
      $region192: #{encoder_block_forward.1} parent=183 // pred_fallthru
        _
    $region184: #{encoder_block_forward.1} parent=5 // pred_fallthru
      _
    %p7495 = scmp.le.s32.totalorder 2, %s92
    // Predicated region
    $region193: #{encoder_block_forward.1} parent=5 // pred_check
      %p7496 = pneg %p7495
    $region194: #{encoder_block_forward.1} parent=5 // pred_check_branch
      %7498 = sbr.rel (%p7496) target = $region196
    $region195: #{encoder_block_forward.1} parent=5 // pred_region
      %s7499 = ssub.s32 %s92, 2
      // Predicated region
      $region197: #{encoder_block_forward.1} parent=195 // pred_check
        %p7500 = pneg %p992
      $region198: #{encoder_block_forward.1} parent=195 // pred_check_branch
        %7502 = sbr.rel (%p7500) target = $region200
      $region199: #{encoder_block_forward.1} parent=195 // pred_region
        %p7503 = scmp.lt.s32.totalorder %s98, 1
        %s7504 = scalar_select %p7503, %s98, 1
        %s7505 = smul.addr %s7504, 18
        %s7506 = smul.addr %s7505, 8
        %s7507 = scalar_lea.vmem %s83, %s7506
      $region200: #{encoder_block_forward.1} parent=195 // pred_fallthru
        _
      // Predicated region
      $region201: #{encoder_block_forward.1} parent=195 // pred_check
        %p7508 = pneg %p1018
      $region202: #{encoder_block_forward.1} parent=195 // pred_check_branch
        %7510 = sbr.rel (%p7508) target = $region204
      $region203: #{encoder_block_forward.1} parent=195 // pred_region
        %p7511 = scmp.lt.s32.totalorder %s98, 1
        %s7512 = scalar_select %p7511, %s98, 1
        %s7513 = smul.addr %s7512, 18
        %s7514 = smul.addr %s7513, 8
        %s7515 = scalar_lea.vmem %s85, %s7514
      $region204: #{encoder_block_forward.1} parent=195 // pred_fallthru
        _
    $region196: #{encoder_block_forward.1} parent=5 // pred_fallthru
      _
  $region6: #{encoder_block_forward.1} parent=0 // loop_footer
    %s96 = sadd.s32 1, %s92
  $region7: #{encoder_block_forward.1} parent=0 // loop_footer_branch
    %91 = sbr.rel target = $region3
  $region8: #{encoder_block_forward.1} parent=0 // loop_exit
    _

</llo_original>
